<compile_context>
chip_gen: v7x
topology: tpu7x:2x2x1
jax: 0.10.0
libtpu: 0.0.40
codegen_flags: <defaults>
</compile_context>

<pallas_src>
import jax
import jax.numpy as jnp
from jax.experimental import pallas as pl
from jax.experimental.pallas import tpu as pltpu

_LANE = 128        # TPU lane width; pad K / Cout to this
_TM_MAX = 512      # default M tile (multiple of 128), capped by VMEM budget


def _round_up(x, m):
    return (x + m - 1) // m * m


# ----------------------------------------------------------------------------
# Pallas kernel: fused  matmul + bias + activation (+ optional skip-add)
# ----------------------------------------------------------------------------
def _make_kernel(act: str, has_skip: bool):
    def kernel(*refs):
        if has_skip:
            x_ref, w_ref, b_ref, s_ref, o_ref = refs
        else:
            x_ref, w_ref, b_ref, o_ref = refs
        # bf16 x bf16 -> f32 accumulator on the MXU
        acc = jnp.dot(x_ref[...], w_ref[...], preferred_element_type=jnp.float32)
        acc = acc + b_ref[...]                           # (1, Cp) broadcast (f32 VPU)
        if act == "leaky_relu":
            acc = jnp.where(acc > 0, acc, 0.2 * acc)
        elif act == "relu":
            acc = jnp.maximum(acc, 0.0)
        elif act == "tanh":
            acc = jnp.tanh(acc)                          # EUP
        if has_skip:
            acc = acc + s_ref[...].astype(jnp.float32)   # fused U-Net skip add
        o_ref[...] = acc.astype(o_ref.dtype)
    return kernel


def matmul_bias_act(x2d, w2d, b1d, act, skip2d=None):
    """x2d: (M, K)  w2d: (K, Cout)  b1d: (Cout,)  skip2d: (M, Cout) or None."""
    M, K = x2d.shape
    Cout = w2d.shape[1]
    has_skip = skip2d is not None

    # Lane/sublane-dense shapes: K, Cout -> multiples of 128; M -> multiple of TM.
    Kp = _round_up(K, _LANE)
    Cp = _round_up(Cout, _LANE)
    # Cap TM so a single bf16 x-tile stays <= ~2 MiB (double-buffered ~4 MiB):
    # safe under v5e's 16 MiB scoped default and v7x's 64 MiB physical VMEM.
    tm_cap = max(_LANE, ((2 * 1024 * 1024) // (Kp * 2)) // _LANE * _LANE)
    TM = min(_TM_MAX, tm_cap, _round_up(M, _LANE))
    Mp = _round_up(M, TM)

    # Zero-pad and cast MXU operands to bf16 (halves HBM->VMEM bytes);
    # bias and accumulator stay f32 (v5e has no bf16 VALU).
    xp = jnp.pad(x2d.astype(jnp.bfloat16), ((0, Mp - M), (0, Kp - K)))
    wp = jnp.pad(w2d.astype(jnp.bfloat16), ((0, Kp - K), (0, Cp - Cout)))
    bp = jnp.pad(b1d.astype(jnp.float32).reshape(1, Cout), ((0, 0), (0, Cp - Cout)))

    args = [xp, wp, bp]
    in_specs = [
        pl.BlockSpec((TM, Kp), lambda i: (i, 0)),   # x tiles streamed over M
        pl.BlockSpec((Kp, Cp), lambda i: (0, 0)),   # weights resident across tiles
        pl.BlockSpec((1, Cp), lambda i: (0, 0)),    # bias resident
    ]
    if has_skip:
        sp = jnp.pad(skip2d.astype(jnp.bfloat16), ((0, Mp - M), (0, Cp - Cout)))
        args.append(sp)
        in_specs.append(pl.BlockSpec((TM, Cp), lambda i: (i, 0)))

    grid = (Mp // TM,)
    cost = pl.CostEstimate(
        flops=2 * Mp * Kp * Cp,
        transcendentals=Mp * Cp if act == "tanh" else 0,
        bytes_accessed=(Mp * Kp + Kp * Cp + (Mp * Cp if has_skip else 0)) * 2
        + Cp * 4 + Mp * Cp * 4,
    )

    out = pl.pallas_call(
        _make_kernel(act, has_skip),
        out_shape=jax.ShapeDtypeStruct((Mp, Cp), jnp.float32),
        grid=grid,
        in_specs=in_specs,
        out_specs=pl.BlockSpec((TM, Cp), lambda i: (i, 0)),
        compiler_params=pltpu.CompilerParams(
            dimension_semantics=("parallel",),       # shard M tiles across TCs (v7x)
            vmem_limit_bytes=32 * 1024 * 1024,       # explicit scoped-VMEM budget
        ),
        cost_estimate=cost,
    )(*args)
    return out[:M, :Cout]


# ----------------------------------------------------------------------------
# Conv / ConvTranspose layers built on the Pallas matmul kernel
# ----------------------------------------------------------------------------
def _im2col(xp, kh, kw, sh, sw, Ho, Wo):
    """xp: padded NHWC input -> (N*Ho*Wo, kh*kw*C) patches (dy, dx, c order)."""
    N, _, _, C = xp.shape
    cols = []
    for dy in range(kh):
        for dx in range(kw):
            cols.append(xp[:, dy:dy + sh * Ho:sh, dx:dx + sw * Wo:sw, :])
    patches = jnp.concatenate(cols, axis=-1)          # (N, Ho, Wo, kh*kw*C)
    return patches.reshape(N * Ho * Wo, kh * kw * C)


def conv2d(x, w, b, stride, padding, act, skip=None):
    """x: NHWC,  w: (kh, kw, Cin, Cout),  b: (Cout,)."""
    N, H, W, Cin = x.shape
    kh, kw, _, Cout = w.shape
    sh, sw = stride
    ph, pw = padding
    xb = x.astype(jnp.bfloat16)                       # bf16 patches: half the HBM traffic
    xpad = jnp.pad(xb, ((0, 0), (ph, ph), (pw, pw), (0, 0)))
    Ho = (H + 2 * ph - kh) // sh + 1
    Wo = (W + 2 * pw - kw) // sw + 1
    x2d = _im2col(xpad, kh, kw, sh, sw, Ho, Wo)
    w2d = w.reshape(kh * kw * Cin, Cout)
    skip2d = None if skip is None else skip.reshape(N * Ho * Wo, Cout)
    out2d = matmul_bias_act(x2d, w2d, b, act, skip2d)
    return out2d.reshape(N, Ho, Wo, Cout)


def conv_transpose2d(x, w, b, stride, padding, output_padding, act, skip=None):
    """Exact ConvTranspose2d arithmetic via the equivalent stride-1 convolution:
    dilate the input by `stride`, pad by (k-1-p) (+output_padding on the far side),
    then run a VALID stride-1 conv. `w` is stored directly in the equivalent-conv
    HWIO layout (synthetic weights, so no separate flip step)."""
    N, H, W, Cin = x.shape
    kh, kw, _, Cout = w.shape
    sh, sw = stride
    ph, pw = padding
    oph, opw = output_padding
    xb = x.astype(jnp.bfloat16)
    Hd = (H - 1) * sh + 1
    Wd = (W - 1) * sw + 1
    # TODO(synk): stride-2 layers (up2/up3) could use a sub-pixel decomposition
    # instead of this zero-dilation to avoid ~75% structurally-zero MACs/bytes.
    xd = jnp.zeros((N, Hd, Wd, Cin), xb.dtype).at[:, ::sh, ::sw, :].set(xb)
    xpad = jnp.pad(xd, ((0, 0),
                        (kh - 1 - ph, kh - 1 - ph + oph),
                        (kw - 1 - pw, kw - 1 - pw + opw),
                        (0, 0)))
    Ho = (H - 1) * sh - 2 * ph + kh + oph
    Wo = (W - 1) * sw - 2 * pw + kw + opw
    x2d = _im2col(xpad, kh, kw, 1, 1, Ho, Wo)
    w2d = w.reshape(kh * kw * Cin, Cout)
    skip2d = None if skip is None else skip.reshape(N * Ho * Wo, Cout)
    out2d = matmul_bias_act(x2d, w2d, b, act, skip2d)
    return out2d.reshape(N, Ho, Wo, Cout)


# ----------------------------------------------------------------------------
# Generator
# ----------------------------------------------------------------------------
_LAYER_CFG = {  # name: (cin, cout, k)
    "down1": (None, 8, 3), "down2": (8, 16, 5), "down3": (16, 32, 3),
    "down4": (32, 64, 3), "down5": (64, 128, 3),
    "up1": (128, 64, 3), "up2": (64, 32, 3), "up3": (32, 16, 4),
    "up4": (16, 8, 5), "up5": (8, 3, 3),
}


def init_params(key, in_channels):
    params = {}
    for name, (cin, cout, k) in _LAYER_CFG.items():
        cin = in_channels if cin is None else cin
        key, wk = jax.random.split(key)
        scale = 1.0 / jnp.sqrt(float(k * k * cin))
        w = jax.random.normal(wk, (k, k, cin, cout), jnp.float32) * scale
        b = jnp.zeros((cout,), jnp.float32)
        params[name] = (w, b)
    return params


def generator_forward(params, x_nchw):
    # NCHW -> NHWC for the kernels, back to NCHW at the end.
    x = jnp.transpose(x_nchw, (0, 2, 3, 1)).astype(jnp.float32)

    d1 = conv2d(x,  *params["down1"], stride=(1, 1), padding=(1, 1), act="leaky_relu")
    o2 = conv2d(d1, *params["down2"], stride=(1, 1), padding=(2, 2), act="leaky_relu")
    o3 = conv2d(o2, *params["down3"], stride=(2, 2), padding=(1, 1), act="leaky_relu")
    o4 = conv2d(o3, *params["down4"], stride=(2, 2), padding=(1, 1), act="leaky_relu")
    out = conv2d(o4, *params["down5"], stride=(1, 1), padding=(1, 1), act="leaky_relu")

    # out = up2(up1(out) + out4): "+out4" fused into up1's epilogue
    out = conv_transpose2d(out, *params["up1"], stride=(1, 1), padding=(1, 1),
                           output_padding=(0, 0), act="relu", skip=o4)
    # out = up2(.) + out3: "+out3" fused into up2's epilogue
    out = conv_transpose2d(out, *params["up2"], stride=(2, 2), padding=(1, 1),
                           output_padding=(1, 1), act="relu", skip=o3)
    out = conv_transpose2d(out, *params["up3"], stride=(2, 2), padding=(1, 1),
                           output_padding=(0, 0), act="relu")
    # out = up5(up4(out) + down1): "+down1" fused into up4's epilogue
    out = conv_transpose2d(out, *params["up4"], stride=(1, 1), padding=(2, 2),
                           output_padding=(0, 0), act="relu", skip=d1)
    out = conv_transpose2d(out, *params["up5"], stride=(1, 1), padding=(1, 1),
                           output_padding=(0, 0), act="tanh")

    return jnp.transpose(out, (0, 3, 1, 2))           # back to NCHW, 3 channels


if __name__ == "__main__":
    key = jax.random.PRNGKey(0)
    key, pkey, xkey = jax.random.split(key, 3)

    in_channels, batch, H, W = 4, 2, 16, 16
    params = init_params(pkey, in_channels)
    x = jax.random.normal(xkey, (batch, in_channels, H, W), jnp.float32)

    fwd = jax.jit(generator_forward)
    y = fwd(params, x)
    y = jax.block_until_ready(y)

    assert y.shape == (batch, 3, H, W), y.shape
    assert jnp.all(jnp.isfinite(y))
    print("KERNEL_OK")
</pallas_src>

<mosaic_0001>
module attributes {stable_mosaic.version = 11 : i64} {
  func.func @kernel(%arg0: i32, %arg1: memref<512x128xbf16, #tpu.memory_space<vmem>>, %arg2: memref<128x128xbf16, #tpu.memory_space<vmem>>, %arg3: memref<1x128xf32, #tpu.memory_space<vmem>>, %arg4: memref<512x128xf32, #tpu.memory_space<vmem>>) attributes {dimension_semantics = [#tpu.dimension_semantics<parallel>], iteration_bounds = array<i64: 1>, scalar_prefetch = 0 : i64, scratch_operands = 0 : i64, tpu.core_type = #tpu.core_type<tc>, window_params = [{transform_indices = @transform_0, window_bounds = array<i64: 512, 128>}, {pipeline_mode = #tpu.pipeline_mode<synchronous>, transform_indices = @transform_1, window_bounds = array<i64: 128, 128>}, {pipeline_mode = #tpu.pipeline_mode<synchronous>, transform_indices = @transform_2, window_bounds = array<i64: 1, 128>}, {transform_indices = @transform_3, window_bounds = array<i64: 512, 128>}]} {
    %c0 = arith.constant 0 : index
    %c0_0 = arith.constant 0 : index
    %0 = vector.load %arg1[%c0, %c0_0] : memref<512x128xbf16, #tpu.memory_space<vmem>>, vector<512x128xbf16>
    %c0_1 = arith.constant 0 : index
    %c0_2 = arith.constant 0 : index
    %1 = vector.load %arg2[%c0_1, %c0_2] : memref<128x128xbf16, #tpu.memory_space<vmem>>, vector<128x128xbf16>
    %cst = arith.constant dense<0.000000e+00> : vector<512x128xf32>
    %2 = tpu.matmul %0, %1, %cst {dimension_numbers = #tpu.dot_dimension_numbers<[1], [0], [0], [1], [0, 0, 1, 1], [], []>} : vector<512x128xbf16>, vector<128x128xbf16>, vector<512x128xf32> -> vector<512x128xf32>
    %c0_3 = arith.constant 0 : index
    %c0_4 = arith.constant 0 : index
    %3 = vector.load %arg3[%c0_3, %c0_4] : memref<1x128xf32, #tpu.memory_space<vmem>>, vector<1x128xf32>
    %4 = vector.broadcast %3 : vector<1x128xf32> to vector<512x128xf32>
    %5 = arith.addf %2, %4 : vector<512x128xf32>
    %cst_5 = arith.constant 0.000000e+00 : f32
    %6 = vector.broadcast %cst_5 : f32 to vector<512x128xf32>
    %7 = arith.cmpf ogt, %5, %6 : vector<512x128xf32>
    %cst_6 = arith.constant 2.000000e-01 : f32
    %8 = vector.broadcast %cst_6 : f32 to vector<512x128xf32>
    %9 = arith.mulf %8, %5 : vector<512x128xf32>
    %10 = arith.select %7, %5, %9 : vector<512x128xi1>, vector<512x128xf32>
    %c0_7 = arith.constant 0 : index
    %c0_8 = arith.constant 0 : index
    %11 = vector.load %arg4[%c0_7, %c0_8] : memref<512x128xf32, #tpu.memory_space<vmem>>, vector<512x128xf32>
    tpu.vector_store %arg4[%c0_7, %c0_8], %10 {strides = array<i32>} : memref<512x128xf32, #tpu.memory_space<vmem>>, vector<512x128xf32>,
    return
  }
  func.func @transform_0(%arg0: i32) -> (i32, i32) {
    %c0_i32 = arith.constant 0 : i32
    %c0_i32_0 = arith.constant 0 : i32
    return %arg0, %c0_i32 : i32, i32
  }
  func.func @transform_1(%arg0: i32) -> (i32, i32) {
    %c0_i32 = arith.constant 0 : i32
    %c0_i32_0 = arith.constant 0 : i32
    %c0_i32_1 = arith.constant 0 : i32
    return %c0_i32, %c0_i32_0 : i32, i32
  }
  func.func @transform_2(%arg0: i32) -> (i32, i32) {
    %c0_i32 = arith.constant 0 : i32
    %c0_i32_0 = arith.constant 0 : i32
    %c0_i32_1 = arith.constant 0 : i32
    return %c0_i32, %c0_i32_0 : i32, i32
  }
  func.func @transform_3(%arg0: i32) -> (i32, i32) {
    %c0_i32 = arith.constant 0 : i32
    %c0_i32_0 = arith.constant 0 : i32
    return %arg0, %c0_i32 : i32, i32
  }
}

module attributes {stable_mosaic.version = 11 : i64} {
  func.func @kernel(%arg0: i32, %arg1: memref<512x256xbf16, #tpu.memory_space<vmem>>, %arg2: memref<256x128xbf16, #tpu.memory_space<vmem>>, %arg3: memref<1x128xf32, #tpu.memory_space<vmem>>, %arg4: memref<512x128xf32, #tpu.memory_space<vmem>>) attributes {dimension_semantics = [#tpu.dimension_semantics<parallel>], iteration_bounds = array<i64: 1>, scalar_prefetch = 0 : i64, scratch_operands = 0 : i64, tpu.core_type = #tpu.core_type<tc>, window_params = [{transform_indices = @transform_0, window_bounds = array<i64: 512, 256>}, {pipeline_mode = #tpu.pipeline_mode<synchronous>, transform_indices = @transform_1, window_bounds = array<i64: 256, 128>}, {pipeline_mode = #tpu.pipeline_mode<synchronous>, transform_indices = @transform_2, window_bounds = array<i64: 1, 128>}, {transform_indices = @transform_3, window_bounds = array<i64: 512, 128>}]} {
    %c0 = arith.constant 0 : index
    %c0_0 = arith.constant 0 : index
    %0 = vector.load %arg1[%c0, %c0_0] : memref<512x256xbf16, #tpu.memory_space<vmem>>, vector<512x256xbf16>
    %c0_1 = arith.constant 0 : index
    %c0_2 = arith.constant 0 : index
    %1 = vector.load %arg2[%c0_1, %c0_2] : memref<256x128xbf16, #tpu.memory_space<vmem>>, vector<256x128xbf16>
    %cst = arith.constant dense<0.000000e+00> : vector<512x128xf32>
    %2 = tpu.matmul %0, %1, %cst {dimension_numbers = #tpu.dot_dimension_numbers<[1], [0], [0], [1], [0, 0, 1, 1], [], []>} : vector<512x256xbf16>, vector<256x128xbf16>, vector<512x128xf32> -> vector<512x128xf32>
    %c0_3 = arith.constant 0 : index
    %c0_4 = arith.constant 0 : index
    %3 = vector.load %arg3[%c0_3, %c0_4] : memref<1x128xf32, #tpu.memory_space<vmem>>, vector<1x128xf32>
    %4 = vector.broadcast %3 : vector<1x128xf32> to vector<512x128xf32>
    %5 = arith.addf %2, %4 : vector<512x128xf32>
    %cst_5 = arith.constant 0.000000e+00 : f32
    %6 = vector.broadcast %cst_5 : f32 to vector<512x128xf32>
    %7 = arith.cmpf ogt, %5, %6 : vector<512x128xf32>
    %cst_6 = arith.constant 2.000000e-01 : f32
    %8 = vector.broadcast %cst_6 : f32 to vector<512x128xf32>
    %9 = arith.mulf %8, %5 : vector<512x128xf32>
    %10 = arith.select %7, %5, %9 : vector<512x128xi1>, vector<512x128xf32>
    %c0_7 = arith.constant 0 : index
    %c0_8 = arith.constant 0 : index
    %11 = vector.load %arg4[%c0_7, %c0_8] : memref<512x128xf32, #tpu.memory_space<vmem>>, vector<512x128xf32>
    tpu.vector_store %arg4[%c0_7, %c0_8], %10 {strides = array<i32>} : memref<512x128xf32, #tpu.memory_space<vmem>>, vector<512x128xf32>,
    return
  }
  func.func @transform_0(%arg0: i32) -> (i32, i32) {
    %c0_i32 = arith.constant 0 : i32
    %c0_i32_0 = arith.constant 0 : i32
    return %arg0, %c0_i32 : i32, i32
  }
  func.func @transform_1(%arg0: i32) -> (i32, i32) {
    %c0_i32 = arith.constant 0 : i32
    %c0_i32_0 = arith.constant 0 : i32
    %c0_i32_1 = arith.constant 0 : i32
    return %c0_i32, %c0_i32_0 : i32, i32
  }
  func.func @transform_2(%arg0: i32) -> (i32, i32) {
    %c0_i32 = arith.constant 0 : i32
    %c0_i32_0 = arith.constant 0 : i32
    %c0_i32_1 = arith.constant 0 : i32
    return %c0_i32, %c0_i32_0 : i32, i32
  }
  func.func @transform_3(%arg0: i32) -> (i32, i32) {
    %c0_i32 = arith.constant 0 : i32
    %c0_i32_0 = arith.constant 0 : i32
    return %arg0, %c0_i32 : i32, i32
  }
}

module attributes {stable_mosaic.version = 11 : i64} {
  func.func @kernel(%arg0: i32, %arg1: memref<128x256xbf16, #tpu.memory_space<vmem>>, %arg2: memref<256x128xbf16, #tpu.memory_space<vmem>>, %arg3: memref<1x128xf32, #tpu.memory_space<vmem>>, %arg4: memref<128x128xf32, #tpu.memory_space<vmem>>) attributes {dimension_semantics = [#tpu.dimension_semantics<parallel>], iteration_bounds = array<i64: 1>, scalar_prefetch = 0 : i64, scratch_operands = 0 : i64, tpu.core_type = #tpu.core_type<tc>, window_params = [{transform_indices = @transform_0, window_bounds = array<i64: 128, 256>}, {pipeline_mode = #tpu.pipeline_mode<synchronous>, transform_indices = @transform_1, window_bounds = array<i64: 256, 128>}, {pipeline_mode = #tpu.pipeline_mode<synchronous>, transform_indices = @transform_2, window_bounds = array<i64: 1, 128>}, {transform_indices = @transform_3, window_bounds = array<i64: 128, 128>}]} {
    %c0 = arith.constant 0 : index
    %c0_0 = arith.constant 0 : index
    %0 = vector.load %arg1[%c0, %c0_0] : memref<128x256xbf16, #tpu.memory_space<vmem>>, vector<128x256xbf16>
    %c0_1 = arith.constant 0 : index
    %c0_2 = arith.constant 0 : index
    %1 = vector.load %arg2[%c0_1, %c0_2] : memref<256x128xbf16, #tpu.memory_space<vmem>>, vector<256x128xbf16>
    %cst = arith.constant dense<0.000000e+00> : vector<128x128xf32>
    %2 = tpu.matmul %0, %1, %cst {dimension_numbers = #tpu.dot_dimension_numbers<[1], [0], [0], [1], [0, 0, 1, 1], [], []>} : vector<128x256xbf16>, vector<256x128xbf16>, vector<128x128xf32> -> vector<128x128xf32>
    %c0_3 = arith.constant 0 : index
    %c0_4 = arith.constant 0 : index
    %3 = vector.load %arg3[%c0_3, %c0_4] : memref<1x128xf32, #tpu.memory_space<vmem>>, vector<1x128xf32>
    %4 = vector.broadcast %3 : vector<1x128xf32> to vector<128x128xf32>
    %5 = arith.addf %2, %4 : vector<128x128xf32>
    %cst_5 = arith.constant 0.000000e+00 : f32
    %6 = vector.broadcast %cst_5 : f32 to vector<128x128xf32>
    %7 = arith.cmpf ogt, %5, %6 : vector<128x128xf32>
    %cst_6 = arith.constant 2.000000e-01 : f32
    %8 = vector.broadcast %cst_6 : f32 to vector<128x128xf32>
    %9 = arith.mulf %8, %5 : vector<128x128xf32>
    %10 = arith.select %7, %5, %9 : vector<128x128xi1>, vector<128x128xf32>
    %c0_7 = arith.constant 0 : index
    %c0_8 = arith.constant 0 : index
    %11 = vector.load %arg4[%c0_7, %c0_8] : memref<128x128xf32, #tpu.memory_space<vmem>>, vector<128x128xf32>
    tpu.vector_store %arg4[%c0_7, %c0_8], %10 {strides = array<i32>} : memref<128x128xf32, #tpu.memory_space<vmem>>, vector<128x128xf32>,
    return
  }
  func.func @transform_0(%arg0: i32) -> (i32, i32) {
    %c0_i32 = arith.constant 0 : i32
    %c0_i32_0 = arith.constant 0 : i32
    return %arg0, %c0_i32 : i32, i32
  }
  func.func @transform_1(%arg0: i32) -> (i32, i32) {
    %c0_i32 = arith.constant 0 : i32
    %c0_i32_0 = arith.constant 0 : i32
    %c0_i32_1 = arith.constant 0 : i32
    return %c0_i32, %c0_i32_0 : i32, i32
  }
  func.func @transform_2(%arg0: i32) -> (i32, i32) {
    %c0_i32 = arith.constant 0 : i32
    %c0_i32_0 = arith.constant 0 : i32
    %c0_i32_1 = arith.constant 0 : i32
    return %c0_i32, %c0_i32_0 : i32, i32
  }
  func.func @transform_3(%arg0: i32) -> (i32, i32) {
    %c0_i32 = arith.constant 0 : i32
    %c0_i32_0 = arith.constant 0 : i32
    return %arg0, %c0_i32 : i32, i32
  }
}

module attributes {stable_mosaic.version = 11 : i64} {
  func.func @kernel(%arg0: i32, %arg1: memref<128x384xbf16, #tpu.memory_space<vmem>>, %arg2: memref<384x128xbf16, #tpu.memory_space<vmem>>, %arg3: memref<1x128xf32, #tpu.memory_space<vmem>>, %arg4: memref<128x128xf32, #tpu.memory_space<vmem>>) attributes {dimension_semantics = [#tpu.dimension_semantics<parallel>], iteration_bounds = array<i64: 1>, scalar_prefetch = 0 : i64, scratch_operands = 0 : i64, tpu.core_type = #tpu.core_type<tc>, window_params = [{transform_indices = @transform_0, window_bounds = array<i64: 128, 384>}, {pipeline_mode = #tpu.pipeline_mode<synchronous>, transform_indices = @transform_1, window_bounds = array<i64: 384, 128>}, {pipeline_mode = #tpu.pipeline_mode<synchronous>, transform_indices = @transform_2, window_bounds = array<i64: 1, 128>}, {transform_indices = @transform_3, window_bounds = array<i64: 128, 128>}]} {
    %c0 = arith.constant 0 : index
    %c0_0 = arith.constant 0 : index
    %0 = vector.load %arg1[%c0, %c0_0] : memref<128x384xbf16, #tpu.memory_space<vmem>>, vector<128x384xbf16>
    %c0_1 = arith.constant 0 : index
    %c0_2 = arith.constant 0 : index
    %1 = vector.load %arg2[%c0_1, %c0_2] : memref<384x128xbf16, #tpu.memory_space<vmem>>, vector<384x128xbf16>
    %cst = arith.constant dense<0.000000e+00> : vector<128x128xf32>
    %2 = tpu.matmul %0, %1, %cst {dimension_numbers = #tpu.dot_dimension_numbers<[1], [0], [0], [1], [0, 0, 1, 1], [], []>} : vector<128x384xbf16>, vector<384x128xbf16>, vector<128x128xf32> -> vector<128x128xf32>
    %c0_3 = arith.constant 0 : index
    %c0_4 = arith.constant 0 : index
    %3 = vector.load %arg3[%c0_3, %c0_4] : memref<1x128xf32, #tpu.memory_space<vmem>>, vector<1x128xf32>
    %4 = vector.broadcast %3 : vector<1x128xf32> to vector<128x128xf32>
    %5 = arith.addf %2, %4 : vector<128x128xf32>
    %cst_5 = arith.constant 0.000000e+00 : f32
    %6 = vector.broadcast %cst_5 : f32 to vector<128x128xf32>
    %7 = arith.cmpf ogt, %5, %6 : vector<128x128xf32>
    %cst_6 = arith.constant 2.000000e-01 : f32
    %8 = vector.broadcast %cst_6 : f32 to vector<128x128xf32>
    %9 = arith.mulf %8, %5 : vector<128x128xf32>
    %10 = arith.select %7, %5, %9 : vector<128x128xi1>, vector<128x128xf32>
    %c0_7 = arith.constant 0 : index
    %c0_8 = arith.constant 0 : index
    %11 = vector.load %arg4[%c0_7, %c0_8] : memref<128x128xf32, #tpu.memory_space<vmem>>, vector<128x128xf32>
    tpu.vector_store %arg4[%c0_7, %c0_8], %10 {strides = array<i32>} : memref<128x128xf32, #tpu.memory_space<vmem>>, vector<128x128xf32>,
    return
  }
  func.func @transform_0(%arg0: i32) -> (i32, i32) {
    %c0_i32 = arith.constant 0 : i32
    %c0_i32_0 = arith.constant 0 : i32
    return %arg0, %c0_i32 : i32, i32
  }
  func.func @transform_1(%arg0: i32) -> (i32, i32) {
    %c0_i32 = arith.constant 0 : i32
    %c0_i32_0 = arith.constant 0 : i32
    %c0_i32_1 = arith.constant 0 : i32
    return %c0_i32, %c0_i32_0 : i32, i32
  }
  func.func @transform_2(%arg0: i32) -> (i32, i32) {
    %c0_i32 = arith.constant 0 : i32
    %c0_i32_0 = arith.constant 0 : i32
    %c0_i32_1 = arith.constant 0 : i32
    return %c0_i32, %c0_i32_0 : i32, i32
  }
  func.func @transform_3(%arg0: i32) -> (i32, i32) {
    %c0_i32 = arith.constant 0 : i32
    %c0_i32_0 = arith.constant 0 : i32
    return %arg0, %c0_i32 : i32, i32
  }
}

module attributes {stable_mosaic.version = 11 : i64} {
  func.func @kernel(%arg0: i32, %arg1: memref<128x640xbf16, #tpu.memory_space<vmem>>, %arg2: memref<640x128xbf16, #tpu.memory_space<vmem>>, %arg3: memref<1x128xf32, #tpu.memory_space<vmem>>, %arg4: memref<128x128xf32, #tpu.memory_space<vmem>>) attributes {dimension_semantics = [#tpu.dimension_semantics<parallel>], iteration_bounds = array<i64: 1>, scalar_prefetch = 0 : i64, scratch_operands = 0 : i64, tpu.core_type = #tpu.core_type<tc>, window_params = [{transform_indices = @transform_0, window_bounds = array<i64: 128, 640>}, {pipeline_mode = #tpu.pipeline_mode<synchronous>, transform_indices = @transform_1, window_bounds = array<i64: 640, 128>}, {pipeline_mode = #tpu.pipeline_mode<synchronous>, transform_indices = @transform_2, window_bounds = array<i64: 1, 128>}, {transform_indices = @transform_3, window_bounds = array<i64: 128, 128>}]} {
    %c0 = arith.constant 0 : index
    %c0_0 = arith.constant 0 : index
    %0 = vector.load %arg1[%c0, %c0_0] : memref<128x640xbf16, #tpu.memory_space<vmem>>, vector<128x640xbf16>
    %c0_1 = arith.constant 0 : index
    %c0_2 = arith.constant 0 : index
    %1 = vector.load %arg2[%c0_1, %c0_2] : memref<640x128xbf16, #tpu.memory_space<vmem>>, vector<640x128xbf16>
    %cst = arith.constant dense<0.000000e+00> : vector<128x128xf32>
    %2 = tpu.matmul %0, %1, %cst {dimension_numbers = #tpu.dot_dimension_numbers<[1], [0], [0], [1], [0, 0, 1, 1], [], []>} : vector<128x640xbf16>, vector<640x128xbf16>, vector<128x128xf32> -> vector<128x128xf32>
    %c0_3 = arith.constant 0 : index
    %c0_4 = arith.constant 0 : index
    %3 = vector.load %arg3[%c0_3, %c0_4] : memref<1x128xf32, #tpu.memory_space<vmem>>, vector<1x128xf32>
    %4 = vector.broadcast %3 : vector<1x128xf32> to vector<128x128xf32>
    %5 = arith.addf %2, %4 : vector<128x128xf32>
    %cst_5 = arith.constant 0.000000e+00 : f32
    %6 = vector.broadcast %cst_5 : f32 to vector<128x128xf32>
    %7 = arith.cmpf ogt, %5, %6 : vector<128x128xf32>
    %cst_6 = arith.constant 2.000000e-01 : f32
    %8 = vector.broadcast %cst_6 : f32 to vector<128x128xf32>
    %9 = arith.mulf %8, %5 : vector<128x128xf32>
    %10 = arith.select %7, %5, %9 : vector<128x128xi1>, vector<128x128xf32>
    %c0_7 = arith.constant 0 : index
    %c0_8 = arith.constant 0 : index
    %11 = vector.load %arg4[%c0_7, %c0_8] : memref<128x128xf32, #tpu.memory_space<vmem>>, vector<128x128xf32>
    tpu.vector_store %arg4[%c0_7, %c0_8], %10 {strides = array<i32>} : memref<128x128xf32, #tpu.memory_space<vmem>>, vector<128x128xf32>,
    return
  }
  func.func @transform_0(%arg0: i32) -> (i32, i32) {
    %c0_i32 = arith.constant 0 : i32
    %c0_i32_0 = arith.constant 0 : i32
    return %arg0, %c0_i32 : i32, i32
  }
  func.func @transform_1(%arg0: i32) -> (i32, i32) {
    %c0_i32 = arith.constant 0 : i32
    %c0_i32_0 = arith.constant 0 : i32
    %c0_i32_1 = arith.constant 0 : i32
    return %c0_i32, %c0_i32_0 : i32, i32
  }
  func.func @transform_2(%arg0: i32) -> (i32, i32) {
    %c0_i32 = arith.constant 0 : i32
    %c0_i32_0 = arith.constant 0 : i32
    %c0_i32_1 = arith.constant 0 : i32
    return %c0_i32, %c0_i32_0 : i32, i32
  }
  func.func @transform_3(%arg0: i32) -> (i32, i32) {
    %c0_i32 = arith.constant 0 : i32
    %c0_i32_0 = arith.constant 0 : i32
    return %arg0, %c0_i32 : i32, i32
  }
}

module attributes {stable_mosaic.version = 11 : i64} {
  func.func @kernel(%arg0: i32, %arg1: memref<128x1152xbf16, #tpu.memory_space<vmem>>, %arg2: memref<1152x128xbf16, #tpu.memory_space<vmem>>, %arg3: memref<1x128xf32, #tpu.memory_space<vmem>>, %arg4: memref<128x128xbf16, #tpu.memory_space<vmem>>, %arg5: memref<128x128xf32, #tpu.memory_space<vmem>>) attributes {dimension_semantics = [#tpu.dimension_semantics<parallel>], iteration_bounds = array<i64: 1>, scalar_prefetch = 0 : i64, scratch_operands = 0 : i64, tpu.core_type = #tpu.core_type<tc>, window_params = [{transform_indices = @transform_0, window_bounds = array<i64: 128, 1152>}, {pipeline_mode = #tpu.pipeline_mode<synchronous>, transform_indices = @transform_1, window_bounds = array<i64: 1152, 128>}, {pipeline_mode = #tpu.pipeline_mode<synchronous>, transform_indices = @transform_2, window_bounds = array<i64: 1, 128>}, {transform_indices = @transform_3, window_bounds = array<i64: 128, 128>}, {transform_indices = @transform_4, window_bounds = array<i64: 128, 128>}]} {
    %c0 = arith.constant 0 : index
    %c0_0 = arith.constant 0 : index
    %0 = vector.load %arg1[%c0, %c0_0] : memref<128x1152xbf16, #tpu.memory_space<vmem>>, vector<128x1152xbf16>
    %c0_1 = arith.constant 0 : index
    %c0_2 = arith.constant 0 : index
    %1 = vector.load %arg2[%c0_1, %c0_2] : memref<1152x128xbf16, #tpu.memory_space<vmem>>, vector<1152x128xbf16>
    %cst = arith.constant dense<0.000000e+00> : vector<128x128xf32>
    %2 = tpu.matmul %0, %1, %cst {dimension_numbers = #tpu.dot_dimension_numbers<[1], [0], [0], [1], [0, 0, 1, 1], [], []>} : vector<128x1152xbf16>, vector<1152x128xbf16>, vector<128x128xf32> -> vector<128x128xf32>
    %c0_3 = arith.constant 0 : index
    %c0_4 = arith.constant 0 : index
    %3 = vector.load %arg3[%c0_3, %c0_4] : memref<1x128xf32, #tpu.memory_space<vmem>>, vector<1x128xf32>
    %4 = vector.broadcast %3 : vector<1x128xf32> to vector<128x128xf32>
    %5 = arith.addf %2, %4 : vector<128x128xf32>
    %cst_5 = arith.constant 0.000000e+00 : f32
    %6 = vector.broadcast %cst_5 : f32 to vector<128x128xf32>
    %7 = arith.maximumf %5, %6 : vector<128x128xf32>
    %c0_6 = arith.constant 0 : index
    %c0_7 = arith.constant 0 : index
    %8 = vector.load %arg4[%c0_6, %c0_7] : memref<128x128xbf16, #tpu.memory_space<vmem>>, vector<128x128xbf16>
    %9 = arith.extf %8 : vector<128x128xbf16> to vector<128x128xf32>
    %10 = arith.addf %7, %9 : vector<128x128xf32>
    %c0_8 = arith.constant 0 : index
    %c0_9 = arith.constant 0 : index
    %11 = vector.load %arg5[%c0_8, %c0_9] : memref<128x128xf32, #tpu.memory_space<vmem>>, vector<128x128xf32>
    tpu.vector_store %arg5[%c0_8, %c0_9], %10 {strides = array<i32>} : memref<128x128xf32, #tpu.memory_space<vmem>>, vector<128x128xf32>,
    return
  }
  func.func @transform_0(%arg0: i32) -> (i32, i32) {
    %c0_i32 = arith.constant 0 : i32
    %c0_i32_0 = arith.constant 0 : i32
    return %arg0, %c0_i32 : i32, i32
  }
  func.func @transform_1(%arg0: i32) -> (i32, i32) {
    %c0_i32 = arith.constant 0 : i32
    %c0_i32_0 = arith.constant 0 : i32
    %c0_i32_1 = arith.constant 0 : i32
    return %c0_i32, %c0_i32_0 : i32, i32
  }
  func.func @transform_2(%arg0: i32) -> (i32, i32) {
    %c0_i32 = arith.constant 0 : i32
    %c0_i32_0 = arith.constant 0 : i32
    %c0_i32_1 = arith.constant 0 : i32
    return %c0_i32, %c0_i32_0 : i32, i32
  }
  func.func @transform_3(%arg0: i32) -> (i32, i32) {
    %c0_i32 = arith.constant 0 : i32
    %c0_i32_0 = arith.constant 0 : i32
    return %arg0, %c0_i32 : i32, i32
  }
  func.func @transform_4(%arg0: i32) -> (i32, i32) {
    %c0_i32 = arith.constant 0 : i32
    %c0_i32_0 = arith.constant 0 : i32
    return %arg0, %c0_i32 : i32, i32
  }
}

module attributes {stable_mosaic.version = 11 : i64} {
  func.func @kernel(%arg0: i32, %arg1: memref<128x640xbf16, #tpu.memory_space<vmem>>, %arg2: memref<640x128xbf16, #tpu.memory_space<vmem>>, %arg3: memref<1x128xf32, #tpu.memory_space<vmem>>, %arg4: memref<128x128xbf16, #tpu.memory_space<vmem>>, %arg5: memref<128x128xf32, #tpu.memory_space<vmem>>) attributes {dimension_semantics = [#tpu.dimension_semantics<parallel>], iteration_bounds = array<i64: 1>, scalar_prefetch = 0 : i64, scratch_operands = 0 : i64, tpu.core_type = #tpu.core_type<tc>, window_params = [{transform_indices = @transform_0, window_bounds = array<i64: 128, 640>}, {pipeline_mode = #tpu.pipeline_mode<synchronous>, transform_indices = @transform_1, window_bounds = array<i64: 640, 128>}, {pipeline_mode = #tpu.pipeline_mode<synchronous>, transform_indices = @transform_2, window_bounds = array<i64: 1, 128>}, {transform_indices = @transform_3, window_bounds = array<i64: 128, 128>}, {transform_indices = @transform_4, window_bounds = array<i64: 128, 128>}]} {
    %c0 = arith.constant 0 : index
    %c0_0 = arith.constant 0 : index
    %0 = vector.load %arg1[%c0, %c0_0] : memref<128x640xbf16, #tpu.memory_space<vmem>>, vector<128x640xbf16>
    %c0_1 = arith.constant 0 : index
    %c0_2 = arith.constant 0 : index
    %1 = vector.load %arg2[%c0_1, %c0_2] : memref<640x128xbf16, #tpu.memory_space<vmem>>, vector<640x128xbf16>
    %cst = arith.constant dense<0.000000e+00> : vector<128x128xf32>
    %2 = tpu.matmul %0, %1, %cst {dimension_numbers = #tpu.dot_dimension_numbers<[1], [0], [0], [1], [0, 0, 1, 1], [], []>} : vector<128x640xbf16>, vector<640x128xbf16>, vector<128x128xf32> -> vector<128x128xf32>
    %c0_3 = arith.constant 0 : index
    %c0_4 = arith.constant 0 : index
    %3 = vector.load %arg3[%c0_3, %c0_4] : memref<1x128xf32, #tpu.memory_space<vmem>>, vector<1x128xf32>
    %4 = vector.broadcast %3 : vector<1x128xf32> to vector<128x128xf32>
    %5 = arith.addf %2, %4 : vector<128x128xf32>
    %cst_5 = arith.constant 0.000000e+00 : f32
    %6 = vector.broadcast %cst_5 : f32 to vector<128x128xf32>
    %7 = arith.maximumf %5, %6 : vector<128x128xf32>
    %c0_6 = arith.constant 0 : index
    %c0_7 = arith.constant 0 : index
    %8 = vector.load %arg4[%c0_6, %c0_7] : memref<128x128xbf16, #tpu.memory_space<vmem>>, vector<128x128xbf16>
    %9 = arith.extf %8 : vector<128x128xbf16> to vector<128x128xf32>
    %10 = arith.addf %7, %9 : vector<128x128xf32>
    %c0_8 = arith.constant 0 : index
    %c0_9 = arith.constant 0 : index
    %11 = vector.load %arg5[%c0_8, %c0_9] : memref<128x128xf32, #tpu.memory_space<vmem>>, vector<128x128xf32>
    tpu.vector_store %arg5[%c0_8, %c0_9], %10 {strides = array<i32>} : memref<128x128xf32, #tpu.memory_space<vmem>>, vector<128x128xf32>,
    return
  }
  func.func @transform_0(%arg0: i32) -> (i32, i32) {
    %c0_i32 = arith.constant 0 : i32
    %c0_i32_0 = arith.constant 0 : i32
    return %arg0, %c0_i32 : i32, i32
  }
  func.func @transform_1(%arg0: i32) -> (i32, i32) {
    %c0_i32 = arith.constant 0 : i32
    %c0_i32_0 = arith.constant 0 : i32
    %c0_i32_1 = arith.constant 0 : i32
    return %c0_i32, %c0_i32_0 : i32, i32
  }
  func.func @transform_2(%arg0: i32) -> (i32, i32) {
    %c0_i32 = arith.constant 0 : i32
    %c0_i32_0 = arith.constant 0 : i32
    %c0_i32_1 = arith.constant 0 : i32
    return %c0_i32, %c0_i32_0 : i32, i32
  }
  func.func @transform_3(%arg0: i32) -> (i32, i32) {
    %c0_i32 = arith.constant 0 : i32
    %c0_i32_0 = arith.constant 0 : i32
    return %arg0, %c0_i32 : i32, i32
  }
  func.func @transform_4(%arg0: i32) -> (i32, i32) {
    %c0_i32 = arith.constant 0 : i32
    %c0_i32_0 = arith.constant 0 : i32
    return %arg0, %c0_i32 : i32, i32
  }
}

module attributes {stable_mosaic.version = 11 : i64} {
  func.func @kernel(%arg0: i32, %arg1: memref<512x512xbf16, #tpu.memory_space<vmem>>, %arg2: memref<512x128xbf16, #tpu.memory_space<vmem>>, %arg3: memref<1x128xf32, #tpu.memory_space<vmem>>, %arg4: memref<512x128xf32, #tpu.memory_space<vmem>>) attributes {dimension_semantics = [#tpu.dimension_semantics<parallel>], iteration_bounds = array<i64: 1>, scalar_prefetch = 0 : i64, scratch_operands = 0 : i64, tpu.core_type = #tpu.core_type<tc>, window_params = [{transform_indices = @transform_0, window_bounds = array<i64: 512, 512>}, {pipeline_mode = #tpu.pipeline_mode<synchronous>, transform_indices = @transform_1, window_bounds = array<i64: 512, 128>}, {pipeline_mode = #tpu.pipeline_mode<synchronous>, transform_indices = @transform_2, window_bounds = array<i64: 1, 128>}, {transform_indices = @transform_3, window_bounds = array<i64: 512, 128>}]} {
    %c0 = arith.constant 0 : index
    %c0_0 = arith.constant 0 : index
    %0 = vector.load %arg1[%c0, %c0_0] : memref<512x512xbf16, #tpu.memory_space<vmem>>, vector<512x512xbf16>
    %c0_1 = arith.constant 0 : index
    %c0_2 = arith.constant 0 : index
    %1 = vector.load %arg2[%c0_1, %c0_2] : memref<512x128xbf16, #tpu.memory_space<vmem>>, vector<512x128xbf16>
    %cst = arith.constant dense<0.000000e+00> : vector<512x128xf32>
    %2 = tpu.matmul %0, %1, %cst {dimension_numbers = #tpu.dot_dimension_numbers<[1], [0], [0], [1], [0, 0, 1, 1], [], []>} : vector<512x512xbf16>, vector<512x128xbf16>, vector<512x128xf32> -> vector<512x128xf32>
    %c0_3 = arith.constant 0 : index
    %c0_4 = arith.constant 0 : index
    %3 = vector.load %arg3[%c0_3, %c0_4] : memref<1x128xf32, #tpu.memory_space<vmem>>, vector<1x128xf32>
    %4 = vector.broadcast %3 : vector<1x128xf32> to vector<512x128xf32>
    %5 = arith.addf %2, %4 : vector<512x128xf32>
    %cst_5 = arith.constant 0.000000e+00 : f32
    %6 = vector.broadcast %cst_5 : f32 to vector<512x128xf32>
    %7 = arith.maximumf %5, %6 : vector<512x128xf32>
    %c0_6 = arith.constant 0 : index
    %c0_7 = arith.constant 0 : index
    %8 = vector.load %arg4[%c0_6, %c0_7] : memref<512x128xf32, #tpu.memory_space<vmem>>, vector<512x128xf32>
    tpu.vector_store %arg4[%c0_6, %c0_7], %7 {strides = array<i32>} : memref<512x128xf32, #tpu.memory_space<vmem>>, vector<512x128xf32>,
    return
  }
  func.func @transform_0(%arg0: i32) -> (i32, i32) {
    %c0_i32 = arith.constant 0 : i32
    %c0_i32_0 = arith.constant 0 : i32
    return %arg0, %c0_i32 : i32, i32
  }
  func.func @transform_1(%arg0: i32) -> (i32, i32) {
    %c0_i32 = arith.constant 0 : i32
    %c0_i32_0 = arith.constant 0 : i32
    %c0_i32_1 = arith.constant 0 : i32
    return %c0_i32, %c0_i32_0 : i32, i32
  }
  func.func @transform_2(%arg0: i32) -> (i32, i32) {
    %c0_i32 = arith.constant 0 : i32
    %c0_i32_0 = arith.constant 0 : i32
    %c0_i32_1 = arith.constant 0 : i32
    return %c0_i32, %c0_i32_0 : i32, i32
  }
  func.func @transform_3(%arg0: i32) -> (i32, i32) {
    %c0_i32 = arith.constant 0 : i32
    %c0_i32_0 = arith.constant 0 : i32
    return %arg0, %c0_i32 : i32, i32
  }
}

module attributes {stable_mosaic.version = 11 : i64} {
  func.func @kernel(%arg0: i32, %arg1: memref<512x512xbf16, #tpu.memory_space<vmem>>, %arg2: memref<512x128xbf16, #tpu.memory_space<vmem>>, %arg3: memref<1x128xf32, #tpu.memory_space<vmem>>, %arg4: memref<512x128xbf16, #tpu.memory_space<vmem>>, %arg5: memref<512x128xf32, #tpu.memory_space<vmem>>) attributes {dimension_semantics = [#tpu.dimension_semantics<parallel>], iteration_bounds = array<i64: 1>, scalar_prefetch = 0 : i64, scratch_operands = 0 : i64, tpu.core_type = #tpu.core_type<tc>, window_params = [{transform_indices = @transform_0, window_bounds = array<i64: 512, 512>}, {pipeline_mode = #tpu.pipeline_mode<synchronous>, transform_indices = @transform_1, window_bounds = array<i64: 512, 128>}, {pipeline_mode = #tpu.pipeline_mode<synchronous>, transform_indices = @transform_2, window_bounds = array<i64: 1, 128>}, {transform_indices = @transform_3, window_bounds = array<i64: 512, 128>}, {transform_indices = @transform_4, window_bounds = array<i64: 512, 128>}]} {
    %c0 = arith.constant 0 : index
    %c0_0 = arith.constant 0 : index
    %0 = vector.load %arg1[%c0, %c0_0] : memref<512x512xbf16, #tpu.memory_space<vmem>>, vector<512x512xbf16>
    %c0_1 = arith.constant 0 : index
    %c0_2 = arith.constant 0 : index
    %1 = vector.load %arg2[%c0_1, %c0_2] : memref<512x128xbf16, #tpu.memory_space<vmem>>, vector<512x128xbf16>
    %cst = arith.constant dense<0.000000e+00> : vector<512x128xf32>
    %2 = tpu.matmul %0, %1, %cst {dimension_numbers = #tpu.dot_dimension_numbers<[1], [0], [0], [1], [0, 0, 1, 1], [], []>} : vector<512x512xbf16>, vector<512x128xbf16>, vector<512x128xf32> -> vector<512x128xf32>
    %c0_3 = arith.constant 0 : index
    %c0_4 = arith.constant 0 : index
    %3 = vector.load %arg3[%c0_3, %c0_4] : memref<1x128xf32, #tpu.memory_space<vmem>>, vector<1x128xf32>
    %4 = vector.broadcast %3 : vector<1x128xf32> to vector<512x128xf32>
    %5 = arith.addf %2, %4 : vector<512x128xf32>
    %cst_5 = arith.constant 0.000000e+00 : f32
    %6 = vector.broadcast %cst_5 : f32 to vector<512x128xf32>
    %7 = arith.maximumf %5, %6 : vector<512x128xf32>
    %c0_6 = arith.constant 0 : index
    %c0_7 = arith.constant 0 : index
    %8 = vector.load %arg4[%c0_6, %c0_7] : memref<512x128xbf16, #tpu.memory_space<vmem>>, vector<512x128xbf16>
    %9 = arith.extf %8 : vector<512x128xbf16> to vector<512x128xf32>
    %10 = arith.addf %7, %9 : vector<512x128xf32>
    %c0_8 = arith.constant 0 : index
    %c0_9 = arith.constant 0 : index
    %11 = vector.load %arg5[%c0_8, %c0_9] : memref<512x128xf32, #tpu.memory_space<vmem>>, vector<512x128xf32>
    tpu.vector_store %arg5[%c0_8, %c0_9], %10 {strides = array<i32>} : memref<512x128xf32, #tpu.memory_space<vmem>>, vector<512x128xf32>,
    return
  }
  func.func @transform_0(%arg0: i32) -> (i32, i32) {
    %c0_i32 = arith.constant 0 : i32
    %c0_i32_0 = arith.constant 0 : i32
    return %arg0, %c0_i32 : i32, i32
  }
  func.func @transform_1(%arg0: i32) -> (i32, i32) {
    %c0_i32 = arith.constant 0 : i32
    %c0_i32_0 = arith.constant 0 : i32
    %c0_i32_1 = arith.constant 0 : i32
    return %c0_i32, %c0_i32_0 : i32, i32
  }
  func.func @transform_2(%arg0: i32) -> (i32, i32) {
    %c0_i32 = arith.constant 0 : i32
    %c0_i32_0 = arith.constant 0 : i32
    %c0_i32_1 = arith.constant 0 : i32
    return %c0_i32, %c0_i32_0 : i32, i32
  }
  func.func @transform_3(%arg0: i32) -> (i32, i32) {
    %c0_i32 = arith.constant 0 : i32
    %c0_i32_0 = arith.constant 0 : i32
    return %arg0, %c0_i32 : i32, i32
  }
  func.func @transform_4(%arg0: i32) -> (i32, i32) {
    %c0_i32 = arith.constant 0 : i32
    %c0_i32_0 = arith.constant 0 : i32
    return %arg0, %c0_i32 : i32, i32
  }
}

module attributes {stable_mosaic.version = 11 : i64} {
  func.func @kernel(%arg0: i32, %arg1: memref<512x128xbf16, #tpu.memory_space<vmem>>, %arg2: memref<128x128xbf16, #tpu.memory_space<vmem>>, %arg3: memref<1x128xf32, #tpu.memory_space<vmem>>, %arg4: memref<512x128xf32, #tpu.memory_space<vmem>>) attributes {dimension_semantics = [#tpu.dimension_semantics<parallel>], iteration_bounds = array<i64: 1>, scalar_prefetch = 0 : i64, scratch_operands = 0 : i64, tpu.core_type = #tpu.core_type<tc>, window_params = [{transform_indices = @transform_0, window_bounds = array<i64: 512, 128>}, {pipeline_mode = #tpu.pipeline_mode<synchronous>, transform_indices = @transform_1, window_bounds = array<i64: 128, 128>}, {pipeline_mode = #tpu.pipeline_mode<synchronous>, transform_indices = @transform_2, window_bounds = array<i64: 1, 128>}, {transform_indices = @transform_3, window_bounds = array<i64: 512, 128>}]} {
    %c0 = arith.constant 0 : index
    %c0_0 = arith.constant 0 : index
    %0 = vector.load %arg1[%c0, %c0_0] : memref<512x128xbf16, #tpu.memory_space<vmem>>, vector<512x128xbf16>
    %c0_1 = arith.constant 0 : index
    %c0_2 = arith.constant 0 : index
    %1 = vector.load %arg2[%c0_1, %c0_2] : memref<128x128xbf16, #tpu.memory_space<vmem>>, vector<128x128xbf16>
    %cst = arith.constant dense<0.000000e+00> : vector<512x128xf32>
    %2 = tpu.matmul %0, %1, %cst {dimension_numbers = #tpu.dot_dimension_numbers<[1], [0], [0], [1], [0, 0, 1, 1], [], []>} : vector<512x128xbf16>, vector<128x128xbf16>, vector<512x128xf32> -> vector<512x128xf32>
    %c0_3 = arith.constant 0 : index
    %c0_4 = arith.constant 0 : index
    %3 = vector.load %arg3[%c0_3, %c0_4] : memref<1x128xf32, #tpu.memory_space<vmem>>, vector<1x128xf32>
    %4 = vector.broadcast %3 : vector<1x128xf32> to vector<512x128xf32>
    %5 = arith.addf %2, %4 : vector<512x128xf32>
    %6 = math.tanh %5 : vector<512x128xf32>
    %c0_5 = arith.constant 0 : index
    %c0_6 = arith.constant 0 : index
    %7 = vector.load %arg4[%c0_5, %c0_6] : memref<512x128xf32, #tpu.memory_space<vmem>>, vector<512x128xf32>
    tpu.vector_store %arg4[%c0_5, %c0_6], %6 {strides = array<i32>} : memref<512x128xf32, #tpu.memory_space<vmem>>, vector<512x128xf32>,
    return
  }
  func.func @transform_0(%arg0: i32) -> (i32, i32) {
    %c0_i32 = arith.constant 0 : i32
    %c0_i32_0 = arith.constant 0 : i32
    return %arg0, %c0_i32 : i32, i32
  }
  func.func @transform_1(%arg0: i32) -> (i32, i32) {
    %c0_i32 = arith.constant 0 : i32
    %c0_i32_0 = arith.constant 0 : i32
    %c0_i32_1 = arith.constant 0 : i32
    return %c0_i32, %c0_i32_0 : i32, i32
  }
  func.func @transform_2(%arg0: i32) -> (i32, i32) {
    %c0_i32 = arith.constant 0 : i32
    %c0_i32_0 = arith.constant 0 : i32
    %c0_i32_1 = arith.constant 0 : i32
    return %c0_i32, %c0_i32_0 : i32, i32
  }
  func.func @transform_3(%arg0: i32) -> (i32, i32) {
    %c0_i32 = arith.constant 0 : i32
    %c0_i32_0 = arith.constant 0 : i32
    return %arg0, %c0_i32 : i32, i32
  }
}

</mosaic_0001>

<llo_original>
// kernel: generator_forward.10
$region0: #{generator_forward.10}
  #allocation0 [shape = 'u32[]', space=smem, size = 0x4, offset = 0x4, fixed_abs, tag = 'smem constant byte address 0x4 - core index']
  #allocation1 [shape = 'u32[144,128]{1,0:T(1,128)}', space=vmem, size = 0x12000, scoped, tag = 'internal scratch']
  %s0 = inlined_call_operand.vmem [shape: bf16[512,128], index: 0, kind: input, shape index: {}]
  %s1 = inlined_call_operand.vmem [shape: bf16[128,128], index: 1, kind: input, shape index: {}]
  %s2 = inlined_call_operand.vmem [shape: f32[1,128], index: 2, kind: input, shape index: {}]
  %s3 = inlined_call_operand.vmem [shape: f32[512,128], index: 3, kind: output, shape index: {}]
  %s4 = sld [smem:[#allocation0]]
  $region22: #{generator_forward.10} parent=0
    _
  %s6 = ssub.s32 1, %s4
  %s7 = scalar_select 0, %s6, %s4
  // Predicated region
  $region2: #{generator_forward.10} parent=0 // pred_check
    _
  $region3: #{generator_forward.10} parent=0 // pred_check_branch
    %9 = sbr.rel (0) target = $region5
  $region4: #{generator_forward.10} parent=0 // pred_region
    _
  $region5: #{generator_forward.10} parent=0 // pred_fallthru
    _
  // Predicated region
  $region6: #{generator_forward.10} parent=0 // pred_check
    _
  $region7: #{generator_forward.10} parent=0 // pred_check_branch
    %11 = sbr.rel (0) target = $region9
  $region8: #{generator_forward.10} parent=0 // pred_region
    _
  $region9: #{generator_forward.10} parent=0 // pred_fallthru
    _
  // Predicated region
  $region10: #{generator_forward.10} parent=0 // pred_check
    _
  $region11: #{generator_forward.10} parent=0 // pred_check_branch
    %13 = sbr.rel (0) target = $region13
  $region12: #{generator_forward.10} parent=0 // pred_region
    _
  $region13: #{generator_forward.10} parent=0 // pred_fallthru
    _
  %v15 = vld [vmem:[%s0] sm:$0xf]
  %v16 = vld [vmem:[%s0 + $0x4] sm:$0xf]
  %v17 = vld [vmem:[%s0 + $0x8] sm:$0xf]
  %v18 = vld [vmem:[%s0 + $0xc] sm:$0xf]
  %v19 = vld [vmem:[%s0 + $0x10] sm:$0xf]
  %v20 = vld [vmem:[%s0 + $0x14] sm:$0xf]
  %v21 = vld [vmem:[%s0 + $0x18] sm:$0xf]
  %v22 = vld [vmem:[%s0 + $0x1c] sm:$0xf]
  %v23 = vld [vmem:[%s0 + $0x20] sm:$0xf]
  %v24 = vld [vmem:[%s0 + $0x24] sm:$0xf]
  %v25 = vld [vmem:[%s0 + $0x28] sm:$0xf]
  %v26 = vld [vmem:[%s0 + $0x2c] sm:$0xf]
  %v27 = vld [vmem:[%s0 + $0x30] sm:$0xf]
  %v28 = vld [vmem:[%s0 + $0x34] sm:$0xf]
  %v29 = vld [vmem:[%s0 + $0x38] sm:$0xf]
  %v30 = vld [vmem:[%s0 + $0x3c] sm:$0xf]
  %v31 = vld [vmem:[%s0 + $0x40] sm:$0xf]
  %v32 = vld [vmem:[%s0 + $0x44] sm:$0xf]
  %v33 = vld [vmem:[%s0 + $0x48] sm:$0xf]
  %v34 = vld [vmem:[%s0 + $0x4c] sm:$0xf]
  %v35 = vld [vmem:[%s0 + $0x50] sm:$0xf]
  %v36 = vld [vmem:[%s0 + $0x54] sm:$0xf]
  %v37 = vld [vmem:[%s0 + $0x58] sm:$0xf]
  %v38 = vld [vmem:[%s0 + $0x5c] sm:$0xf]
  %v39 = vld [vmem:[%s0 + $0x60] sm:$0xf]
  %v40 = vld [vmem:[%s0 + $0x64] sm:$0xf]
  %v41 = vld [vmem:[%s0 + $0x68] sm:$0xf]
  %v42 = vld [vmem:[%s0 + $0x6c] sm:$0xf]
  %v43 = vld [vmem:[%s0 + $0x70] sm:$0xf]
  %v44 = vld [vmem:[%s0 + $0x74] sm:$0xf]
  %v45 = vld [vmem:[%s0 + $0x78] sm:$0xf]
  %v46 = vld [vmem:[%s0 + $0x7c] sm:$0xf]
  %v47 = vld [vmem:[%s0 + $0x80] sm:$0xf]
  %v48 = vld [vmem:[%s0 + $0x84] sm:$0xf]
  %v49 = vld [vmem:[%s0 + $0x88] sm:$0xf]
  %v50 = vld [vmem:[%s0 + $0x8c] sm:$0xf]
  %v51 = vld [vmem:[%s0 + $0x90] sm:$0xf]
  %v52 = vld [vmem:[%s0 + $0x94] sm:$0xf]
  %v53 = vld [vmem:[%s0 + $0x98] sm:$0xf]
  %v54 = vld [vmem:[%s0 + $0x9c] sm:$0xf]
  %v55 = vld [vmem:[%s0 + $0xa0] sm:$0xf]
  %v56 = vld [vmem:[%s0 + $0xa4] sm:$0xf]
  %v57 = vld [vmem:[%s0 + $0xa8] sm:$0xf]
  %v58 = vld [vmem:[%s0 + $0xac] sm:$0xf]
  %v59 = vld [vmem:[%s0 + $0xb0] sm:$0xf]
  %v60 = vld [vmem:[%s0 + $0xb4] sm:$0xf]
  %v61 = vld [vmem:[%s0 + $0xb8] sm:$0xf]
  %v62 = vld [vmem:[%s0 + $0xbc] sm:$0xf]
  %v63 = vld [vmem:[%s0 + $0xc0] sm:$0xf]
  %v64 = vld [vmem:[%s0 + $0xc4] sm:$0xf]
  %v65 = vld [vmem:[%s0 + $0xc8] sm:$0xf]
  %v66 = vld [vmem:[%s0 + $0xcc] sm:$0xf]
  %v67 = vld [vmem:[%s0 + $0xd0] sm:$0xf]
  %v68 = vld [vmem:[%s0 + $0xd4] sm:$0xf]
  %v69 = vld [vmem:[%s0 + $0xd8] sm:$0xf]
  %v70 = vld [vmem:[%s0 + $0xdc] sm:$0xf]
  %v71 = vld [vmem:[%s0 + $0xe0] sm:$0xf]
  %v72 = vld [vmem:[%s0 + $0xe4] sm:$0xf]
  %v73 = vld [vmem:[%s0 + $0xe8] sm:$0xf]
  %v74 = vld [vmem:[%s0 + $0xec] sm:$0xf]
  %v75 = vld [vmem:[%s0 + $0xf0] sm:$0xf]
  %v76 = vld [vmem:[%s0 + $0xf4] sm:$0xf]
  %v77 = vld [vmem:[%s0 + $0xf8] sm:$0xf]
  %v78 = vld [vmem:[%s0 + $0xfc] sm:$0xf]
  %v79 = vld [vmem:[%s1] sm:$0xf]
  %v80 = vld [vmem:[%s1 + $0x4] sm:$0xf]
  %v81 = vld [vmem:[%s1 + $0x8] sm:$0xf]
  %v82 = vld [vmem:[%s1 + $0xc] sm:$0xf]
  %v83 = vld [vmem:[%s1 + $0x10] sm:$0xf]
  %v84 = vld [vmem:[%s1 + $0x14] sm:$0xf]
  %v85 = vld [vmem:[%s1 + $0x18] sm:$0xf]
  %v86 = vld [vmem:[%s1 + $0x1c] sm:$0xf]
  %v87 = vld [vmem:[%s1 + $0x20] sm:$0xf]
  %v88 = vld [vmem:[%s1 + $0x24] sm:$0xf]
  %v89 = vld [vmem:[%s1 + $0x28] sm:$0xf]
  %v90 = vld [vmem:[%s1 + $0x2c] sm:$0xf]
  %v91 = vld [vmem:[%s1 + $0x30] sm:$0xf]
  %v92 = vld [vmem:[%s1 + $0x34] sm:$0xf]
  %v93 = vld [vmem:[%s1 + $0x38] sm:$0xf]
  %v94 = vld [vmem:[%s1 + $0x3c] sm:$0xf]
  %v95 = vld [vmem:[%s2] sm:$0x1]
  %v97 = vlaneseq
  %v98 = vshrl.u32 %v97, 7
  %v99 = vsub.s32 0, %v98
  %v100 = vrot.slane %v95, %v99
  %v166 = vunpack.c.l.b16 %v15
  %v167 = vunpack.c.l.b16 %v16
  %v168 = vunpack.c.l.b16 %v17
  %v169 = vunpack.c.l.b16 %v18
  %v170 = vunpack.c.l.b16 %v19
  %v171 = vunpack.c.l.b16 %v20
  %v172 = vunpack.c.l.b16 %v21
  %v173 = vunpack.c.l.b16 %v22
  %v174 = vunpack.c.l.b16 %v23
  %v175 = vunpack.c.l.b16 %v24
  %v176 = vunpack.c.l.b16 %v25
  %v177 = vunpack.c.l.b16 %v26
  %v178 = vunpack.c.l.b16 %v27
  %v179 = vunpack.c.l.b16 %v28
  %v180 = vunpack.c.l.b16 %v29
  %v181 = vunpack.c.l.b16 %v30
  %v182 = vunpack.c.l.b16 %v31
  %v183 = vunpack.c.l.b16 %v32
  %v184 = vunpack.c.l.b16 %v33
  %v185 = vunpack.c.l.b16 %v34
  %v186 = vunpack.c.l.b16 %v35
  %v187 = vunpack.c.l.b16 %v36
  %v188 = vunpack.c.l.b16 %v37
  %v189 = vunpack.c.l.b16 %v38
  %v190 = vunpack.c.l.b16 %v39
  %v191 = vunpack.c.l.b16 %v40
  %v192 = vunpack.c.l.b16 %v41
  %v193 = vunpack.c.l.b16 %v42
  %v194 = vunpack.c.l.b16 %v43
  %v195 = vunpack.c.l.b16 %v44
  %v196 = vunpack.c.l.b16 %v45
  %v197 = vunpack.c.l.b16 %v46
  %v198 = vunpack.c.l.b16 %v47
  %v199 = vunpack.c.l.b16 %v48
  %v200 = vunpack.c.l.b16 %v49
  %v201 = vunpack.c.l.b16 %v50
  %v202 = vunpack.c.l.b16 %v51
  %v203 = vunpack.c.l.b16 %v52
  %v204 = vunpack.c.l.b16 %v53
  %v205 = vunpack.c.l.b16 %v54
  %v206 = vunpack.c.l.b16 %v55
  %v207 = vunpack.c.l.b16 %v56
  %v208 = vunpack.c.l.b16 %v57
  %v209 = vunpack.c.l.b16 %v58
  %v210 = vunpack.c.l.b16 %v59
  %v211 = vunpack.c.l.b16 %v60
  %v212 = vunpack.c.l.b16 %v61
  %v213 = vunpack.c.l.b16 %v62
  %v214 = vunpack.c.l.b16 %v63
  %v215 = vunpack.c.l.b16 %v64
  %v216 = vunpack.c.l.b16 %v65
  %v217 = vunpack.c.l.b16 %v66
  %v218 = vunpack.c.l.b16 %v67
  %v219 = vunpack.c.l.b16 %v68
  %v220 = vunpack.c.l.b16 %v69
  %v221 = vunpack.c.l.b16 %v70
  %v222 = vunpack.c.l.b16 %v71
  %v223 = vunpack.c.l.b16 %v72
  %v224 = vunpack.c.l.b16 %v73
  %v225 = vunpack.c.l.b16 %v74
  %v226 = vunpack.c.l.b16 %v75
  %v227 = vunpack.c.l.b16 %v76
  %v228 = vunpack.c.l.b16 %v77
  %v229 = vunpack.c.l.b16 %v78
  %v230 = vpack.c.b16 %v167, %v166
  %v231 = vpack.c.b16 %v169, %v168
  %v232 = vpack.c.b16 %v171, %v170
  %v233 = vpack.c.b16 %v173, %v172
  %v234 = vpack.c.b16 %v175, %v174
  %v235 = vpack.c.b16 %v177, %v176
  %v236 = vpack.c.b16 %v179, %v178
  %v237 = vpack.c.b16 %v181, %v180
  %v238 = vpack.c.b16 %v183, %v182
  %v239 = vpack.c.b16 %v185, %v184
  %v240 = vpack.c.b16 %v187, %v186
  %v241 = vpack.c.b16 %v189, %v188
  %v242 = vpack.c.b16 %v191, %v190
  %v243 = vpack.c.b16 %v193, %v192
  %v244 = vpack.c.b16 %v195, %v194
  %v245 = vpack.c.b16 %v197, %v196
  %v246 = vpack.c.b16 %v199, %v198
  %v247 = vpack.c.b16 %v201, %v200
  %v248 = vpack.c.b16 %v203, %v202
  %v249 = vpack.c.b16 %v205, %v204
  %v250 = vpack.c.b16 %v207, %v206
  %v251 = vpack.c.b16 %v209, %v208
  %v252 = vpack.c.b16 %v211, %v210
  %v253 = vpack.c.b16 %v213, %v212
  %v254 = vpack.c.b16 %v215, %v214
  %v255 = vpack.c.b16 %v217, %v216
  %v256 = vpack.c.b16 %v219, %v218
  %v257 = vpack.c.b16 %v221, %v220
  %v258 = vpack.c.b16 %v223, %v222
  %v259 = vpack.c.b16 %v225, %v224
  %v260 = vpack.c.b16 %v227, %v226
  %v261 = vpack.c.b16 %v229, %v228
  %v310 = vunpack.c.l.b16 %v79
  %v311 = vunpack.c.l.b16 %v80
  %v312 = vunpack.c.l.b16 %v81
  %v313 = vunpack.c.l.b16 %v82
  %v314 = vunpack.c.l.b16 %v83
  %v315 = vunpack.c.l.b16 %v84
  %v316 = vunpack.c.l.b16 %v85
  %v317 = vunpack.c.l.b16 %v86
  %v318 = vunpack.c.l.b16 %v87
  %v319 = vunpack.c.l.b16 %v88
  %v320 = vunpack.c.l.b16 %v89
  %v321 = vunpack.c.l.b16 %v90
  %v322 = vunpack.c.l.b16 %v91
  %v323 = vunpack.c.l.b16 %v92
  %v324 = vunpack.c.l.b16 %v93
  %v325 = vunpack.c.l.b16 %v94
  %v326 = vpack.c.b16 %v311, %v310
  %v327 = vpack.c.b16 %v313, %v312
  %v328 = vpack.c.b16 %v315, %v314
  %v329 = vpack.c.b16 %v317, %v316
  %v330 = vpack.c.b16 %v319, %v318
  %v331 = vpack.c.b16 %v321, %v320
  %v332 = vpack.c.b16 %v323, %v322
  %v333 = vpack.c.b16 %v325, %v324
  %342 = vmatprep.subr.bf16.mxu0 0
  %343 = vmatpush1.bf16.msra.mxu0 %v326
  %344 = vmatprep.subr.bf16.mxu0 0
  %345 = vmatpush1.bf16.msra.mxu0 %v327
  %346 = vmatprep.subr.bf16.mxu0 0
  %347 = vmatpush1.bf16.msra.mxu0 %v328
  %348 = vmatprep.subr.bf16.mxu0 0
  %349 = vmatpush1.bf16.msra.mxu0 %v329
  %350 = vmatprep.subr.bf16.mxu0 0
  %351 = vmatpush1.bf16.msra.mxu0 %v330
  %352 = vmatprep.subr.bf16.mxu0 0
  %353 = vmatpush1.bf16.msra.mxu0 %v331
  %354 = vmatprep.subr.bf16.mxu0 0
  %355 = vmatpush1.bf16.msra.mxu0 %v332
  %356 = vmatprep.subr.bf16.mxu0 0
  %357 = vmatpush1.bf16.msra.mxu0 %v333
  %358 = vmatprep.subr.bf16.mxu0 0
  %359 = vmatpush1.bf16.msra.mxu0 0
  %360 = vmatprep.subr.bf16.mxu0 0
  %361 = vmatpush1.bf16.msra.mxu0 0
  %362 = vmatprep.subr.bf16.mxu0 0
  %363 = vmatpush1.bf16.msra.mxu0 0
  %364 = vmatprep.subr.bf16.mxu0 0
  %365 = vmatpush1.bf16.msra.mxu0 0
  %366 = vmatprep.subr.bf16.mxu0 0
  %367 = vmatpush1.bf16.msra.mxu0 0
  %368 = vmatprep.subr.bf16.mxu0 0
  %369 = vmatpush1.bf16.msra.mxu0 0
  %370 = vmatprep.subr.bf16.mxu0 0
  %371 = vmatpush1.bf16.msra.mxu0 0
  %372 = vmatprep.subr.bf16.mxu0 0
  %373 = vmatpush1.bf16.msra.mxu0 0
  %374 = vmatprep.mubr.bf16.mxu0 0
  %375 = vmatmul.mubr.bf16.gmra.mrb[0].mxu0 %v230
  %v376 = vpop.f32.mrb[0].mxu0
  %v377 = vadd.f32 %v100, %v376
  %v378 = vpop.f32.mrb[0].mxu0
  %v379 = vpop.f32.mrb[0].mxu0
  %v380 = vadd.f32 %v100, %v379
  %v381 = vpop.f32.mrb[0].mxu0
  %382 = vmatprep.mubr.bf16.mxu0 0
  %383 = vmatmul.mubr.bf16.gmra.mrb[0].mxu0 %v231
  %v384 = vpop.f32.mrb[0].mxu0
  %v385 = vadd.f32 %v100, %v384
  %v386 = vpop.f32.mrb[0].mxu0
  %v387 = vpop.f32.mrb[0].mxu0
  %v388 = vadd.f32 %v100, %v387
  %v389 = vpop.f32.mrb[0].mxu0
  %390 = vmatprep.mubr.bf16.mxu0 0
  %391 = vmatmul.mubr.bf16.gmra.mrb[0].mxu0 %v232
  %v392 = vpop.f32.mrb[0].mxu0
  %v393 = vadd.f32 %v100, %v392
  %v394 = vpop.f32.mrb[0].mxu0
  %v395 = vpop.f32.mrb[0].mxu0
  %v396 = vadd.f32 %v100, %v395
  %v397 = vpop.f32.mrb[0].mxu0
  %398 = vmatprep.mubr.bf16.mxu0 0
  %399 = vmatmul.mubr.bf16.gmra.mrb[0].mxu0 %v233
  %v400 = vpop.f32.mrb[0].mxu0
  %v401 = vadd.f32 %v100, %v400
  %v402 = vpop.f32.mrb[0].mxu0
  %v403 = vpop.f32.mrb[0].mxu0
  %v404 = vadd.f32 %v100, %v403
  %v405 = vpop.f32.mrb[0].mxu0
  %406 = vmatprep.mubr.bf16.mxu0 0
  %407 = vmatmul.mubr.bf16.gmra.mrb[0].mxu0 %v234
  %v408 = vpop.f32.mrb[0].mxu0
  %v409 = vadd.f32 %v100, %v408
  %v410 = vpop.f32.mrb[0].mxu0
  %v411 = vpop.f32.mrb[0].mxu0
  %v412 = vadd.f32 %v100, %v411
  %v413 = vpop.f32.mrb[0].mxu0
  %414 = vmatprep.mubr.bf16.mxu0 0
  %415 = vmatmul.mubr.bf16.gmra.mrb[0].mxu0 %v235
  %v416 = vpop.f32.mrb[0].mxu0
  %v417 = vadd.f32 %v100, %v416
  %v418 = vpop.f32.mrb[0].mxu0
  %v419 = vpop.f32.mrb[0].mxu0
  %v420 = vadd.f32 %v100, %v419
  %v421 = vpop.f32.mrb[0].mxu0
  %422 = vmatprep.mubr.bf16.mxu0 0
  %423 = vmatmul.mubr.bf16.gmra.mrb[0].mxu0 %v236
  %v424 = vpop.f32.mrb[0].mxu0
  %v425 = vadd.f32 %v100, %v424
  %v426 = vpop.f32.mrb[0].mxu0
  %v427 = vpop.f32.mrb[0].mxu0
  %v428 = vadd.f32 %v100, %v427
  %v429 = vpop.f32.mrb[0].mxu0
  %430 = vmatprep.mubr.bf16.mxu0 0
  %431 = vmatmul.mubr.bf16.gmra.mrb[0].mxu0 %v237
  %v432 = vpop.f32.mrb[0].mxu0
  %v433 = vadd.f32 %v100, %v432
  %v434 = vpop.f32.mrb[0].mxu0
  %v435 = vpop.f32.mrb[0].mxu0
  %v436 = vadd.f32 %v100, %v435
  %v437 = vpop.f32.mrb[0].mxu0
  %438 = vmatprep.mubr.bf16.mxu0 0
  %439 = vmatmul.mubr.bf16.gmra.mrb[0].mxu0 %v238
  %v440 = vpop.f32.mrb[0].mxu0
  %v441 = vadd.f32 %v100, %v440
  %v442 = vpop.f32.mrb[0].mxu0
  %v443 = vpop.f32.mrb[0].mxu0
  %v444 = vadd.f32 %v100, %v443
  %v445 = vpop.f32.mrb[0].mxu0
  %446 = vmatprep.mubr.bf16.mxu0 0
  %447 = vmatmul.mubr.bf16.gmra.mrb[0].mxu0 %v239
  %v448 = vpop.f32.mrb[0].mxu0
  %v449 = vadd.f32 %v100, %v448
  %v450 = vpop.f32.mrb[0].mxu0
  %v451 = vpop.f32.mrb[0].mxu0
  %v452 = vadd.f32 %v100, %v451
  %v453 = vpop.f32.mrb[0].mxu0
  %454 = vmatprep.mubr.bf16.mxu0 0
  %455 = vmatmul.mubr.bf16.gmra.mrb[0].mxu0 %v240
  %v456 = vpop.f32.mrb[0].mxu0
  %v457 = vadd.f32 %v100, %v456
  %v458 = vpop.f32.mrb[0].mxu0
  %v459 = vpop.f32.mrb[0].mxu0
  %v460 = vadd.f32 %v100, %v459
  %v461 = vpop.f32.mrb[0].mxu0
  %462 = vmatprep.mubr.bf16.mxu0 0
  %463 = vmatmul.mubr.bf16.gmra.mrb[0].mxu0 %v241
  %v464 = vpop.f32.mrb[0].mxu0
  %v465 = vadd.f32 %v100, %v464
  %v466 = vpop.f32.mrb[0].mxu0
  %v467 = vpop.f32.mrb[0].mxu0
  %v468 = vadd.f32 %v100, %v467
  %v469 = vpop.f32.mrb[0].mxu0
  %470 = vmatprep.mubr.bf16.mxu0 0
  %471 = vmatmul.mubr.bf16.gmra.mrb[0].mxu0 %v242
  %v472 = vpop.f32.mrb[0].mxu0
  %v473 = vadd.f32 %v100, %v472
  %v474 = vpop.f32.mrb[0].mxu0
  %v475 = vpop.f32.mrb[0].mxu0
  %v476 = vadd.f32 %v100, %v475
  %v477 = vpop.f32.mrb[0].mxu0
  %478 = vmatprep.mubr.bf16.mxu0 0
  %479 = vmatmul.mubr.bf16.gmra.mrb[0].mxu0 %v243
  %v480 = vpop.f32.mrb[0].mxu0
  %v481 = vadd.f32 %v100, %v480
  %v482 = vpop.f32.mrb[0].mxu0
  %v483 = vpop.f32.mrb[0].mxu0
  %v484 = vadd.f32 %v100, %v483
  %v485 = vpop.f32.mrb[0].mxu0
  %486 = vmatprep.mubr.bf16.mxu0 0
  %487 = vmatmul.mubr.bf16.gmra.mrb[0].mxu0 %v244
  %v488 = vpop.f32.mrb[0].mxu0
  %v489 = vadd.f32 %v100, %v488
  %v490 = vpop.f32.mrb[0].mxu0
  %v491 = vpop.f32.mrb[0].mxu0
  %v492 = vadd.f32 %v100, %v491
  %v493 = vpop.f32.mrb[0].mxu0
  %494 = vmatprep.mubr.bf16.mxu0 0
  %495 = vmatmul.mubr.bf16.gmra.mrb[0].mxu0 %v245
  %v496 = vpop.f32.mrb[0].mxu0
  %v497 = vadd.f32 %v100, %v496
  %v498 = vpop.f32.mrb[0].mxu0
  %v499 = vpop.f32.mrb[0].mxu0
  %v500 = vadd.f32 %v100, %v499
  %v501 = vpop.f32.mrb[0].mxu0
  %502 = vmatprep.mubr.bf16.mxu0 0
  %503 = vmatmul.mubr.bf16.gmra.mrb[0].mxu0 %v246
  %v504 = vpop.f32.mrb[0].mxu0
  %v505 = vadd.f32 %v100, %v504
  %v506 = vpop.f32.mrb[0].mxu0
  %v507 = vpop.f32.mrb[0].mxu0
  %v508 = vadd.f32 %v100, %v507
  %v509 = vpop.f32.mrb[0].mxu0
  %510 = vmatprep.mubr.bf16.mxu0 0
  %511 = vmatmul.mubr.bf16.gmra.mrb[0].mxu0 %v247
  %v512 = vpop.f32.mrb[0].mxu0
  %v513 = vadd.f32 %v100, %v512
  %v514 = vpop.f32.mrb[0].mxu0
  %v515 = vpop.f32.mrb[0].mxu0
  %v516 = vadd.f32 %v100, %v515
  %v517 = vpop.f32.mrb[0].mxu0
  %518 = vmatprep.mubr.bf16.mxu0 0
  %519 = vmatmul.mubr.bf16.gmra.mrb[0].mxu0 %v248
  %v520 = vpop.f32.mrb[0].mxu0
  %v521 = vadd.f32 %v100, %v520
  %v522 = vpop.f32.mrb[0].mxu0
  %v523 = vpop.f32.mrb[0].mxu0
  %v524 = vadd.f32 %v100, %v523
  %v525 = vpop.f32.mrb[0].mxu0
  %526 = vmatprep.mubr.bf16.mxu0 0
  %527 = vmatmul.mubr.bf16.gmra.mrb[0].mxu0 %v249
  %v528 = vpop.f32.mrb[0].mxu0
  %v529 = vadd.f32 %v100, %v528
  %v530 = vpop.f32.mrb[0].mxu0
  %v531 = vpop.f32.mrb[0].mxu0
  %v532 = vadd.f32 %v100, %v531
  %v533 = vpop.f32.mrb[0].mxu0
  %534 = vmatprep.mubr.bf16.mxu0 0
  %535 = vmatmul.mubr.bf16.gmra.mrb[0].mxu0 %v250
  %v536 = vpop.f32.mrb[0].mxu0
  %v537 = vadd.f32 %v100, %v536
  %v538 = vpop.f32.mrb[0].mxu0
  %v539 = vpop.f32.mrb[0].mxu0
  %v540 = vadd.f32 %v100, %v539
  %v541 = vpop.f32.mrb[0].mxu0
  %542 = vmatprep.mubr.bf16.mxu0 0
  %543 = vmatmul.mubr.bf16.gmra.mrb[0].mxu0 %v251
  %v544 = vpop.f32.mrb[0].mxu0
  %v545 = vadd.f32 %v100, %v544
  %v546 = vpop.f32.mrb[0].mxu0
  %v547 = vpop.f32.mrb[0].mxu0
  %v548 = vadd.f32 %v100, %v547
  %v549 = vpop.f32.mrb[0].mxu0
  %550 = vmatprep.mubr.bf16.mxu0 0
  %551 = vmatmul.mubr.bf16.gmra.mrb[0].mxu0 %v252
  %v552 = vpop.f32.mrb[0].mxu0
  %v553 = vadd.f32 %v100, %v552
  %v554 = vpop.f32.mrb[0].mxu0
  %v555 = vpop.f32.mrb[0].mxu0
  %v556 = vadd.f32 %v100, %v555
  %v557 = vpop.f32.mrb[0].mxu0
  %558 = vmatprep.mubr.bf16.mxu0 0
  %559 = vmatmul.mubr.bf16.gmra.mrb[0].mxu0 %v253
  %v560 = vpop.f32.mrb[0].mxu0
  %v561 = vadd.f32 %v100, %v560
  %v562 = vpop.f32.mrb[0].mxu0
  %v563 = vpop.f32.mrb[0].mxu0
  %v564 = vadd.f32 %v100, %v563
  %v565 = vpop.f32.mrb[0].mxu0
  %566 = vmatprep.mubr.bf16.mxu0 0
  %567 = vmatmul.mubr.bf16.gmra.mrb[0].mxu0 %v254
  %v568 = vpop.f32.mrb[0].mxu0
  %v569 = vadd.f32 %v100, %v568
  %v570 = vpop.f32.mrb[0].mxu0
  %v571 = vpop.f32.mrb[0].mxu0
  %v572 = vadd.f32 %v100, %v571
  %v573 = vpop.f32.mrb[0].mxu0
  %574 = vmatprep.mubr.bf16.mxu0 0
  %575 = vmatmul.mubr.bf16.gmra.mrb[0].mxu0 %v255
  %v576 = vpop.f32.mrb[0].mxu0
  %v577 = vadd.f32 %v100, %v576
  %v578 = vpop.f32.mrb[0].mxu0
  %v579 = vpop.f32.mrb[0].mxu0
  %v580 = vadd.f32 %v100, %v579
  %v581 = vpop.f32.mrb[0].mxu0
  %582 = vmatprep.mubr.bf16.mxu0 0
  %583 = vmatmul.mubr.bf16.gmra.mrb[0].mxu0 %v256
  %v584 = vpop.f32.mrb[0].mxu0
  %v585 = vadd.f32 %v100, %v584
  %v586 = vpop.f32.mrb[0].mxu0
  %v587 = vpop.f32.mrb[0].mxu0
  %v588 = vadd.f32 %v100, %v587
  %v589 = vpop.f32.mrb[0].mxu0
  %590 = vmatprep.mubr.bf16.mxu0 0
  %591 = vmatmul.mubr.bf16.gmra.mrb[0].mxu0 %v257
  %v592 = vpop.f32.mrb[0].mxu0
  %v593 = vadd.f32 %v100, %v592
  %v594 = vpop.f32.mrb[0].mxu0
  %v595 = vpop.f32.mrb[0].mxu0
  %v596 = vadd.f32 %v100, %v595
  %v597 = vpop.f32.mrb[0].mxu0
  %598 = vmatprep.mubr.bf16.mxu0 0
  %599 = vmatmul.mubr.bf16.gmra.mrb[0].mxu0 %v258
  %v600 = vpop.f32.mrb[0].mxu0
  %v601 = vadd.f32 %v100, %v600
  %v602 = vpop.f32.mrb[0].mxu0
  %v603 = vpop.f32.mrb[0].mxu0
  %v604 = vadd.f32 %v100, %v603
  %v605 = vpop.f32.mrb[0].mxu0
  %606 = vmatprep.mubr.bf16.mxu0 0
  %607 = vmatmul.mubr.bf16.gmra.mrb[0].mxu0 %v259
  %v608 = vpop.f32.mrb[0].mxu0
  %v609 = vadd.f32 %v100, %v608
  %v610 = vpop.f32.mrb[0].mxu0
  %v611 = vpop.f32.mrb[0].mxu0
  %v612 = vadd.f32 %v100, %v611
  %v613 = vpop.f32.mrb[0].mxu0
  %614 = vmatprep.mubr.bf16.mxu0 0
  %615 = vmatmul.mubr.bf16.gmra.mrb[0].mxu0 %v260
  %v616 = vpop.f32.mrb[0].mxu0
  %v617 = vadd.f32 %v100, %v616
  %v618 = vpop.f32.mrb[0].mxu0
  %v619 = vpop.f32.mrb[0].mxu0
  %v620 = vadd.f32 %v100, %v619
  %v621 = vpop.f32.mrb[0].mxu0
  %622 = vmatprep.mubr.bf16.mxu0 0
  %623 = vmatmul.mubr.bf16.gmra.mrb[0].mxu0 %v261
  %v624 = vpop.f32.mrb[0].mxu0
  %v625 = vadd.f32 %v100, %v624
  %v626 = vpop.f32.mrb[0].mxu0
  %v627 = vpop.f32.mrb[0].mxu0
  %v628 = vadd.f32 %v100, %v627
  %v629 = vpop.f32.mrb[0].mxu0
  %630 = vdwg.mxu0
  %vm631 = vcmp.gt.f32.partialorder %v377, 0.0
  %vm632 = vcmp.gt.f32.partialorder %v380, 0.0
  %vm633 = vcmp.gt.f32.partialorder %v385, 0.0
  %vm634 = vcmp.gt.f32.partialorder %v388, 0.0
  %vm635 = vcmp.gt.f32.partialorder %v393, 0.0
  %vm636 = vcmp.gt.f32.partialorder %v396, 0.0
  %vm637 = vcmp.gt.f32.partialorder %v401, 0.0
  %vm638 = vcmp.gt.f32.partialorder %v404, 0.0
  %vm639 = vcmp.gt.f32.partialorder %v409, 0.0
  %vm640 = vcmp.gt.f32.partialorder %v412, 0.0
  %vm641 = vcmp.gt.f32.partialorder %v417, 0.0
  %vm642 = vcmp.gt.f32.partialorder %v420, 0.0
  %vm643 = vcmp.gt.f32.partialorder %v425, 0.0
  %vm644 = vcmp.gt.f32.partialorder %v428, 0.0
  %vm645 = vcmp.gt.f32.partialorder %v433, 0.0
  %vm646 = vcmp.gt.f32.partialorder %v436, 0.0
  %vm647 = vcmp.gt.f32.partialorder %v441, 0.0
  %vm648 = vcmp.gt.f32.partialorder %v444, 0.0
  %vm649 = vcmp.gt.f32.partialorder %v449, 0.0
  %vm650 = vcmp.gt.f32.partialorder %v452, 0.0
  %vm651 = vcmp.gt.f32.partialorder %v457, 0.0
  %vm652 = vcmp.gt.f32.partialorder %v460, 0.0
  %vm653 = vcmp.gt.f32.partialorder %v465, 0.0
  %vm654 = vcmp.gt.f32.partialorder %v468, 0.0
  %vm655 = vcmp.gt.f32.partialorder %v473, 0.0
  %vm656 = vcmp.gt.f32.partialorder %v476, 0.0
  %vm657 = vcmp.gt.f32.partialorder %v481, 0.0
  %vm658 = vcmp.gt.f32.partialorder %v484, 0.0
  %vm659 = vcmp.gt.f32.partialorder %v489, 0.0
  %vm660 = vcmp.gt.f32.partialorder %v492, 0.0
  %vm661 = vcmp.gt.f32.partialorder %v497, 0.0
  %vm662 = vcmp.gt.f32.partialorder %v500, 0.0
  %vm663 = vcmp.gt.f32.partialorder %v505, 0.0
  %vm664 = vcmp.gt.f32.partialorder %v508, 0.0
  %vm665 = vcmp.gt.f32.partialorder %v513, 0.0
  %vm666 = vcmp.gt.f32.partialorder %v516, 0.0
  %vm667 = vcmp.gt.f32.partialorder %v521, 0.0
  %vm668 = vcmp.gt.f32.partialorder %v524, 0.0
  %vm669 = vcmp.gt.f32.partialorder %v529, 0.0
  %vm670 = vcmp.gt.f32.partialorder %v532, 0.0
  %vm671 = vcmp.gt.f32.partialorder %v537, 0.0
  %vm672 = vcmp.gt.f32.partialorder %v540, 0.0
  %vm673 = vcmp.gt.f32.partialorder %v545, 0.0
  %vm674 = vcmp.gt.f32.partialorder %v548, 0.0
  %vm675 = vcmp.gt.f32.partialorder %v553, 0.0
  %vm676 = vcmp.gt.f32.partialorder %v556, 0.0
  %vm677 = vcmp.gt.f32.partialorder %v561, 0.0
  %vm678 = vcmp.gt.f32.partialorder %v564, 0.0
  %vm679 = vcmp.gt.f32.partialorder %v569, 0.0
  %vm680 = vcmp.gt.f32.partialorder %v572, 0.0
  %vm681 = vcmp.gt.f32.partialorder %v577, 0.0
  %vm682 = vcmp.gt.f32.partialorder %v580, 0.0
  %vm683 = vcmp.gt.f32.partialorder %v585, 0.0
  %vm684 = vcmp.gt.f32.partialorder %v588, 0.0
  %vm685 = vcmp.gt.f32.partialorder %v593, 0.0
  %vm686 = vcmp.gt.f32.partialorder %v596, 0.0
  %vm687 = vcmp.gt.f32.partialorder %v601, 0.0
  %vm688 = vcmp.gt.f32.partialorder %v604, 0.0
  %vm689 = vcmp.gt.f32.partialorder %v609, 0.0
  %vm690 = vcmp.gt.f32.partialorder %v612, 0.0
  %vm691 = vcmp.gt.f32.partialorder %v617, 0.0
  %vm692 = vcmp.gt.f32.partialorder %v620, 0.0
  %vm693 = vcmp.gt.f32.partialorder %v625, 0.0
  %vm694 = vcmp.gt.f32.partialorder %v628, 0.0
  %v695 = vmul.f32 %v377, 0.2
  %v696 = vmul.f32 %v380, 0.2
  %v697 = vmul.f32 %v385, 0.2
  %v698 = vmul.f32 %v388, 0.2
  %v699 = vmul.f32 %v393, 0.2
  %v700 = vmul.f32 %v396, 0.2
  %v701 = vmul.f32 %v401, 0.2
  %v702 = vmul.f32 %v404, 0.2
  %v703 = vmul.f32 %v409, 0.2
  %v704 = vmul.f32 %v412, 0.2
  %v705 = vmul.f32 %v417, 0.2
  %v706 = vmul.f32 %v420, 0.2
  %v707 = vmul.f32 %v425, 0.2
  %v708 = vmul.f32 %v428, 0.2
  %v709 = vmul.f32 %v433, 0.2
  %v710 = vmul.f32 %v436, 0.2
  %v711 = vmul.f32 %v441, 0.2
  %v712 = vmul.f32 %v444, 0.2
  %v713 = vmul.f32 %v449, 0.2
  %v714 = vmul.f32 %v452, 0.2
  %v715 = vmul.f32 %v457, 0.2
  %v716 = vmul.f32 %v460, 0.2
  %v717 = vmul.f32 %v465, 0.2
  %v718 = vmul.f32 %v468, 0.2
  %v719 = vmul.f32 %v473, 0.2
  %v720 = vmul.f32 %v476, 0.2
  %v721 = vmul.f32 %v481, 0.2
  %v722 = vmul.f32 %v484, 0.2
  %v723 = vmul.f32 %v489, 0.2
  %v724 = vmul.f32 %v492, 0.2
  %v725 = vmul.f32 %v497, 0.2
  %v726 = vmul.f32 %v500, 0.2
  %v727 = vmul.f32 %v505, 0.2
  %v728 = vmul.f32 %v508, 0.2
  %v729 = vmul.f32 %v513, 0.2
  %v730 = vmul.f32 %v516, 0.2
  %v731 = vmul.f32 %v521, 0.2
  %v732 = vmul.f32 %v524, 0.2
  %v733 = vmul.f32 %v529, 0.2
  %v734 = vmul.f32 %v532, 0.2
  %v735 = vmul.f32 %v537, 0.2
  %v736 = vmul.f32 %v540, 0.2
  %v737 = vmul.f32 %v545, 0.2
  %v738 = vmul.f32 %v548, 0.2
  %v739 = vmul.f32 %v553, 0.2
  %v740 = vmul.f32 %v556, 0.2
  %v741 = vmul.f32 %v561, 0.2
  %v742 = vmul.f32 %v564, 0.2
  %v743 = vmul.f32 %v569, 0.2
  %v744 = vmul.f32 %v572, 0.2
  %v745 = vmul.f32 %v577, 0.2
  %v746 = vmul.f32 %v580, 0.2
  %v747 = vmul.f32 %v585, 0.2
  %v748 = vmul.f32 %v588, 0.2
  %v749 = vmul.f32 %v593, 0.2
  %v750 = vmul.f32 %v596, 0.2
  %v751 = vmul.f32 %v601, 0.2
  %v752 = vmul.f32 %v604, 0.2
  %v753 = vmul.f32 %v609, 0.2
  %v754 = vmul.f32 %v612, 0.2
  %v755 = vmul.f32 %v617, 0.2
  %v756 = vmul.f32 %v620, 0.2
  %v757 = vmul.f32 %v625, 0.2
  %v758 = vmul.f32 %v628, 0.2
  %v759 = vsel %vm631, %v377, %v695
  %v760 = vsel %vm632, %v380, %v696
  %v761 = vsel %vm633, %v385, %v697
  %v762 = vsel %vm634, %v388, %v698
  %v763 = vsel %vm635, %v393, %v699
  %v764 = vsel %vm636, %v396, %v700
  %v765 = vsel %vm637, %v401, %v701
  %v766 = vsel %vm638, %v404, %v702
  %v767 = vsel %vm639, %v409, %v703
  %v768 = vsel %vm640, %v412, %v704
  %v769 = vsel %vm641, %v417, %v705
  %v770 = vsel %vm642, %v420, %v706
  %v771 = vsel %vm643, %v425, %v707
  %v772 = vsel %vm644, %v428, %v708
  %v773 = vsel %vm645, %v433, %v709
  %v774 = vsel %vm646, %v436, %v710
  %v775 = vsel %vm647, %v441, %v711
  %v776 = vsel %vm648, %v444, %v712
  %v777 = vsel %vm649, %v449, %v713
  %v778 = vsel %vm650, %v452, %v714
  %v779 = vsel %vm651, %v457, %v715
  %v780 = vsel %vm652, %v460, %v716
  %v781 = vsel %vm653, %v465, %v717
  %v782 = vsel %vm654, %v468, %v718
  %v783 = vsel %vm655, %v473, %v719
  %v784 = vsel %vm656, %v476, %v720
  %v785 = vsel %vm657, %v481, %v721
  %v786 = vsel %vm658, %v484, %v722
  %v787 = vsel %vm659, %v489, %v723
  %v788 = vsel %vm660, %v492, %v724
  %v789 = vsel %vm661, %v497, %v725
  %v790 = vsel %vm662, %v500, %v726
  %v791 = vsel %vm663, %v505, %v727
  %v792 = vsel %vm664, %v508, %v728
  %v793 = vsel %vm665, %v513, %v729
  %v794 = vsel %vm666, %v516, %v730
  %v795 = vsel %vm667, %v521, %v731
  %v796 = vsel %vm668, %v524, %v732
  %v797 = vsel %vm669, %v529, %v733
  %v798 = vsel %vm670, %v532, %v734
  %v799 = vsel %vm671, %v537, %v735
  %v800 = vsel %vm672, %v540, %v736
  %v801 = vsel %vm673, %v545, %v737
  %v802 = vsel %vm674, %v548, %v738
  %v803 = vsel %vm675, %v553, %v739
  %v804 = vsel %vm676, %v556, %v740
  %v805 = vsel %vm677, %v561, %v741
  %v806 = vsel %vm678, %v564, %v742
  %v807 = vsel %vm679, %v569, %v743
  %v808 = vsel %vm680, %v572, %v744
  %v809 = vsel %vm681, %v577, %v745
  %v810 = vsel %vm682, %v580, %v746
  %v811 = vsel %vm683, %v585, %v747
  %v812 = vsel %vm684, %v588, %v748
  %v813 = vsel %vm685, %v593, %v749
  %v814 = vsel %vm686, %v596, %v750
  %v815 = vsel %vm687, %v601, %v751
  %v816 = vsel %vm688, %v604, %v752
  %v817 = vsel %vm689, %v609, %v753
  %v818 = vsel %vm690, %v612, %v754
  %v819 = vsel %vm691, %v617, %v755
  %v820 = vsel %vm692, %v620, %v756
  %v821 = vsel %vm693, %v625, %v757
  %v822 = vsel %vm694, %v628, %v758
  %823 = vst [vmem:[%s3] sm:$0xff] %v759
  %824 = vst [vmem:[%s3 + $0x8] sm:$0xff] %v760
  %825 = vst [vmem:[%s3 + $0x10] sm:$0xff] %v761
  %826 = vst [vmem:[%s3 + $0x18] sm:$0xff] %v762
  %827 = vst [vmem:[%s3 + $0x20] sm:$0xff] %v763
  %828 = vst [vmem:[%s3 + $0x28] sm:$0xff] %v764
  %829 = vst [vmem:[%s3 + $0x30] sm:$0xff] %v765
  %830 = vst [vmem:[%s3 + $0x38] sm:$0xff] %v766
  %831 = vst [vmem:[%s3 + $0x40] sm:$0xff] %v767
  %832 = vst [vmem:[%s3 + $0x48] sm:$0xff] %v768
  %833 = vst [vmem:[%s3 + $0x50] sm:$0xff] %v769
  %834 = vst [vmem:[%s3 + $0x58] sm:$0xff] %v770
  %835 = vst [vmem:[%s3 + $0x60] sm:$0xff] %v771
  %836 = vst [vmem:[%s3 + $0x68] sm:$0xff] %v772
  %837 = vst [vmem:[%s3 + $0x70] sm:$0xff] %v773
  %838 = vst [vmem:[%s3 + $0x78] sm:$0xff] %v774
  %839 = vst [vmem:[%s3 + $0x80] sm:$0xff] %v775
  %840 = vst [vmem:[%s3 + $0x88] sm:$0xff] %v776
  %841 = vst [vmem:[%s3 + $0x90] sm:$0xff] %v777
  %842 = vst [vmem:[%s3 + $0x98] sm:$0xff] %v778
  %843 = vst [vmem:[%s3 + $0xa0] sm:$0xff] %v779
  %844 = vst [vmem:[%s3 + $0xa8] sm:$0xff] %v780
  %845 = vst [vmem:[%s3 + $0xb0] sm:$0xff] %v781
  %846 = vst [vmem:[%s3 + $0xb8] sm:$0xff] %v782
  %847 = vst [vmem:[%s3 + $0xc0] sm:$0xff] %v783
  %848 = vst [vmem:[%s3 + $0xc8] sm:$0xff] %v784
  %849 = vst [vmem:[%s3 + $0xd0] sm:$0xff] %v785
  %850 = vst [vmem:[%s3 + $0xd8] sm:$0xff] %v786
  %851 = vst [vmem:[%s3 + $0xe0] sm:$0xff] %v787
  %852 = vst [vmem:[%s3 + $0xe8] sm:$0xff] %v788
  %853 = vst [vmem:[%s3 + $0xf0] sm:$0xff] %v789
  %854 = vst [vmem:[%s3 + $0xf8] sm:$0xff] %v790
  %855 = vst [vmem:[%s3 + $0x100] sm:$0xff] %v791
  %856 = vst [vmem:[%s3 + $0x108] sm:$0xff] %v792
  %857 = vst [vmem:[%s3 + $0x110] sm:$0xff] %v793
  %858 = vst [vmem:[%s3 + $0x118] sm:$0xff] %v794
  %859 = vst [vmem:[%s3 + $0x120] sm:$0xff] %v795
  %860 = vst [vmem:[%s3 + $0x128] sm:$0xff] %v796
  %861 = vst [vmem:[%s3 + $0x130] sm:$0xff] %v797
  %862 = vst [vmem:[%s3 + $0x138] sm:$0xff] %v798
  %863 = vst [vmem:[%s3 + $0x140] sm:$0xff] %v799
  %864 = vst [vmem:[%s3 + $0x148] sm:$0xff] %v800
  %865 = vst [vmem:[%s3 + $0x150] sm:$0xff] %v801
  %866 = vst [vmem:[%s3 + $0x158] sm:$0xff] %v802
  %867 = vst [vmem:[%s3 + $0x160] sm:$0xff] %v803
  %868 = vst [vmem:[%s3 + $0x168] sm:$0xff] %v804
  %869 = vst [vmem:[%s3 + $0x170] sm:$0xff] %v805
  %870 = vst [vmem:[%s3 + $0x178] sm:$0xff] %v806
  %871 = vst [vmem:[%s3 + $0x180] sm:$0xff] %v807
  %872 = vst [vmem:[%s3 + $0x188] sm:$0xff] %v808
  %873 = vst [vmem:[%s3 + $0x190] sm:$0xff] %v809
  %874 = vst [vmem:[%s3 + $0x198] sm:$0xff] %v810
  %875 = vst [vmem:[%s3 + $0x1a0] sm:$0xff] %v811
  %876 = vst [vmem:[%s3 + $0x1a8] sm:$0xff] %v812
  %877 = vst [vmem:[%s3 + $0x1b0] sm:$0xff] %v813
  %878 = vst [vmem:[%s3 + $0x1b8] sm:$0xff] %v814
  %879 = vst [vmem:[%s3 + $0x1c0] sm:$0xff] %v815
  %880 = vst [vmem:[%s3 + $0x1c8] sm:$0xff] %v816
  %881 = vst [vmem:[%s3 + $0x1d0] sm:$0xff] %v817
  %882 = vst [vmem:[%s3 + $0x1d8] sm:$0xff] %v818
  %883 = vst [vmem:[%s3 + $0x1e0] sm:$0xff] %v819
  %884 = vst [vmem:[%s3 + $0x1e8] sm:$0xff] %v820
  %885 = vst [vmem:[%s3 + $0x1f0] sm:$0xff] %v821
  %886 = vst [vmem:[%s3 + $0x1f8] sm:$0xff] %v822
  // Predicated region
  $region14: #{generator_forward.10} parent=0 // pred_check
    _
  $region15: #{generator_forward.10} parent=0 // pred_check_branch
    %888 = sbr.rel (0) target = $region17
  $region16: #{generator_forward.10} parent=0 // pred_region
    _
  $region17: #{generator_forward.10} parent=0 // pred_fallthru
    _
  // Predicated region
  $region18: #{generator_forward.10} parent=0 // pred_check
    _
  $region19: #{generator_forward.10} parent=0 // pred_check_branch
    %890 = sbr.rel (0) target = $region21
  $region20: #{generator_forward.10} parent=0 // pred_region
    _
  $region21: #{generator_forward.10} parent=0 // pred_fallthru
    _

// kernel: generator_forward.11
$region0: #{generator_forward.11}
  #allocation0 [shape = 'u32[]', space=smem, size = 0x4, offset = 0x4, fixed_abs, tag = 'smem constant byte address 0x4 - core index']
  #allocation1 [shape = 'u32[144,128]{1,0:T(1,128)}', space=vmem, size = 0x12000, scoped, tag = 'internal scratch']
  %s0 = inlined_call_operand.vmem [shape: bf16[512,256], index: 0, kind: input, shape index: {}]
  %s1 = inlined_call_operand.vmem [shape: bf16[256,128], index: 1, kind: input, shape index: {}]
  %s2 = inlined_call_operand.vmem [shape: f32[1,128], index: 2, kind: input, shape index: {}]
  %s3 = inlined_call_operand.vmem [shape: f32[512,128], index: 3, kind: output, shape index: {}]
  %s4 = sld [smem:[#allocation0]]
  $region22: #{generator_forward.11} parent=0
    _
  %s6 = ssub.s32 1, %s4
  %s7 = scalar_select 0, %s6, %s4
  // Predicated region
  $region2: #{generator_forward.11} parent=0 // pred_check
    _
  $region3: #{generator_forward.11} parent=0 // pred_check_branch
    %9 = sbr.rel (0) target = $region5
  $region4: #{generator_forward.11} parent=0 // pred_region
    _
  $region5: #{generator_forward.11} parent=0 // pred_fallthru
    _
  // Predicated region
  $region6: #{generator_forward.11} parent=0 // pred_check
    _
  $region7: #{generator_forward.11} parent=0 // pred_check_branch
    %11 = sbr.rel (0) target = $region9
  $region8: #{generator_forward.11} parent=0 // pred_region
    _
  $region9: #{generator_forward.11} parent=0 // pred_fallthru
    _
  // Predicated region
  $region10: #{generator_forward.11} parent=0 // pred_check
    _
  $region11: #{generator_forward.11} parent=0 // pred_check_branch
    %13 = sbr.rel (0) target = $region13
  $region12: #{generator_forward.11} parent=0 // pred_region
    _
  $region13: #{generator_forward.11} parent=0 // pred_fallthru
    _
  %v15 = vld [vmem:[%s0] sm:$0xff]
  %v16 = vld [vmem:[%s0 + $0x8] sm:$0xff]
  %v17 = vld [vmem:[%s0 + $0x10] sm:$0xff]
  %v18 = vld [vmem:[%s0 + $0x18] sm:$0xff]
  %v19 = vld [vmem:[%s0 + $0x20] sm:$0xff]
  %v20 = vld [vmem:[%s0 + $0x28] sm:$0xff]
  %v21 = vld [vmem:[%s0 + $0x30] sm:$0xff]
  %v22 = vld [vmem:[%s0 + $0x38] sm:$0xff]
  %v23 = vld [vmem:[%s0 + $0x40] sm:$0xff]
  %v24 = vld [vmem:[%s0 + $0x48] sm:$0xff]
  %v25 = vld [vmem:[%s0 + $0x50] sm:$0xff]
  %v26 = vld [vmem:[%s0 + $0x58] sm:$0xff]
  %v27 = vld [vmem:[%s0 + $0x60] sm:$0xff]
  %v28 = vld [vmem:[%s0 + $0x68] sm:$0xff]
  %v29 = vld [vmem:[%s0 + $0x70] sm:$0xff]
  %v30 = vld [vmem:[%s0 + $0x78] sm:$0xff]
  %v31 = vld [vmem:[%s0 + $0x80] sm:$0xff]
  %v32 = vld [vmem:[%s0 + $0x88] sm:$0xff]
  %v33 = vld [vmem:[%s0 + $0x90] sm:$0xff]
  %v34 = vld [vmem:[%s0 + $0x98] sm:$0xff]
  %v35 = vld [vmem:[%s0 + $0xa0] sm:$0xff]
  %v36 = vld [vmem:[%s0 + $0xa8] sm:$0xff]
  %v37 = vld [vmem:[%s0 + $0xb0] sm:$0xff]
  %v38 = vld [vmem:[%s0 + $0xb8] sm:$0xff]
  %v39 = vld [vmem:[%s0 + $0xc0] sm:$0xff]
  %v40 = vld [vmem:[%s0 + $0xc8] sm:$0xff]
  %v41 = vld [vmem:[%s0 + $0xd0] sm:$0xff]
  %v42 = vld [vmem:[%s0 + $0xd8] sm:$0xff]
  %v43 = vld [vmem:[%s0 + $0xe0] sm:$0xff]
  %v44 = vld [vmem:[%s0 + $0xe8] sm:$0xff]
  %v45 = vld [vmem:[%s0 + $0xf0] sm:$0xff]
  %v46 = vld [vmem:[%s0 + $0xf8] sm:$0xff]
  %v47 = vld [vmem:[%s0 + $0x100] sm:$0xff]
  %v48 = vld [vmem:[%s0 + $0x108] sm:$0xff]
  %v49 = vld [vmem:[%s0 + $0x110] sm:$0xff]
  %v50 = vld [vmem:[%s0 + $0x118] sm:$0xff]
  %v51 = vld [vmem:[%s0 + $0x120] sm:$0xff]
  %v52 = vld [vmem:[%s0 + $0x128] sm:$0xff]
  %v53 = vld [vmem:[%s0 + $0x130] sm:$0xff]
  %v54 = vld [vmem:[%s0 + $0x138] sm:$0xff]
  %v55 = vld [vmem:[%s0 + $0x140] sm:$0xff]
  %v56 = vld [vmem:[%s0 + $0x148] sm:$0xff]
  %v57 = vld [vmem:[%s0 + $0x150] sm:$0xff]
  %v58 = vld [vmem:[%s0 + $0x158] sm:$0xff]
  %v59 = vld [vmem:[%s0 + $0x160] sm:$0xff]
  %v60 = vld [vmem:[%s0 + $0x168] sm:$0xff]
  %v61 = vld [vmem:[%s0 + $0x170] sm:$0xff]
  %v62 = vld [vmem:[%s0 + $0x178] sm:$0xff]
  %v63 = vld [vmem:[%s0 + $0x180] sm:$0xff]
  %v64 = vld [vmem:[%s0 + $0x188] sm:$0xff]
  %v65 = vld [vmem:[%s0 + $0x190] sm:$0xff]
  %v66 = vld [vmem:[%s0 + $0x198] sm:$0xff]
  %v67 = vld [vmem:[%s0 + $0x1a0] sm:$0xff]
  %v68 = vld [vmem:[%s0 + $0x1a8] sm:$0xff]
  %v69 = vld [vmem:[%s0 + $0x1b0] sm:$0xff]
  %v70 = vld [vmem:[%s0 + $0x1b8] sm:$0xff]
  %v71 = vld [vmem:[%s0 + $0x1c0] sm:$0xff]
  %v72 = vld [vmem:[%s0 + $0x1c8] sm:$0xff]
  %v73 = vld [vmem:[%s0 + $0x1d0] sm:$0xff]
  %v74 = vld [vmem:[%s0 + $0x1d8] sm:$0xff]
  %v75 = vld [vmem:[%s0 + $0x1e0] sm:$0xff]
  %v76 = vld [vmem:[%s0 + $0x1e8] sm:$0xff]
  %v77 = vld [vmem:[%s0 + $0x1f0] sm:$0xff]
  %v78 = vld [vmem:[%s0 + $0x1f8] sm:$0xff]
  %v79 = vld [vmem:[%s1] sm:$0xf]
  %v80 = vld [vmem:[%s1 + $0x4] sm:$0xf]
  %v81 = vld [vmem:[%s1 + $0x8] sm:$0xf]
  %v82 = vld [vmem:[%s1 + $0xc] sm:$0xf]
  %v83 = vld [vmem:[%s1 + $0x10] sm:$0xf]
  %v84 = vld [vmem:[%s1 + $0x14] sm:$0xf]
  %v85 = vld [vmem:[%s1 + $0x18] sm:$0xf]
  %v86 = vld [vmem:[%s1 + $0x1c] sm:$0xf]
  %v87 = vld [vmem:[%s1 + $0x20] sm:$0xf]
  %v88 = vld [vmem:[%s1 + $0x24] sm:$0xf]
  %v89 = vld [vmem:[%s1 + $0x28] sm:$0xf]
  %v90 = vld [vmem:[%s1 + $0x2c] sm:$0xf]
  %v91 = vld [vmem:[%s1 + $0x30] sm:$0xf]
  %v92 = vld [vmem:[%s1 + $0x34] sm:$0xf]
  %v93 = vld [vmem:[%s1 + $0x38] sm:$0xf]
  %v94 = vld [vmem:[%s1 + $0x3c] sm:$0xf]
  %v95 = vld [vmem:[%s1 + $0x40] sm:$0xf]
  %v96 = vld [vmem:[%s1 + $0x44] sm:$0xf]
  %v97 = vld [vmem:[%s1 + $0x48] sm:$0xf]
  %v98 = vld [vmem:[%s1 + $0x4c] sm:$0xf]
  %v99 = vld [vmem:[%s1 + $0x50] sm:$0xf]
  %v100 = vld [vmem:[%s1 + $0x54] sm:$0xf]
  %v101 = vld [vmem:[%s1 + $0x58] sm:$0xf]
  %v102 = vld [vmem:[%s1 + $0x5c] sm:$0xf]
  %v103 = vld [vmem:[%s1 + $0x60] sm:$0xf]
  %v104 = vld [vmem:[%s1 + $0x64] sm:$0xf]
  %v105 = vld [vmem:[%s1 + $0x68] sm:$0xf]
  %v106 = vld [vmem:[%s1 + $0x6c] sm:$0xf]
  %v107 = vld [vmem:[%s1 + $0x70] sm:$0xf]
  %v108 = vld [vmem:[%s1 + $0x74] sm:$0xf]
  %v109 = vld [vmem:[%s1 + $0x78] sm:$0xf]
  %v110 = vld [vmem:[%s1 + $0x7c] sm:$0xf]
  %v111 = vld [vmem:[%s2] sm:$0x1]
  %v113 = vlaneseq
  %v114 = vshrl.u32 %v113, 7
  %v115 = vsub.s32 0, %v114
  %v116 = vrot.slane %v111, %v115
  %v182 = vunpack.c.l.b16 %v15
  %v183 = vunpack.c.h.b16 %v15
  %v184 = vunpack.c.l.b16 %v16
  %v185 = vunpack.c.h.b16 %v16
  %v186 = vunpack.c.l.b16 %v17
  %v187 = vunpack.c.h.b16 %v17
  %v188 = vunpack.c.l.b16 %v18
  %v189 = vunpack.c.h.b16 %v18
  %v190 = vunpack.c.l.b16 %v19
  %v191 = vunpack.c.h.b16 %v19
  %v192 = vunpack.c.l.b16 %v20
  %v193 = vunpack.c.h.b16 %v20
  %v194 = vunpack.c.l.b16 %v21
  %v195 = vunpack.c.h.b16 %v21
  %v196 = vunpack.c.l.b16 %v22
  %v197 = vunpack.c.h.b16 %v22
  %v198 = vunpack.c.l.b16 %v23
  %v199 = vunpack.c.h.b16 %v23
  %v200 = vunpack.c.l.b16 %v24
  %v201 = vunpack.c.h.b16 %v24
  %v202 = vunpack.c.l.b16 %v25
  %v203 = vunpack.c.h.b16 %v25
  %v204 = vunpack.c.l.b16 %v26
  %v205 = vunpack.c.h.b16 %v26
  %v206 = vunpack.c.l.b16 %v27
  %v207 = vunpack.c.h.b16 %v27
  %v208 = vunpack.c.l.b16 %v28
  %v209 = vunpack.c.h.b16 %v28
  %v210 = vunpack.c.l.b16 %v29
  %v211 = vunpack.c.h.b16 %v29
  %v212 = vunpack.c.l.b16 %v30
  %v213 = vunpack.c.h.b16 %v30
  %v214 = vunpack.c.l.b16 %v31
  %v215 = vunpack.c.h.b16 %v31
  %v216 = vunpack.c.l.b16 %v32
  %v217 = vunpack.c.h.b16 %v32
  %v218 = vunpack.c.l.b16 %v33
  %v219 = vunpack.c.h.b16 %v33
  %v220 = vunpack.c.l.b16 %v34
  %v221 = vunpack.c.h.b16 %v34
  %v222 = vunpack.c.l.b16 %v35
  %v223 = vunpack.c.h.b16 %v35
  %v224 = vunpack.c.l.b16 %v36
  %v225 = vunpack.c.h.b16 %v36
  %v226 = vunpack.c.l.b16 %v37
  %v227 = vunpack.c.h.b16 %v37
  %v228 = vunpack.c.l.b16 %v38
  %v229 = vunpack.c.h.b16 %v38
  %v230 = vunpack.c.l.b16 %v39
  %v231 = vunpack.c.h.b16 %v39
  %v232 = vunpack.c.l.b16 %v40
  %v233 = vunpack.c.h.b16 %v40
  %v234 = vunpack.c.l.b16 %v41
  %v235 = vunpack.c.h.b16 %v41
  %v236 = vunpack.c.l.b16 %v42
  %v237 = vunpack.c.h.b16 %v42
  %v238 = vunpack.c.l.b16 %v43
  %v239 = vunpack.c.h.b16 %v43
  %v240 = vunpack.c.l.b16 %v44
  %v241 = vunpack.c.h.b16 %v44
  %v242 = vunpack.c.l.b16 %v45
  %v243 = vunpack.c.h.b16 %v45
  %v244 = vunpack.c.l.b16 %v46
  %v245 = vunpack.c.h.b16 %v46
  %v246 = vunpack.c.l.b16 %v47
  %v247 = vunpack.c.h.b16 %v47
  %v248 = vunpack.c.l.b16 %v48
  %v249 = vunpack.c.h.b16 %v48
  %v250 = vunpack.c.l.b16 %v49
  %v251 = vunpack.c.h.b16 %v49
  %v252 = vunpack.c.l.b16 %v50
  %v253 = vunpack.c.h.b16 %v50
  %v254 = vunpack.c.l.b16 %v51
  %v255 = vunpack.c.h.b16 %v51
  %v256 = vunpack.c.l.b16 %v52
  %v257 = vunpack.c.h.b16 %v52
  %v258 = vunpack.c.l.b16 %v53
  %v259 = vunpack.c.h.b16 %v53
  %v260 = vunpack.c.l.b16 %v54
  %v261 = vunpack.c.h.b16 %v54
  %v262 = vunpack.c.l.b16 %v55
  %v263 = vunpack.c.h.b16 %v55
  %v264 = vunpack.c.l.b16 %v56
  %v265 = vunpack.c.h.b16 %v56
  %v266 = vunpack.c.l.b16 %v57
  %v267 = vunpack.c.h.b16 %v57
  %v268 = vunpack.c.l.b16 %v58
  %v269 = vunpack.c.h.b16 %v58
  %v270 = vunpack.c.l.b16 %v59
  %v271 = vunpack.c.h.b16 %v59
  %v272 = vunpack.c.l.b16 %v60
  %v273 = vunpack.c.h.b16 %v60
  %v274 = vunpack.c.l.b16 %v61
  %v275 = vunpack.c.h.b16 %v61
  %v276 = vunpack.c.l.b16 %v62
  %v277 = vunpack.c.h.b16 %v62
  %v278 = vunpack.c.l.b16 %v63
  %v279 = vunpack.c.h.b16 %v63
  %v280 = vunpack.c.l.b16 %v64
  %v281 = vunpack.c.h.b16 %v64
  %v282 = vunpack.c.l.b16 %v65
  %v283 = vunpack.c.h.b16 %v65
  %v284 = vunpack.c.l.b16 %v66
  %v285 = vunpack.c.h.b16 %v66
  %v286 = vunpack.c.l.b16 %v67
  %v287 = vunpack.c.h.b16 %v67
  %v288 = vunpack.c.l.b16 %v68
  %v289 = vunpack.c.h.b16 %v68
  %v290 = vunpack.c.l.b16 %v69
  %v291 = vunpack.c.h.b16 %v69
  %v292 = vunpack.c.l.b16 %v70
  %v293 = vunpack.c.h.b16 %v70
  %v294 = vunpack.c.l.b16 %v71
  %v295 = vunpack.c.h.b16 %v71
  %v296 = vunpack.c.l.b16 %v72
  %v297 = vunpack.c.h.b16 %v72
  %v298 = vunpack.c.l.b16 %v73
  %v299 = vunpack.c.h.b16 %v73
  %v300 = vunpack.c.l.b16 %v74
  %v301 = vunpack.c.h.b16 %v74
  %v302 = vunpack.c.l.b16 %v75
  %v303 = vunpack.c.h.b16 %v75
  %v304 = vunpack.c.l.b16 %v76
  %v305 = vunpack.c.h.b16 %v76
  %v306 = vunpack.c.l.b16 %v77
  %v307 = vunpack.c.h.b16 %v77
  %v308 = vunpack.c.l.b16 %v78
  %v309 = vunpack.c.h.b16 %v78
  %v310 = vpack.c.b16 %v184, %v182
  %v311 = vpack.c.b16 %v185, %v183
  %v312 = vpack.c.b16 %v188, %v186
  %v313 = vpack.c.b16 %v189, %v187
  %v314 = vpack.c.b16 %v192, %v190
  %v315 = vpack.c.b16 %v193, %v191
  %v316 = vpack.c.b16 %v196, %v194
  %v317 = vpack.c.b16 %v197, %v195
  %v318 = vpack.c.b16 %v200, %v198
  %v319 = vpack.c.b16 %v201, %v199
  %v320 = vpack.c.b16 %v204, %v202
  %v321 = vpack.c.b16 %v205, %v203
  %v322 = vpack.c.b16 %v208, %v206
  %v323 = vpack.c.b16 %v209, %v207
  %v324 = vpack.c.b16 %v212, %v210
  %v325 = vpack.c.b16 %v213, %v211
  %v326 = vpack.c.b16 %v216, %v214
  %v327 = vpack.c.b16 %v217, %v215
  %v328 = vpack.c.b16 %v220, %v218
  %v329 = vpack.c.b16 %v221, %v219
  %v330 = vpack.c.b16 %v224, %v222
  %v331 = vpack.c.b16 %v225, %v223
  %v332 = vpack.c.b16 %v228, %v226
  %v333 = vpack.c.b16 %v229, %v227
  %v334 = vpack.c.b16 %v232, %v230
  %v335 = vpack.c.b16 %v233, %v231
  %v336 = vpack.c.b16 %v236, %v234
  %v337 = vpack.c.b16 %v237, %v235
  %v338 = vpack.c.b16 %v240, %v238
  %v339 = vpack.c.b16 %v241, %v239
  %v340 = vpack.c.b16 %v244, %v242
  %v341 = vpack.c.b16 %v245, %v243
  %v342 = vpack.c.b16 %v248, %v246
  %v343 = vpack.c.b16 %v249, %v247
  %v344 = vpack.c.b16 %v252, %v250
  %v345 = vpack.c.b16 %v253, %v251
  %v346 = vpack.c.b16 %v256, %v254
  %v347 = vpack.c.b16 %v257, %v255
  %v348 = vpack.c.b16 %v260, %v258
  %v349 = vpack.c.b16 %v261, %v259
  %v350 = vpack.c.b16 %v264, %v262
  %v351 = vpack.c.b16 %v265, %v263
  %v352 = vpack.c.b16 %v268, %v266
  %v353 = vpack.c.b16 %v269, %v267
  %v354 = vpack.c.b16 %v272, %v270
  %v355 = vpack.c.b16 %v273, %v271
  %v356 = vpack.c.b16 %v276, %v274
  %v357 = vpack.c.b16 %v277, %v275
  %v358 = vpack.c.b16 %v280, %v278
  %v359 = vpack.c.b16 %v281, %v279
  %v360 = vpack.c.b16 %v284, %v282
  %v361 = vpack.c.b16 %v285, %v283
  %v362 = vpack.c.b16 %v288, %v286
  %v363 = vpack.c.b16 %v289, %v287
  %v364 = vpack.c.b16 %v292, %v290
  %v365 = vpack.c.b16 %v293, %v291
  %v366 = vpack.c.b16 %v296, %v294
  %v367 = vpack.c.b16 %v297, %v295
  %v368 = vpack.c.b16 %v300, %v298
  %v369 = vpack.c.b16 %v301, %v299
  %v370 = vpack.c.b16 %v304, %v302
  %v371 = vpack.c.b16 %v305, %v303
  %v372 = vpack.c.b16 %v308, %v306
  %v373 = vpack.c.b16 %v309, %v307
  %v470 = vunpack.c.l.b16 %v79
  %v471 = vunpack.c.l.b16 %v80
  %v472 = vunpack.c.l.b16 %v81
  %v473 = vunpack.c.l.b16 %v82
  %v474 = vunpack.c.l.b16 %v83
  %v475 = vunpack.c.l.b16 %v84
  %v476 = vunpack.c.l.b16 %v85
  %v477 = vunpack.c.l.b16 %v86
  %v478 = vunpack.c.l.b16 %v87
  %v479 = vunpack.c.l.b16 %v88
  %v480 = vunpack.c.l.b16 %v89
  %v481 = vunpack.c.l.b16 %v90
  %v482 = vunpack.c.l.b16 %v91
  %v483 = vunpack.c.l.b16 %v92
  %v484 = vunpack.c.l.b16 %v93
  %v485 = vunpack.c.l.b16 %v94
  %v486 = vunpack.c.l.b16 %v95
  %v487 = vunpack.c.l.b16 %v96
  %v488 = vunpack.c.l.b16 %v97
  %v489 = vunpack.c.l.b16 %v98
  %v490 = vunpack.c.l.b16 %v99
  %v491 = vunpack.c.l.b16 %v100
  %v492 = vunpack.c.l.b16 %v101
  %v493 = vunpack.c.l.b16 %v102
  %v494 = vunpack.c.l.b16 %v103
  %v495 = vunpack.c.l.b16 %v104
  %v496 = vunpack.c.l.b16 %v105
  %v497 = vunpack.c.l.b16 %v106
  %v498 = vunpack.c.l.b16 %v107
  %v499 = vunpack.c.l.b16 %v108
  %v500 = vunpack.c.l.b16 %v109
  %v501 = vunpack.c.l.b16 %v110
  %v502 = vpack.c.b16 %v471, %v470
  %v503 = vpack.c.b16 %v473, %v472
  %v504 = vpack.c.b16 %v475, %v474
  %v505 = vpack.c.b16 %v477, %v476
  %v506 = vpack.c.b16 %v479, %v478
  %v507 = vpack.c.b16 %v481, %v480
  %v508 = vpack.c.b16 %v483, %v482
  %v509 = vpack.c.b16 %v485, %v484
  %v510 = vpack.c.b16 %v487, %v486
  %v511 = vpack.c.b16 %v489, %v488
  %v512 = vpack.c.b16 %v491, %v490
  %v513 = vpack.c.b16 %v493, %v492
  %v514 = vpack.c.b16 %v495, %v494
  %v515 = vpack.c.b16 %v497, %v496
  %v516 = vpack.c.b16 %v499, %v498
  %v517 = vpack.c.b16 %v501, %v500
  %534 = vmatprep.subr.bf16.mxu0 0
  %535 = vmatpush1.bf16.msra.mxu0 %v502
  %536 = vmatprep.subr.bf16.mxu0 0
  %537 = vmatpush1.bf16.msra.mxu0 %v503
  %538 = vmatprep.subr.bf16.mxu0 0
  %539 = vmatpush1.bf16.msra.mxu0 %v504
  %540 = vmatprep.subr.bf16.mxu0 0
  %541 = vmatpush1.bf16.msra.mxu0 %v505
  %542 = vmatprep.subr.bf16.mxu0 0
  %543 = vmatpush1.bf16.msra.mxu0 %v506
  %544 = vmatprep.subr.bf16.mxu0 0
  %545 = vmatpush1.bf16.msra.mxu0 %v507
  %546 = vmatprep.subr.bf16.mxu0 0
  %547 = vmatpush1.bf16.msra.mxu0 %v508
  %548 = vmatprep.subr.bf16.mxu0 0
  %549 = vmatpush1.bf16.msra.mxu0 %v509
  %550 = vmatprep.subr.bf16.mxu0 0
  %551 = vmatpush1.bf16.msra.mxu0 %v510
  %552 = vmatprep.subr.bf16.mxu0 0
  %553 = vmatpush1.bf16.msra.mxu0 %v511
  %554 = vmatprep.subr.bf16.mxu0 0
  %555 = vmatpush1.bf16.msra.mxu0 %v512
  %556 = vmatprep.subr.bf16.mxu0 0
  %557 = vmatpush1.bf16.msra.mxu0 %v513
  %558 = vmatprep.subr.bf16.mxu0 0
  %559 = vmatpush1.bf16.msra.mxu0 %v514
  %560 = vmatprep.subr.bf16.mxu0 0
  %561 = vmatpush1.bf16.msra.mxu0 %v515
  %562 = vmatprep.subr.bf16.mxu0 0
  %563 = vmatpush1.bf16.msra.mxu0 %v516
  %564 = vmatprep.subr.bf16.mxu0 0
  %565 = vmatpush1.bf16.msra.mxu0 %v517
  %566 = vmatprep.mubr.bf16.mxu0 %v311
  %567 = vmatmul.mubr.bf16.gmra.mrb[0].mxu0 %v310
  %v568 = vpop.f32.mrb[0].mxu0
  %v569 = vadd.f32 %v116, %v568
  %v570 = vpop.f32.mrb[0].mxu0
  %v571 = vpop.f32.mrb[0].mxu0
  %v572 = vadd.f32 %v116, %v571
  %v573 = vpop.f32.mrb[0].mxu0
  %574 = vmatprep.mubr.bf16.mxu0 %v313
  %575 = vmatmul.mubr.bf16.gmra.mrb[0].mxu0 %v312
  %v576 = vpop.f32.mrb[0].mxu0
  %v577 = vadd.f32 %v116, %v576
  %v578 = vpop.f32.mrb[0].mxu0
  %v579 = vpop.f32.mrb[0].mxu0
  %v580 = vadd.f32 %v116, %v579
  %v581 = vpop.f32.mrb[0].mxu0
  %582 = vmatprep.mubr.bf16.mxu0 %v315
  %583 = vmatmul.mubr.bf16.gmra.mrb[0].mxu0 %v314
  %v584 = vpop.f32.mrb[0].mxu0
  %v585 = vadd.f32 %v116, %v584
  %v586 = vpop.f32.mrb[0].mxu0
  %v587 = vpop.f32.mrb[0].mxu0
  %v588 = vadd.f32 %v116, %v587
  %v589 = vpop.f32.mrb[0].mxu0
  %590 = vmatprep.mubr.bf16.mxu0 %v317
  %591 = vmatmul.mubr.bf16.gmra.mrb[0].mxu0 %v316
  %v592 = vpop.f32.mrb[0].mxu0
  %v593 = vadd.f32 %v116, %v592
  %v594 = vpop.f32.mrb[0].mxu0
  %v595 = vpop.f32.mrb[0].mxu0
  %v596 = vadd.f32 %v116, %v595
  %v597 = vpop.f32.mrb[0].mxu0
  %598 = vmatprep.mubr.bf16.mxu0 %v319
  %599 = vmatmul.mubr.bf16.gmra.mrb[0].mxu0 %v318
  %v600 = vpop.f32.mrb[0].mxu0
  %v601 = vadd.f32 %v116, %v600
  %v602 = vpop.f32.mrb[0].mxu0
  %v603 = vpop.f32.mrb[0].mxu0
  %v604 = vadd.f32 %v116, %v603
  %v605 = vpop.f32.mrb[0].mxu0
  %606 = vmatprep.mubr.bf16.mxu0 %v321
  %607 = vmatmul.mubr.bf16.gmra.mrb[0].mxu0 %v320
  %v608 = vpop.f32.mrb[0].mxu0
  %v609 = vadd.f32 %v116, %v608
  %v610 = vpop.f32.mrb[0].mxu0
  %v611 = vpop.f32.mrb[0].mxu0
  %v612 = vadd.f32 %v116, %v611
  %v613 = vpop.f32.mrb[0].mxu0
  %614 = vmatprep.mubr.bf16.mxu0 %v323
  %615 = vmatmul.mubr.bf16.gmra.mrb[0].mxu0 %v322
  %v616 = vpop.f32.mrb[0].mxu0
  %v617 = vadd.f32 %v116, %v616
  %v618 = vpop.f32.mrb[0].mxu0
  %v619 = vpop.f32.mrb[0].mxu0
  %v620 = vadd.f32 %v116, %v619
  %v621 = vpop.f32.mrb[0].mxu0
  %622 = vmatprep.mubr.bf16.mxu0 %v325
  %623 = vmatmul.mubr.bf16.gmra.mrb[0].mxu0 %v324
  %v624 = vpop.f32.mrb[0].mxu0
  %v625 = vadd.f32 %v116, %v624
  %v626 = vpop.f32.mrb[0].mxu0
  %v627 = vpop.f32.mrb[0].mxu0
  %v628 = vadd.f32 %v116, %v627
  %v629 = vpop.f32.mrb[0].mxu0
  %630 = vmatprep.mubr.bf16.mxu0 %v327
  %631 = vmatmul.mubr.bf16.gmra.mrb[0].mxu0 %v326
  %v632 = vpop.f32.mrb[0].mxu0
  %v633 = vadd.f32 %v116, %v632
  %v634 = vpop.f32.mrb[0].mxu0
  %v635 = vpop.f32.mrb[0].mxu0
  %v636 = vadd.f32 %v116, %v635
  %v637 = vpop.f32.mrb[0].mxu0
  %638 = vmatprep.mubr.bf16.mxu0 %v329
  %639 = vmatmul.mubr.bf16.gmra.mrb[0].mxu0 %v328
  %v640 = vpop.f32.mrb[0].mxu0
  %v641 = vadd.f32 %v116, %v640
  %v642 = vpop.f32.mrb[0].mxu0
  %v643 = vpop.f32.mrb[0].mxu0
  %v644 = vadd.f32 %v116, %v643
  %v645 = vpop.f32.mrb[0].mxu0
  %646 = vmatprep.mubr.bf16.mxu0 %v331
  %647 = vmatmul.mubr.bf16.gmra.mrb[0].mxu0 %v330
  %v648 = vpop.f32.mrb[0].mxu0
  %v649 = vadd.f32 %v116, %v648
  %v650 = vpop.f32.mrb[0].mxu0
  %v651 = vpop.f32.mrb[0].mxu0
  %v652 = vadd.f32 %v116, %v651
  %v653 = vpop.f32.mrb[0].mxu0
  %654 = vmatprep.mubr.bf16.mxu0 %v333
  %655 = vmatmul.mubr.bf16.gmra.mrb[0].mxu0 %v332
  %v656 = vpop.f32.mrb[0].mxu0
  %v657 = vadd.f32 %v116, %v656
  %v658 = vpop.f32.mrb[0].mxu0
  %v659 = vpop.f32.mrb[0].mxu0
  %v660 = vadd.f32 %v116, %v659
  %v661 = vpop.f32.mrb[0].mxu0
  %662 = vmatprep.mubr.bf16.mxu0 %v335
  %663 = vmatmul.mubr.bf16.gmra.mrb[0].mxu0 %v334
  %v664 = vpop.f32.mrb[0].mxu0
  %v665 = vadd.f32 %v116, %v664
  %v666 = vpop.f32.mrb[0].mxu0
  %v667 = vpop.f32.mrb[0].mxu0
  %v668 = vadd.f32 %v116, %v667
  %v669 = vpop.f32.mrb[0].mxu0
  %670 = vmatprep.mubr.bf16.mxu0 %v337
  %671 = vmatmul.mubr.bf16.gmra.mrb[0].mxu0 %v336
  %v672 = vpop.f32.mrb[0].mxu0
  %v673 = vadd.f32 %v116, %v672
  %v674 = vpop.f32.mrb[0].mxu0
  %v675 = vpop.f32.mrb[0].mxu0
  %v676 = vadd.f32 %v116, %v675
  %v677 = vpop.f32.mrb[0].mxu0
  %678 = vmatprep.mubr.bf16.mxu0 %v339
  %679 = vmatmul.mubr.bf16.gmra.mrb[0].mxu0 %v338
  %v680 = vpop.f32.mrb[0].mxu0
  %v681 = vadd.f32 %v116, %v680
  %v682 = vpop.f32.mrb[0].mxu0
  %v683 = vpop.f32.mrb[0].mxu0
  %v684 = vadd.f32 %v116, %v683
  %v685 = vpop.f32.mrb[0].mxu0
  %686 = vmatprep.mubr.bf16.mxu0 %v341
  %687 = vmatmul.mubr.bf16.gmra.mrb[0].mxu0 %v340
  %v688 = vpop.f32.mrb[0].mxu0
  %v689 = vadd.f32 %v116, %v688
  %v690 = vpop.f32.mrb[0].mxu0
  %v691 = vpop.f32.mrb[0].mxu0
  %v692 = vadd.f32 %v116, %v691
  %v693 = vpop.f32.mrb[0].mxu0
  %694 = vmatprep.mubr.bf16.mxu0 %v343
  %695 = vmatmul.mubr.bf16.gmra.mrb[0].mxu0 %v342
  %v696 = vpop.f32.mrb[0].mxu0
  %v697 = vadd.f32 %v116, %v696
  %v698 = vpop.f32.mrb[0].mxu0
  %v699 = vpop.f32.mrb[0].mxu0
  %v700 = vadd.f32 %v116, %v699
  %v701 = vpop.f32.mrb[0].mxu0
  %702 = vmatprep.mubr.bf16.mxu0 %v345
  %703 = vmatmul.mubr.bf16.gmra.mrb[0].mxu0 %v344
  %v704 = vpop.f32.mrb[0].mxu0
  %v705 = vadd.f32 %v116, %v704
  %v706 = vpop.f32.mrb[0].mxu0
  %v707 = vpop.f32.mrb[0].mxu0
  %v708 = vadd.f32 %v116, %v707
  %v709 = vpop.f32.mrb[0].mxu0
  %710 = vmatprep.mubr.bf16.mxu0 %v347
  %711 = vmatmul.mubr.bf16.gmra.mrb[0].mxu0 %v346
  %v712 = vpop.f32.mrb[0].mxu0
  %v713 = vadd.f32 %v116, %v712
  %v714 = vpop.f32.mrb[0].mxu0
  %v715 = vpop.f32.mrb[0].mxu0
  %v716 = vadd.f32 %v116, %v715
  %v717 = vpop.f32.mrb[0].mxu0
  %718 = vmatprep.mubr.bf16.mxu0 %v349
  %719 = vmatmul.mubr.bf16.gmra.mrb[0].mxu0 %v348
  %v720 = vpop.f32.mrb[0].mxu0
  %v721 = vadd.f32 %v116, %v720
  %v722 = vpop.f32.mrb[0].mxu0
  %v723 = vpop.f32.mrb[0].mxu0
  %v724 = vadd.f32 %v116, %v723
  %v725 = vpop.f32.mrb[0].mxu0
  %726 = vmatprep.mubr.bf16.mxu0 %v351
  %727 = vmatmul.mubr.bf16.gmra.mrb[0].mxu0 %v350
  %v728 = vpop.f32.mrb[0].mxu0
  %v729 = vadd.f32 %v116, %v728
  %v730 = vpop.f32.mrb[0].mxu0
  %v731 = vpop.f32.mrb[0].mxu0
  %v732 = vadd.f32 %v116, %v731
  %v733 = vpop.f32.mrb[0].mxu0
  %734 = vmatprep.mubr.bf16.mxu0 %v353
  %735 = vmatmul.mubr.bf16.gmra.mrb[0].mxu0 %v352
  %v736 = vpop.f32.mrb[0].mxu0
  %v737 = vadd.f32 %v116, %v736
  %v738 = vpop.f32.mrb[0].mxu0
  %v739 = vpop.f32.mrb[0].mxu0
  %v740 = vadd.f32 %v116, %v739
  %v741 = vpop.f32.mrb[0].mxu0
  %742 = vmatprep.mubr.bf16.mxu0 %v355
  %743 = vmatmul.mubr.bf16.gmra.mrb[0].mxu0 %v354
  %v744 = vpop.f32.mrb[0].mxu0
  %v745 = vadd.f32 %v116, %v744
  %v746 = vpop.f32.mrb[0].mxu0
  %v747 = vpop.f32.mrb[0].mxu0
  %v748 = vadd.f32 %v116, %v747
  %v749 = vpop.f32.mrb[0].mxu0
  %750 = vmatprep.mubr.bf16.mxu0 %v357
  %751 = vmatmul.mubr.bf16.gmra.mrb[0].mxu0 %v356
  %v752 = vpop.f32.mrb[0].mxu0
  %v753 = vadd.f32 %v116, %v752
  %v754 = vpop.f32.mrb[0].mxu0
  %v755 = vpop.f32.mrb[0].mxu0
  %v756 = vadd.f32 %v116, %v755
  %v757 = vpop.f32.mrb[0].mxu0
  %758 = vmatprep.mubr.bf16.mxu0 %v359
  %759 = vmatmul.mubr.bf16.gmra.mrb[0].mxu0 %v358
  %v760 = vpop.f32.mrb[0].mxu0
  %v761 = vadd.f32 %v116, %v760
  %v762 = vpop.f32.mrb[0].mxu0
  %v763 = vpop.f32.mrb[0].mxu0
  %v764 = vadd.f32 %v116, %v763
  %v765 = vpop.f32.mrb[0].mxu0
  %766 = vmatprep.mubr.bf16.mxu0 %v361
  %767 = vmatmul.mubr.bf16.gmra.mrb[0].mxu0 %v360
  %v768 = vpop.f32.mrb[0].mxu0
  %v769 = vadd.f32 %v116, %v768
  %v770 = vpop.f32.mrb[0].mxu0
  %v771 = vpop.f32.mrb[0].mxu0
  %v772 = vadd.f32 %v116, %v771
  %v773 = vpop.f32.mrb[0].mxu0
  %774 = vmatprep.mubr.bf16.mxu0 %v363
  %775 = vmatmul.mubr.bf16.gmra.mrb[0].mxu0 %v362
  %v776 = vpop.f32.mrb[0].mxu0
  %v777 = vadd.f32 %v116, %v776
  %v778 = vpop.f32.mrb[0].mxu0
  %v779 = vpop.f32.mrb[0].mxu0
  %v780 = vadd.f32 %v116, %v779
  %v781 = vpop.f32.mrb[0].mxu0
  %782 = vmatprep.mubr.bf16.mxu0 %v365
  %783 = vmatmul.mubr.bf16.gmra.mrb[0].mxu0 %v364
  %v784 = vpop.f32.mrb[0].mxu0
  %v785 = vadd.f32 %v116, %v784
  %v786 = vpop.f32.mrb[0].mxu0
  %v787 = vpop.f32.mrb[0].mxu0
  %v788 = vadd.f32 %v116, %v787
  %v789 = vpop.f32.mrb[0].mxu0
  %790 = vmatprep.mubr.bf16.mxu0 %v367
  %791 = vmatmul.mubr.bf16.gmra.mrb[0].mxu0 %v366
  %v792 = vpop.f32.mrb[0].mxu0
  %v793 = vadd.f32 %v116, %v792
  %v794 = vpop.f32.mrb[0].mxu0
  %v795 = vpop.f32.mrb[0].mxu0
  %v796 = vadd.f32 %v116, %v795
  %v797 = vpop.f32.mrb[0].mxu0
  %798 = vmatprep.mubr.bf16.mxu0 %v369
  %799 = vmatmul.mubr.bf16.gmra.mrb[0].mxu0 %v368
  %v800 = vpop.f32.mrb[0].mxu0
  %v801 = vadd.f32 %v116, %v800
  %v802 = vpop.f32.mrb[0].mxu0
  %v803 = vpop.f32.mrb[0].mxu0
  %v804 = vadd.f32 %v116, %v803
  %v805 = vpop.f32.mrb[0].mxu0
  %806 = vmatprep.mubr.bf16.mxu0 %v371
  %807 = vmatmul.mubr.bf16.gmra.mrb[0].mxu0 %v370
  %v808 = vpop.f32.mrb[0].mxu0
  %v809 = vadd.f32 %v116, %v808
  %v810 = vpop.f32.mrb[0].mxu0
  %v811 = vpop.f32.mrb[0].mxu0
  %v812 = vadd.f32 %v116, %v811
  %v813 = vpop.f32.mrb[0].mxu0
  %814 = vmatprep.mubr.bf16.mxu0 %v373
  %815 = vmatmul.mubr.bf16.gmra.mrb[0].mxu0 %v372
  %v816 = vpop.f32.mrb[0].mxu0
  %v817 = vadd.f32 %v116, %v816
  %v818 = vpop.f32.mrb[0].mxu0
  %v819 = vpop.f32.mrb[0].mxu0
  %v820 = vadd.f32 %v116, %v819
  %v821 = vpop.f32.mrb[0].mxu0
  %822 = vdwg.mxu0
  %vm823 = vcmp.gt.f32.partialorder %v569, 0.0
  %vm824 = vcmp.gt.f32.partialorder %v572, 0.0
  %vm825 = vcmp.gt.f32.partialorder %v577, 0.0
  %vm826 = vcmp.gt.f32.partialorder %v580, 0.0
  %vm827 = vcmp.gt.f32.partialorder %v585, 0.0
  %vm828 = vcmp.gt.f32.partialorder %v588, 0.0
  %vm829 = vcmp.gt.f32.partialorder %v593, 0.0
  %vm830 = vcmp.gt.f32.partialorder %v596, 0.0
  %vm831 = vcmp.gt.f32.partialorder %v601, 0.0
  %vm832 = vcmp.gt.f32.partialorder %v604, 0.0
  %vm833 = vcmp.gt.f32.partialorder %v609, 0.0
  %vm834 = vcmp.gt.f32.partialorder %v612, 0.0
  %vm835 = vcmp.gt.f32.partialorder %v617, 0.0
  %vm836 = vcmp.gt.f32.partialorder %v620, 0.0
  %vm837 = vcmp.gt.f32.partialorder %v625, 0.0
  %vm838 = vcmp.gt.f32.partialorder %v628, 0.0
  %vm839 = vcmp.gt.f32.partialorder %v633, 0.0
  %vm840 = vcmp.gt.f32.partialorder %v636, 0.0
  %vm841 = vcmp.gt.f32.partialorder %v641, 0.0
  %vm842 = vcmp.gt.f32.partialorder %v644, 0.0
  %vm843 = vcmp.gt.f32.partialorder %v649, 0.0
  %vm844 = vcmp.gt.f32.partialorder %v652, 0.0
  %vm845 = vcmp.gt.f32.partialorder %v657, 0.0
  %vm846 = vcmp.gt.f32.partialorder %v660, 0.0
  %vm847 = vcmp.gt.f32.partialorder %v665, 0.0
  %vm848 = vcmp.gt.f32.partialorder %v668, 0.0
  %vm849 = vcmp.gt.f32.partialorder %v673, 0.0
  %vm850 = vcmp.gt.f32.partialorder %v676, 0.0
  %vm851 = vcmp.gt.f32.partialorder %v681, 0.0
  %vm852 = vcmp.gt.f32.partialorder %v684, 0.0
  %vm853 = vcmp.gt.f32.partialorder %v689, 0.0
  %vm854 = vcmp.gt.f32.partialorder %v692, 0.0
  %vm855 = vcmp.gt.f32.partialorder %v697, 0.0
  %vm856 = vcmp.gt.f32.partialorder %v700, 0.0
  %vm857 = vcmp.gt.f32.partialorder %v705, 0.0
  %vm858 = vcmp.gt.f32.partialorder %v708, 0.0
  %vm859 = vcmp.gt.f32.partialorder %v713, 0.0
  %vm860 = vcmp.gt.f32.partialorder %v716, 0.0
  %vm861 = vcmp.gt.f32.partialorder %v721, 0.0
  %vm862 = vcmp.gt.f32.partialorder %v724, 0.0
  %vm863 = vcmp.gt.f32.partialorder %v729, 0.0
  %vm864 = vcmp.gt.f32.partialorder %v732, 0.0
  %vm865 = vcmp.gt.f32.partialorder %v737, 0.0
  %vm866 = vcmp.gt.f32.partialorder %v740, 0.0
  %vm867 = vcmp.gt.f32.partialorder %v745, 0.0
  %vm868 = vcmp.gt.f32.partialorder %v748, 0.0
  %vm869 = vcmp.gt.f32.partialorder %v753, 0.0
  %vm870 = vcmp.gt.f32.partialorder %v756, 0.0
  %vm871 = vcmp.gt.f32.partialorder %v761, 0.0
  %vm872 = vcmp.gt.f32.partialorder %v764, 0.0
  %vm873 = vcmp.gt.f32.partialorder %v769, 0.0
  %vm874 = vcmp.gt.f32.partialorder %v772, 0.0
  %vm875 = vcmp.gt.f32.partialorder %v777, 0.0
  %vm876 = vcmp.gt.f32.partialorder %v780, 0.0
  %vm877 = vcmp.gt.f32.partialorder %v785, 0.0
  %vm878 = vcmp.gt.f32.partialorder %v788, 0.0
  %vm879 = vcmp.gt.f32.partialorder %v793, 0.0
  %vm880 = vcmp.gt.f32.partialorder %v796, 0.0
  %vm881 = vcmp.gt.f32.partialorder %v801, 0.0
  %vm882 = vcmp.gt.f32.partialorder %v804, 0.0
  %vm883 = vcmp.gt.f32.partialorder %v809, 0.0
  %vm884 = vcmp.gt.f32.partialorder %v812, 0.0
  %vm885 = vcmp.gt.f32.partialorder %v817, 0.0
  %vm886 = vcmp.gt.f32.partialorder %v820, 0.0
  %v887 = vmul.f32 %v569, 0.2
  %v888 = vmul.f32 %v572, 0.2
  %v889 = vmul.f32 %v577, 0.2
  %v890 = vmul.f32 %v580, 0.2
  %v891 = vmul.f32 %v585, 0.2
  %v892 = vmul.f32 %v588, 0.2
  %v893 = vmul.f32 %v593, 0.2
  %v894 = vmul.f32 %v596, 0.2
  %v895 = vmul.f32 %v601, 0.2
  %v896 = vmul.f32 %v604, 0.2
  %v897 = vmul.f32 %v609, 0.2
  %v898 = vmul.f32 %v612, 0.2
  %v899 = vmul.f32 %v617, 0.2
  %v900 = vmul.f32 %v620, 0.2
  %v901 = vmul.f32 %v625, 0.2
  %v902 = vmul.f32 %v628, 0.2
  %v903 = vmul.f32 %v633, 0.2
  %v904 = vmul.f32 %v636, 0.2
  %v905 = vmul.f32 %v641, 0.2
  %v906 = vmul.f32 %v644, 0.2
  %v907 = vmul.f32 %v649, 0.2
  %v908 = vmul.f32 %v652, 0.2
  %v909 = vmul.f32 %v657, 0.2
  %v910 = vmul.f32 %v660, 0.2
  %v911 = vmul.f32 %v665, 0.2
  %v912 = vmul.f32 %v668, 0.2
  %v913 = vmul.f32 %v673, 0.2
  %v914 = vmul.f32 %v676, 0.2
  %v915 = vmul.f32 %v681, 0.2
  %v916 = vmul.f32 %v684, 0.2
  %v917 = vmul.f32 %v689, 0.2
  %v918 = vmul.f32 %v692, 0.2
  %v919 = vmul.f32 %v697, 0.2
  %v920 = vmul.f32 %v700, 0.2
  %v921 = vmul.f32 %v705, 0.2
  %v922 = vmul.f32 %v708, 0.2
  %v923 = vmul.f32 %v713, 0.2
  %v924 = vmul.f32 %v716, 0.2
  %v925 = vmul.f32 %v721, 0.2
  %v926 = vmul.f32 %v724, 0.2
  %v927 = vmul.f32 %v729, 0.2
  %v928 = vmul.f32 %v732, 0.2
  %v929 = vmul.f32 %v737, 0.2
  %v930 = vmul.f32 %v740, 0.2
  %v931 = vmul.f32 %v745, 0.2
  %v932 = vmul.f32 %v748, 0.2
  %v933 = vmul.f32 %v753, 0.2
  %v934 = vmul.f32 %v756, 0.2
  %v935 = vmul.f32 %v761, 0.2
  %v936 = vmul.f32 %v764, 0.2
  %v937 = vmul.f32 %v769, 0.2
  %v938 = vmul.f32 %v772, 0.2
  %v939 = vmul.f32 %v777, 0.2
  %v940 = vmul.f32 %v780, 0.2
  %v941 = vmul.f32 %v785, 0.2
  %v942 = vmul.f32 %v788, 0.2
  %v943 = vmul.f32 %v793, 0.2
  %v944 = vmul.f32 %v796, 0.2
  %v945 = vmul.f32 %v801, 0.2
  %v946 = vmul.f32 %v804, 0.2
  %v947 = vmul.f32 %v809, 0.2
  %v948 = vmul.f32 %v812, 0.2
  %v949 = vmul.f32 %v817, 0.2
  %v950 = vmul.f32 %v820, 0.2
  %v951 = vsel %vm823, %v569, %v887
  %v952 = vsel %vm824, %v572, %v888
  %v953 = vsel %vm825, %v577, %v889
  %v954 = vsel %vm826, %v580, %v890
  %v955 = vsel %vm827, %v585, %v891
  %v956 = vsel %vm828, %v588, %v892
  %v957 = vsel %vm829, %v593, %v893
  %v958 = vsel %vm830, %v596, %v894
  %v959 = vsel %vm831, %v601, %v895
  %v960 = vsel %vm832, %v604, %v896
  %v961 = vsel %vm833, %v609, %v897
  %v962 = vsel %vm834, %v612, %v898
  %v963 = vsel %vm835, %v617, %v899
  %v964 = vsel %vm836, %v620, %v900
  %v965 = vsel %vm837, %v625, %v901
  %v966 = vsel %vm838, %v628, %v902
  %v967 = vsel %vm839, %v633, %v903
  %v968 = vsel %vm840, %v636, %v904
  %v969 = vsel %vm841, %v641, %v905
  %v970 = vsel %vm842, %v644, %v906
  %v971 = vsel %vm843, %v649, %v907
  %v972 = vsel %vm844, %v652, %v908
  %v973 = vsel %vm845, %v657, %v909
  %v974 = vsel %vm846, %v660, %v910
  %v975 = vsel %vm847, %v665, %v911
  %v976 = vsel %vm848, %v668, %v912
  %v977 = vsel %vm849, %v673, %v913
  %v978 = vsel %vm850, %v676, %v914
  %v979 = vsel %vm851, %v681, %v915
  %v980 = vsel %vm852, %v684, %v916
  %v981 = vsel %vm853, %v689, %v917
  %v982 = vsel %vm854, %v692, %v918
  %v983 = vsel %vm855, %v697, %v919
  %v984 = vsel %vm856, %v700, %v920
  %v985 = vsel %vm857, %v705, %v921
  %v986 = vsel %vm858, %v708, %v922
  %v987 = vsel %vm859, %v713, %v923
  %v988 = vsel %vm860, %v716, %v924
  %v989 = vsel %vm861, %v721, %v925
  %v990 = vsel %vm862, %v724, %v926
  %v991 = vsel %vm863, %v729, %v927
  %v992 = vsel %vm864, %v732, %v928
  %v993 = vsel %vm865, %v737, %v929
  %v994 = vsel %vm866, %v740, %v930
  %v995 = vsel %vm867, %v745, %v931
  %v996 = vsel %vm868, %v748, %v932
  %v997 = vsel %vm869, %v753, %v933
  %v998 = vsel %vm870, %v756, %v934
  %v999 = vsel %vm871, %v761, %v935
  %v1000 = vsel %vm872, %v764, %v936
  %v1001 = vsel %vm873, %v769, %v937
  %v1002 = vsel %vm874, %v772, %v938
  %v1003 = vsel %vm875, %v777, %v939
  %v1004 = vsel %vm876, %v780, %v940
  %v1005 = vsel %vm877, %v785, %v941
  %v1006 = vsel %vm878, %v788, %v942
  %v1007 = vsel %vm879, %v793, %v943
  %v1008 = vsel %vm880, %v796, %v944
  %v1009 = vsel %vm881, %v801, %v945
  %v1010 = vsel %vm882, %v804, %v946
  %v1011 = vsel %vm883, %v809, %v947
  %v1012 = vsel %vm884, %v812, %v948
  %v1013 = vsel %vm885, %v817, %v949
  %v1014 = vsel %vm886, %v820, %v950
  %1015 = vst [vmem:[%s3] sm:$0xff] %v951
  %1016 = vst [vmem:[%s3 + $0x8] sm:$0xff] %v952
  %1017 = vst [vmem:[%s3 + $0x10] sm:$0xff] %v953
  %1018 = vst [vmem:[%s3 + $0x18] sm:$0xff] %v954
  %1019 = vst [vmem:[%s3 + $0x20] sm:$0xff] %v955
  %1020 = vst [vmem:[%s3 + $0x28] sm:$0xff] %v956
  %1021 = vst [vmem:[%s3 + $0x30] sm:$0xff] %v957
  %1022 = vst [vmem:[%s3 + $0x38] sm:$0xff] %v958
  %1023 = vst [vmem:[%s3 + $0x40] sm:$0xff] %v959
  %1024 = vst [vmem:[%s3 + $0x48] sm:$0xff] %v960
  %1025 = vst [vmem:[%s3 + $0x50] sm:$0xff] %v961
  %1026 = vst [vmem:[%s3 + $0x58] sm:$0xff] %v962
  %1027 = vst [vmem:[%s3 + $0x60] sm:$0xff] %v963
  %1028 = vst [vmem:[%s3 + $0x68] sm:$0xff] %v964
  %1029 = vst [vmem:[%s3 + $0x70] sm:$0xff] %v965
  %1030 = vst [vmem:[%s3 + $0x78] sm:$0xff] %v966
  %1031 = vst [vmem:[%s3 + $0x80] sm:$0xff] %v967
  %1032 = vst [vmem:[%s3 + $0x88] sm:$0xff] %v968
  %1033 = vst [vmem:[%s3 + $0x90] sm:$0xff] %v969
  %1034 = vst [vmem:[%s3 + $0x98] sm:$0xff] %v970
  %1035 = vst [vmem:[%s3 + $0xa0] sm:$0xff] %v971
  %1036 = vst [vmem:[%s3 + $0xa8] sm:$0xff] %v972
  %1037 = vst [vmem:[%s3 + $0xb0] sm:$0xff] %v973
  %1038 = vst [vmem:[%s3 + $0xb8] sm:$0xff] %v974
  %1039 = vst [vmem:[%s3 + $0xc0] sm:$0xff] %v975
  %1040 = vst [vmem:[%s3 + $0xc8] sm:$0xff] %v976
  %1041 = vst [vmem:[%s3 + $0xd0] sm:$0xff] %v977
  %1042 = vst [vmem:[%s3 + $0xd8] sm:$0xff] %v978
  %1043 = vst [vmem:[%s3 + $0xe0] sm:$0xff] %v979
  %1044 = vst [vmem:[%s3 + $0xe8] sm:$0xff] %v980
  %1045 = vst [vmem:[%s3 + $0xf0] sm:$0xff] %v981
  %1046 = vst [vmem:[%s3 + $0xf8] sm:$0xff] %v982
  %1047 = vst [vmem:[%s3 + $0x100] sm:$0xff] %v983
  %1048 = vst [vmem:[%s3 + $0x108] sm:$0xff] %v984
  %1049 = vst [vmem:[%s3 + $0x110] sm:$0xff] %v985
  %1050 = vst [vmem:[%s3 + $0x118] sm:$0xff] %v986
  %1051 = vst [vmem:[%s3 + $0x120] sm:$0xff] %v987
  %1052 = vst [vmem:[%s3 + $0x128] sm:$0xff] %v988
  %1053 = vst [vmem:[%s3 + $0x130] sm:$0xff] %v989
  %1054 = vst [vmem:[%s3 + $0x138] sm:$0xff] %v990
  %1055 = vst [vmem:[%s3 + $0x140] sm:$0xff] %v991
  %1056 = vst [vmem:[%s3 + $0x148] sm:$0xff] %v992
  %1057 = vst [vmem:[%s3 + $0x150] sm:$0xff] %v993
  %1058 = vst [vmem:[%s3 + $0x158] sm:$0xff] %v994
  %1059 = vst [vmem:[%s3 + $0x160] sm:$0xff] %v995
  %1060 = vst [vmem:[%s3 + $0x168] sm:$0xff] %v996
  %1061 = vst [vmem:[%s3 + $0x170] sm:$0xff] %v997
  %1062 = vst [vmem:[%s3 + $0x178] sm:$0xff] %v998
  %1063 = vst [vmem:[%s3 + $0x180] sm:$0xff] %v999
  %1064 = vst [vmem:[%s3 + $0x188] sm:$0xff] %v1000
  %1065 = vst [vmem:[%s3 + $0x190] sm:$0xff] %v1001
  %1066 = vst [vmem:[%s3 + $0x198] sm:$0xff] %v1002
  %1067 = vst [vmem:[%s3 + $0x1a0] sm:$0xff] %v1003
  %1068 = vst [vmem:[%s3 + $0x1a8] sm:$0xff] %v1004
  %1069 = vst [vmem:[%s3 + $0x1b0] sm:$0xff] %v1005
  %1070 = vst [vmem:[%s3 + $0x1b8] sm:$0xff] %v1006
  %1071 = vst [vmem:[%s3 + $0x1c0] sm:$0xff] %v1007
  %1072 = vst [vmem:[%s3 + $0x1c8] sm:$0xff] %v1008
  %1073 = vst [vmem:[%s3 + $0x1d0] sm:$0xff] %v1009
  %1074 = vst [vmem:[%s3 + $0x1d8] sm:$0xff] %v1010
  %1075 = vst [vmem:[%s3 + $0x1e0] sm:$0xff] %v1011
  %1076 = vst [vmem:[%s3 + $0x1e8] sm:$0xff] %v1012
  %1077 = vst [vmem:[%s3 + $0x1f0] sm:$0xff] %v1013
  %1078 = vst [vmem:[%s3 + $0x1f8] sm:$0xff] %v1014
  // Predicated region
  $region14: #{generator_forward.11} parent=0 // pred_check
    _
  $region15: #{generator_forward.11} parent=0 // pred_check_branch
    %1080 = sbr.rel (0) target = $region17
  $region16: #{generator_forward.11} parent=0 // pred_region
    _
  $region17: #{generator_forward.11} parent=0 // pred_fallthru
    _
  // Predicated region
  $region18: #{generator_forward.11} parent=0 // pred_check
    _
  $region19: #{generator_forward.11} parent=0 // pred_check_branch
    %1082 = sbr.rel (0) target = $region21
  $region20: #{generator_forward.11} parent=0 // pred_region
    _
  $region21: #{generator_forward.11} parent=0 // pred_fallthru
    _

// kernel: generator_forward.12
$region0: #{generator_forward.12}
  #allocation0 [shape = 'u32[]', space=smem, size = 0x4, offset = 0x4, fixed_abs, tag = 'smem constant byte address 0x4 - core index']
  #allocation1 [shape = 'u32[144,128]{1,0:T(1,128)}', space=vmem, size = 0x12000, scoped, tag = 'internal scratch']
  %s0 = inlined_call_operand.vmem [shape: bf16[128,256], index: 0, kind: input, shape index: {}]
  %s1 = inlined_call_operand.vmem [shape: bf16[256,128], index: 1, kind: input, shape index: {}]
  %s2 = inlined_call_operand.vmem [shape: f32[1,128], index: 2, kind: input, shape index: {}]
  %s3 = inlined_call_operand.vmem [shape: f32[128,128], index: 3, kind: output, shape index: {}]
  %s4 = sld [smem:[#allocation0]]
  $region22: #{generator_forward.12} parent=0
    _
  %s6 = ssub.s32 1, %s4
  %s7 = scalar_select 0, %s6, %s4
  // Predicated region
  $region2: #{generator_forward.12} parent=0 // pred_check
    _
  $region3: #{generator_forward.12} parent=0 // pred_check_branch
    %9 = sbr.rel (0) target = $region5
  $region4: #{generator_forward.12} parent=0 // pred_region
    _
  $region5: #{generator_forward.12} parent=0 // pred_fallthru
    _
  // Predicated region
  $region6: #{generator_forward.12} parent=0 // pred_check
    _
  $region7: #{generator_forward.12} parent=0 // pred_check_branch
    %11 = sbr.rel (0) target = $region9
  $region8: #{generator_forward.12} parent=0 // pred_region
    _
  $region9: #{generator_forward.12} parent=0 // pred_fallthru
    _
  // Predicated region
  $region10: #{generator_forward.12} parent=0 // pred_check
    _
  $region11: #{generator_forward.12} parent=0 // pred_check_branch
    %13 = sbr.rel (0) target = $region13
  $region12: #{generator_forward.12} parent=0 // pred_region
    _
  $region13: #{generator_forward.12} parent=0 // pred_fallthru
    _
  %v15 = vld [vmem:[%s0] sm:$0xff]
  %v16 = vld [vmem:[%s0 + $0x8] sm:$0xff]
  %v17 = vld [vmem:[%s0 + $0x10] sm:$0xff]
  %v18 = vld [vmem:[%s0 + $0x18] sm:$0xff]
  %v19 = vld [vmem:[%s0 + $0x20] sm:$0xff]
  %v20 = vld [vmem:[%s0 + $0x28] sm:$0xff]
  %v21 = vld [vmem:[%s0 + $0x30] sm:$0xff]
  %v22 = vld [vmem:[%s0 + $0x38] sm:$0xff]
  %v23 = vld [vmem:[%s0 + $0x40] sm:$0xff]
  %v24 = vld [vmem:[%s0 + $0x48] sm:$0xff]
  %v25 = vld [vmem:[%s0 + $0x50] sm:$0xff]
  %v26 = vld [vmem:[%s0 + $0x58] sm:$0xff]
  %v27 = vld [vmem:[%s0 + $0x60] sm:$0xff]
  %v28 = vld [vmem:[%s0 + $0x68] sm:$0xff]
  %v29 = vld [vmem:[%s0 + $0x70] sm:$0xff]
  %v30 = vld [vmem:[%s0 + $0x78] sm:$0xff]
  %v31 = vld [vmem:[%s1] sm:$0xf]
  %v32 = vld [vmem:[%s1 + $0x4] sm:$0xf]
  %v33 = vld [vmem:[%s1 + $0x8] sm:$0xf]
  %v34 = vld [vmem:[%s1 + $0xc] sm:$0xf]
  %v35 = vld [vmem:[%s1 + $0x10] sm:$0xf]
  %v36 = vld [vmem:[%s1 + $0x14] sm:$0xf]
  %v37 = vld [vmem:[%s1 + $0x18] sm:$0xf]
  %v38 = vld [vmem:[%s1 + $0x1c] sm:$0xf]
  %v39 = vld [vmem:[%s1 + $0x20] sm:$0xf]
  %v40 = vld [vmem:[%s1 + $0x24] sm:$0xf]
  %v41 = vld [vmem:[%s1 + $0x28] sm:$0xf]
  %v42 = vld [vmem:[%s1 + $0x2c] sm:$0xf]
  %v43 = vld [vmem:[%s1 + $0x30] sm:$0xf]
  %v44 = vld [vmem:[%s1 + $0x34] sm:$0xf]
  %v45 = vld [vmem:[%s1 + $0x38] sm:$0xf]
  %v46 = vld [vmem:[%s1 + $0x3c] sm:$0xf]
  %v47 = vld [vmem:[%s1 + $0x40] sm:$0xf]
  %v48 = vld [vmem:[%s1 + $0x44] sm:$0xf]
  %v49 = vld [vmem:[%s1 + $0x48] sm:$0xf]
  %v50 = vld [vmem:[%s1 + $0x4c] sm:$0xf]
  %v51 = vld [vmem:[%s1 + $0x50] sm:$0xf]
  %v52 = vld [vmem:[%s1 + $0x54] sm:$0xf]
  %v53 = vld [vmem:[%s1 + $0x58] sm:$0xf]
  %v54 = vld [vmem:[%s1 + $0x5c] sm:$0xf]
  %v55 = vld [vmem:[%s1 + $0x60] sm:$0xf]
  %v56 = vld [vmem:[%s1 + $0x64] sm:$0xf]
  %v57 = vld [vmem:[%s1 + $0x68] sm:$0xf]
  %v58 = vld [vmem:[%s1 + $0x6c] sm:$0xf]
  %v59 = vld [vmem:[%s1 + $0x70] sm:$0xf]
  %v60 = vld [vmem:[%s1 + $0x74] sm:$0xf]
  %v61 = vld [vmem:[%s1 + $0x78] sm:$0xf]
  %v62 = vld [vmem:[%s1 + $0x7c] sm:$0xf]
  %v63 = vld [vmem:[%s2] sm:$0x1]
  %v65 = vlaneseq
  %v66 = vshrl.u32 %v65, 7
  %v67 = vsub.s32 0, %v66
  %v68 = vrot.slane %v63, %v67
  %v86 = vunpack.c.l.b16 %v15
  %v87 = vunpack.c.h.b16 %v15
  %v88 = vunpack.c.l.b16 %v16
  %v89 = vunpack.c.h.b16 %v16
  %v90 = vunpack.c.l.b16 %v17
  %v91 = vunpack.c.h.b16 %v17
  %v92 = vunpack.c.l.b16 %v18
  %v93 = vunpack.c.h.b16 %v18
  %v94 = vunpack.c.l.b16 %v19
  %v95 = vunpack.c.h.b16 %v19
  %v96 = vunpack.c.l.b16 %v20
  %v97 = vunpack.c.h.b16 %v20
  %v98 = vunpack.c.l.b16 %v21
  %v99 = vunpack.c.h.b16 %v21
  %v100 = vunpack.c.l.b16 %v22
  %v101 = vunpack.c.h.b16 %v22
  %v102 = vunpack.c.l.b16 %v23
  %v103 = vunpack.c.h.b16 %v23
  %v104 = vunpack.c.l.b16 %v24
  %v105 = vunpack.c.h.b16 %v24
  %v106 = vunpack.c.l.b16 %v25
  %v107 = vunpack.c.h.b16 %v25
  %v108 = vunpack.c.l.b16 %v26
  %v109 = vunpack.c.h.b16 %v26
  %v110 = vunpack.c.l.b16 %v27
  %v111 = vunpack.c.h.b16 %v27
  %v112 = vunpack.c.l.b16 %v28
  %v113 = vunpack.c.h.b16 %v28
  %v114 = vunpack.c.l.b16 %v29
  %v115 = vunpack.c.h.b16 %v29
  %v116 = vunpack.c.l.b16 %v30
  %v117 = vunpack.c.h.b16 %v30
  %v118 = vpack.c.b16 %v88, %v86
  %v119 = vpack.c.b16 %v89, %v87
  %v120 = vpack.c.b16 %v92, %v90
  %v121 = vpack.c.b16 %v93, %v91
  %v122 = vpack.c.b16 %v96, %v94
  %v123 = vpack.c.b16 %v97, %v95
  %v124 = vpack.c.b16 %v100, %v98
  %v125 = vpack.c.b16 %v101, %v99
  %v126 = vpack.c.b16 %v104, %v102
  %v127 = vpack.c.b16 %v105, %v103
  %v128 = vpack.c.b16 %v108, %v106
  %v129 = vpack.c.b16 %v109, %v107
  %v130 = vpack.c.b16 %v112, %v110
  %v131 = vpack.c.b16 %v113, %v111
  %v132 = vpack.c.b16 %v116, %v114
  %v133 = vpack.c.b16 %v117, %v115
  %v182 = vunpack.c.l.b16 %v31
  %v183 = vunpack.c.l.b16 %v32
  %v184 = vunpack.c.l.b16 %v33
  %v185 = vunpack.c.l.b16 %v34
  %v186 = vunpack.c.l.b16 %v35
  %v187 = vunpack.c.l.b16 %v36
  %v188 = vunpack.c.l.b16 %v37
  %v189 = vunpack.c.l.b16 %v38
  %v190 = vunpack.c.l.b16 %v39
  %v191 = vunpack.c.l.b16 %v40
  %v192 = vunpack.c.l.b16 %v41
  %v193 = vunpack.c.l.b16 %v42
  %v194 = vunpack.c.l.b16 %v43
  %v195 = vunpack.c.l.b16 %v44
  %v196 = vunpack.c.l.b16 %v45
  %v197 = vunpack.c.l.b16 %v46
  %v198 = vunpack.c.l.b16 %v47
  %v199 = vunpack.c.l.b16 %v48
  %v200 = vunpack.c.l.b16 %v49
  %v201 = vunpack.c.l.b16 %v50
  %v202 = vunpack.c.l.b16 %v51
  %v203 = vunpack.c.l.b16 %v52
  %v204 = vunpack.c.l.b16 %v53
  %v205 = vunpack.c.l.b16 %v54
  %v206 = vunpack.c.l.b16 %v55
  %v207 = vunpack.c.l.b16 %v56
  %v208 = vunpack.c.l.b16 %v57
  %v209 = vunpack.c.l.b16 %v58
  %v210 = vunpack.c.l.b16 %v59
  %v211 = vunpack.c.l.b16 %v60
  %v212 = vunpack.c.l.b16 %v61
  %v213 = vunpack.c.l.b16 %v62
  %v214 = vpack.c.b16 %v183, %v182
  %v215 = vpack.c.b16 %v185, %v184
  %v216 = vpack.c.b16 %v187, %v186
  %v217 = vpack.c.b16 %v189, %v188
  %v218 = vpack.c.b16 %v191, %v190
  %v219 = vpack.c.b16 %v193, %v192
  %v220 = vpack.c.b16 %v195, %v194
  %v221 = vpack.c.b16 %v197, %v196
  %v222 = vpack.c.b16 %v199, %v198
  %v223 = vpack.c.b16 %v201, %v200
  %v224 = vpack.c.b16 %v203, %v202
  %v225 = vpack.c.b16 %v205, %v204
  %v226 = vpack.c.b16 %v207, %v206
  %v227 = vpack.c.b16 %v209, %v208
  %v228 = vpack.c.b16 %v211, %v210
  %v229 = vpack.c.b16 %v213, %v212
  %246 = vmatprep.subr.bf16.mxu0 0
  %247 = vmatpush1.bf16.msra.mxu0 %v214
  %248 = vmatprep.subr.bf16.mxu0 0
  %249 = vmatpush1.bf16.msra.mxu0 %v215
  %250 = vmatprep.subr.bf16.mxu0 0
  %251 = vmatpush1.bf16.msra.mxu0 %v216
  %252 = vmatprep.subr.bf16.mxu0 0
  %253 = vmatpush1.bf16.msra.mxu0 %v217
  %254 = vmatprep.subr.bf16.mxu0 0
  %255 = vmatpush1.bf16.msra.mxu0 %v218
  %256 = vmatprep.subr.bf16.mxu0 0
  %257 = vmatpush1.bf16.msra.mxu0 %v219
  %258 = vmatprep.subr.bf16.mxu0 0
  %259 = vmatpush1.bf16.msra.mxu0 %v220
  %260 = vmatprep.subr.bf16.mxu0 0
  %261 = vmatpush1.bf16.msra.mxu0 %v221
  %262 = vmatprep.subr.bf16.mxu0 0
  %263 = vmatpush1.bf16.msra.mxu0 %v222
  %264 = vmatprep.subr.bf16.mxu0 0
  %265 = vmatpush1.bf16.msra.mxu0 %v223
  %266 = vmatprep.subr.bf16.mxu0 0
  %267 = vmatpush1.bf16.msra.mxu0 %v224
  %268 = vmatprep.subr.bf16.mxu0 0
  %269 = vmatpush1.bf16.msra.mxu0 %v225
  %270 = vmatprep.subr.bf16.mxu0 0
  %271 = vmatpush1.bf16.msra.mxu0 %v226
  %272 = vmatprep.subr.bf16.mxu0 0
  %273 = vmatpush1.bf16.msra.mxu0 %v227
  %274 = vmatprep.subr.bf16.mxu0 0
  %275 = vmatpush1.bf16.msra.mxu0 %v228
  %276 = vmatprep.subr.bf16.mxu0 0
  %277 = vmatpush1.bf16.msra.mxu0 %v229
  %278 = vmatprep.mubr.bf16.mxu0 %v119
  %279 = vmatmul.mubr.bf16.gmra.mrb[0].mxu0 %v118
  %v280 = vpop.f32.mrb[0].mxu0
  %v281 = vadd.f32 %v68, %v280
  %v282 = vpop.f32.mrb[0].mxu0
  %v283 = vpop.f32.mrb[0].mxu0
  %v284 = vadd.f32 %v68, %v283
  %v285 = vpop.f32.mrb[0].mxu0
  %286 = vmatprep.mubr.bf16.mxu0 %v121
  %287 = vmatmul.mubr.bf16.gmra.mrb[0].mxu0 %v120
  %v288 = vpop.f32.mrb[0].mxu0
  %v289 = vadd.f32 %v68, %v288
  %v290 = vpop.f32.mrb[0].mxu0
  %v291 = vpop.f32.mrb[0].mxu0
  %v292 = vadd.f32 %v68, %v291
  %v293 = vpop.f32.mrb[0].mxu0
  %294 = vmatprep.mubr.bf16.mxu0 %v123
  %295 = vmatmul.mubr.bf16.gmra.mrb[0].mxu0 %v122
  %v296 = vpop.f32.mrb[0].mxu0
  %v297 = vadd.f32 %v68, %v296
  %v298 = vpop.f32.mrb[0].mxu0
  %v299 = vpop.f32.mrb[0].mxu0
  %v300 = vadd.f32 %v68, %v299
  %v301 = vpop.f32.mrb[0].mxu0
  %302 = vmatprep.mubr.bf16.mxu0 %v125
  %303 = vmatmul.mubr.bf16.gmra.mrb[0].mxu0 %v124
  %v304 = vpop.f32.mrb[0].mxu0
  %v305 = vadd.f32 %v68, %v304
  %v306 = vpop.f32.mrb[0].mxu0
  %v307 = vpop.f32.mrb[0].mxu0
  %v308 = vadd.f32 %v68, %v307
  %v309 = vpop.f32.mrb[0].mxu0
  %310 = vmatprep.mubr.bf16.mxu0 %v127
  %311 = vmatmul.mubr.bf16.gmra.mrb[0].mxu0 %v126
  %v312 = vpop.f32.mrb[0].mxu0
  %v313 = vadd.f32 %v68, %v312
  %v314 = vpop.f32.mrb[0].mxu0
  %v315 = vpop.f32.mrb[0].mxu0
  %v316 = vadd.f32 %v68, %v315
  %v317 = vpop.f32.mrb[0].mxu0
  %318 = vmatprep.mubr.bf16.mxu0 %v129
  %319 = vmatmul.mubr.bf16.gmra.mrb[0].mxu0 %v128
  %v320 = vpop.f32.mrb[0].mxu0
  %v321 = vadd.f32 %v68, %v320
  %v322 = vpop.f32.mrb[0].mxu0
  %v323 = vpop.f32.mrb[0].mxu0
  %v324 = vadd.f32 %v68, %v323
  %v325 = vpop.f32.mrb[0].mxu0
  %326 = vmatprep.mubr.bf16.mxu0 %v131
  %327 = vmatmul.mubr.bf16.gmra.mrb[0].mxu0 %v130
  %v328 = vpop.f32.mrb[0].mxu0
  %v329 = vadd.f32 %v68, %v328
  %v330 = vpop.f32.mrb[0].mxu0
  %v331 = vpop.f32.mrb[0].mxu0
  %v332 = vadd.f32 %v68, %v331
  %v333 = vpop.f32.mrb[0].mxu0
  %334 = vmatprep.mubr.bf16.mxu0 %v133
  %335 = vmatmul.mubr.bf16.gmra.mrb[0].mxu0 %v132
  %v336 = vpop.f32.mrb[0].mxu0
  %v337 = vadd.f32 %v68, %v336
  %v338 = vpop.f32.mrb[0].mxu0
  %v339 = vpop.f32.mrb[0].mxu0
  %v340 = vadd.f32 %v68, %v339
  %v341 = vpop.f32.mrb[0].mxu0
  %342 = vdwg.mxu0
  %vm343 = vcmp.gt.f32.partialorder %v281, 0.0
  %vm344 = vcmp.gt.f32.partialorder %v284, 0.0
  %vm345 = vcmp.gt.f32.partialorder %v289, 0.0
  %vm346 = vcmp.gt.f32.partialorder %v292, 0.0
  %vm347 = vcmp.gt.f32.partialorder %v297, 0.0
  %vm348 = vcmp.gt.f32.partialorder %v300, 0.0
  %vm349 = vcmp.gt.f32.partialorder %v305, 0.0
  %vm350 = vcmp.gt.f32.partialorder %v308, 0.0
  %vm351 = vcmp.gt.f32.partialorder %v313, 0.0
  %vm352 = vcmp.gt.f32.partialorder %v316, 0.0
  %vm353 = vcmp.gt.f32.partialorder %v321, 0.0
  %vm354 = vcmp.gt.f32.partialorder %v324, 0.0
  %vm355 = vcmp.gt.f32.partialorder %v329, 0.0
  %vm356 = vcmp.gt.f32.partialorder %v332, 0.0
  %vm357 = vcmp.gt.f32.partialorder %v337, 0.0
  %vm358 = vcmp.gt.f32.partialorder %v340, 0.0
  %v359 = vmul.f32 %v281, 0.2
  %v360 = vmul.f32 %v284, 0.2
  %v361 = vmul.f32 %v289, 0.2
  %v362 = vmul.f32 %v292, 0.2
  %v363 = vmul.f32 %v297, 0.2
  %v364 = vmul.f32 %v300, 0.2
  %v365 = vmul.f32 %v305, 0.2
  %v366 = vmul.f32 %v308, 0.2
  %v367 = vmul.f32 %v313, 0.2
  %v368 = vmul.f32 %v316, 0.2
  %v369 = vmul.f32 %v321, 0.2
  %v370 = vmul.f32 %v324, 0.2
  %v371 = vmul.f32 %v329, 0.2
  %v372 = vmul.f32 %v332, 0.2
  %v373 = vmul.f32 %v337, 0.2
  %v374 = vmul.f32 %v340, 0.2
  %v375 = vsel %vm343, %v281, %v359
  %v376 = vsel %vm344, %v284, %v360
  %v377 = vsel %vm345, %v289, %v361
  %v378 = vsel %vm346, %v292, %v362
  %v379 = vsel %vm347, %v297, %v363
  %v380 = vsel %vm348, %v300, %v364
  %v381 = vsel %vm349, %v305, %v365
  %v382 = vsel %vm350, %v308, %v366
  %v383 = vsel %vm351, %v313, %v367
  %v384 = vsel %vm352, %v316, %v368
  %v385 = vsel %vm353, %v321, %v369
  %v386 = vsel %vm354, %v324, %v370
  %v387 = vsel %vm355, %v329, %v371
  %v388 = vsel %vm356, %v332, %v372
  %v389 = vsel %vm357, %v337, %v373
  %v390 = vsel %vm358, %v340, %v374
  %391 = vst [vmem:[%s3] sm:$0xff] %v375
  %392 = vst [vmem:[%s3 + $0x8] sm:$0xff] %v376
  %393 = vst [vmem:[%s3 + $0x10] sm:$0xff] %v377
  %394 = vst [vmem:[%s3 + $0x18] sm:$0xff] %v378
  %395 = vst [vmem:[%s3 + $0x20] sm:$0xff] %v379
  %396 = vst [vmem:[%s3 + $0x28] sm:$0xff] %v380
  %397 = vst [vmem:[%s3 + $0x30] sm:$0xff] %v381
  %398 = vst [vmem:[%s3 + $0x38] sm:$0xff] %v382
  %399 = vst [vmem:[%s3 + $0x40] sm:$0xff] %v383
  %400 = vst [vmem:[%s3 + $0x48] sm:$0xff] %v384
  %401 = vst [vmem:[%s3 + $0x50] sm:$0xff] %v385
  %402 = vst [vmem:[%s3 + $0x58] sm:$0xff] %v386
  %403 = vst [vmem:[%s3 + $0x60] sm:$0xff] %v387
  %404 = vst [vmem:[%s3 + $0x68] sm:$0xff] %v388
  %405 = vst [vmem:[%s3 + $0x70] sm:$0xff] %v389
  %406 = vst [vmem:[%s3 + $0x78] sm:$0xff] %v390
  // Predicated region
  $region14: #{generator_forward.12} parent=0 // pred_check
    _
  $region15: #{generator_forward.12} parent=0 // pred_check_branch
    %408 = sbr.rel (0) target = $region17
  $region16: #{generator_forward.12} parent=0 // pred_region
    _
  $region17: #{generator_forward.12} parent=0 // pred_fallthru
    _
  // Predicated region
  $region18: #{generator_forward.12} parent=0 // pred_check
    _
  $region19: #{generator_forward.12} parent=0 // pred_check_branch
    %410 = sbr.rel (0) target = $region21
  $region20: #{generator_forward.12} parent=0 // pred_region
    _
  $region21: #{generator_forward.12} parent=0 // pred_fallthru
    _

// kernel: generator_forward.13
$region0: #{generator_forward.13}
  #allocation0 [shape = 'u32[]', space=smem, size = 0x4, offset = 0x4, fixed_abs, tag = 'smem constant byte address 0x4 - core index']
  #allocation1 [shape = 'u32[144,128]{1,0:T(1,128)}', space=vmem, size = 0x12000, scoped, tag = 'internal scratch']
  %s0 = inlined_call_operand.vmem [shape: bf16[128,384], index: 0, kind: input, shape index: {}]
  %s1 = inlined_call_operand.vmem [shape: bf16[384,128], index: 1, kind: input, shape index: {}]
  %s2 = inlined_call_operand.vmem [shape: f32[1,128], index: 2, kind: input, shape index: {}]
  %s3 = inlined_call_operand.vmem [shape: f32[128,128], index: 3, kind: output, shape index: {}]
  %s4 = sld [smem:[#allocation0]]
  $region22: #{generator_forward.13} parent=0
    _
  %s6 = ssub.s32 1, %s4
  %s7 = scalar_select 0, %s6, %s4
  // Predicated region
  $region2: #{generator_forward.13} parent=0 // pred_check
    _
  $region3: #{generator_forward.13} parent=0 // pred_check_branch
    %9 = sbr.rel (0) target = $region5
  $region4: #{generator_forward.13} parent=0 // pred_region
    _
  $region5: #{generator_forward.13} parent=0 // pred_fallthru
    _
  // Predicated region
  $region6: #{generator_forward.13} parent=0 // pred_check
    _
  $region7: #{generator_forward.13} parent=0 // pred_check_branch
    %11 = sbr.rel (0) target = $region9
  $region8: #{generator_forward.13} parent=0 // pred_region
    _
  $region9: #{generator_forward.13} parent=0 // pred_fallthru
    _
  // Predicated region
  $region10: #{generator_forward.13} parent=0 // pred_check
    _
  $region11: #{generator_forward.13} parent=0 // pred_check_branch
    %13 = sbr.rel (0) target = $region13
  $region12: #{generator_forward.13} parent=0 // pred_region
    _
  $region13: #{generator_forward.13} parent=0 // pred_fallthru
    _
  %v15 = vld [vmem:[%s0] sm:$0xff]
  %v16 = vld [vmem:[%s0 + $0x8] sm:$0xf]
  %v17 = vld [vmem:[%s0 + $0xc] sm:$0xff]
  %v18 = vld [vmem:[%s0 + $0x14] sm:$0xf]
  %v19 = vld [vmem:[%s0 + $0x18] sm:$0xff]
  %v20 = vld [vmem:[%s0 + $0x20] sm:$0xf]
  %v21 = vld [vmem:[%s0 + $0x24] sm:$0xff]
  %v22 = vld [vmem:[%s0 + $0x2c] sm:$0xf]
  %v23 = vld [vmem:[%s0 + $0x30] sm:$0xff]
  %v24 = vld [vmem:[%s0 + $0x38] sm:$0xf]
  %v25 = vld [vmem:[%s0 + $0x3c] sm:$0xff]
  %v26 = vld [vmem:[%s0 + $0x44] sm:$0xf]
  %v27 = vld [vmem:[%s0 + $0x48] sm:$0xff]
  %v28 = vld [vmem:[%s0 + $0x50] sm:$0xf]
  %v29 = vld [vmem:[%s0 + $0x54] sm:$0xff]
  %v30 = vld [vmem:[%s0 + $0x5c] sm:$0xf]
  %v31 = vld [vmem:[%s0 + $0x60] sm:$0xff]
  %v32 = vld [vmem:[%s0 + $0x68] sm:$0xf]
  %v33 = vld [vmem:[%s0 + $0x6c] sm:$0xff]
  %v34 = vld [vmem:[%s0 + $0x74] sm:$0xf]
  %v35 = vld [vmem:[%s0 + $0x78] sm:$0xff]
  %v36 = vld [vmem:[%s0 + $0x80] sm:$0xf]
  %v37 = vld [vmem:[%s0 + $0x84] sm:$0xff]
  %v38 = vld [vmem:[%s0 + $0x8c] sm:$0xf]
  %v39 = vld [vmem:[%s0 + $0x90] sm:$0xff]
  %v40 = vld [vmem:[%s0 + $0x98] sm:$0xf]
  %v41 = vld [vmem:[%s0 + $0x9c] sm:$0xff]
  %v42 = vld [vmem:[%s0 + $0xa4] sm:$0xf]
  %v43 = vld [vmem:[%s0 + $0xa8] sm:$0xff]
  %v44 = vld [vmem:[%s0 + $0xb0] sm:$0xf]
  %v45 = vld [vmem:[%s0 + $0xb4] sm:$0xff]
  %v46 = vld [vmem:[%s0 + $0xbc] sm:$0xf]
  %v47 = vld [vmem:[%s1] sm:$0xf]
  %v48 = vld [vmem:[%s1 + $0x4] sm:$0xf]
  %v49 = vld [vmem:[%s1 + $0x8] sm:$0xf]
  %v50 = vld [vmem:[%s1 + $0xc] sm:$0xf]
  %v51 = vld [vmem:[%s1 + $0x10] sm:$0xf]
  %v52 = vld [vmem:[%s1 + $0x14] sm:$0xf]
  %v53 = vld [vmem:[%s1 + $0x18] sm:$0xf]
  %v54 = vld [vmem:[%s1 + $0x1c] sm:$0xf]
  %v55 = vld [vmem:[%s1 + $0x20] sm:$0xf]
  %v56 = vld [vmem:[%s1 + $0x24] sm:$0xf]
  %v57 = vld [vmem:[%s1 + $0x28] sm:$0xf]
  %v58 = vld [vmem:[%s1 + $0x2c] sm:$0xf]
  %v59 = vld [vmem:[%s1 + $0x30] sm:$0xf]
  %v60 = vld [vmem:[%s1 + $0x34] sm:$0xf]
  %v61 = vld [vmem:[%s1 + $0x38] sm:$0xf]
  %v62 = vld [vmem:[%s1 + $0x3c] sm:$0xf]
  %v63 = vld [vmem:[%s1 + $0x40] sm:$0xf]
  %v64 = vld [vmem:[%s1 + $0x44] sm:$0xf]
  %v65 = vld [vmem:[%s1 + $0x48] sm:$0xf]
  %v66 = vld [vmem:[%s1 + $0x4c] sm:$0xf]
  %v67 = vld [vmem:[%s1 + $0x50] sm:$0xf]
  %v68 = vld [vmem:[%s1 + $0x54] sm:$0xf]
  %v69 = vld [vmem:[%s1 + $0x58] sm:$0xf]
  %v70 = vld [vmem:[%s1 + $0x5c] sm:$0xf]
  %v71 = vld [vmem:[%s1 + $0x60] sm:$0xf]
  %v72 = vld [vmem:[%s1 + $0x64] sm:$0xf]
  %v73 = vld [vmem:[%s1 + $0x68] sm:$0xf]
  %v74 = vld [vmem:[%s1 + $0x6c] sm:$0xf]
  %v75 = vld [vmem:[%s1 + $0x70] sm:$0xf]
  %v76 = vld [vmem:[%s1 + $0x74] sm:$0xf]
  %v77 = vld [vmem:[%s1 + $0x78] sm:$0xf]
  %v78 = vld [vmem:[%s1 + $0x7c] sm:$0xf]
  %v79 = vld [vmem:[%s1 + $0x80] sm:$0xf]
  %v80 = vld [vmem:[%s1 + $0x84] sm:$0xf]
  %v81 = vld [vmem:[%s1 + $0x88] sm:$0xf]
  %v82 = vld [vmem:[%s1 + $0x8c] sm:$0xf]
  %v83 = vld [vmem:[%s1 + $0x90] sm:$0xf]
  %v84 = vld [vmem:[%s1 + $0x94] sm:$0xf]
  %v85 = vld [vmem:[%s1 + $0x98] sm:$0xf]
  %v86 = vld [vmem:[%s1 + $0x9c] sm:$0xf]
  %v87 = vld [vmem:[%s1 + $0xa0] sm:$0xf]
  %v88 = vld [vmem:[%s1 + $0xa4] sm:$0xf]
  %v89 = vld [vmem:[%s1 + $0xa8] sm:$0xf]
  %v90 = vld [vmem:[%s1 + $0xac] sm:$0xf]
  %v91 = vld [vmem:[%s1 + $0xb0] sm:$0xf]
  %v92 = vld [vmem:[%s1 + $0xb4] sm:$0xf]
  %v93 = vld [vmem:[%s1 + $0xb8] sm:$0xf]
  %v94 = vld [vmem:[%s1 + $0xbc] sm:$0xf]
  %v95 = vld [vmem:[%s2] sm:$0x1]
  %v97 = vlaneseq
  %v98 = vshrl.u32 %v97, 7
  %v99 = vsub.s32 0, %v98
  %v100 = vrot.slane %v95, %v99
  %v134 = vunpack.c.l.b16 %v15
  %v135 = vunpack.c.h.b16 %v15
  %v136 = vunpack.c.l.b16 %v16
  %v137 = vunpack.c.l.b16 %v17
  %v138 = vunpack.c.h.b16 %v17
  %v139 = vunpack.c.l.b16 %v18
  %v140 = vunpack.c.l.b16 %v19
  %v141 = vunpack.c.h.b16 %v19
  %v142 = vunpack.c.l.b16 %v20
  %v143 = vunpack.c.l.b16 %v21
  %v144 = vunpack.c.h.b16 %v21
  %v145 = vunpack.c.l.b16 %v22
  %v146 = vunpack.c.l.b16 %v23
  %v147 = vunpack.c.h.b16 %v23
  %v148 = vunpack.c.l.b16 %v24
  %v149 = vunpack.c.l.b16 %v25
  %v150 = vunpack.c.h.b16 %v25
  %v151 = vunpack.c.l.b16 %v26
  %v152 = vunpack.c.l.b16 %v27
  %v153 = vunpack.c.h.b16 %v27
  %v154 = vunpack.c.l.b16 %v28
  %v155 = vunpack.c.l.b16 %v29
  %v156 = vunpack.c.h.b16 %v29
  %v157 = vunpack.c.l.b16 %v30
  %v158 = vunpack.c.l.b16 %v31
  %v159 = vunpack.c.h.b16 %v31
  %v160 = vunpack.c.l.b16 %v32
  %v161 = vunpack.c.l.b16 %v33
  %v162 = vunpack.c.h.b16 %v33
  %v163 = vunpack.c.l.b16 %v34
  %v164 = vunpack.c.l.b16 %v35
  %v165 = vunpack.c.h.b16 %v35
  %v166 = vunpack.c.l.b16 %v36
  %v167 = vunpack.c.l.b16 %v37
  %v168 = vunpack.c.h.b16 %v37
  %v169 = vunpack.c.l.b16 %v38
  %v170 = vunpack.c.l.b16 %v39
  %v171 = vunpack.c.h.b16 %v39
  %v172 = vunpack.c.l.b16 %v40
  %v173 = vunpack.c.l.b16 %v41
  %v174 = vunpack.c.h.b16 %v41
  %v175 = vunpack.c.l.b16 %v42
  %v176 = vunpack.c.l.b16 %v43
  %v177 = vunpack.c.h.b16 %v43
  %v178 = vunpack.c.l.b16 %v44
  %v179 = vunpack.c.l.b16 %v45
  %v180 = vunpack.c.h.b16 %v45
  %v181 = vunpack.c.l.b16 %v46
  %v182 = vpack.c.b16 %v137, %v134
  %v183 = vpack.c.b16 %v138, %v135
  %v184 = vpack.c.b16 %v139, %v136
  %v185 = vpack.c.b16 %v143, %v140
  %v186 = vpack.c.b16 %v144, %v141
  %v187 = vpack.c.b16 %v145, %v142
  %v188 = vpack.c.b16 %v149, %v146
  %v189 = vpack.c.b16 %v150, %v147
  %v190 = vpack.c.b16 %v151, %v148
  %v191 = vpack.c.b16 %v155, %v152
  %v192 = vpack.c.b16 %v156, %v153
  %v193 = vpack.c.b16 %v157, %v154
  %v194 = vpack.c.b16 %v161, %v158
  %v195 = vpack.c.b16 %v162, %v159
  %v196 = vpack.c.b16 %v163, %v160
  %v197 = vpack.c.b16 %v167, %v164
  %v198 = vpack.c.b16 %v168, %v165
  %v199 = vpack.c.b16 %v169, %v166
  %v200 = vpack.c.b16 %v173, %v170
  %v201 = vpack.c.b16 %v174, %v171
  %v202 = vpack.c.b16 %v175, %v172
  %v203 = vpack.c.b16 %v179, %v176
  %v204 = vpack.c.b16 %v180, %v177
  %v205 = vpack.c.b16 %v181, %v178
  %v278 = vunpack.c.l.b16 %v47
  %v279 = vunpack.c.l.b16 %v48
  %v280 = vunpack.c.l.b16 %v49
  %v281 = vunpack.c.l.b16 %v50
  %v282 = vunpack.c.l.b16 %v51
  %v283 = vunpack.c.l.b16 %v52
  %v284 = vunpack.c.l.b16 %v53
  %v285 = vunpack.c.l.b16 %v54
  %v286 = vunpack.c.l.b16 %v55
  %v287 = vunpack.c.l.b16 %v56
  %v288 = vunpack.c.l.b16 %v57
  %v289 = vunpack.c.l.b16 %v58
  %v290 = vunpack.c.l.b16 %v59
  %v291 = vunpack.c.l.b16 %v60
  %v292 = vunpack.c.l.b16 %v61
  %v293 = vunpack.c.l.b16 %v62
  %v294 = vunpack.c.l.b16 %v63
  %v295 = vunpack.c.l.b16 %v64
  %v296 = vunpack.c.l.b16 %v65
  %v297 = vunpack.c.l.b16 %v66
  %v298 = vunpack.c.l.b16 %v67
  %v299 = vunpack.c.l.b16 %v68
  %v300 = vunpack.c.l.b16 %v69
  %v301 = vunpack.c.l.b16 %v70
  %v302 = vunpack.c.l.b16 %v71
  %v303 = vunpack.c.l.b16 %v72
  %v304 = vunpack.c.l.b16 %v73
  %v305 = vunpack.c.l.b16 %v74
  %v306 = vunpack.c.l.b16 %v75
  %v307 = vunpack.c.l.b16 %v76
  %v308 = vunpack.c.l.b16 %v77
  %v309 = vunpack.c.l.b16 %v78
  %v310 = vunpack.c.l.b16 %v79
  %v311 = vunpack.c.l.b16 %v80
  %v312 = vunpack.c.l.b16 %v81
  %v313 = vunpack.c.l.b16 %v82
  %v314 = vunpack.c.l.b16 %v83
  %v315 = vunpack.c.l.b16 %v84
  %v316 = vunpack.c.l.b16 %v85
  %v317 = vunpack.c.l.b16 %v86
  %v318 = vunpack.c.l.b16 %v87
  %v319 = vunpack.c.l.b16 %v88
  %v320 = vunpack.c.l.b16 %v89
  %v321 = vunpack.c.l.b16 %v90
  %v322 = vunpack.c.l.b16 %v91
  %v323 = vunpack.c.l.b16 %v92
  %v324 = vunpack.c.l.b16 %v93
  %v325 = vunpack.c.l.b16 %v94
  %v326 = vpack.c.b16 %v279, %v278
  %v327 = vpack.c.b16 %v281, %v280
  %v328 = vpack.c.b16 %v283, %v282
  %v329 = vpack.c.b16 %v285, %v284
  %v330 = vpack.c.b16 %v287, %v286
  %v331 = vpack.c.b16 %v289, %v288
  %v332 = vpack.c.b16 %v291, %v290
  %v333 = vpack.c.b16 %v293, %v292
  %v334 = vpack.c.b16 %v295, %v294
  %v335 = vpack.c.b16 %v297, %v296
  %v336 = vpack.c.b16 %v299, %v298
  %v337 = vpack.c.b16 %v301, %v300
  %v338 = vpack.c.b16 %v303, %v302
  %v339 = vpack.c.b16 %v305, %v304
  %v340 = vpack.c.b16 %v307, %v306
  %v341 = vpack.c.b16 %v309, %v308
  %v342 = vpack.c.b16 %v311, %v310
  %v343 = vpack.c.b16 %v313, %v312
  %v344 = vpack.c.b16 %v315, %v314
  %v345 = vpack.c.b16 %v317, %v316
  %v346 = vpack.c.b16 %v319, %v318
  %v347 = vpack.c.b16 %v321, %v320
  %v348 = vpack.c.b16 %v323, %v322
  %v349 = vpack.c.b16 %v325, %v324
  %374 = vmatprep.subr.bf16.mxu0 0
  %375 = vmatpush1.bf16.msra.mxu0 %v326
  %376 = vmatprep.subr.bf16.mxu0 0
  %377 = vmatpush1.bf16.msra.mxu0 %v327
  %378 = vmatprep.subr.bf16.mxu0 0
  %379 = vmatpush1.bf16.msra.mxu0 %v328
  %380 = vmatprep.subr.bf16.mxu0 0
  %381 = vmatpush1.bf16.msra.mxu0 %v329
  %382 = vmatprep.subr.bf16.mxu0 0
  %383 = vmatpush1.bf16.msra.mxu0 %v330
  %384 = vmatprep.subr.bf16.mxu0 0
  %385 = vmatpush1.bf16.msra.mxu0 %v331
  %386 = vmatprep.subr.bf16.mxu0 0
  %387 = vmatpush1.bf16.msra.mxu0 %v332
  %388 = vmatprep.subr.bf16.mxu0 0
  %389 = vmatpush1.bf16.msra.mxu0 %v333
  %390 = vmatprep.subr.bf16.mxu0 0
  %391 = vmatpush1.bf16.msra.mxu0 %v334
  %392 = vmatprep.subr.bf16.mxu0 0
  %393 = vmatpush1.bf16.msra.mxu0 %v335
  %394 = vmatprep.subr.bf16.mxu0 0
  %395 = vmatpush1.bf16.msra.mxu0 %v336
  %396 = vmatprep.subr.bf16.mxu0 0
  %397 = vmatpush1.bf16.msra.mxu0 %v337
  %398 = vmatprep.subr.bf16.mxu0 0
  %399 = vmatpush1.bf16.msra.mxu0 %v338
  %400 = vmatprep.subr.bf16.mxu0 0
  %401 = vmatpush1.bf16.msra.mxu0 %v339
  %402 = vmatprep.subr.bf16.mxu0 0
  %403 = vmatpush1.bf16.msra.mxu0 %v340
  %404 = vmatprep.subr.bf16.mxu0 0
  %405 = vmatpush1.bf16.msra.mxu0 %v341
  %406 = vmatprep.mubr.bf16.mxu0 %v183
  %407 = vmatmul.mubr.bf16.gmra.mrb[0].mxu0 %v182
  %v408 = vpop.f32.mrb[0].mxu0
  %v409 = vadd.f32 %v100, %v408
  %v410 = vpop.f32.mrb[0].mxu0
  %v411 = vpop.f32.mrb[0].mxu0
  %v412 = vadd.f32 %v100, %v411
  %v413 = vpop.f32.mrb[0].mxu0
  %414 = vmatprep.mubr.bf16.mxu0 %v186
  %415 = vmatmul.mubr.bf16.gmra.mrb[0].mxu0 %v185
  %v416 = vpop.f32.mrb[0].mxu0
  %v417 = vadd.f32 %v100, %v416
  %v418 = vpop.f32.mrb[0].mxu0
  %v419 = vpop.f32.mrb[0].mxu0
  %v420 = vadd.f32 %v100, %v419
  %v421 = vpop.f32.mrb[0].mxu0
  %422 = vmatprep.mubr.bf16.mxu0 %v189
  %423 = vmatmul.mubr.bf16.gmra.mrb[0].mxu0 %v188
  %v424 = vpop.f32.mrb[0].mxu0
  %v425 = vadd.f32 %v100, %v424
  %v426 = vpop.f32.mrb[0].mxu0
  %v427 = vpop.f32.mrb[0].mxu0
  %v428 = vadd.f32 %v100, %v427
  %v429 = vpop.f32.mrb[0].mxu0
  %430 = vmatprep.mubr.bf16.mxu0 %v192
  %431 = vmatmul.mubr.bf16.gmra.mrb[0].mxu0 %v191
  %v432 = vpop.f32.mrb[0].mxu0
  %v433 = vadd.f32 %v100, %v432
  %v434 = vpop.f32.mrb[0].mxu0
  %v435 = vpop.f32.mrb[0].mxu0
  %v436 = vadd.f32 %v100, %v435
  %v437 = vpop.f32.mrb[0].mxu0
  %438 = vmatprep.mubr.bf16.mxu0 %v195
  %439 = vmatmul.mubr.bf16.gmra.mrb[0].mxu0 %v194
  %v440 = vpop.f32.mrb[0].mxu0
  %v441 = vadd.f32 %v100, %v440
  %v442 = vpop.f32.mrb[0].mxu0
  %v443 = vpop.f32.mrb[0].mxu0
  %v444 = vadd.f32 %v100, %v443
  %v445 = vpop.f32.mrb[0].mxu0
  %446 = vmatprep.mubr.bf16.mxu0 %v198
  %447 = vmatmul.mubr.bf16.gmra.mrb[0].mxu0 %v197
  %v448 = vpop.f32.mrb[0].mxu0
  %v449 = vadd.f32 %v100, %v448
  %v450 = vpop.f32.mrb[0].mxu0
  %v451 = vpop.f32.mrb[0].mxu0
  %v452 = vadd.f32 %v100, %v451
  %v453 = vpop.f32.mrb[0].mxu0
  %454 = vmatprep.mubr.bf16.mxu0 %v201
  %455 = vmatmul.mubr.bf16.gmra.mrb[0].mxu0 %v200
  %v456 = vpop.f32.mrb[0].mxu0
  %v457 = vadd.f32 %v100, %v456
  %v458 = vpop.f32.mrb[0].mxu0
  %v459 = vpop.f32.mrb[0].mxu0
  %v460 = vadd.f32 %v100, %v459
  %v461 = vpop.f32.mrb[0].mxu0
  %462 = vmatprep.mubr.bf16.mxu0 %v204
  %463 = vmatmul.mubr.bf16.gmra.mrb[0].mxu0 %v203
  %v464 = vpop.f32.mrb[0].mxu0
  %v465 = vadd.f32 %v100, %v464
  %v466 = vpop.f32.mrb[0].mxu0
  %v467 = vpop.f32.mrb[0].mxu0
  %v468 = vadd.f32 %v100, %v467
  %v469 = vpop.f32.mrb[0].mxu0
  %470 = vdwg.mxu0
  %471 = vmatprep.subr.bf16.mxu0 0
  %472 = vmatpush1.bf16.msra.mxu0 %v342
  %473 = vmatprep.subr.bf16.mxu0 0
  %474 = vmatpush1.bf16.msra.mxu0 %v343
  %475 = vmatprep.subr.bf16.mxu0 0
  %476 = vmatpush1.bf16.msra.mxu0 %v344
  %477 = vmatprep.subr.bf16.mxu0 0
  %478 = vmatpush1.bf16.msra.mxu0 %v345
  %479 = vmatprep.subr.bf16.mxu0 0
  %480 = vmatpush1.bf16.msra.mxu0 %v346
  %481 = vmatprep.subr.bf16.mxu0 0
  %482 = vmatpush1.bf16.msra.mxu0 %v347
  %483 = vmatprep.subr.bf16.mxu0 0
  %484 = vmatpush1.bf16.msra.mxu0 %v348
  %485 = vmatprep.subr.bf16.mxu0 0
  %486 = vmatpush1.bf16.msra.mxu0 %v349
  %487 = vmatprep.subr.bf16.mxu0 0
  %488 = vmatpush1.bf16.msra.mxu0 0
  %489 = vmatprep.subr.bf16.mxu0 0
  %490 = vmatpush1.bf16.msra.mxu0 0
  %491 = vmatprep.subr.bf16.mxu0 0
  %492 = vmatpush1.bf16.msra.mxu0 0
  %493 = vmatprep.subr.bf16.mxu0 0
  %494 = vmatpush1.bf16.msra.mxu0 0
  %495 = vmatprep.subr.bf16.mxu0 0
  %496 = vmatpush1.bf16.msra.mxu0 0
  %497 = vmatprep.subr.bf16.mxu0 0
  %498 = vmatpush1.bf16.msra.mxu0 0
  %499 = vmatprep.subr.bf16.mxu0 0
  %500 = vmatpush1.bf16.msra.mxu0 0
  %501 = vmatprep.subr.bf16.mxu0 0
  %502 = vmatpush1.bf16.msra.mxu0 0
  %503 = vmatprep.mubr.bf16.mxu0 0
  %504 = vmatmul.mubr.bf16.gmra.mrb[0].mxu0 %v184
  %v505 = vpop.f32.mrb[0].mxu0
  %v506 = vadd.f32 %v409, %v505
  %v507 = vpop.f32.mrb[0].mxu0
  %v508 = vpop.f32.mrb[0].mxu0
  %v509 = vadd.f32 %v412, %v508
  %v510 = vpop.f32.mrb[0].mxu0
  %511 = vmatprep.mubr.bf16.mxu0 0
  %512 = vmatmul.mubr.bf16.gmra.mrb[0].mxu0 %v187
  %v513 = vpop.f32.mrb[0].mxu0
  %v514 = vadd.f32 %v417, %v513
  %v515 = vpop.f32.mrb[0].mxu0
  %v516 = vpop.f32.mrb[0].mxu0
  %v517 = vadd.f32 %v420, %v516
  %v518 = vpop.f32.mrb[0].mxu0
  %519 = vmatprep.mubr.bf16.mxu0 0
  %520 = vmatmul.mubr.bf16.gmra.mrb[0].mxu0 %v190
  %v521 = vpop.f32.mrb[0].mxu0
  %v522 = vadd.f32 %v425, %v521
  %v523 = vpop.f32.mrb[0].mxu0
  %v524 = vpop.f32.mrb[0].mxu0
  %v525 = vadd.f32 %v428, %v524
  %v526 = vpop.f32.mrb[0].mxu0
  %527 = vmatprep.mubr.bf16.mxu0 0
  %528 = vmatmul.mubr.bf16.gmra.mrb[0].mxu0 %v193
  %v529 = vpop.f32.mrb[0].mxu0
  %v530 = vadd.f32 %v433, %v529
  %v531 = vpop.f32.mrb[0].mxu0
  %v532 = vpop.f32.mrb[0].mxu0
  %v533 = vadd.f32 %v436, %v532
  %v534 = vpop.f32.mrb[0].mxu0
  %535 = vmatprep.mubr.bf16.mxu0 0
  %536 = vmatmul.mubr.bf16.gmra.mrb[0].mxu0 %v196
  %v537 = vpop.f32.mrb[0].mxu0
  %v538 = vadd.f32 %v441, %v537
  %v539 = vpop.f32.mrb[0].mxu0
  %v540 = vpop.f32.mrb[0].mxu0
  %v541 = vadd.f32 %v444, %v540
  %v542 = vpop.f32.mrb[0].mxu0
  %543 = vmatprep.mubr.bf16.mxu0 0
  %544 = vmatmul.mubr.bf16.gmra.mrb[0].mxu0 %v199
  %v545 = vpop.f32.mrb[0].mxu0
  %v546 = vadd.f32 %v449, %v545
  %v547 = vpop.f32.mrb[0].mxu0
  %v548 = vpop.f32.mrb[0].mxu0
  %v549 = vadd.f32 %v452, %v548
  %v550 = vpop.f32.mrb[0].mxu0
  %551 = vmatprep.mubr.bf16.mxu0 0
  %552 = vmatmul.mubr.bf16.gmra.mrb[0].mxu0 %v202
  %v553 = vpop.f32.mrb[0].mxu0
  %v554 = vadd.f32 %v457, %v553
  %v555 = vpop.f32.mrb[0].mxu0
  %v556 = vpop.f32.mrb[0].mxu0
  %v557 = vadd.f32 %v460, %v556
  %v558 = vpop.f32.mrb[0].mxu0
  %559 = vmatprep.mubr.bf16.mxu0 0
  %560 = vmatmul.mubr.bf16.gmra.mrb[0].mxu0 %v205
  %v561 = vpop.f32.mrb[0].mxu0
  %v562 = vadd.f32 %v465, %v561
  %v563 = vpop.f32.mrb[0].mxu0
  %v564 = vpop.f32.mrb[0].mxu0
  %v565 = vadd.f32 %v468, %v564
  %v566 = vpop.f32.mrb[0].mxu0
  %567 = vdwg.mxu0
  %vm568 = vcmp.gt.f32.partialorder %v506, 0.0
  %vm569 = vcmp.gt.f32.partialorder %v509, 0.0
  %vm570 = vcmp.gt.f32.partialorder %v514, 0.0
  %vm571 = vcmp.gt.f32.partialorder %v517, 0.0
  %vm572 = vcmp.gt.f32.partialorder %v522, 0.0
  %vm573 = vcmp.gt.f32.partialorder %v525, 0.0
  %vm574 = vcmp.gt.f32.partialorder %v530, 0.0
  %vm575 = vcmp.gt.f32.partialorder %v533, 0.0
  %vm576 = vcmp.gt.f32.partialorder %v538, 0.0
  %vm577 = vcmp.gt.f32.partialorder %v541, 0.0
  %vm578 = vcmp.gt.f32.partialorder %v546, 0.0
  %vm579 = vcmp.gt.f32.partialorder %v549, 0.0
  %vm580 = vcmp.gt.f32.partialorder %v554, 0.0
  %vm581 = vcmp.gt.f32.partialorder %v557, 0.0
  %vm582 = vcmp.gt.f32.partialorder %v562, 0.0
  %vm583 = vcmp.gt.f32.partialorder %v565, 0.0
  %v584 = vmul.f32 %v506, 0.2
  %v585 = vmul.f32 %v509, 0.2
  %v586 = vmul.f32 %v514, 0.2
  %v587 = vmul.f32 %v517, 0.2
  %v588 = vmul.f32 %v522, 0.2
  %v589 = vmul.f32 %v525, 0.2
  %v590 = vmul.f32 %v530, 0.2
  %v591 = vmul.f32 %v533, 0.2
  %v592 = vmul.f32 %v538, 0.2
  %v593 = vmul.f32 %v541, 0.2
  %v594 = vmul.f32 %v546, 0.2
  %v595 = vmul.f32 %v549, 0.2
  %v596 = vmul.f32 %v554, 0.2
  %v597 = vmul.f32 %v557, 0.2
  %v598 = vmul.f32 %v562, 0.2
  %v599 = vmul.f32 %v565, 0.2
  %v600 = vsel %vm568, %v506, %v584
  %v601 = vsel %vm569, %v509, %v585
  %v602 = vsel %vm570, %v514, %v586
  %v603 = vsel %vm571, %v517, %v587
  %v604 = vsel %vm572, %v522, %v588
  %v605 = vsel %vm573, %v525, %v589
  %v606 = vsel %vm574, %v530, %v590
  %v607 = vsel %vm575, %v533, %v591
  %v608 = vsel %vm576, %v538, %v592
  %v609 = vsel %vm577, %v541, %v593
  %v610 = vsel %vm578, %v546, %v594
  %v611 = vsel %vm579, %v549, %v595
  %v612 = vsel %vm580, %v554, %v596
  %v613 = vsel %vm581, %v557, %v597
  %v614 = vsel %vm582, %v562, %v598
  %v615 = vsel %vm583, %v565, %v599
  %616 = vst [vmem:[%s3] sm:$0xff] %v600
  %617 = vst [vmem:[%s3 + $0x8] sm:$0xff] %v601
  %618 = vst [vmem:[%s3 + $0x10] sm:$0xff] %v602
  %619 = vst [vmem:[%s3 + $0x18] sm:$0xff] %v603
  %620 = vst [vmem:[%s3 + $0x20] sm:$0xff] %v604
  %621 = vst [vmem:[%s3 + $0x28] sm:$0xff] %v605
  %622 = vst [vmem:[%s3 + $0x30] sm:$0xff] %v606
  %623 = vst [vmem:[%s3 + $0x38] sm:$0xff] %v607
  %624 = vst [vmem:[%s3 + $0x40] sm:$0xff] %v608
  %625 = vst [vmem:[%s3 + $0x48] sm:$0xff] %v609
  %626 = vst [vmem:[%s3 + $0x50] sm:$0xff] %v610
  %627 = vst [vmem:[%s3 + $0x58] sm:$0xff] %v611
  %628 = vst [vmem:[%s3 + $0x60] sm:$0xff] %v612
  %629 = vst [vmem:[%s3 + $0x68] sm:$0xff] %v613
  %630 = vst [vmem:[%s3 + $0x70] sm:$0xff] %v614
  %631 = vst [vmem:[%s3 + $0x78] sm:$0xff] %v615
  // Predicated region
  $region14: #{generator_forward.13} parent=0 // pred_check
    _
  $region15: #{generator_forward.13} parent=0 // pred_check_branch
    %633 = sbr.rel (0) target = $region17
  $region16: #{generator_forward.13} parent=0 // pred_region
    _
  $region17: #{generator_forward.13} parent=0 // pred_fallthru
    _
  // Predicated region
  $region18: #{generator_forward.13} parent=0 // pred_check
    _
  $region19: #{generator_forward.13} parent=0 // pred_check_branch
    %635 = sbr.rel (0) target = $region21
  $region20: #{generator_forward.13} parent=0 // pred_region
    _
  $region21: #{generator_forward.13} parent=0 // pred_fallthru
    _

// kernel: generator_forward.14
$region0: #{generator_forward.14}
  #allocation0 [shape = 'u32[]', space=smem, size = 0x4, offset = 0x4, fixed_abs, tag = 'smem constant byte address 0x4 - core index']
  #allocation1 [shape = 'u32[144,128]{1,0:T(1,128)}', space=vmem, size = 0x12000, scoped, tag = 'internal scratch']
  %s0 = inlined_call_operand.vmem [shape: bf16[128,640], index: 0, kind: input, shape index: {}]
  %s1 = inlined_call_operand.vmem [shape: bf16[640,128], index: 1, kind: input, shape index: {}]
  %s2 = inlined_call_operand.vmem [shape: f32[1,128], index: 2, kind: input, shape index: {}]
  %s3 = inlined_call_operand.vmem [shape: f32[128,128], index: 3, kind: output, shape index: {}]
  %s4 = sld [smem:[#allocation0]]
  $region22: #{generator_forward.14} parent=0
    _
  %s6 = ssub.s32 1, %s4
  %s7 = scalar_select 0, %s6, %s4
  // Predicated region
  $region2: #{generator_forward.14} parent=0 // pred_check
    _
  $region3: #{generator_forward.14} parent=0 // pred_check_branch
    %9 = sbr.rel (0) target = $region5
  $region4: #{generator_forward.14} parent=0 // pred_region
    _
  $region5: #{generator_forward.14} parent=0 // pred_fallthru
    _
  // Predicated region
  $region6: #{generator_forward.14} parent=0 // pred_check
    _
  $region7: #{generator_forward.14} parent=0 // pred_check_branch
    %11 = sbr.rel (0) target = $region9
  $region8: #{generator_forward.14} parent=0 // pred_region
    _
  $region9: #{generator_forward.14} parent=0 // pred_fallthru
    _
  // Predicated region
  $region10: #{generator_forward.14} parent=0 // pred_check
    _
  $region11: #{generator_forward.14} parent=0 // pred_check_branch
    %13 = sbr.rel (0) target = $region13
  $region12: #{generator_forward.14} parent=0 // pred_region
    _
  $region13: #{generator_forward.14} parent=0 // pred_fallthru
    _
  %v15 = vld [vmem:[%s0] sm:$0xff]
  %v16 = vld [vmem:[%s0 + $0x8] sm:$0xff]
  %v17 = vld [vmem:[%s0 + $0x10] sm:$0xf]
  %v18 = vld [vmem:[%s0 + $0x14] sm:$0xff]
  %v19 = vld [vmem:[%s0 + $0x1c] sm:$0xff]
  %v20 = vld [vmem:[%s0 + $0x24] sm:$0xf]
  %v21 = vld [vmem:[%s0 + $0x28] sm:$0xff]
  %v22 = vld [vmem:[%s0 + $0x30] sm:$0xff]
  %v23 = vld [vmem:[%s0 + $0x38] sm:$0xf]
  %v24 = vld [vmem:[%s0 + $0x3c] sm:$0xff]
  %v25 = vld [vmem:[%s0 + $0x44] sm:$0xff]
  %v26 = vld [vmem:[%s0 + $0x4c] sm:$0xf]
  %v27 = vld [vmem:[%s0 + $0x50] sm:$0xff]
  %v28 = vld [vmem:[%s0 + $0x58] sm:$0xff]
  %v29 = vld [vmem:[%s0 + $0x60] sm:$0xf]
  %v30 = vld [vmem:[%s0 + $0x64] sm:$0xff]
  %v31 = vld [vmem:[%s0 + $0x6c] sm:$0xff]
  %v32 = vld [vmem:[%s0 + $0x74] sm:$0xf]
  %v33 = vld [vmem:[%s0 + $0x78] sm:$0xff]
  %v34 = vld [vmem:[%s0 + $0x80] sm:$0xff]
  %v35 = vld [vmem:[%s0 + $0x88] sm:$0xf]
  %v36 = vld [vmem:[%s0 + $0x8c] sm:$0xff]
  %v37 = vld [vmem:[%s0 + $0x94] sm:$0xff]
  %v38 = vld [vmem:[%s0 + $0x9c] sm:$0xf]
  %v39 = vld [vmem:[%s0 + $0xa0] sm:$0xff]
  %v40 = vld [vmem:[%s0 + $0xa8] sm:$0xff]
  %v41 = vld [vmem:[%s0 + $0xb0] sm:$0xf]
  %v42 = vld [vmem:[%s0 + $0xb4] sm:$0xff]
  %v43 = vld [vmem:[%s0 + $0xbc] sm:$0xff]
  %v44 = vld [vmem:[%s0 + $0xc4] sm:$0xf]
  %v45 = vld [vmem:[%s0 + $0xc8] sm:$0xff]
  %v46 = vld [vmem:[%s0 + $0xd0] sm:$0xff]
  %v47 = vld [vmem:[%s0 + $0xd8] sm:$0xf]
  %v48 = vld [vmem:[%s0 + $0xdc] sm:$0xff]
  %v49 = vld [vmem:[%s0 + $0xe4] sm:$0xff]
  %v50 = vld [vmem:[%s0 + $0xec] sm:$0xf]
  %v51 = vld [vmem:[%s0 + $0xf0] sm:$0xff]
  %v52 = vld [vmem:[%s0 + $0xf8] sm:$0xff]
  %v53 = vld [vmem:[%s0 + $0x100] sm:$0xf]
  %v54 = vld [vmem:[%s0 + $0x104] sm:$0xff]
  %v55 = vld [vmem:[%s0 + $0x10c] sm:$0xff]
  %v56 = vld [vmem:[%s0 + $0x114] sm:$0xf]
  %v57 = vld [vmem:[%s0 + $0x118] sm:$0xff]
  %v58 = vld [vmem:[%s0 + $0x120] sm:$0xff]
  %v59 = vld [vmem:[%s0 + $0x128] sm:$0xf]
  %v60 = vld [vmem:[%s0 + $0x12c] sm:$0xff]
  %v61 = vld [vmem:[%s0 + $0x134] sm:$0xff]
  %v62 = vld [vmem:[%s0 + $0x13c] sm:$0xf]
  %v63 = vld [vmem:[%s1] sm:$0xf]
  %v64 = vld [vmem:[%s1 + $0x4] sm:$0xf]
  %v65 = vld [vmem:[%s1 + $0x8] sm:$0xf]
  %v66 = vld [vmem:[%s1 + $0xc] sm:$0xf]
  %v67 = vld [vmem:[%s1 + $0x10] sm:$0xf]
  %v68 = vld [vmem:[%s1 + $0x14] sm:$0xf]
  %v69 = vld [vmem:[%s1 + $0x18] sm:$0xf]
  %v70 = vld [vmem:[%s1 + $0x1c] sm:$0xf]
  %v71 = vld [vmem:[%s1 + $0x20] sm:$0xf]
  %v72 = vld [vmem:[%s1 + $0x24] sm:$0xf]
  %v73 = vld [vmem:[%s1 + $0x28] sm:$0xf]
  %v74 = vld [vmem:[%s1 + $0x2c] sm:$0xf]
  %v75 = vld [vmem:[%s1 + $0x30] sm:$0xf]
  %v76 = vld [vmem:[%s1 + $0x34] sm:$0xf]
  %v77 = vld [vmem:[%s1 + $0x38] sm:$0xf]
  %v78 = vld [vmem:[%s1 + $0x3c] sm:$0xf]
  %v79 = vld [vmem:[%s1 + $0x40] sm:$0xf]
  %v80 = vld [vmem:[%s1 + $0x44] sm:$0xf]
  %v81 = vld [vmem:[%s1 + $0x48] sm:$0xf]
  %v82 = vld [vmem:[%s1 + $0x4c] sm:$0xf]
  %v83 = vld [vmem:[%s1 + $0x50] sm:$0xf]
  %v84 = vld [vmem:[%s1 + $0x54] sm:$0xf]
  %v85 = vld [vmem:[%s1 + $0x58] sm:$0xf]
  %v86 = vld [vmem:[%s1 + $0x5c] sm:$0xf]
  %v87 = vld [vmem:[%s1 + $0x60] sm:$0xf]
  %v88 = vld [vmem:[%s1 + $0x64] sm:$0xf]
  %v89 = vld [vmem:[%s1 + $0x68] sm:$0xf]
  %v90 = vld [vmem:[%s1 + $0x6c] sm:$0xf]
  %v91 = vld [vmem:[%s1 + $0x70] sm:$0xf]
  %v92 = vld [vmem:[%s1 + $0x74] sm:$0xf]
  %v93 = vld [vmem:[%s1 + $0x78] sm:$0xf]
  %v94 = vld [vmem:[%s1 + $0x7c] sm:$0xf]
  %v95 = vld [vmem:[%s1 + $0x80] sm:$0xf]
  %v96 = vld [vmem:[%s1 + $0x84] sm:$0xf]
  %v97 = vld [vmem:[%s1 + $0x88] sm:$0xf]
  %v98 = vld [vmem:[%s1 + $0x8c] sm:$0xf]
  %v99 = vld [vmem:[%s1 + $0x90] sm:$0xf]
  %v100 = vld [vmem:[%s1 + $0x94] sm:$0xf]
  %v101 = vld [vmem:[%s1 + $0x98] sm:$0xf]
  %v102 = vld [vmem:[%s1 + $0x9c] sm:$0xf]
  %v103 = vld [vmem:[%s1 + $0xa0] sm:$0xf]
  %v104 = vld [vmem:[%s1 + $0xa4] sm:$0xf]
  %v105 = vld [vmem:[%s1 + $0xa8] sm:$0xf]
  %v106 = vld [vmem:[%s1 + $0xac] sm:$0xf]
  %v107 = vld [vmem:[%s1 + $0xb0] sm:$0xf]
  %v108 = vld [vmem:[%s1 + $0xb4] sm:$0xf]
  %v109 = vld [vmem:[%s1 + $0xb8] sm:$0xf]
  %v110 = vld [vmem:[%s1 + $0xbc] sm:$0xf]
  %v111 = vld [vmem:[%s1 + $0xc0] sm:$0xf]
  %v112 = vld [vmem:[%s1 + $0xc4] sm:$0xf]
  %v113 = vld [vmem:[%s1 + $0xc8] sm:$0xf]
  %v114 = vld [vmem:[%s1 + $0xcc] sm:$0xf]
  %v115 = vld [vmem:[%s1 + $0xd0] sm:$0xf]
  %v116 = vld [vmem:[%s1 + $0xd4] sm:$0xf]
  %v117 = vld [vmem:[%s1 + $0xd8] sm:$0xf]
  %v118 = vld [vmem:[%s1 + $0xdc] sm:$0xf]
  %v119 = vld [vmem:[%s1 + $0xe0] sm:$0xf]
  %v120 = vld [vmem:[%s1 + $0xe4] sm:$0xf]
  %v121 = vld [vmem:[%s1 + $0xe8] sm:$0xf]
  %v122 = vld [vmem:[%s1 + $0xec] sm:$0xf]
  %v123 = vld [vmem:[%s1 + $0xf0] sm:$0xf]
  %v124 = vld [vmem:[%s1 + $0xf4] sm:$0xf]
  %v125 = vld [vmem:[%s1 + $0xf8] sm:$0xf]
  %v126 = vld [vmem:[%s1 + $0xfc] sm:$0xf]
  %v127 = vld [vmem:[%s1 + $0x100] sm:$0xf]
  %v128 = vld [vmem:[%s1 + $0x104] sm:$0xf]
  %v129 = vld [vmem:[%s1 + $0x108] sm:$0xf]
  %v130 = vld [vmem:[%s1 + $0x10c] sm:$0xf]
  %v131 = vld [vmem:[%s1 + $0x110] sm:$0xf]
  %v132 = vld [vmem:[%s1 + $0x114] sm:$0xf]
  %v133 = vld [vmem:[%s1 + $0x118] sm:$0xf]
  %v134 = vld [vmem:[%s1 + $0x11c] sm:$0xf]
  %v135 = vld [vmem:[%s1 + $0x120] sm:$0xf]
  %v136 = vld [vmem:[%s1 + $0x124] sm:$0xf]
  %v137 = vld [vmem:[%s1 + $0x128] sm:$0xf]
  %v138 = vld [vmem:[%s1 + $0x12c] sm:$0xf]
  %v139 = vld [vmem:[%s1 + $0x130] sm:$0xf]
  %v140 = vld [vmem:[%s1 + $0x134] sm:$0xf]
  %v141 = vld [vmem:[%s1 + $0x138] sm:$0xf]
  %v142 = vld [vmem:[%s1 + $0x13c] sm:$0xf]
  %v143 = vld [vmem:[%s2] sm:$0x1]
  %v145 = vlaneseq
  %v146 = vshrl.u32 %v145, 7
  %v147 = vsub.s32 0, %v146
  %v148 = vrot.slane %v143, %v147
  %v198 = vunpack.c.l.b16 %v15
  %v199 = vunpack.c.h.b16 %v15
  %v200 = vunpack.c.l.b16 %v16
  %v201 = vunpack.c.h.b16 %v16
  %v202 = vunpack.c.l.b16 %v17
  %v203 = vunpack.c.l.b16 %v18
  %v204 = vunpack.c.h.b16 %v18
  %v205 = vunpack.c.l.b16 %v19
  %v206 = vunpack.c.h.b16 %v19
  %v207 = vunpack.c.l.b16 %v20
  %v208 = vunpack.c.l.b16 %v21
  %v209 = vunpack.c.h.b16 %v21
  %v210 = vunpack.c.l.b16 %v22
  %v211 = vunpack.c.h.b16 %v22
  %v212 = vunpack.c.l.b16 %v23
  %v213 = vunpack.c.l.b16 %v24
  %v214 = vunpack.c.h.b16 %v24
  %v215 = vunpack.c.l.b16 %v25
  %v216 = vunpack.c.h.b16 %v25
  %v217 = vunpack.c.l.b16 %v26
  %v218 = vunpack.c.l.b16 %v27
  %v219 = vunpack.c.h.b16 %v27
  %v220 = vunpack.c.l.b16 %v28
  %v221 = vunpack.c.h.b16 %v28
  %v222 = vunpack.c.l.b16 %v29
  %v223 = vunpack.c.l.b16 %v30
  %v224 = vunpack.c.h.b16 %v30
  %v225 = vunpack.c.l.b16 %v31
  %v226 = vunpack.c.h.b16 %v31
  %v227 = vunpack.c.l.b16 %v32
  %v228 = vunpack.c.l.b16 %v33
  %v229 = vunpack.c.h.b16 %v33
  %v230 = vunpack.c.l.b16 %v34
  %v231 = vunpack.c.h.b16 %v34
  %v232 = vunpack.c.l.b16 %v35
  %v233 = vunpack.c.l.b16 %v36
  %v234 = vunpack.c.h.b16 %v36
  %v235 = vunpack.c.l.b16 %v37
  %v236 = vunpack.c.h.b16 %v37
  %v237 = vunpack.c.l.b16 %v38
  %v238 = vunpack.c.l.b16 %v39
  %v239 = vunpack.c.h.b16 %v39
  %v240 = vunpack.c.l.b16 %v40
  %v241 = vunpack.c.h.b16 %v40
  %v242 = vunpack.c.l.b16 %v41
  %v243 = vunpack.c.l.b16 %v42
  %v244 = vunpack.c.h.b16 %v42
  %v245 = vunpack.c.l.b16 %v43
  %v246 = vunpack.c.h.b16 %v43
  %v247 = vunpack.c.l.b16 %v44
  %v248 = vunpack.c.l.b16 %v45
  %v249 = vunpack.c.h.b16 %v45
  %v250 = vunpack.c.l.b16 %v46
  %v251 = vunpack.c.h.b16 %v46
  %v252 = vunpack.c.l.b16 %v47
  %v253 = vunpack.c.l.b16 %v48
  %v254 = vunpack.c.h.b16 %v48
  %v255 = vunpack.c.l.b16 %v49
  %v256 = vunpack.c.h.b16 %v49
  %v257 = vunpack.c.l.b16 %v50
  %v258 = vunpack.c.l.b16 %v51
  %v259 = vunpack.c.h.b16 %v51
  %v260 = vunpack.c.l.b16 %v52
  %v261 = vunpack.c.h.b16 %v52
  %v262 = vunpack.c.l.b16 %v53
  %v263 = vunpack.c.l.b16 %v54
  %v264 = vunpack.c.h.b16 %v54
  %v265 = vunpack.c.l.b16 %v55
  %v266 = vunpack.c.h.b16 %v55
  %v267 = vunpack.c.l.b16 %v56
  %v268 = vunpack.c.l.b16 %v57
  %v269 = vunpack.c.h.b16 %v57
  %v270 = vunpack.c.l.b16 %v58
  %v271 = vunpack.c.h.b16 %v58
  %v272 = vunpack.c.l.b16 %v59
  %v273 = vunpack.c.l.b16 %v60
  %v274 = vunpack.c.h.b16 %v60
  %v275 = vunpack.c.l.b16 %v61
  %v276 = vunpack.c.h.b16 %v61
  %v277 = vunpack.c.l.b16 %v62
  %v278 = vpack.c.b16 %v203, %v198
  %v279 = vpack.c.b16 %v204, %v199
  %v280 = vpack.c.b16 %v205, %v200
  %v281 = vpack.c.b16 %v206, %v201
  %v282 = vpack.c.b16 %v207, %v202
  %v283 = vpack.c.b16 %v213, %v208
  %v284 = vpack.c.b16 %v214, %v209
  %v285 = vpack.c.b16 %v215, %v210
  %v286 = vpack.c.b16 %v216, %v211
  %v287 = vpack.c.b16 %v217, %v212
  %v288 = vpack.c.b16 %v223, %v218
  %v289 = vpack.c.b16 %v224, %v219
  %v290 = vpack.c.b16 %v225, %v220
  %v291 = vpack.c.b16 %v226, %v221
  %v292 = vpack.c.b16 %v227, %v222
  %v293 = vpack.c.b16 %v233, %v228
  %v294 = vpack.c.b16 %v234, %v229
  %v295 = vpack.c.b16 %v235, %v230
  %v296 = vpack.c.b16 %v236, %v231
  %v297 = vpack.c.b16 %v237, %v232
  %v298 = vpack.c.b16 %v243, %v238
  %v299 = vpack.c.b16 %v244, %v239
  %v300 = vpack.c.b16 %v245, %v240
  %v301 = vpack.c.b16 %v246, %v241
  %v302 = vpack.c.b16 %v247, %v242
  %v303 = vpack.c.b16 %v253, %v248
  %v304 = vpack.c.b16 %v254, %v249
  %v305 = vpack.c.b16 %v255, %v250
  %v306 = vpack.c.b16 %v256, %v251
  %v307 = vpack.c.b16 %v257, %v252
  %v308 = vpack.c.b16 %v263, %v258
  %v309 = vpack.c.b16 %v264, %v259
  %v310 = vpack.c.b16 %v265, %v260
  %v311 = vpack.c.b16 %v266, %v261
  %v312 = vpack.c.b16 %v267, %v262
  %v313 = vpack.c.b16 %v273, %v268
  %v314 = vpack.c.b16 %v274, %v269
  %v315 = vpack.c.b16 %v275, %v270
  %v316 = vpack.c.b16 %v276, %v271
  %v317 = vpack.c.b16 %v277, %v272
  %v438 = vunpack.c.l.b16 %v63
  %v439 = vunpack.c.l.b16 %v64
  %v440 = vunpack.c.l.b16 %v65
  %v441 = vunpack.c.l.b16 %v66
  %v442 = vunpack.c.l.b16 %v67
  %v443 = vunpack.c.l.b16 %v68
  %v444 = vunpack.c.l.b16 %v69
  %v445 = vunpack.c.l.b16 %v70
  %v446 = vunpack.c.l.b16 %v71
  %v447 = vunpack.c.l.b16 %v72
  %v448 = vunpack.c.l.b16 %v73
  %v449 = vunpack.c.l.b16 %v74
  %v450 = vunpack.c.l.b16 %v75
  %v451 = vunpack.c.l.b16 %v76
  %v452 = vunpack.c.l.b16 %v77
  %v453 = vunpack.c.l.b16 %v78
  %v454 = vunpack.c.l.b16 %v79
  %v455 = vunpack.c.l.b16 %v80
  %v456 = vunpack.c.l.b16 %v81
  %v457 = vunpack.c.l.b16 %v82
  %v458 = vunpack.c.l.b16 %v83
  %v459 = vunpack.c.l.b16 %v84
  %v460 = vunpack.c.l.b16 %v85
  %v461 = vunpack.c.l.b16 %v86
  %v462 = vunpack.c.l.b16 %v87
  %v463 = vunpack.c.l.b16 %v88
  %v464 = vunpack.c.l.b16 %v89
  %v465 = vunpack.c.l.b16 %v90
  %v466 = vunpack.c.l.b16 %v91
  %v467 = vunpack.c.l.b16 %v92
  %v468 = vunpack.c.l.b16 %v93
  %v469 = vunpack.c.l.b16 %v94
  %v470 = vunpack.c.l.b16 %v95
  %v471 = vunpack.c.l.b16 %v96
  %v472 = vunpack.c.l.b16 %v97
  %v473 = vunpack.c.l.b16 %v98
  %v474 = vunpack.c.l.b16 %v99
  %v475 = vunpack.c.l.b16 %v100
  %v476 = vunpack.c.l.b16 %v101
  %v477 = vunpack.c.l.b16 %v102
  %v478 = vunpack.c.l.b16 %v103
  %v479 = vunpack.c.l.b16 %v104
  %v480 = vunpack.c.l.b16 %v105
  %v481 = vunpack.c.l.b16 %v106
  %v482 = vunpack.c.l.b16 %v107
  %v483 = vunpack.c.l.b16 %v108
  %v484 = vunpack.c.l.b16 %v109
  %v485 = vunpack.c.l.b16 %v110
  %v486 = vunpack.c.l.b16 %v111
  %v487 = vunpack.c.l.b16 %v112
  %v488 = vunpack.c.l.b16 %v113
  %v489 = vunpack.c.l.b16 %v114
  %v490 = vunpack.c.l.b16 %v115
  %v491 = vunpack.c.l.b16 %v116
  %v492 = vunpack.c.l.b16 %v117
  %v493 = vunpack.c.l.b16 %v118
  %v494 = vunpack.c.l.b16 %v119
  %v495 = vunpack.c.l.b16 %v120
  %v496 = vunpack.c.l.b16 %v121
  %v497 = vunpack.c.l.b16 %v122
  %v498 = vunpack.c.l.b16 %v123
  %v499 = vunpack.c.l.b16 %v124
  %v500 = vunpack.c.l.b16 %v125
  %v501 = vunpack.c.l.b16 %v126
  %v502 = vunpack.c.l.b16 %v127
  %v503 = vunpack.c.l.b16 %v128
  %v504 = vunpack.c.l.b16 %v129
  %v505 = vunpack.c.l.b16 %v130
  %v506 = vunpack.c.l.b16 %v131
  %v507 = vunpack.c.l.b16 %v132
  %v508 = vunpack.c.l.b16 %v133
  %v509 = vunpack.c.l.b16 %v134
  %v510 = vunpack.c.l.b16 %v135
  %v511 = vunpack.c.l.b16 %v136
  %v512 = vunpack.c.l.b16 %v137
  %v513 = vunpack.c.l.b16 %v138
  %v514 = vunpack.c.l.b16 %v139
  %v515 = vunpack.c.l.b16 %v140
  %v516 = vunpack.c.l.b16 %v141
  %v517 = vunpack.c.l.b16 %v142
  %v518 = vpack.c.b16 %v439, %v438
  %v519 = vpack.c.b16 %v441, %v440
  %v520 = vpack.c.b16 %v443, %v442
  %v521 = vpack.c.b16 %v445, %v444
  %v522 = vpack.c.b16 %v447, %v446
  %v523 = vpack.c.b16 %v449, %v448
  %v524 = vpack.c.b16 %v451, %v450
  %v525 = vpack.c.b16 %v453, %v452
  %v526 = vpack.c.b16 %v455, %v454
  %v527 = vpack.c.b16 %v457, %v456
  %v528 = vpack.c.b16 %v459, %v458
  %v529 = vpack.c.b16 %v461, %v460
  %v530 = vpack.c.b16 %v463, %v462
  %v531 = vpack.c.b16 %v465, %v464
  %v532 = vpack.c.b16 %v467, %v466
  %v533 = vpack.c.b16 %v469, %v468
  %v534 = vpack.c.b16 %v471, %v470
  %v535 = vpack.c.b16 %v473, %v472
  %v536 = vpack.c.b16 %v475, %v474
  %v537 = vpack.c.b16 %v477, %v476
  %v538 = vpack.c.b16 %v479, %v478
  %v539 = vpack.c.b16 %v481, %v480
  %v540 = vpack.c.b16 %v483, %v482
  %v541 = vpack.c.b16 %v485, %v484
  %v542 = vpack.c.b16 %v487, %v486
  %v543 = vpack.c.b16 %v489, %v488
  %v544 = vpack.c.b16 %v491, %v490
  %v545 = vpack.c.b16 %v493, %v492
  %v546 = vpack.c.b16 %v495, %v494
  %v547 = vpack.c.b16 %v497, %v496
  %v548 = vpack.c.b16 %v499, %v498
  %v549 = vpack.c.b16 %v501, %v500
  %v550 = vpack.c.b16 %v503, %v502
  %v551 = vpack.c.b16 %v505, %v504
  %v552 = vpack.c.b16 %v507, %v506
  %v553 = vpack.c.b16 %v509, %v508
  %v554 = vpack.c.b16 %v511, %v510
  %v555 = vpack.c.b16 %v513, %v512
  %v556 = vpack.c.b16 %v515, %v514
  %v557 = vpack.c.b16 %v517, %v516
  %598 = vmatprep.subr.bf16.mxu0 0
  %599 = vmatpush1.bf16.msra.mxu0 %v518
  %600 = vmatprep.subr.bf16.mxu0 0
  %601 = vmatpush1.bf16.msra.mxu0 %v519
  %602 = vmatprep.subr.bf16.mxu0 0
  %603 = vmatpush1.bf16.msra.mxu0 %v520
  %604 = vmatprep.subr.bf16.mxu0 0
  %605 = vmatpush1.bf16.msra.mxu0 %v521
  %606 = vmatprep.subr.bf16.mxu0 0
  %607 = vmatpush1.bf16.msra.mxu0 %v522
  %608 = vmatprep.subr.bf16.mxu0 0
  %609 = vmatpush1.bf16.msra.mxu0 %v523
  %610 = vmatprep.subr.bf16.mxu0 0
  %611 = vmatpush1.bf16.msra.mxu0 %v524
  %612 = vmatprep.subr.bf16.mxu0 0
  %613 = vmatpush1.bf16.msra.mxu0 %v525
  %614 = vmatprep.subr.bf16.mxu0 0
  %615 = vmatpush1.bf16.msra.mxu0 %v526
  %616 = vmatprep.subr.bf16.mxu0 0
  %617 = vmatpush1.bf16.msra.mxu0 %v527
  %618 = vmatprep.subr.bf16.mxu0 0
  %619 = vmatpush1.bf16.msra.mxu0 %v528
  %620 = vmatprep.subr.bf16.mxu0 0
  %621 = vmatpush1.bf16.msra.mxu0 %v529
  %622 = vmatprep.subr.bf16.mxu0 0
  %623 = vmatpush1.bf16.msra.mxu0 %v530
  %624 = vmatprep.subr.bf16.mxu0 0
  %625 = vmatpush1.bf16.msra.mxu0 %v531
  %626 = vmatprep.subr.bf16.mxu0 0
  %627 = vmatpush1.bf16.msra.mxu0 %v532
  %628 = vmatprep.subr.bf16.mxu0 0
  %629 = vmatpush1.bf16.msra.mxu0 %v533
  %630 = vmatprep.mubr.bf16.mxu0 %v279
  %631 = vmatmul.mubr.bf16.gmra.mrb[0].mxu0 %v278
  %v632 = vpop.f32.mrb[0].mxu0
  %v633 = vadd.f32 %v148, %v632
  %v634 = vpop.f32.mrb[0].mxu0
  %v635 = vpop.f32.mrb[0].mxu0
  %v636 = vadd.f32 %v148, %v635
  %v637 = vpop.f32.mrb[0].mxu0
  %638 = vmatprep.mubr.bf16.mxu0 %v284
  %639 = vmatmul.mubr.bf16.gmra.mrb[0].mxu0 %v283
  %v640 = vpop.f32.mrb[0].mxu0
  %v641 = vadd.f32 %v148, %v640
  %v642 = vpop.f32.mrb[0].mxu0
  %v643 = vpop.f32.mrb[0].mxu0
  %v644 = vadd.f32 %v148, %v643
  %v645 = vpop.f32.mrb[0].mxu0
  %646 = vmatprep.mubr.bf16.mxu0 %v289
  %647 = vmatmul.mubr.bf16.gmra.mrb[0].mxu0 %v288
  %v648 = vpop.f32.mrb[0].mxu0
  %v649 = vadd.f32 %v148, %v648
  %v650 = vpop.f32.mrb[0].mxu0
  %v651 = vpop.f32.mrb[0].mxu0
  %v652 = vadd.f32 %v148, %v651
  %v653 = vpop.f32.mrb[0].mxu0
  %654 = vmatprep.mubr.bf16.mxu0 %v294
  %655 = vmatmul.mubr.bf16.gmra.mrb[0].mxu0 %v293
  %v656 = vpop.f32.mrb[0].mxu0
  %v657 = vadd.f32 %v148, %v656
  %v658 = vpop.f32.mrb[0].mxu0
  %v659 = vpop.f32.mrb[0].mxu0
  %v660 = vadd.f32 %v148, %v659
  %v661 = vpop.f32.mrb[0].mxu0
  %662 = vmatprep.mubr.bf16.mxu0 %v299
  %663 = vmatmul.mubr.bf16.gmra.mrb[0].mxu0 %v298
  %v664 = vpop.f32.mrb[0].mxu0
  %v665 = vadd.f32 %v148, %v664
  %v666 = vpop.f32.mrb[0].mxu0
  %v667 = vpop.f32.mrb[0].mxu0
  %v668 = vadd.f32 %v148, %v667
  %v669 = vpop.f32.mrb[0].mxu0
  %670 = vmatprep.mubr.bf16.mxu0 %v304
  %671 = vmatmul.mubr.bf16.gmra.mrb[0].mxu0 %v303
  %v672 = vpop.f32.mrb[0].mxu0
  %v673 = vadd.f32 %v148, %v672
  %v674 = vpop.f32.mrb[0].mxu0
  %v675 = vpop.f32.mrb[0].mxu0
  %v676 = vadd.f32 %v148, %v675
  %v677 = vpop.f32.mrb[0].mxu0
  %678 = vmatprep.mubr.bf16.mxu0 %v309
  %679 = vmatmul.mubr.bf16.gmra.mrb[0].mxu0 %v308
  %v680 = vpop.f32.mrb[0].mxu0
  %v681 = vadd.f32 %v148, %v680
  %v682 = vpop.f32.mrb[0].mxu0
  %v683 = vpop.f32.mrb[0].mxu0
  %v684 = vadd.f32 %v148, %v683
  %v685 = vpop.f32.mrb[0].mxu0
  %686 = vmatprep.mubr.bf16.mxu0 %v314
  %687 = vmatmul.mubr.bf16.gmra.mrb[0].mxu0 %v313
  %v688 = vpop.f32.mrb[0].mxu0
  %v689 = vadd.f32 %v148, %v688
  %v690 = vpop.f32.mrb[0].mxu0
  %v691 = vpop.f32.mrb[0].mxu0
  %v692 = vadd.f32 %v148, %v691
  %v693 = vpop.f32.mrb[0].mxu0
  %694 = vdwg.mxu0
  %695 = vmatprep.subr.bf16.mxu0 0
  %696 = vmatpush1.bf16.msra.mxu0 %v534
  %697 = vmatprep.subr.bf16.mxu0 0
  %698 = vmatpush1.bf16.msra.mxu0 %v535
  %699 = vmatprep.subr.bf16.mxu0 0
  %700 = vmatpush1.bf16.msra.mxu0 %v536
  %701 = vmatprep.subr.bf16.mxu0 0
  %702 = vmatpush1.bf16.msra.mxu0 %v537
  %703 = vmatprep.subr.bf16.mxu0 0
  %704 = vmatpush1.bf16.msra.mxu0 %v538
  %705 = vmatprep.subr.bf16.mxu0 0
  %706 = vmatpush1.bf16.msra.mxu0 %v539
  %707 = vmatprep.subr.bf16.mxu0 0
  %708 = vmatpush1.bf16.msra.mxu0 %v540
  %709 = vmatprep.subr.bf16.mxu0 0
  %710 = vmatpush1.bf16.msra.mxu0 %v541
  %711 = vmatprep.subr.bf16.mxu0 0
  %712 = vmatpush1.bf16.msra.mxu0 %v542
  %713 = vmatprep.subr.bf16.mxu0 0
  %714 = vmatpush1.bf16.msra.mxu0 %v543
  %715 = vmatprep.subr.bf16.mxu0 0
  %716 = vmatpush1.bf16.msra.mxu0 %v544
  %717 = vmatprep.subr.bf16.mxu0 0
  %718 = vmatpush1.bf16.msra.mxu0 %v545
  %719 = vmatprep.subr.bf16.mxu0 0
  %720 = vmatpush1.bf16.msra.mxu0 %v546
  %721 = vmatprep.subr.bf16.mxu0 0
  %722 = vmatpush1.bf16.msra.mxu0 %v547
  %723 = vmatprep.subr.bf16.mxu0 0
  %724 = vmatpush1.bf16.msra.mxu0 %v548
  %725 = vmatprep.subr.bf16.mxu0 0
  %726 = vmatpush1.bf16.msra.mxu0 %v549
  %727 = vmatprep.mubr.bf16.mxu0 %v281
  %728 = vmatmul.mubr.bf16.gmra.mrb[0].mxu0 %v280
  %v729 = vpop.f32.mrb[0].mxu0
  %v730 = vadd.f32 %v633, %v729
  %v731 = vpop.f32.mrb[0].mxu0
  %v732 = vpop.f32.mrb[0].mxu0
  %v733 = vadd.f32 %v636, %v732
  %v734 = vpop.f32.mrb[0].mxu0
  %735 = vmatprep.mubr.bf16.mxu0 %v286
  %736 = vmatmul.mubr.bf16.gmra.mrb[0].mxu0 %v285
  %v737 = vpop.f32.mrb[0].mxu0
  %v738 = vadd.f32 %v641, %v737
  %v739 = vpop.f32.mrb[0].mxu0
  %v740 = vpop.f32.mrb[0].mxu0
  %v741 = vadd.f32 %v644, %v740
  %v742 = vpop.f32.mrb[0].mxu0
  %743 = vmatprep.mubr.bf16.mxu0 %v291
  %744 = vmatmul.mubr.bf16.gmra.mrb[0].mxu0 %v290
  %v745 = vpop.f32.mrb[0].mxu0
  %v746 = vadd.f32 %v649, %v745
  %v747 = vpop.f32.mrb[0].mxu0
  %v748 = vpop.f32.mrb[0].mxu0
  %v749 = vadd.f32 %v652, %v748
  %v750 = vpop.f32.mrb[0].mxu0
  %751 = vmatprep.mubr.bf16.mxu0 %v296
  %752 = vmatmul.mubr.bf16.gmra.mrb[0].mxu0 %v295
  %v753 = vpop.f32.mrb[0].mxu0
  %v754 = vadd.f32 %v657, %v753
  %v755 = vpop.f32.mrb[0].mxu0
  %v756 = vpop.f32.mrb[0].mxu0
  %v757 = vadd.f32 %v660, %v756
  %v758 = vpop.f32.mrb[0].mxu0
  %759 = vmatprep.mubr.bf16.mxu0 %v301
  %760 = vmatmul.mubr.bf16.gmra.mrb[0].mxu0 %v300
  %v761 = vpop.f32.mrb[0].mxu0
  %v762 = vadd.f32 %v665, %v761
  %v763 = vpop.f32.mrb[0].mxu0
  %v764 = vpop.f32.mrb[0].mxu0
  %v765 = vadd.f32 %v668, %v764
  %v766 = vpop.f32.mrb[0].mxu0
  %767 = vmatprep.mubr.bf16.mxu0 %v306
  %768 = vmatmul.mubr.bf16.gmra.mrb[0].mxu0 %v305
  %v769 = vpop.f32.mrb[0].mxu0
  %v770 = vadd.f32 %v673, %v769
  %v771 = vpop.f32.mrb[0].mxu0
  %v772 = vpop.f32.mrb[0].mxu0
  %v773 = vadd.f32 %v676, %v772
  %v774 = vpop.f32.mrb[0].mxu0
  %775 = vmatprep.mubr.bf16.mxu0 %v311
  %776 = vmatmul.mubr.bf16.gmra.mrb[0].mxu0 %v310
  %v777 = vpop.f32.mrb[0].mxu0
  %v778 = vadd.f32 %v681, %v777
  %v779 = vpop.f32.mrb[0].mxu0
  %v780 = vpop.f32.mrb[0].mxu0
  %v781 = vadd.f32 %v684, %v780
  %v782 = vpop.f32.mrb[0].mxu0
  %783 = vmatprep.mubr.bf16.mxu0 %v316
  %784 = vmatmul.mubr.bf16.gmra.mrb[0].mxu0 %v315
  %v785 = vpop.f32.mrb[0].mxu0
  %v786 = vadd.f32 %v689, %v785
  %v787 = vpop.f32.mrb[0].mxu0
  %v788 = vpop.f32.mrb[0].mxu0
  %v789 = vadd.f32 %v692, %v788
  %v790 = vpop.f32.mrb[0].mxu0
  %791 = vdwg.mxu0
  %792 = vmatprep.subr.bf16.mxu0 0
  %793 = vmatpush1.bf16.msra.mxu0 %v550
  %794 = vmatprep.subr.bf16.mxu0 0
  %795 = vmatpush1.bf16.msra.mxu0 %v551
  %796 = vmatprep.subr.bf16.mxu0 0
  %797 = vmatpush1.bf16.msra.mxu0 %v552
  %798 = vmatprep.subr.bf16.mxu0 0
  %799 = vmatpush1.bf16.msra.mxu0 %v553
  %800 = vmatprep.subr.bf16.mxu0 0
  %801 = vmatpush1.bf16.msra.mxu0 %v554
  %802 = vmatprep.subr.bf16.mxu0 0
  %803 = vmatpush1.bf16.msra.mxu0 %v555
  %804 = vmatprep.subr.bf16.mxu0 0
  %805 = vmatpush1.bf16.msra.mxu0 %v556
  %806 = vmatprep.subr.bf16.mxu0 0
  %807 = vmatpush1.bf16.msra.mxu0 %v557
  %808 = vmatprep.subr.bf16.mxu0 0
  %809 = vmatpush1.bf16.msra.mxu0 0
  %810 = vmatprep.subr.bf16.mxu0 0
  %811 = vmatpush1.bf16.msra.mxu0 0
  %812 = vmatprep.subr.bf16.mxu0 0
  %813 = vmatpush1.bf16.msra.mxu0 0
  %814 = vmatprep.subr.bf16.mxu0 0
  %815 = vmatpush1.bf16.msra.mxu0 0
  %816 = vmatprep.subr.bf16.mxu0 0
  %817 = vmatpush1.bf16.msra.mxu0 0
  %818 = vmatprep.subr.bf16.mxu0 0
  %819 = vmatpush1.bf16.msra.mxu0 0
  %820 = vmatprep.subr.bf16.mxu0 0
  %821 = vmatpush1.bf16.msra.mxu0 0
  %822 = vmatprep.subr.bf16.mxu0 0
  %823 = vmatpush1.bf16.msra.mxu0 0
  %824 = vmatprep.mubr.bf16.mxu0 0
  %825 = vmatmul.mubr.bf16.gmra.mrb[0].mxu0 %v282
  %v826 = vpop.f32.mrb[0].mxu0
  %v827 = vadd.f32 %v730, %v826
  %v828 = vpop.f32.mrb[0].mxu0
  %v829 = vpop.f32.mrb[0].mxu0
  %v830 = vadd.f32 %v733, %v829
  %v831 = vpop.f32.mrb[0].mxu0
  %832 = vmatprep.mubr.bf16.mxu0 0
  %833 = vmatmul.mubr.bf16.gmra.mrb[0].mxu0 %v287
  %v834 = vpop.f32.mrb[0].mxu0
  %v835 = vadd.f32 %v738, %v834
  %v836 = vpop.f32.mrb[0].mxu0
  %v837 = vpop.f32.mrb[0].mxu0
  %v838 = vadd.f32 %v741, %v837
  %v839 = vpop.f32.mrb[0].mxu0
  %840 = vmatprep.mubr.bf16.mxu0 0
  %841 = vmatmul.mubr.bf16.gmra.mrb[0].mxu0 %v292
  %v842 = vpop.f32.mrb[0].mxu0
  %v843 = vadd.f32 %v746, %v842
  %v844 = vpop.f32.mrb[0].mxu0
  %v845 = vpop.f32.mrb[0].mxu0
  %v846 = vadd.f32 %v749, %v845
  %v847 = vpop.f32.mrb[0].mxu0
  %848 = vmatprep.mubr.bf16.mxu0 0
  %849 = vmatmul.mubr.bf16.gmra.mrb[0].mxu0 %v297
  %v850 = vpop.f32.mrb[0].mxu0
  %v851 = vadd.f32 %v754, %v850
  %v852 = vpop.f32.mrb[0].mxu0
  %v853 = vpop.f32.mrb[0].mxu0
  %v854 = vadd.f32 %v757, %v853
  %v855 = vpop.f32.mrb[0].mxu0
  %856 = vmatprep.mubr.bf16.mxu0 0
  %857 = vmatmul.mubr.bf16.gmra.mrb[0].mxu0 %v302
  %v858 = vpop.f32.mrb[0].mxu0
  %v859 = vadd.f32 %v762, %v858
  %v860 = vpop.f32.mrb[0].mxu0
  %v861 = vpop.f32.mrb[0].mxu0
  %v862 = vadd.f32 %v765, %v861
  %v863 = vpop.f32.mrb[0].mxu0
  %864 = vmatprep.mubr.bf16.mxu0 0
  %865 = vmatmul.mubr.bf16.gmra.mrb[0].mxu0 %v307
  %v866 = vpop.f32.mrb[0].mxu0
  %v867 = vadd.f32 %v770, %v866
  %v868 = vpop.f32.mrb[0].mxu0
  %v869 = vpop.f32.mrb[0].mxu0
  %v870 = vadd.f32 %v773, %v869
  %v871 = vpop.f32.mrb[0].mxu0
  %872 = vmatprep.mubr.bf16.mxu0 0
  %873 = vmatmul.mubr.bf16.gmra.mrb[0].mxu0 %v312
  %v874 = vpop.f32.mrb[0].mxu0
  %v875 = vadd.f32 %v778, %v874
  %v876 = vpop.f32.mrb[0].mxu0
  %v877 = vpop.f32.mrb[0].mxu0
  %v878 = vadd.f32 %v781, %v877
  %v879 = vpop.f32.mrb[0].mxu0
  %880 = vmatprep.mubr.bf16.mxu0 0
  %881 = vmatmul.mubr.bf16.gmra.mrb[0].mxu0 %v317
  %v882 = vpop.f32.mrb[0].mxu0
  %v883 = vadd.f32 %v786, %v882
  %v884 = vpop.f32.mrb[0].mxu0
  %v885 = vpop.f32.mrb[0].mxu0
  %v886 = vadd.f32 %v789, %v885
  %v887 = vpop.f32.mrb[0].mxu0
  %888 = vdwg.mxu0
  %vm889 = vcmp.gt.f32.partialorder %v827, 0.0
  %vm890 = vcmp.gt.f32.partialorder %v830, 0.0
  %vm891 = vcmp.gt.f32.partialorder %v835, 0.0
  %vm892 = vcmp.gt.f32.partialorder %v838, 0.0
  %vm893 = vcmp.gt.f32.partialorder %v843, 0.0
  %vm894 = vcmp.gt.f32.partialorder %v846, 0.0
  %vm895 = vcmp.gt.f32.partialorder %v851, 0.0
  %vm896 = vcmp.gt.f32.partialorder %v854, 0.0
  %vm897 = vcmp.gt.f32.partialorder %v859, 0.0
  %vm898 = vcmp.gt.f32.partialorder %v862, 0.0
  %vm899 = vcmp.gt.f32.partialorder %v867, 0.0
  %vm900 = vcmp.gt.f32.partialorder %v870, 0.0
  %vm901 = vcmp.gt.f32.partialorder %v875, 0.0
  %vm902 = vcmp.gt.f32.partialorder %v878, 0.0
  %vm903 = vcmp.gt.f32.partialorder %v883, 0.0
  %vm904 = vcmp.gt.f32.partialorder %v886, 0.0
  %v905 = vmul.f32 %v827, 0.2
  %v906 = vmul.f32 %v830, 0.2
  %v907 = vmul.f32 %v835, 0.2
  %v908 = vmul.f32 %v838, 0.2
  %v909 = vmul.f32 %v843, 0.2
  %v910 = vmul.f32 %v846, 0.2
  %v911 = vmul.f32 %v851, 0.2
  %v912 = vmul.f32 %v854, 0.2
  %v913 = vmul.f32 %v859, 0.2
  %v914 = vmul.f32 %v862, 0.2
  %v915 = vmul.f32 %v867, 0.2
  %v916 = vmul.f32 %v870, 0.2
  %v917 = vmul.f32 %v875, 0.2
  %v918 = vmul.f32 %v878, 0.2
  %v919 = vmul.f32 %v883, 0.2
  %v920 = vmul.f32 %v886, 0.2
  %v921 = vsel %vm889, %v827, %v905
  %v922 = vsel %vm890, %v830, %v906
  %v923 = vsel %vm891, %v835, %v907
  %v924 = vsel %vm892, %v838, %v908
  %v925 = vsel %vm893, %v843, %v909
  %v926 = vsel %vm894, %v846, %v910
  %v927 = vsel %vm895, %v851, %v911
  %v928 = vsel %vm896, %v854, %v912
  %v929 = vsel %vm897, %v859, %v913
  %v930 = vsel %vm898, %v862, %v914
  %v931 = vsel %vm899, %v867, %v915
  %v932 = vsel %vm900, %v870, %v916
  %v933 = vsel %vm901, %v875, %v917
  %v934 = vsel %vm902, %v878, %v918
  %v935 = vsel %vm903, %v883, %v919
  %v936 = vsel %vm904, %v886, %v920
  %937 = vst [vmem:[%s3] sm:$0xff] %v921
  %938 = vst [vmem:[%s3 + $0x8] sm:$0xff] %v922
  %939 = vst [vmem:[%s3 + $0x10] sm:$0xff] %v923
  %940 = vst [vmem:[%s3 + $0x18] sm:$0xff] %v924
  %941 = vst [vmem:[%s3 + $0x20] sm:$0xff] %v925
  %942 = vst [vmem:[%s3 + $0x28] sm:$0xff] %v926
  %943 = vst [vmem:[%s3 + $0x30] sm:$0xff] %v927
  %944 = vst [vmem:[%s3 + $0x38] sm:$0xff] %v928
  %945 = vst [vmem:[%s3 + $0x40] sm:$0xff] %v929
  %946 = vst [vmem:[%s3 + $0x48] sm:$0xff] %v930
  %947 = vst [vmem:[%s3 + $0x50] sm:$0xff] %v931
  %948 = vst [vmem:[%s3 + $0x58] sm:$0xff] %v932
  %949 = vst [vmem:[%s3 + $0x60] sm:$0xff] %v933
  %950 = vst [vmem:[%s3 + $0x68] sm:$0xff] %v934
  %951 = vst [vmem:[%s3 + $0x70] sm:$0xff] %v935
  %952 = vst [vmem:[%s3 + $0x78] sm:$0xff] %v936
  // Predicated region
  $region14: #{generator_forward.14} parent=0 // pred_check
    _
  $region15: #{generator_forward.14} parent=0 // pred_check_branch
    %954 = sbr.rel (0) target = $region17
  $region16: #{generator_forward.14} parent=0 // pred_region
    _
  $region17: #{generator_forward.14} parent=0 // pred_fallthru
    _
  // Predicated region
  $region18: #{generator_forward.14} parent=0 // pred_check
    _
  $region19: #{generator_forward.14} parent=0 // pred_check_branch
    %956 = sbr.rel (0) target = $region21
  $region20: #{generator_forward.14} parent=0 // pred_region
    _
  $region21: #{generator_forward.14} parent=0 // pred_fallthru
    _

// kernel: generator_forward.15
$region0: #{generator_forward.15}
  #allocation0 [shape = 'u32[]', space=smem, size = 0x4, offset = 0x4, fixed_abs, tag = 'smem constant byte address 0x4 - core index']
  #allocation1 [shape = 'u32[144,128]{1,0:T(1,128)}', space=vmem, size = 0x12000, scoped, tag = 'internal scratch']
  %s0 = inlined_call_operand.vmem [shape: bf16[128,1152], index: 0, kind: input, shape index: {}]
  %s1 = inlined_call_operand.vmem [shape: bf16[1152,128], index: 1, kind: input, shape index: {}]
  %s2 = inlined_call_operand.vmem [shape: f32[1,128], index: 2, kind: input, shape index: {}]
  %s3 = inlined_call_operand.vmem [shape: bf16[128,128], index: 3, kind: input, shape index: {}]
  %s4 = inlined_call_operand.vmem [shape: f32[128,128], index: 4, kind: output, shape index: {}]
  %s5 = sld [smem:[#allocation0]]
  $region26: #{generator_forward.15} parent=0
    _
  %s7 = ssub.s32 1, %s5
  %s8 = scalar_select 0, %s7, %s5
  // Predicated region
  $region2: #{generator_forward.15} parent=0 // pred_check
    _
  $region3: #{generator_forward.15} parent=0 // pred_check_branch
    %10 = sbr.rel (0) target = $region5
  $region4: #{generator_forward.15} parent=0 // pred_region
    _
  $region5: #{generator_forward.15} parent=0 // pred_fallthru
    _
  // Predicated region
  $region6: #{generator_forward.15} parent=0 // pred_check
    _
  $region7: #{generator_forward.15} parent=0 // pred_check_branch
    %12 = sbr.rel (0) target = $region9
  $region8: #{generator_forward.15} parent=0 // pred_region
    _
  $region9: #{generator_forward.15} parent=0 // pred_fallthru
    _
  // Predicated region
  $region10: #{generator_forward.15} parent=0 // pred_check
    _
  $region11: #{generator_forward.15} parent=0 // pred_check_branch
    %14 = sbr.rel (0) target = $region13
  $region12: #{generator_forward.15} parent=0 // pred_region
    _
  $region13: #{generator_forward.15} parent=0 // pred_fallthru
    _
  // Predicated region
  $region14: #{generator_forward.15} parent=0 // pred_check
    _
  $region15: #{generator_forward.15} parent=0 // pred_check_branch
    %16 = sbr.rel (0) target = $region17
  $region16: #{generator_forward.15} parent=0 // pred_region
    _
  $region17: #{generator_forward.15} parent=0 // pred_fallthru
    _
  %v18 = vld [vmem:[%s0] sm:$0xff]
  %v19 = vld [vmem:[%s0 + $0x8] sm:$0xff]
  %v20 = vld [vmem:[%s0 + $0x10] sm:$0xff]
  %v21 = vld [vmem:[%s0 + $0x18] sm:$0xff]
  %v22 = vld [vmem:[%s0 + $0x20] sm:$0xf]
  %v23 = vld [vmem:[%s0 + $0x24] sm:$0xff]
  %v24 = vld [vmem:[%s0 + $0x2c] sm:$0xff]
  %v25 = vld [vmem:[%s0 + $0x34] sm:$0xff]
  %v26 = vld [vmem:[%s0 + $0x3c] sm:$0xff]
  %v27 = vld [vmem:[%s0 + $0x44] sm:$0xf]
  %v28 = vld [vmem:[%s0 + $0x48] sm:$0xff]
  %v29 = vld [vmem:[%s0 + $0x50] sm:$0xff]
  %v30 = vld [vmem:[%s0 + $0x58] sm:$0xff]
  %v31 = vld [vmem:[%s0 + $0x60] sm:$0xff]
  %v32 = vld [vmem:[%s0 + $0x68] sm:$0xf]
  %v33 = vld [vmem:[%s0 + $0x6c] sm:$0xff]
  %v34 = vld [vmem:[%s0 + $0x74] sm:$0xff]
  %v35 = vld [vmem:[%s0 + $0x7c] sm:$0xff]
  %v36 = vld [vmem:[%s0 + $0x84] sm:$0xff]
  %v37 = vld [vmem:[%s0 + $0x8c] sm:$0xf]
  %v38 = vld [vmem:[%s0 + $0x90] sm:$0xff]
  %v39 = vld [vmem:[%s0 + $0x98] sm:$0xff]
  %v40 = vld [vmem:[%s0 + $0xa0] sm:$0xff]
  %v41 = vld [vmem:[%s0 + $0xa8] sm:$0xff]
  %v42 = vld [vmem:[%s0 + $0xb0] sm:$0xf]
  %v43 = vld [vmem:[%s0 + $0xb4] sm:$0xff]
  %v44 = vld [vmem:[%s0 + $0xbc] sm:$0xff]
  %v45 = vld [vmem:[%s0 + $0xc4] sm:$0xff]
  %v46 = vld [vmem:[%s0 + $0xcc] sm:$0xff]
  %v47 = vld [vmem:[%s0 + $0xd4] sm:$0xf]
  %v48 = vld [vmem:[%s0 + $0xd8] sm:$0xff]
  %v49 = vld [vmem:[%s0 + $0xe0] sm:$0xff]
  %v50 = vld [vmem:[%s0 + $0xe8] sm:$0xff]
  %v51 = vld [vmem:[%s0 + $0xf0] sm:$0xff]
  %v52 = vld [vmem:[%s0 + $0xf8] sm:$0xf]
  %v53 = vld [vmem:[%s0 + $0xfc] sm:$0xff]
  %v54 = vld [vmem:[%s0 + $0x104] sm:$0xff]
  %v55 = vld [vmem:[%s0 + $0x10c] sm:$0xff]
  %v56 = vld [vmem:[%s0 + $0x114] sm:$0xff]
  %v57 = vld [vmem:[%s0 + $0x11c] sm:$0xf]
  %v58 = vld [vmem:[%s0 + $0x120] sm:$0xff]
  %v59 = vld [vmem:[%s0 + $0x128] sm:$0xff]
  %v60 = vld [vmem:[%s0 + $0x130] sm:$0xff]
  %v61 = vld [vmem:[%s0 + $0x138] sm:$0xff]
  %v62 = vld [vmem:[%s0 + $0x140] sm:$0xf]
  %v63 = vld [vmem:[%s0 + $0x144] sm:$0xff]
  %v64 = vld [vmem:[%s0 + $0x14c] sm:$0xff]
  %v65 = vld [vmem:[%s0 + $0x154] sm:$0xff]
  %v66 = vld [vmem:[%s0 + $0x15c] sm:$0xff]
  %v67 = vld [vmem:[%s0 + $0x164] sm:$0xf]
  %v68 = vld [vmem:[%s0 + $0x168] sm:$0xff]
  %v69 = vld [vmem:[%s0 + $0x170] sm:$0xff]
  %v70 = vld [vmem:[%s0 + $0x178] sm:$0xff]
  %v71 = vld [vmem:[%s0 + $0x180] sm:$0xff]
  %v72 = vld [vmem:[%s0 + $0x188] sm:$0xf]
  %v73 = vld [vmem:[%s0 + $0x18c] sm:$0xff]
  %v74 = vld [vmem:[%s0 + $0x194] sm:$0xff]
  %v75 = vld [vmem:[%s0 + $0x19c] sm:$0xff]
  %v76 = vld [vmem:[%s0 + $0x1a4] sm:$0xff]
  %v77 = vld [vmem:[%s0 + $0x1ac] sm:$0xf]
  %v78 = vld [vmem:[%s0 + $0x1b0] sm:$0xff]
  %v79 = vld [vmem:[%s0 + $0x1b8] sm:$0xff]
  %v80 = vld [vmem:[%s0 + $0x1c0] sm:$0xff]
  %v81 = vld [vmem:[%s0 + $0x1c8] sm:$0xff]
  %v82 = vld [vmem:[%s0 + $0x1d0] sm:$0xf]
  %v83 = vld [vmem:[%s0 + $0x1d4] sm:$0xff]
  %v84 = vld [vmem:[%s0 + $0x1dc] sm:$0xff]
  %v85 = vld [vmem:[%s0 + $0x1e4] sm:$0xff]
  %v86 = vld [vmem:[%s0 + $0x1ec] sm:$0xff]
  %v87 = vld [vmem:[%s0 + $0x1f4] sm:$0xf]
  %v88 = vld [vmem:[%s0 + $0x1f8] sm:$0xff]
  %v89 = vld [vmem:[%s0 + $0x200] sm:$0xff]
  %v90 = vld [vmem:[%s0 + $0x208] sm:$0xff]
  %v91 = vld [vmem:[%s0 + $0x210] sm:$0xff]
  %v92 = vld [vmem:[%s0 + $0x218] sm:$0xf]
  %v93 = vld [vmem:[%s0 + $0x21c] sm:$0xff]
  %v94 = vld [vmem:[%s0 + $0x224] sm:$0xff]
  %v95 = vld [vmem:[%s0 + $0x22c] sm:$0xff]
  %v96 = vld [vmem:[%s0 + $0x234] sm:$0xff]
  %v97 = vld [vmem:[%s0 + $0x23c] sm:$0xf]
  %v98 = vld [vmem:[%s1] sm:$0xf]
  %v99 = vld [vmem:[%s1 + $0x4] sm:$0xf]
  %v100 = vld [vmem:[%s1 + $0x8] sm:$0xf]
  %v101 = vld [vmem:[%s1 + $0xc] sm:$0xf]
  %v102 = vld [vmem:[%s1 + $0x10] sm:$0xf]
  %v103 = vld [vmem:[%s1 + $0x14] sm:$0xf]
  %v104 = vld [vmem:[%s1 + $0x18] sm:$0xf]
  %v105 = vld [vmem:[%s1 + $0x1c] sm:$0xf]
  %v106 = vld [vmem:[%s1 + $0x20] sm:$0xf]
  %v107 = vld [vmem:[%s1 + $0x24] sm:$0xf]
  %v108 = vld [vmem:[%s1 + $0x28] sm:$0xf]
  %v109 = vld [vmem:[%s1 + $0x2c] sm:$0xf]
  %v110 = vld [vmem:[%s1 + $0x30] sm:$0xf]
  %v111 = vld [vmem:[%s1 + $0x34] sm:$0xf]
  %v112 = vld [vmem:[%s1 + $0x38] sm:$0xf]
  %v113 = vld [vmem:[%s1 + $0x3c] sm:$0xf]
  %v114 = vld [vmem:[%s1 + $0x40] sm:$0xf]
  %v115 = vld [vmem:[%s1 + $0x44] sm:$0xf]
  %v116 = vld [vmem:[%s1 + $0x48] sm:$0xf]
  %v117 = vld [vmem:[%s1 + $0x4c] sm:$0xf]
  %v118 = vld [vmem:[%s1 + $0x50] sm:$0xf]
  %v119 = vld [vmem:[%s1 + $0x54] sm:$0xf]
  %v120 = vld [vmem:[%s1 + $0x58] sm:$0xf]
  %v121 = vld [vmem:[%s1 + $0x5c] sm:$0xf]
  %v122 = vld [vmem:[%s1 + $0x60] sm:$0xf]
  %v123 = vld [vmem:[%s1 + $0x64] sm:$0xf]
  %v124 = vld [vmem:[%s1 + $0x68] sm:$0xf]
  %v125 = vld [vmem:[%s1 + $0x6c] sm:$0xf]
  %v126 = vld [vmem:[%s1 + $0x70] sm:$0xf]
  %v127 = vld [vmem:[%s1 + $0x74] sm:$0xf]
  %v128 = vld [vmem:[%s1 + $0x78] sm:$0xf]
  %v129 = vld [vmem:[%s1 + $0x7c] sm:$0xf]
  %v130 = vld [vmem:[%s1 + $0x80] sm:$0xf]
  %v131 = vld [vmem:[%s1 + $0x84] sm:$0xf]
  %v132 = vld [vmem:[%s1 + $0x88] sm:$0xf]
  %v133 = vld [vmem:[%s1 + $0x8c] sm:$0xf]
  %v134 = vld [vmem:[%s1 + $0x90] sm:$0xf]
  %v135 = vld [vmem:[%s1 + $0x94] sm:$0xf]
  %v136 = vld [vmem:[%s1 + $0x98] sm:$0xf]
  %v137 = vld [vmem:[%s1 + $0x9c] sm:$0xf]
  %v138 = vld [vmem:[%s1 + $0xa0] sm:$0xf]
  %v139 = vld [vmem:[%s1 + $0xa4] sm:$0xf]
  %v140 = vld [vmem:[%s1 + $0xa8] sm:$0xf]
  %v141 = vld [vmem:[%s1 + $0xac] sm:$0xf]
  %v142 = vld [vmem:[%s1 + $0xb0] sm:$0xf]
  %v143 = vld [vmem:[%s1 + $0xb4] sm:$0xf]
  %v144 = vld [vmem:[%s1 + $0xb8] sm:$0xf]
  %v145 = vld [vmem:[%s1 + $0xbc] sm:$0xf]
  %v146 = vld [vmem:[%s1 + $0xc0] sm:$0xf]
  %v147 = vld [vmem:[%s1 + $0xc4] sm:$0xf]
  %v148 = vld [vmem:[%s1 + $0xc8] sm:$0xf]
  %v149 = vld [vmem:[%s1 + $0xcc] sm:$0xf]
  %v150 = vld [vmem:[%s1 + $0xd0] sm:$0xf]
  %v151 = vld [vmem:[%s1 + $0xd4] sm:$0xf]
  %v152 = vld [vmem:[%s1 + $0xd8] sm:$0xf]
  %v153 = vld [vmem:[%s1 + $0xdc] sm:$0xf]
  %v154 = vld [vmem:[%s1 + $0xe0] sm:$0xf]
  %v155 = vld [vmem:[%s1 + $0xe4] sm:$0xf]
  %v156 = vld [vmem:[%s1 + $0xe8] sm:$0xf]
  %v157 = vld [vmem:[%s1 + $0xec] sm:$0xf]
  %v158 = vld [vmem:[%s1 + $0xf0] sm:$0xf]
  %v159 = vld [vmem:[%s1 + $0xf4] sm:$0xf]
  %v160 = vld [vmem:[%s1 + $0xf8] sm:$0xf]
  %v161 = vld [vmem:[%s1 + $0xfc] sm:$0xf]
  %v162 = vld [vmem:[%s1 + $0x100] sm:$0xf]
  %v163 = vld [vmem:[%s1 + $0x104] sm:$0xf]
  %v164 = vld [vmem:[%s1 + $0x108] sm:$0xf]
  %v165 = vld [vmem:[%s1 + $0x10c] sm:$0xf]
  %v166 = vld [vmem:[%s1 + $0x110] sm:$0xf]
  %v167 = vld [vmem:[%s1 + $0x114] sm:$0xf]
  %v168 = vld [vmem:[%s1 + $0x118] sm:$0xf]
  %v169 = vld [vmem:[%s1 + $0x11c] sm:$0xf]
  %v170 = vld [vmem:[%s1 + $0x120] sm:$0xf]
  %v171 = vld [vmem:[%s1 + $0x124] sm:$0xf]
  %v172 = vld [vmem:[%s1 + $0x128] sm:$0xf]
  %v173 = vld [vmem:[%s1 + $0x12c] sm:$0xf]
  %v174 = vld [vmem:[%s1 + $0x130] sm:$0xf]
  %v175 = vld [vmem:[%s1 + $0x134] sm:$0xf]
  %v176 = vld [vmem:[%s1 + $0x138] sm:$0xf]
  %v177 = vld [vmem:[%s1 + $0x13c] sm:$0xf]
  %v178 = vld [vmem:[%s1 + $0x140] sm:$0xf]
  %v179 = vld [vmem:[%s1 + $0x144] sm:$0xf]
  %v180 = vld [vmem:[%s1 + $0x148] sm:$0xf]
  %v181 = vld [vmem:[%s1 + $0x14c] sm:$0xf]
  %v182 = vld [vmem:[%s1 + $0x150] sm:$0xf]
  %v183 = vld [vmem:[%s1 + $0x154] sm:$0xf]
  %v184 = vld [vmem:[%s1 + $0x158] sm:$0xf]
  %v185 = vld [vmem:[%s1 + $0x15c] sm:$0xf]
  %v186 = vld [vmem:[%s1 + $0x160] sm:$0xf]
  %v187 = vld [vmem:[%s1 + $0x164] sm:$0xf]
  %v188 = vld [vmem:[%s1 + $0x168] sm:$0xf]
  %v189 = vld [vmem:[%s1 + $0x16c] sm:$0xf]
  %v190 = vld [vmem:[%s1 + $0x170] sm:$0xf]
  %v191 = vld [vmem:[%s1 + $0x174] sm:$0xf]
  %v192 = vld [vmem:[%s1 + $0x178] sm:$0xf]
  %v193 = vld [vmem:[%s1 + $0x17c] sm:$0xf]
  %v194 = vld [vmem:[%s1 + $0x180] sm:$0xf]
  %v195 = vld [vmem:[%s1 + $0x184] sm:$0xf]
  %v196 = vld [vmem:[%s1 + $0x188] sm:$0xf]
  %v197 = vld [vmem:[%s1 + $0x18c] sm:$0xf]
  %v198 = vld [vmem:[%s1 + $0x190] sm:$0xf]
  %v199 = vld [vmem:[%s1 + $0x194] sm:$0xf]
  %v200 = vld [vmem:[%s1 + $0x198] sm:$0xf]
  %v201 = vld [vmem:[%s1 + $0x19c] sm:$0xf]
  %v202 = vld [vmem:[%s1 + $0x1a0] sm:$0xf]
  %v203 = vld [vmem:[%s1 + $0x1a4] sm:$0xf]
  %v204 = vld [vmem:[%s1 + $0x1a8] sm:$0xf]
  %v205 = vld [vmem:[%s1 + $0x1ac] sm:$0xf]
  %v206 = vld [vmem:[%s1 + $0x1b0] sm:$0xf]
  %v207 = vld [vmem:[%s1 + $0x1b4] sm:$0xf]
  %v208 = vld [vmem:[%s1 + $0x1b8] sm:$0xf]
  %v209 = vld [vmem:[%s1 + $0x1bc] sm:$0xf]
  %v210 = vld [vmem:[%s1 + $0x1c0] sm:$0xf]
  %v211 = vld [vmem:[%s1 + $0x1c4] sm:$0xf]
  %v212 = vld [vmem:[%s1 + $0x1c8] sm:$0xf]
  %v213 = vld [vmem:[%s1 + $0x1cc] sm:$0xf]
  %v214 = vld [vmem:[%s1 + $0x1d0] sm:$0xf]
  %v215 = vld [vmem:[%s1 + $0x1d4] sm:$0xf]
  %v216 = vld [vmem:[%s1 + $0x1d8] sm:$0xf]
  %v217 = vld [vmem:[%s1 + $0x1dc] sm:$0xf]
  %v218 = vld [vmem:[%s1 + $0x1e0] sm:$0xf]
  %v219 = vld [vmem:[%s1 + $0x1e4] sm:$0xf]
  %v220 = vld [vmem:[%s1 + $0x1e8] sm:$0xf]
  %v221 = vld [vmem:[%s1 + $0x1ec] sm:$0xf]
  %v222 = vld [vmem:[%s1 + $0x1f0] sm:$0xf]
  %v223 = vld [vmem:[%s1 + $0x1f4] sm:$0xf]
  %v224 = vld [vmem:[%s1 + $0x1f8] sm:$0xf]
  %v225 = vld [vmem:[%s1 + $0x1fc] sm:$0xf]
  %v226 = vld [vmem:[%s1 + $0x200] sm:$0xf]
  %v227 = vld [vmem:[%s1 + $0x204] sm:$0xf]
  %v228 = vld [vmem:[%s1 + $0x208] sm:$0xf]
  %v229 = vld [vmem:[%s1 + $0x20c] sm:$0xf]
  %v230 = vld [vmem:[%s1 + $0x210] sm:$0xf]
  %v231 = vld [vmem:[%s1 + $0x214] sm:$0xf]
  %v232 = vld [vmem:[%s1 + $0x218] sm:$0xf]
  %v233 = vld [vmem:[%s1 + $0x21c] sm:$0xf]
  %v234 = vld [vmem:[%s1 + $0x220] sm:$0xf]
  %v235 = vld [vmem:[%s1 + $0x224] sm:$0xf]
  %v236 = vld [vmem:[%s1 + $0x228] sm:$0xf]
  %v237 = vld [vmem:[%s1 + $0x22c] sm:$0xf]
  %v238 = vld [vmem:[%s1 + $0x230] sm:$0xf]
  %v239 = vld [vmem:[%s1 + $0x234] sm:$0xf]
  %v240 = vld [vmem:[%s1 + $0x238] sm:$0xf]
  %v241 = vld [vmem:[%s1 + $0x23c] sm:$0xf]
  %v242 = vld [vmem:[%s2] sm:$0x1]
  %v244 = vlaneseq
  %v245 = vshrl.u32 %v244, 7
  %v246 = vsub.s32 0, %v245
  %v247 = vrot.slane %v242, %v246
  %v329 = vunpack.c.l.b16 %v18
  %v330 = vunpack.c.h.b16 %v18
  %v331 = vunpack.c.l.b16 %v19
  %v332 = vunpack.c.h.b16 %v19
  %v333 = vunpack.c.l.b16 %v20
  %v334 = vunpack.c.h.b16 %v20
  %v335 = vunpack.c.l.b16 %v21
  %v336 = vunpack.c.h.b16 %v21
  %v337 = vunpack.c.l.b16 %v22
  %v338 = vunpack.c.l.b16 %v23
  %v339 = vunpack.c.h.b16 %v23
  %v340 = vunpack.c.l.b16 %v24
  %v341 = vunpack.c.h.b16 %v24
  %v342 = vunpack.c.l.b16 %v25
  %v343 = vunpack.c.h.b16 %v25
  %v344 = vunpack.c.l.b16 %v26
  %v345 = vunpack.c.h.b16 %v26
  %v346 = vunpack.c.l.b16 %v27
  %v347 = vunpack.c.l.b16 %v28
  %v348 = vunpack.c.h.b16 %v28
  %v349 = vunpack.c.l.b16 %v29
  %v350 = vunpack.c.h.b16 %v29
  %v351 = vunpack.c.l.b16 %v30
  %v352 = vunpack.c.h.b16 %v30
  %v353 = vunpack.c.l.b16 %v31
  %v354 = vunpack.c.h.b16 %v31
  %v355 = vunpack.c.l.b16 %v32
  %v356 = vunpack.c.l.b16 %v33
  %v357 = vunpack.c.h.b16 %v33
  %v358 = vunpack.c.l.b16 %v34
  %v359 = vunpack.c.h.b16 %v34
  %v360 = vunpack.c.l.b16 %v35
  %v361 = vunpack.c.h.b16 %v35
  %v362 = vunpack.c.l.b16 %v36
  %v363 = vunpack.c.h.b16 %v36
  %v364 = vunpack.c.l.b16 %v37
  %v365 = vunpack.c.l.b16 %v38
  %v366 = vunpack.c.h.b16 %v38
  %v367 = vunpack.c.l.b16 %v39
  %v368 = vunpack.c.h.b16 %v39
  %v369 = vunpack.c.l.b16 %v40
  %v370 = vunpack.c.h.b16 %v40
  %v371 = vunpack.c.l.b16 %v41
  %v372 = vunpack.c.h.b16 %v41
  %v373 = vunpack.c.l.b16 %v42
  %v374 = vunpack.c.l.b16 %v43
  %v375 = vunpack.c.h.b16 %v43
  %v376 = vunpack.c.l.b16 %v44
  %v377 = vunpack.c.h.b16 %v44
  %v378 = vunpack.c.l.b16 %v45
  %v379 = vunpack.c.h.b16 %v45
  %v380 = vunpack.c.l.b16 %v46
  %v381 = vunpack.c.h.b16 %v46
  %v382 = vunpack.c.l.b16 %v47
  %v383 = vunpack.c.l.b16 %v48
  %v384 = vunpack.c.h.b16 %v48
  %v385 = vunpack.c.l.b16 %v49
  %v386 = vunpack.c.h.b16 %v49
  %v387 = vunpack.c.l.b16 %v50
  %v388 = vunpack.c.h.b16 %v50
  %v389 = vunpack.c.l.b16 %v51
  %v390 = vunpack.c.h.b16 %v51
  %v391 = vunpack.c.l.b16 %v52
  %v392 = vunpack.c.l.b16 %v53
  %v393 = vunpack.c.h.b16 %v53
  %v394 = vunpack.c.l.b16 %v54
  %v395 = vunpack.c.h.b16 %v54
  %v396 = vunpack.c.l.b16 %v55
  %v397 = vunpack.c.h.b16 %v55
  %v398 = vunpack.c.l.b16 %v56
  %v399 = vunpack.c.h.b16 %v56
  %v400 = vunpack.c.l.b16 %v57
  %v401 = vunpack.c.l.b16 %v58
  %v402 = vunpack.c.h.b16 %v58
  %v403 = vunpack.c.l.b16 %v59
  %v404 = vunpack.c.h.b16 %v59
  %v405 = vunpack.c.l.b16 %v60
  %v406 = vunpack.c.h.b16 %v60
  %v407 = vunpack.c.l.b16 %v61
  %v408 = vunpack.c.h.b16 %v61
  %v409 = vunpack.c.l.b16 %v62
  %v410 = vunpack.c.l.b16 %v63
  %v411 = vunpack.c.h.b16 %v63
  %v412 = vunpack.c.l.b16 %v64
  %v413 = vunpack.c.h.b16 %v64
  %v414 = vunpack.c.l.b16 %v65
  %v415 = vunpack.c.h.b16 %v65
  %v416 = vunpack.c.l.b16 %v66
  %v417 = vunpack.c.h.b16 %v66
  %v418 = vunpack.c.l.b16 %v67
  %v419 = vunpack.c.l.b16 %v68
  %v420 = vunpack.c.h.b16 %v68
  %v421 = vunpack.c.l.b16 %v69
  %v422 = vunpack.c.h.b16 %v69
  %v423 = vunpack.c.l.b16 %v70
  %v424 = vunpack.c.h.b16 %v70
  %v425 = vunpack.c.l.b16 %v71
  %v426 = vunpack.c.h.b16 %v71
  %v427 = vunpack.c.l.b16 %v72
  %v428 = vunpack.c.l.b16 %v73
  %v429 = vunpack.c.h.b16 %v73
  %v430 = vunpack.c.l.b16 %v74
  %v431 = vunpack.c.h.b16 %v74
  %v432 = vunpack.c.l.b16 %v75
  %v433 = vunpack.c.h.b16 %v75
  %v434 = vunpack.c.l.b16 %v76
  %v435 = vunpack.c.h.b16 %v76
  %v436 = vunpack.c.l.b16 %v77
  %v437 = vunpack.c.l.b16 %v78
  %v438 = vunpack.c.h.b16 %v78
  %v439 = vunpack.c.l.b16 %v79
  %v440 = vunpack.c.h.b16 %v79
  %v441 = vunpack.c.l.b16 %v80
  %v442 = vunpack.c.h.b16 %v80
  %v443 = vunpack.c.l.b16 %v81
  %v444 = vunpack.c.h.b16 %v81
  %v445 = vunpack.c.l.b16 %v82
  %v446 = vunpack.c.l.b16 %v83
  %v447 = vunpack.c.h.b16 %v83
  %v448 = vunpack.c.l.b16 %v84
  %v449 = vunpack.c.h.b16 %v84
  %v450 = vunpack.c.l.b16 %v85
  %v451 = vunpack.c.h.b16 %v85
  %v452 = vunpack.c.l.b16 %v86
  %v453 = vunpack.c.h.b16 %v86
  %v454 = vunpack.c.l.b16 %v87
  %v455 = vunpack.c.l.b16 %v88
  %v456 = vunpack.c.h.b16 %v88
  %v457 = vunpack.c.l.b16 %v89
  %v458 = vunpack.c.h.b16 %v89
  %v459 = vunpack.c.l.b16 %v90
  %v460 = vunpack.c.h.b16 %v90
  %v461 = vunpack.c.l.b16 %v91
  %v462 = vunpack.c.h.b16 %v91
  %v463 = vunpack.c.l.b16 %v92
  %v464 = vunpack.c.l.b16 %v93
  %v465 = vunpack.c.h.b16 %v93
  %v466 = vunpack.c.l.b16 %v94
  %v467 = vunpack.c.h.b16 %v94
  %v468 = vunpack.c.l.b16 %v95
  %v469 = vunpack.c.h.b16 %v95
  %v470 = vunpack.c.l.b16 %v96
  %v471 = vunpack.c.h.b16 %v96
  %v472 = vunpack.c.l.b16 %v97
  %v473 = vpack.c.b16 %v338, %v329
  %v474 = vpack.c.b16 %v339, %v330
  %v475 = vpack.c.b16 %v340, %v331
  %v476 = vpack.c.b16 %v341, %v332
  %v477 = vpack.c.b16 %v342, %v333
  %v478 = vpack.c.b16 %v343, %v334
  %v479 = vpack.c.b16 %v344, %v335
  %v480 = vpack.c.b16 %v345, %v336
  %v481 = vpack.c.b16 %v346, %v337
  %v482 = vpack.c.b16 %v356, %v347
  %v483 = vpack.c.b16 %v357, %v348
  %v484 = vpack.c.b16 %v358, %v349
  %v485 = vpack.c.b16 %v359, %v350
  %v486 = vpack.c.b16 %v360, %v351
  %v487 = vpack.c.b16 %v361, %v352
  %v488 = vpack.c.b16 %v362, %v353
  %v489 = vpack.c.b16 %v363, %v354
  %v490 = vpack.c.b16 %v364, %v355
  %v491 = vpack.c.b16 %v374, %v365
  %v492 = vpack.c.b16 %v375, %v366
  %v493 = vpack.c.b16 %v376, %v367
  %v494 = vpack.c.b16 %v377, %v368
  %v495 = vpack.c.b16 %v378, %v369
  %v496 = vpack.c.b16 %v379, %v370
  %v497 = vpack.c.b16 %v380, %v371
  %v498 = vpack.c.b16 %v381, %v372
  %v499 = vpack.c.b16 %v382, %v373
  %v500 = vpack.c.b16 %v392, %v383
  %v501 = vpack.c.b16 %v393, %v384
  %v502 = vpack.c.b16 %v394, %v385
  %v503 = vpack.c.b16 %v395, %v386
  %v504 = vpack.c.b16 %v396, %v387
  %v505 = vpack.c.b16 %v397, %v388
  %v506 = vpack.c.b16 %v398, %v389
  %v507 = vpack.c.b16 %v399, %v390
  %v508 = vpack.c.b16 %v400, %v391
  %v509 = vpack.c.b16 %v410, %v401
  %v510 = vpack.c.b16 %v411, %v402
  %v511 = vpack.c.b16 %v412, %v403
  %v512 = vpack.c.b16 %v413, %v404
  %v513 = vpack.c.b16 %v414, %v405
  %v514 = vpack.c.b16 %v415, %v406
  %v515 = vpack.c.b16 %v416, %v407
  %v516 = vpack.c.b16 %v417, %v408
  %v517 = vpack.c.b16 %v418, %v409
  %v518 = vpack.c.b16 %v428, %v419
  %v519 = vpack.c.b16 %v429, %v420
  %v520 = vpack.c.b16 %v430, %v421
  %v521 = vpack.c.b16 %v431, %v422
  %v522 = vpack.c.b16 %v432, %v423
  %v523 = vpack.c.b16 %v433, %v424
  %v524 = vpack.c.b16 %v434, %v425
  %v525 = vpack.c.b16 %v435, %v426
  %v526 = vpack.c.b16 %v436, %v427
  %v527 = vpack.c.b16 %v446, %v437
  %v528 = vpack.c.b16 %v447, %v438
  %v529 = vpack.c.b16 %v448, %v439
  %v530 = vpack.c.b16 %v449, %v440
  %v531 = vpack.c.b16 %v450, %v441
  %v532 = vpack.c.b16 %v451, %v442
  %v533 = vpack.c.b16 %v452, %v443
  %v534 = vpack.c.b16 %v453, %v444
  %v535 = vpack.c.b16 %v454, %v445
  %v536 = vpack.c.b16 %v464, %v455
  %v537 = vpack.c.b16 %v465, %v456
  %v538 = vpack.c.b16 %v466, %v457
  %v539 = vpack.c.b16 %v467, %v458
  %v540 = vpack.c.b16 %v468, %v459
  %v541 = vpack.c.b16 %v469, %v460
  %v542 = vpack.c.b16 %v470, %v461
  %v543 = vpack.c.b16 %v471, %v462
  %v544 = vpack.c.b16 %v472, %v463
  %v761 = vunpack.c.l.b16 %v98
  %v762 = vunpack.c.l.b16 %v99
  %v763 = vunpack.c.l.b16 %v100
  %v764 = vunpack.c.l.b16 %v101
  %v765 = vunpack.c.l.b16 %v102
  %v766 = vunpack.c.l.b16 %v103
  %v767 = vunpack.c.l.b16 %v104
  %v768 = vunpack.c.l.b16 %v105
  %v769 = vunpack.c.l.b16 %v106
  %v770 = vunpack.c.l.b16 %v107
  %v771 = vunpack.c.l.b16 %v108
  %v772 = vunpack.c.l.b16 %v109
  %v773 = vunpack.c.l.b16 %v110
  %v774 = vunpack.c.l.b16 %v111
  %v775 = vunpack.c.l.b16 %v112
  %v776 = vunpack.c.l.b16 %v113
  %v777 = vunpack.c.l.b16 %v114
  %v778 = vunpack.c.l.b16 %v115
  %v779 = vunpack.c.l.b16 %v116
  %v780 = vunpack.c.l.b16 %v117
  %v781 = vunpack.c.l.b16 %v118
  %v782 = vunpack.c.l.b16 %v119
  %v783 = vunpack.c.l.b16 %v120
  %v784 = vunpack.c.l.b16 %v121
  %v785 = vunpack.c.l.b16 %v122
  %v786 = vunpack.c.l.b16 %v123
  %v787 = vunpack.c.l.b16 %v124
  %v788 = vunpack.c.l.b16 %v125
  %v789 = vunpack.c.l.b16 %v126
  %v790 = vunpack.c.l.b16 %v127
  %v791 = vunpack.c.l.b16 %v128
  %v792 = vunpack.c.l.b16 %v129
  %v793 = vunpack.c.l.b16 %v130
  %v794 = vunpack.c.l.b16 %v131
  %v795 = vunpack.c.l.b16 %v132
  %v796 = vunpack.c.l.b16 %v133
  %v797 = vunpack.c.l.b16 %v134
  %v798 = vunpack.c.l.b16 %v135
  %v799 = vunpack.c.l.b16 %v136
  %v800 = vunpack.c.l.b16 %v137
  %v801 = vunpack.c.l.b16 %v138
  %v802 = vunpack.c.l.b16 %v139
  %v803 = vunpack.c.l.b16 %v140
  %v804 = vunpack.c.l.b16 %v141
  %v805 = vunpack.c.l.b16 %v142
  %v806 = vunpack.c.l.b16 %v143
  %v807 = vunpack.c.l.b16 %v144
  %v808 = vunpack.c.l.b16 %v145
  %v809 = vunpack.c.l.b16 %v146
  %v810 = vunpack.c.l.b16 %v147
  %v811 = vunpack.c.l.b16 %v148
  %v812 = vunpack.c.l.b16 %v149
  %v813 = vunpack.c.l.b16 %v150
  %v814 = vunpack.c.l.b16 %v151
  %v815 = vunpack.c.l.b16 %v152
  %v816 = vunpack.c.l.b16 %v153
  %v817 = vunpack.c.l.b16 %v154
  %v818 = vunpack.c.l.b16 %v155
  %v819 = vunpack.c.l.b16 %v156
  %v820 = vunpack.c.l.b16 %v157
  %v821 = vunpack.c.l.b16 %v158
  %v822 = vunpack.c.l.b16 %v159
  %v823 = vunpack.c.l.b16 %v160
  %v824 = vunpack.c.l.b16 %v161
  %v825 = vunpack.c.l.b16 %v162
  %v826 = vunpack.c.l.b16 %v163
  %v827 = vunpack.c.l.b16 %v164
  %v828 = vunpack.c.l.b16 %v165
  %v829 = vunpack.c.l.b16 %v166
  %v830 = vunpack.c.l.b16 %v167
  %v831 = vunpack.c.l.b16 %v168
  %v832 = vunpack.c.l.b16 %v169
  %v833 = vunpack.c.l.b16 %v170
  %v834 = vunpack.c.l.b16 %v171
  %v835 = vunpack.c.l.b16 %v172
  %v836 = vunpack.c.l.b16 %v173
  %v837 = vunpack.c.l.b16 %v174
  %v838 = vunpack.c.l.b16 %v175
  %v839 = vunpack.c.l.b16 %v176
  %v840 = vunpack.c.l.b16 %v177
  %v841 = vunpack.c.l.b16 %v178
  %v842 = vunpack.c.l.b16 %v179
  %v843 = vunpack.c.l.b16 %v180
  %v844 = vunpack.c.l.b16 %v181
  %v845 = vunpack.c.l.b16 %v182
  %v846 = vunpack.c.l.b16 %v183
  %v847 = vunpack.c.l.b16 %v184
  %v848 = vunpack.c.l.b16 %v185
  %v849 = vunpack.c.l.b16 %v186
  %v850 = vunpack.c.l.b16 %v187
  %v851 = vunpack.c.l.b16 %v188
  %v852 = vunpack.c.l.b16 %v189
  %v853 = vunpack.c.l.b16 %v190
  %v854 = vunpack.c.l.b16 %v191
  %v855 = vunpack.c.l.b16 %v192
  %v856 = vunpack.c.l.b16 %v193
  %v857 = vunpack.c.l.b16 %v194
  %v858 = vunpack.c.l.b16 %v195
  %v859 = vunpack.c.l.b16 %v196
  %v860 = vunpack.c.l.b16 %v197
  %v861 = vunpack.c.l.b16 %v198
  %v862 = vunpack.c.l.b16 %v199
  %v863 = vunpack.c.l.b16 %v200
  %v864 = vunpack.c.l.b16 %v201
  %v865 = vunpack.c.l.b16 %v202
  %v866 = vunpack.c.l.b16 %v203
  %v867 = vunpack.c.l.b16 %v204
  %v868 = vunpack.c.l.b16 %v205
  %v869 = vunpack.c.l.b16 %v206
  %v870 = vunpack.c.l.b16 %v207
  %v871 = vunpack.c.l.b16 %v208
  %v872 = vunpack.c.l.b16 %v209
  %v873 = vunpack.c.l.b16 %v210
  %v874 = vunpack.c.l.b16 %v211
  %v875 = vunpack.c.l.b16 %v212
  %v876 = vunpack.c.l.b16 %v213
  %v877 = vunpack.c.l.b16 %v214
  %v878 = vunpack.c.l.b16 %v215
  %v879 = vunpack.c.l.b16 %v216
  %v880 = vunpack.c.l.b16 %v217
  %v881 = vunpack.c.l.b16 %v218
  %v882 = vunpack.c.l.b16 %v219
  %v883 = vunpack.c.l.b16 %v220
  %v884 = vunpack.c.l.b16 %v221
  %v885 = vunpack.c.l.b16 %v222
  %v886 = vunpack.c.l.b16 %v223
  %v887 = vunpack.c.l.b16 %v224
  %v888 = vunpack.c.l.b16 %v225
  %v889 = vunpack.c.l.b16 %v226
  %v890 = vunpack.c.l.b16 %v227
  %v891 = vunpack.c.l.b16 %v228
  %v892 = vunpack.c.l.b16 %v229
  %v893 = vunpack.c.l.b16 %v230
  %v894 = vunpack.c.l.b16 %v231
  %v895 = vunpack.c.l.b16 %v232
  %v896 = vunpack.c.l.b16 %v233
  %v897 = vunpack.c.l.b16 %v234
  %v898 = vunpack.c.l.b16 %v235
  %v899 = vunpack.c.l.b16 %v236
  %v900 = vunpack.c.l.b16 %v237
  %v901 = vunpack.c.l.b16 %v238
  %v902 = vunpack.c.l.b16 %v239
  %v903 = vunpack.c.l.b16 %v240
  %v904 = vunpack.c.l.b16 %v241
  %v905 = vpack.c.b16 %v762, %v761
  %v906 = vpack.c.b16 %v764, %v763
  %v907 = vpack.c.b16 %v766, %v765
  %v908 = vpack.c.b16 %v768, %v767
  %v909 = vpack.c.b16 %v770, %v769
  %v910 = vpack.c.b16 %v772, %v771
  %v911 = vpack.c.b16 %v774, %v773
  %v912 = vpack.c.b16 %v776, %v775
  %v913 = vpack.c.b16 %v778, %v777
  %v914 = vpack.c.b16 %v780, %v779
  %v915 = vpack.c.b16 %v782, %v781
  %v916 = vpack.c.b16 %v784, %v783
  %v917 = vpack.c.b16 %v786, %v785
  %v918 = vpack.c.b16 %v788, %v787
  %v919 = vpack.c.b16 %v790, %v789
  %v920 = vpack.c.b16 %v792, %v791
  %v921 = vpack.c.b16 %v794, %v793
  %v922 = vpack.c.b16 %v796, %v795
  %v923 = vpack.c.b16 %v798, %v797
  %v924 = vpack.c.b16 %v800, %v799
  %v925 = vpack.c.b16 %v802, %v801
  %v926 = vpack.c.b16 %v804, %v803
  %v927 = vpack.c.b16 %v806, %v805
  %v928 = vpack.c.b16 %v808, %v807
  %v929 = vpack.c.b16 %v810, %v809
  %v930 = vpack.c.b16 %v812, %v811
  %v931 = vpack.c.b16 %v814, %v813
  %v932 = vpack.c.b16 %v816, %v815
  %v933 = vpack.c.b16 %v818, %v817
  %v934 = vpack.c.b16 %v820, %v819
  %v935 = vpack.c.b16 %v822, %v821
  %v936 = vpack.c.b16 %v824, %v823
  %v937 = vpack.c.b16 %v826, %v825
  %v938 = vpack.c.b16 %v828, %v827
  %v939 = vpack.c.b16 %v830, %v829
  %v940 = vpack.c.b16 %v832, %v831
  %v941 = vpack.c.b16 %v834, %v833
  %v942 = vpack.c.b16 %v836, %v835
  %v943 = vpack.c.b16 %v838, %v837
  %v944 = vpack.c.b16 %v840, %v839
  %v945 = vpack.c.b16 %v842, %v841
  %v946 = vpack.c.b16 %v844, %v843
  %v947 = vpack.c.b16 %v846, %v845
  %v948 = vpack.c.b16 %v848, %v847
  %v949 = vpack.c.b16 %v850, %v849
  %v950 = vpack.c.b16 %v852, %v851
  %v951 = vpack.c.b16 %v854, %v853
  %v952 = vpack.c.b16 %v856, %v855
  %v953 = vpack.c.b16 %v858, %v857
  %v954 = vpack.c.b16 %v860, %v859
  %v955 = vpack.c.b16 %v862, %v861
  %v956 = vpack.c.b16 %v864, %v863
  %v957 = vpack.c.b16 %v866, %v865
  %v958 = vpack.c.b16 %v868, %v867
  %v959 = vpack.c.b16 %v870, %v869
  %v960 = vpack.c.b16 %v872, %v871
  %v961 = vpack.c.b16 %v874, %v873
  %v962 = vpack.c.b16 %v876, %v875
  %v963 = vpack.c.b16 %v878, %v877
  %v964 = vpack.c.b16 %v880, %v879
  %v965 = vpack.c.b16 %v882, %v881
  %v966 = vpack.c.b16 %v884, %v883
  %v967 = vpack.c.b16 %v886, %v885
  %v968 = vpack.c.b16 %v888, %v887
  %v969 = vpack.c.b16 %v890, %v889
  %v970 = vpack.c.b16 %v892, %v891
  %v971 = vpack.c.b16 %v894, %v893
  %v972 = vpack.c.b16 %v896, %v895
  %v973 = vpack.c.b16 %v898, %v897
  %v974 = vpack.c.b16 %v900, %v899
  %v975 = vpack.c.b16 %v902, %v901
  %v976 = vpack.c.b16 %v904, %v903
  %1049 = vmatprep.subr.bf16.mxu0 0
  %1050 = vmatpush1.bf16.msra.mxu0 %v905
  %1051 = vmatprep.subr.bf16.mxu0 0
  %1052 = vmatpush1.bf16.msra.mxu0 %v906
  %1053 = vmatprep.subr.bf16.mxu0 0
  %1054 = vmatpush1.bf16.msra.mxu0 %v907
  %1055 = vmatprep.subr.bf16.mxu0 0
  %1056 = vmatpush1.bf16.msra.mxu0 %v908
  %1057 = vmatprep.subr.bf16.mxu0 0
  %1058 = vmatpush1.bf16.msra.mxu0 %v909
  %1059 = vmatprep.subr.bf16.mxu0 0
  %1060 = vmatpush1.bf16.msra.mxu0 %v910
  %1061 = vmatprep.subr.bf16.mxu0 0
  %1062 = vmatpush1.bf16.msra.mxu0 %v911
  %1063 = vmatprep.subr.bf16.mxu0 0
  %1064 = vmatpush1.bf16.msra.mxu0 %v912
  %1065 = vmatprep.subr.bf16.mxu0 0
  %1066 = vmatpush1.bf16.msra.mxu0 %v913
  %1067 = vmatprep.subr.bf16.mxu0 0
  %1068 = vmatpush1.bf16.msra.mxu0 %v914
  %1069 = vmatprep.subr.bf16.mxu0 0
  %1070 = vmatpush1.bf16.msra.mxu0 %v915
  %1071 = vmatprep.subr.bf16.mxu0 0
  %1072 = vmatpush1.bf16.msra.mxu0 %v916
  %1073 = vmatprep.subr.bf16.mxu0 0
  %1074 = vmatpush1.bf16.msra.mxu0 %v917
  %1075 = vmatprep.subr.bf16.mxu0 0
  %1076 = vmatpush1.bf16.msra.mxu0 %v918
  %1077 = vmatprep.subr.bf16.mxu0 0
  %1078 = vmatpush1.bf16.msra.mxu0 %v919
  %1079 = vmatprep.subr.bf16.mxu0 0
  %1080 = vmatpush1.bf16.msra.mxu0 %v920
  %1081 = vmatprep.mubr.bf16.mxu0 %v474
  %1082 = vmatmul.mubr.bf16.gmra.mrb[0].mxu0 %v473
  %v1083 = vpop.f32.mrb[0].mxu0
  %v1084 = vadd.f32 %v247, %v1083
  %v1085 = vpop.f32.mrb[0].mxu0
  %v1086 = vpop.f32.mrb[0].mxu0
  %v1087 = vadd.f32 %v247, %v1086
  %v1088 = vpop.f32.mrb[0].mxu0
  %1089 = vmatprep.mubr.bf16.mxu0 %v483
  %1090 = vmatmul.mubr.bf16.gmra.mrb[0].mxu0 %v482
  %v1091 = vpop.f32.mrb[0].mxu0
  %v1092 = vadd.f32 %v247, %v1091
  %v1093 = vpop.f32.mrb[0].mxu0
  %v1094 = vpop.f32.mrb[0].mxu0
  %v1095 = vadd.f32 %v247, %v1094
  %v1096 = vpop.f32.mrb[0].mxu0
  %1097 = vmatprep.mubr.bf16.mxu0 %v492
  %1098 = vmatmul.mubr.bf16.gmra.mrb[0].mxu0 %v491
  %v1099 = vpop.f32.mrb[0].mxu0
  %v1100 = vadd.f32 %v247, %v1099
  %v1101 = vpop.f32.mrb[0].mxu0
  %v1102 = vpop.f32.mrb[0].mxu0
  %v1103 = vadd.f32 %v247, %v1102
  %v1104 = vpop.f32.mrb[0].mxu0
  %1105 = vmatprep.mubr.bf16.mxu0 %v501
  %1106 = vmatmul.mubr.bf16.gmra.mrb[0].mxu0 %v500
  %v1107 = vpop.f32.mrb[0].mxu0
  %v1108 = vadd.f32 %v247, %v1107
  %v1109 = vpop.f32.mrb[0].mxu0
  %v1110 = vpop.f32.mrb[0].mxu0
  %v1111 = vadd.f32 %v247, %v1110
  %v1112 = vpop.f32.mrb[0].mxu0
  %1113 = vmatprep.mubr.bf16.mxu0 %v510
  %1114 = vmatmul.mubr.bf16.gmra.mrb[0].mxu0 %v509
  %v1115 = vpop.f32.mrb[0].mxu0
  %v1116 = vadd.f32 %v247, %v1115
  %v1117 = vpop.f32.mrb[0].mxu0
  %v1118 = vpop.f32.mrb[0].mxu0
  %v1119 = vadd.f32 %v247, %v1118
  %v1120 = vpop.f32.mrb[0].mxu0
  %1121 = vmatprep.mubr.bf16.mxu0 %v519
  %1122 = vmatmul.mubr.bf16.gmra.mrb[0].mxu0 %v518
  %v1123 = vpop.f32.mrb[0].mxu0
  %v1124 = vadd.f32 %v247, %v1123
  %v1125 = vpop.f32.mrb[0].mxu0
  %v1126 = vpop.f32.mrb[0].mxu0
  %v1127 = vadd.f32 %v247, %v1126
  %v1128 = vpop.f32.mrb[0].mxu0
  %1129 = vmatprep.mubr.bf16.mxu0 %v528
  %1130 = vmatmul.mubr.bf16.gmra.mrb[0].mxu0 %v527
  %v1131 = vpop.f32.mrb[0].mxu0
  %v1132 = vadd.f32 %v247, %v1131
  %v1133 = vpop.f32.mrb[0].mxu0
  %v1134 = vpop.f32.mrb[0].mxu0
  %v1135 = vadd.f32 %v247, %v1134
  %v1136 = vpop.f32.mrb[0].mxu0
  %1137 = vmatprep.mubr.bf16.mxu0 %v537
  %1138 = vmatmul.mubr.bf16.gmra.mrb[0].mxu0 %v536
  %v1139 = vpop.f32.mrb[0].mxu0
  %v1140 = vadd.f32 %v247, %v1139
  %v1141 = vpop.f32.mrb[0].mxu0
  %v1142 = vpop.f32.mrb[0].mxu0
  %v1143 = vadd.f32 %v247, %v1142
  %v1144 = vpop.f32.mrb[0].mxu0
  %1145 = vdwg.mxu0
  %1146 = vmatprep.subr.bf16.mxu0 0
  %1147 = vmatpush1.bf16.msra.mxu0 %v921
  %1148 = vmatprep.subr.bf16.mxu0 0
  %1149 = vmatpush1.bf16.msra.mxu0 %v922
  %1150 = vmatprep.subr.bf16.mxu0 0
  %1151 = vmatpush1.bf16.msra.mxu0 %v923
  %1152 = vmatprep.subr.bf16.mxu0 0
  %1153 = vmatpush1.bf16.msra.mxu0 %v924
  %1154 = vmatprep.subr.bf16.mxu0 0
  %1155 = vmatpush1.bf16.msra.mxu0 %v925
  %1156 = vmatprep.subr.bf16.mxu0 0
  %1157 = vmatpush1.bf16.msra.mxu0 %v926
  %1158 = vmatprep.subr.bf16.mxu0 0
  %1159 = vmatpush1.bf16.msra.mxu0 %v927
  %1160 = vmatprep.subr.bf16.mxu0 0
  %1161 = vmatpush1.bf16.msra.mxu0 %v928
  %1162 = vmatprep.subr.bf16.mxu0 0
  %1163 = vmatpush1.bf16.msra.mxu0 %v929
  %1164 = vmatprep.subr.bf16.mxu0 0
  %1165 = vmatpush1.bf16.msra.mxu0 %v930
  %1166 = vmatprep.subr.bf16.mxu0 0
  %1167 = vmatpush1.bf16.msra.mxu0 %v931
  %1168 = vmatprep.subr.bf16.mxu0 0
  %1169 = vmatpush1.bf16.msra.mxu0 %v932
  %1170 = vmatprep.subr.bf16.mxu0 0
  %1171 = vmatpush1.bf16.msra.mxu0 %v933
  %1172 = vmatprep.subr.bf16.mxu0 0
  %1173 = vmatpush1.bf16.msra.mxu0 %v934
  %1174 = vmatprep.subr.bf16.mxu0 0
  %1175 = vmatpush1.bf16.msra.mxu0 %v935
  %1176 = vmatprep.subr.bf16.mxu0 0
  %1177 = vmatpush1.bf16.msra.mxu0 %v936
  %1178 = vmatprep.mubr.bf16.mxu0 %v476
  %1179 = vmatmul.mubr.bf16.gmra.mrb[0].mxu0 %v475
  %v1180 = vpop.f32.mrb[0].mxu0
  %v1181 = vadd.f32 %v1084, %v1180
  %v1182 = vpop.f32.mrb[0].mxu0
  %v1183 = vpop.f32.mrb[0].mxu0
  %v1184 = vadd.f32 %v1087, %v1183
  %v1185 = vpop.f32.mrb[0].mxu0
  %1186 = vmatprep.mubr.bf16.mxu0 %v485
  %1187 = vmatmul.mubr.bf16.gmra.mrb[0].mxu0 %v484
  %v1188 = vpop.f32.mrb[0].mxu0
  %v1189 = vadd.f32 %v1092, %v1188
  %v1190 = vpop.f32.mrb[0].mxu0
  %v1191 = vpop.f32.mrb[0].mxu0
  %v1192 = vadd.f32 %v1095, %v1191
  %v1193 = vpop.f32.mrb[0].mxu0
  %1194 = vmatprep.mubr.bf16.mxu0 %v494
  %1195 = vmatmul.mubr.bf16.gmra.mrb[0].mxu0 %v493
  %v1196 = vpop.f32.mrb[0].mxu0
  %v1197 = vadd.f32 %v1100, %v1196
  %v1198 = vpop.f32.mrb[0].mxu0
  %v1199 = vpop.f32.mrb[0].mxu0
  %v1200 = vadd.f32 %v1103, %v1199
  %v1201 = vpop.f32.mrb[0].mxu0
  %1202 = vmatprep.mubr.bf16.mxu0 %v503
  %1203 = vmatmul.mubr.bf16.gmra.mrb[0].mxu0 %v502
  %v1204 = vpop.f32.mrb[0].mxu0
  %v1205 = vadd.f32 %v1108, %v1204
  %v1206 = vpop.f32.mrb[0].mxu0
  %v1207 = vpop.f32.mrb[0].mxu0
  %v1208 = vadd.f32 %v1111, %v1207
  %v1209 = vpop.f32.mrb[0].mxu0
  %1210 = vmatprep.mubr.bf16.mxu0 %v512
  %1211 = vmatmul.mubr.bf16.gmra.mrb[0].mxu0 %v511
  %v1212 = vpop.f32.mrb[0].mxu0
  %v1213 = vadd.f32 %v1116, %v1212
  %v1214 = vpop.f32.mrb[0].mxu0
  %v1215 = vpop.f32.mrb[0].mxu0
  %v1216 = vadd.f32 %v1119, %v1215
  %v1217 = vpop.f32.mrb[0].mxu0
  %1218 = vmatprep.mubr.bf16.mxu0 %v521
  %1219 = vmatmul.mubr.bf16.gmra.mrb[0].mxu0 %v520
  %v1220 = vpop.f32.mrb[0].mxu0
  %v1221 = vadd.f32 %v1124, %v1220
  %v1222 = vpop.f32.mrb[0].mxu0
  %v1223 = vpop.f32.mrb[0].mxu0
  %v1224 = vadd.f32 %v1127, %v1223
  %v1225 = vpop.f32.mrb[0].mxu0
  %1226 = vmatprep.mubr.bf16.mxu0 %v530
  %1227 = vmatmul.mubr.bf16.gmra.mrb[0].mxu0 %v529
  %v1228 = vpop.f32.mrb[0].mxu0
  %v1229 = vadd.f32 %v1132, %v1228
  %v1230 = vpop.f32.mrb[0].mxu0
  %v1231 = vpop.f32.mrb[0].mxu0
  %v1232 = vadd.f32 %v1135, %v1231
  %v1233 = vpop.f32.mrb[0].mxu0
  %1234 = vmatprep.mubr.bf16.mxu0 %v539
  %1235 = vmatmul.mubr.bf16.gmra.mrb[0].mxu0 %v538
  %v1236 = vpop.f32.mrb[0].mxu0
  %v1237 = vadd.f32 %v1140, %v1236
  %v1238 = vpop.f32.mrb[0].mxu0
  %v1239 = vpop.f32.mrb[0].mxu0
  %v1240 = vadd.f32 %v1143, %v1239
  %v1241 = vpop.f32.mrb[0].mxu0
  %1242 = vdwg.mxu0
  %1243 = vmatprep.subr.bf16.mxu0 0
  %1244 = vmatpush1.bf16.msra.mxu0 %v937
  %1245 = vmatprep.subr.bf16.mxu0 0
  %1246 = vmatpush1.bf16.msra.mxu0 %v938
  %1247 = vmatprep.subr.bf16.mxu0 0
  %1248 = vmatpush1.bf16.msra.mxu0 %v939
  %1249 = vmatprep.subr.bf16.mxu0 0
  %1250 = vmatpush1.bf16.msra.mxu0 %v940
  %1251 = vmatprep.subr.bf16.mxu0 0
  %1252 = vmatpush1.bf16.msra.mxu0 %v941
  %1253 = vmatprep.subr.bf16.mxu0 0
  %1254 = vmatpush1.bf16.msra.mxu0 %v942
  %1255 = vmatprep.subr.bf16.mxu0 0
  %1256 = vmatpush1.bf16.msra.mxu0 %v943
  %1257 = vmatprep.subr.bf16.mxu0 0
  %1258 = vmatpush1.bf16.msra.mxu0 %v944
  %1259 = vmatprep.subr.bf16.mxu0 0
  %1260 = vmatpush1.bf16.msra.mxu0 %v945
  %1261 = vmatprep.subr.bf16.mxu0 0
  %1262 = vmatpush1.bf16.msra.mxu0 %v946
  %1263 = vmatprep.subr.bf16.mxu0 0
  %1264 = vmatpush1.bf16.msra.mxu0 %v947
  %1265 = vmatprep.subr.bf16.mxu0 0
  %1266 = vmatpush1.bf16.msra.mxu0 %v948
  %1267 = vmatprep.subr.bf16.mxu0 0
  %1268 = vmatpush1.bf16.msra.mxu0 %v949
  %1269 = vmatprep.subr.bf16.mxu0 0
  %1270 = vmatpush1.bf16.msra.mxu0 %v950
  %1271 = vmatprep.subr.bf16.mxu0 0
  %1272 = vmatpush1.bf16.msra.mxu0 %v951
  %1273 = vmatprep.subr.bf16.mxu0 0
  %1274 = vmatpush1.bf16.msra.mxu0 %v952
  %1275 = vmatprep.mubr.bf16.mxu0 %v478
  %1276 = vmatmul.mubr.bf16.gmra.mrb[0].mxu0 %v477
  %v1277 = vpop.f32.mrb[0].mxu0
  %v1278 = vadd.f32 %v1181, %v1277
  %v1279 = vpop.f32.mrb[0].mxu0
  %v1280 = vpop.f32.mrb[0].mxu0
  %v1281 = vadd.f32 %v1184, %v1280
  %v1282 = vpop.f32.mrb[0].mxu0
  %1283 = vmatprep.mubr.bf16.mxu0 %v487
  %1284 = vmatmul.mubr.bf16.gmra.mrb[0].mxu0 %v486
  %v1285 = vpop.f32.mrb[0].mxu0
  %v1286 = vadd.f32 %v1189, %v1285
  %v1287 = vpop.f32.mrb[0].mxu0
  %v1288 = vpop.f32.mrb[0].mxu0
  %v1289 = vadd.f32 %v1192, %v1288
  %v1290 = vpop.f32.mrb[0].mxu0
  %1291 = vmatprep.mubr.bf16.mxu0 %v496
  %1292 = vmatmul.mubr.bf16.gmra.mrb[0].mxu0 %v495
  %v1293 = vpop.f32.mrb[0].mxu0
  %v1294 = vadd.f32 %v1197, %v1293
  %v1295 = vpop.f32.mrb[0].mxu0
  %v1296 = vpop.f32.mrb[0].mxu0
  %v1297 = vadd.f32 %v1200, %v1296
  %v1298 = vpop.f32.mrb[0].mxu0
  %1299 = vmatprep.mubr.bf16.mxu0 %v505
  %1300 = vmatmul.mubr.bf16.gmra.mrb[0].mxu0 %v504
  %v1301 = vpop.f32.mrb[0].mxu0
  %v1302 = vadd.f32 %v1205, %v1301
  %v1303 = vpop.f32.mrb[0].mxu0
  %v1304 = vpop.f32.mrb[0].mxu0
  %v1305 = vadd.f32 %v1208, %v1304
  %v1306 = vpop.f32.mrb[0].mxu0
  %1307 = vmatprep.mubr.bf16.mxu0 %v514
  %1308 = vmatmul.mubr.bf16.gmra.mrb[0].mxu0 %v513
  %v1309 = vpop.f32.mrb[0].mxu0
  %v1310 = vadd.f32 %v1213, %v1309
  %v1311 = vpop.f32.mrb[0].mxu0
  %v1312 = vpop.f32.mrb[0].mxu0
  %v1313 = vadd.f32 %v1216, %v1312
  %v1314 = vpop.f32.mrb[0].mxu0
  %1315 = vmatprep.mubr.bf16.mxu0 %v523
  %1316 = vmatmul.mubr.bf16.gmra.mrb[0].mxu0 %v522
  %v1317 = vpop.f32.mrb[0].mxu0
  %v1318 = vadd.f32 %v1221, %v1317
  %v1319 = vpop.f32.mrb[0].mxu0
  %v1320 = vpop.f32.mrb[0].mxu0
  %v1321 = vadd.f32 %v1224, %v1320
  %v1322 = vpop.f32.mrb[0].mxu0
  %1323 = vmatprep.mubr.bf16.mxu0 %v532
  %1324 = vmatmul.mubr.bf16.gmra.mrb[0].mxu0 %v531
  %v1325 = vpop.f32.mrb[0].mxu0
  %v1326 = vadd.f32 %v1229, %v1325
  %v1327 = vpop.f32.mrb[0].mxu0
  %v1328 = vpop.f32.mrb[0].mxu0
  %v1329 = vadd.f32 %v1232, %v1328
  %v1330 = vpop.f32.mrb[0].mxu0
  %1331 = vmatprep.mubr.bf16.mxu0 %v541
  %1332 = vmatmul.mubr.bf16.gmra.mrb[0].mxu0 %v540
  %v1333 = vpop.f32.mrb[0].mxu0
  %v1334 = vadd.f32 %v1237, %v1333
  %v1335 = vpop.f32.mrb[0].mxu0
  %v1336 = vpop.f32.mrb[0].mxu0
  %v1337 = vadd.f32 %v1240, %v1336
  %v1338 = vpop.f32.mrb[0].mxu0
  %1339 = vdwg.mxu0
  %1340 = vmatprep.subr.bf16.mxu0 0
  %1341 = vmatpush1.bf16.msra.mxu0 %v953
  %1342 = vmatprep.subr.bf16.mxu0 0
  %1343 = vmatpush1.bf16.msra.mxu0 %v954
  %1344 = vmatprep.subr.bf16.mxu0 0
  %1345 = vmatpush1.bf16.msra.mxu0 %v955
  %1346 = vmatprep.subr.bf16.mxu0 0
  %1347 = vmatpush1.bf16.msra.mxu0 %v956
  %1348 = vmatprep.subr.bf16.mxu0 0
  %1349 = vmatpush1.bf16.msra.mxu0 %v957
  %1350 = vmatprep.subr.bf16.mxu0 0
  %1351 = vmatpush1.bf16.msra.mxu0 %v958
  %1352 = vmatprep.subr.bf16.mxu0 0
  %1353 = vmatpush1.bf16.msra.mxu0 %v959
  %1354 = vmatprep.subr.bf16.mxu0 0
  %1355 = vmatpush1.bf16.msra.mxu0 %v960
  %1356 = vmatprep.subr.bf16.mxu0 0
  %1357 = vmatpush1.bf16.msra.mxu0 %v961
  %1358 = vmatprep.subr.bf16.mxu0 0
  %1359 = vmatpush1.bf16.msra.mxu0 %v962
  %1360 = vmatprep.subr.bf16.mxu0 0
  %1361 = vmatpush1.bf16.msra.mxu0 %v963
  %1362 = vmatprep.subr.bf16.mxu0 0
  %1363 = vmatpush1.bf16.msra.mxu0 %v964
  %1364 = vmatprep.subr.bf16.mxu0 0
  %1365 = vmatpush1.bf16.msra.mxu0 %v965
  %1366 = vmatprep.subr.bf16.mxu0 0
  %1367 = vmatpush1.bf16.msra.mxu0 %v966
  %1368 = vmatprep.subr.bf16.mxu0 0
  %1369 = vmatpush1.bf16.msra.mxu0 %v967
  %1370 = vmatprep.subr.bf16.mxu0 0
  %1371 = vmatpush1.bf16.msra.mxu0 %v968
  %1372 = vmatprep.mubr.bf16.mxu0 %v480
  %1373 = vmatmul.mubr.bf16.gmra.mrb[0].mxu0 %v479
  %v1374 = vpop.f32.mrb[0].mxu0
  %v1375 = vadd.f32 %v1278, %v1374
  %v1376 = vpop.f32.mrb[0].mxu0
  %v1377 = vpop.f32.mrb[0].mxu0
  %v1378 = vadd.f32 %v1281, %v1377
  %v1379 = vpop.f32.mrb[0].mxu0
  %1380 = vmatprep.mubr.bf16.mxu0 %v489
  %1381 = vmatmul.mubr.bf16.gmra.mrb[0].mxu0 %v488
  %v1382 = vpop.f32.mrb[0].mxu0
  %v1383 = vadd.f32 %v1286, %v1382
  %v1384 = vpop.f32.mrb[0].mxu0
  %v1385 = vpop.f32.mrb[0].mxu0
  %v1386 = vadd.f32 %v1289, %v1385
  %v1387 = vpop.f32.mrb[0].mxu0
  %1388 = vmatprep.mubr.bf16.mxu0 %v498
  %1389 = vmatmul.mubr.bf16.gmra.mrb[0].mxu0 %v497
  %v1390 = vpop.f32.mrb[0].mxu0
  %v1391 = vadd.f32 %v1294, %v1390
  %v1392 = vpop.f32.mrb[0].mxu0
  %v1393 = vpop.f32.mrb[0].mxu0
  %v1394 = vadd.f32 %v1297, %v1393
  %v1395 = vpop.f32.mrb[0].mxu0
  %1396 = vmatprep.mubr.bf16.mxu0 %v507
  %1397 = vmatmul.mubr.bf16.gmra.mrb[0].mxu0 %v506
  %v1398 = vpop.f32.mrb[0].mxu0
  %v1399 = vadd.f32 %v1302, %v1398
  %v1400 = vpop.f32.mrb[0].mxu0
  %v1401 = vpop.f32.mrb[0].mxu0
  %v1402 = vadd.f32 %v1305, %v1401
  %v1403 = vpop.f32.mrb[0].mxu0
  %1404 = vmatprep.mubr.bf16.mxu0 %v516
  %1405 = vmatmul.mubr.bf16.gmra.mrb[0].mxu0 %v515
  %v1406 = vpop.f32.mrb[0].mxu0
  %v1407 = vadd.f32 %v1310, %v1406
  %v1408 = vpop.f32.mrb[0].mxu0
  %v1409 = vpop.f32.mrb[0].mxu0
  %v1410 = vadd.f32 %v1313, %v1409
  %v1411 = vpop.f32.mrb[0].mxu0
  %1412 = vmatprep.mubr.bf16.mxu0 %v525
  %1413 = vmatmul.mubr.bf16.gmra.mrb[0].mxu0 %v524
  %v1414 = vpop.f32.mrb[0].mxu0
  %v1415 = vadd.f32 %v1318, %v1414
  %v1416 = vpop.f32.mrb[0].mxu0
  %v1417 = vpop.f32.mrb[0].mxu0
  %v1418 = vadd.f32 %v1321, %v1417
  %v1419 = vpop.f32.mrb[0].mxu0
  %1420 = vmatprep.mubr.bf16.mxu0 %v534
  %1421 = vmatmul.mubr.bf16.gmra.mrb[0].mxu0 %v533
  %v1422 = vpop.f32.mrb[0].mxu0
  %v1423 = vadd.f32 %v1326, %v1422
  %v1424 = vpop.f32.mrb[0].mxu0
  %v1425 = vpop.f32.mrb[0].mxu0
  %v1426 = vadd.f32 %v1329, %v1425
  %v1427 = vpop.f32.mrb[0].mxu0
  %1428 = vmatprep.mubr.bf16.mxu0 %v543
  %1429 = vmatmul.mubr.bf16.gmra.mrb[0].mxu0 %v542
  %v1430 = vpop.f32.mrb[0].mxu0
  %v1431 = vadd.f32 %v1334, %v1430
  %v1432 = vpop.f32.mrb[0].mxu0
  %v1433 = vpop.f32.mrb[0].mxu0
  %v1434 = vadd.f32 %v1337, %v1433
  %v1435 = vpop.f32.mrb[0].mxu0
  %1436 = vdwg.mxu0
  %1437 = vmatprep.subr.bf16.mxu0 0
  %1438 = vmatpush1.bf16.msra.mxu0 %v969
  %1439 = vmatprep.subr.bf16.mxu0 0
  %1440 = vmatpush1.bf16.msra.mxu0 %v970
  %1441 = vmatprep.subr.bf16.mxu0 0
  %1442 = vmatpush1.bf16.msra.mxu0 %v971
  %1443 = vmatprep.subr.bf16.mxu0 0
  %1444 = vmatpush1.bf16.msra.mxu0 %v972
  %1445 = vmatprep.subr.bf16.mxu0 0
  %1446 = vmatpush1.bf16.msra.mxu0 %v973
  %1447 = vmatprep.subr.bf16.mxu0 0
  %1448 = vmatpush1.bf16.msra.mxu0 %v974
  %1449 = vmatprep.subr.bf16.mxu0 0
  %1450 = vmatpush1.bf16.msra.mxu0 %v975
  %1451 = vmatprep.subr.bf16.mxu0 0
  %1452 = vmatpush1.bf16.msra.mxu0 %v976
  %1453 = vmatprep.subr.bf16.mxu0 0
  %1454 = vmatpush1.bf16.msra.mxu0 0
  %1455 = vmatprep.subr.bf16.mxu0 0
  %1456 = vmatpush1.bf16.msra.mxu0 0
  %1457 = vmatprep.subr.bf16.mxu0 0
  %1458 = vmatpush1.bf16.msra.mxu0 0
  %1459 = vmatprep.subr.bf16.mxu0 0
  %1460 = vmatpush1.bf16.msra.mxu0 0
  %1461 = vmatprep.subr.bf16.mxu0 0
  %1462 = vmatpush1.bf16.msra.mxu0 0
  %1463 = vmatprep.subr.bf16.mxu0 0
  %1464 = vmatpush1.bf16.msra.mxu0 0
  %1465 = vmatprep.subr.bf16.mxu0 0
  %1466 = vmatpush1.bf16.msra.mxu0 0
  %1467 = vmatprep.subr.bf16.mxu0 0
  %1468 = vmatpush1.bf16.msra.mxu0 0
  %1469 = vmatprep.mubr.bf16.mxu0 0
  %1470 = vmatmul.mubr.bf16.gmra.mrb[0].mxu0 %v481
  %v1471 = vpop.f32.mrb[0].mxu0
  %v1472 = vadd.f32 %v1375, %v1471
  %v1473 = vpop.f32.mrb[0].mxu0
  %v1474 = vpop.f32.mrb[0].mxu0
  %v1475 = vadd.f32 %v1378, %v1474
  %v1476 = vpop.f32.mrb[0].mxu0
  %1477 = vmatprep.mubr.bf16.mxu0 0
  %1478 = vmatmul.mubr.bf16.gmra.mrb[0].mxu0 %v490
  %v1479 = vpop.f32.mrb[0].mxu0
  %v1480 = vadd.f32 %v1383, %v1479
  %v1481 = vpop.f32.mrb[0].mxu0
  %v1482 = vpop.f32.mrb[0].mxu0
  %v1483 = vadd.f32 %v1386, %v1482
  %v1484 = vpop.f32.mrb[0].mxu0
  %1485 = vmatprep.mubr.bf16.mxu0 0
  %1486 = vmatmul.mubr.bf16.gmra.mrb[0].mxu0 %v499
  %v1487 = vpop.f32.mrb[0].mxu0
  %v1488 = vadd.f32 %v1391, %v1487
  %v1489 = vpop.f32.mrb[0].mxu0
  %v1490 = vpop.f32.mrb[0].mxu0
  %v1491 = vadd.f32 %v1394, %v1490
  %v1492 = vpop.f32.mrb[0].mxu0
  %1493 = vmatprep.mubr.bf16.mxu0 0
  %1494 = vmatmul.mubr.bf16.gmra.mrb[0].mxu0 %v508
  %v1495 = vpop.f32.mrb[0].mxu0
  %v1496 = vadd.f32 %v1399, %v1495
  %v1497 = vpop.f32.mrb[0].mxu0
  %v1498 = vpop.f32.mrb[0].mxu0
  %v1499 = vadd.f32 %v1402, %v1498
  %v1500 = vpop.f32.mrb[0].mxu0
  %1501 = vmatprep.mubr.bf16.mxu0 0
  %1502 = vmatmul.mubr.bf16.gmra.mrb[0].mxu0 %v517
  %v1503 = vpop.f32.mrb[0].mxu0
  %v1504 = vadd.f32 %v1407, %v1503
  %v1505 = vpop.f32.mrb[0].mxu0
  %v1506 = vpop.f32.mrb[0].mxu0
  %v1507 = vadd.f32 %v1410, %v1506
  %v1508 = vpop.f32.mrb[0].mxu0
  %1509 = vmatprep.mubr.bf16.mxu0 0
  %1510 = vmatmul.mubr.bf16.gmra.mrb[0].mxu0 %v526
  %v1511 = vpop.f32.mrb[0].mxu0
  %v1512 = vadd.f32 %v1415, %v1511
  %v1513 = vpop.f32.mrb[0].mxu0
  %v1514 = vpop.f32.mrb[0].mxu0
  %v1515 = vadd.f32 %v1418, %v1514
  %v1516 = vpop.f32.mrb[0].mxu0
  %1517 = vmatprep.mubr.bf16.mxu0 0
  %1518 = vmatmul.mubr.bf16.gmra.mrb[0].mxu0 %v535
  %v1519 = vpop.f32.mrb[0].mxu0
  %v1520 = vadd.f32 %v1423, %v1519
  %v1521 = vpop.f32.mrb[0].mxu0
  %v1522 = vpop.f32.mrb[0].mxu0
  %v1523 = vadd.f32 %v1426, %v1522
  %v1524 = vpop.f32.mrb[0].mxu0
  %1525 = vmatprep.mubr.bf16.mxu0 0
  %1526 = vmatmul.mubr.bf16.gmra.mrb[0].mxu0 %v544
  %v1527 = vpop.f32.mrb[0].mxu0
  %v1528 = vadd.f32 %v1431, %v1527
  %v1529 = vpop.f32.mrb[0].mxu0
  %v1530 = vpop.f32.mrb[0].mxu0
  %v1531 = vadd.f32 %v1434, %v1530
  %v1532 = vpop.f32.mrb[0].mxu0
  %1533 = vdwg.mxu0
  %v1534 = vmax.f32 %v1472, 0.0
  %v1535 = vmax.f32 %v1475, 0.0
  %v1536 = vmax.f32 %v1480, 0.0
  %v1537 = vmax.f32 %v1483, 0.0
  %v1538 = vmax.f32 %v1488, 0.0
  %v1539 = vmax.f32 %v1491, 0.0
  %v1540 = vmax.f32 %v1496, 0.0
  %v1541 = vmax.f32 %v1499, 0.0
  %v1542 = vmax.f32 %v1504, 0.0
  %v1543 = vmax.f32 %v1507, 0.0
  %v1544 = vmax.f32 %v1512, 0.0
  %v1545 = vmax.f32 %v1515, 0.0
  %v1546 = vmax.f32 %v1520, 0.0
  %v1547 = vmax.f32 %v1523, 0.0
  %v1548 = vmax.f32 %v1528, 0.0
  %v1549 = vmax.f32 %v1531, 0.0
  %v1550 = vld [vmem:[%s3] sm:$0xf]
  %v1551 = vld [vmem:[%s3 + $0x4] sm:$0xf]
  %v1552 = vld [vmem:[%s3 + $0x8] sm:$0xf]
  %v1553 = vld [vmem:[%s3 + $0xc] sm:$0xf]
  %v1554 = vld [vmem:[%s3 + $0x10] sm:$0xf]
  %v1555 = vld [vmem:[%s3 + $0x14] sm:$0xf]
  %v1556 = vld [vmem:[%s3 + $0x18] sm:$0xf]
  %v1557 = vld [vmem:[%s3 + $0x1c] sm:$0xf]
  %v1558 = vld [vmem:[%s3 + $0x20] sm:$0xf]
  %v1559 = vld [vmem:[%s3 + $0x24] sm:$0xf]
  %v1560 = vld [vmem:[%s3 + $0x28] sm:$0xf]
  %v1561 = vld [vmem:[%s3 + $0x2c] sm:$0xf]
  %v1562 = vld [vmem:[%s3 + $0x30] sm:$0xf]
  %v1563 = vld [vmem:[%s3 + $0x34] sm:$0xf]
  %v1564 = vld [vmem:[%s3 + $0x38] sm:$0xf]
  %v1565 = vld [vmem:[%s3 + $0x3c] sm:$0xf]
  %v1566 = vunpack.c.l.bf16 %v1550
  %v1567 = vunpack.c.l.bf16 %v1551
  %v1568 = vunpack.c.l.bf16 %v1552
  %v1569 = vunpack.c.l.bf16 %v1553
  %v1570 = vunpack.c.l.bf16 %v1554
  %v1571 = vunpack.c.l.bf16 %v1555
  %v1572 = vunpack.c.l.bf16 %v1556
  %v1573 = vunpack.c.l.bf16 %v1557
  %v1574 = vunpack.c.l.bf16 %v1558
  %v1575 = vunpack.c.l.bf16 %v1559
  %v1576 = vunpack.c.l.bf16 %v1560
  %v1577 = vunpack.c.l.bf16 %v1561
  %v1578 = vunpack.c.l.bf16 %v1562
  %v1579 = vunpack.c.l.bf16 %v1563
  %v1580 = vunpack.c.l.bf16 %v1564
  %v1581 = vunpack.c.l.bf16 %v1565
  %v1582 = vadd.f32 %v1534, %v1566
  %v1583 = vadd.f32 %v1535, %v1567
  %v1584 = vadd.f32 %v1536, %v1568
  %v1585 = vadd.f32 %v1537, %v1569
  %v1586 = vadd.f32 %v1538, %v1570
  %v1587 = vadd.f32 %v1539, %v1571
  %v1588 = vadd.f32 %v1540, %v1572
  %v1589 = vadd.f32 %v1541, %v1573
  %v1590 = vadd.f32 %v1542, %v1574
  %v1591 = vadd.f32 %v1543, %v1575
  %v1592 = vadd.f32 %v1544, %v1576
  %v1593 = vadd.f32 %v1545, %v1577
  %v1594 = vadd.f32 %v1546, %v1578
  %v1595 = vadd.f32 %v1547, %v1579
  %v1596 = vadd.f32 %v1548, %v1580
  %v1597 = vadd.f32 %v1549, %v1581
  %1598 = vst [vmem:[%s4] sm:$0xff] %v1582
  %1599 = vst [vmem:[%s4 + $0x8] sm:$0xff] %v1583
  %1600 = vst [vmem:[%s4 + $0x10] sm:$0xff] %v1584
  %1601 = vst [vmem:[%s4 + $0x18] sm:$0xff] %v1585
  %1602 = vst [vmem:[%s4 + $0x20] sm:$0xff] %v1586
  %1603 = vst [vmem:[%s4 + $0x28] sm:$0xff] %v1587
  %1604 = vst [vmem:[%s4 + $0x30] sm:$0xff] %v1588
  %1605 = vst [vmem:[%s4 + $0x38] sm:$0xff] %v1589
  %1606 = vst [vmem:[%s4 + $0x40] sm:$0xff] %v1590
  %1607 = vst [vmem:[%s4 + $0x48] sm:$0xff] %v1591
  %1608 = vst [vmem:[%s4 + $0x50] sm:$0xff] %v1592
  %1609 = vst [vmem:[%s4 + $0x58] sm:$0xff] %v1593
  %1610 = vst [vmem:[%s4 + $0x60] sm:$0xff] %v1594
  %1611 = vst [vmem:[%s4 + $0x68] sm:$0xff] %v1595
  %1612 = vst [vmem:[%s4 + $0x70] sm:$0xff] %v1596
  %1613 = vst [vmem:[%s4 + $0x78] sm:$0xff] %v1597
  // Predicated region
  $region18: #{generator_forward.15} parent=0 // pred_check
    _
  $region19: #{generator_forward.15} parent=0 // pred_check_branch
    %1615 = sbr.rel (0) target = $region21
  $region20: #{generator_forward.15} parent=0 // pred_region
    _
  $region21: #{generator_forward.15} parent=0 // pred_fallthru
    _
  // Predicated region
  $region22: #{generator_forward.15} parent=0 // pred_check
    _
  $region23: #{generator_forward.15} parent=0 // pred_check_branch
    %1617 = sbr.rel (0) target = $region25
  $region24: #{generator_forward.15} parent=0 // pred_region
    _
  $region25: #{generator_forward.15} parent=0 // pred_fallthru
    _

// kernel: generator_forward.16
$region0: #{generator_forward.16}
  #allocation0 [shape = 'u32[]', space=smem, size = 0x4, offset = 0x4, fixed_abs, tag = 'smem constant byte address 0x4 - core index']
  #allocation1 [shape = 'u32[144,128]{1,0:T(1,128)}', space=vmem, size = 0x12000, scoped, tag = 'internal scratch']
  %s0 = inlined_call_operand.vmem [shape: bf16[128,640], index: 0, kind: input, shape index: {}]
  %s1 = inlined_call_operand.vmem [shape: bf16[640,128], index: 1, kind: input, shape index: {}]
  %s2 = inlined_call_operand.vmem [shape: f32[1,128], index: 2, kind: input, shape index: {}]
  %s3 = inlined_call_operand.vmem [shape: bf16[128,128], index: 3, kind: input, shape index: {}]
  %s4 = inlined_call_operand.vmem [shape: f32[128,128], index: 4, kind: output, shape index: {}]
  %s5 = sld [smem:[#allocation0]]
  $region26: #{generator_forward.16} parent=0
    _
  %s7 = ssub.s32 1, %s5
  %s8 = scalar_select 0, %s7, %s5
  // Predicated region
  $region2: #{generator_forward.16} parent=0 // pred_check
    _
  $region3: #{generator_forward.16} parent=0 // pred_check_branch
    %10 = sbr.rel (0) target = $region5
  $region4: #{generator_forward.16} parent=0 // pred_region
    _
  $region5: #{generator_forward.16} parent=0 // pred_fallthru
    _
  // Predicated region
  $region6: #{generator_forward.16} parent=0 // pred_check
    _
  $region7: #{generator_forward.16} parent=0 // pred_check_branch
    %12 = sbr.rel (0) target = $region9
  $region8: #{generator_forward.16} parent=0 // pred_region
    _
  $region9: #{generator_forward.16} parent=0 // pred_fallthru
    _
  // Predicated region
  $region10: #{generator_forward.16} parent=0 // pred_check
    _
  $region11: #{generator_forward.16} parent=0 // pred_check_branch
    %14 = sbr.rel (0) target = $region13
  $region12: #{generator_forward.16} parent=0 // pred_region
    _
  $region13: #{generator_forward.16} parent=0 // pred_fallthru
    _
  // Predicated region
  $region14: #{generator_forward.16} parent=0 // pred_check
    _
  $region15: #{generator_forward.16} parent=0 // pred_check_branch
    %16 = sbr.rel (0) target = $region17
  $region16: #{generator_forward.16} parent=0 // pred_region
    _
  $region17: #{generator_forward.16} parent=0 // pred_fallthru
    _
  %v18 = vld [vmem:[%s0] sm:$0xff]
  %v19 = vld [vmem:[%s0 + $0x8] sm:$0xff]
  %v20 = vld [vmem:[%s0 + $0x10] sm:$0xf]
  %v21 = vld [vmem:[%s0 + $0x14] sm:$0xff]
  %v22 = vld [vmem:[%s0 + $0x1c] sm:$0xff]
  %v23 = vld [vmem:[%s0 + $0x24] sm:$0xf]
  %v24 = vld [vmem:[%s0 + $0x28] sm:$0xff]
  %v25 = vld [vmem:[%s0 + $0x30] sm:$0xff]
  %v26 = vld [vmem:[%s0 + $0x38] sm:$0xf]
  %v27 = vld [vmem:[%s0 + $0x3c] sm:$0xff]
  %v28 = vld [vmem:[%s0 + $0x44] sm:$0xff]
  %v29 = vld [vmem:[%s0 + $0x4c] sm:$0xf]
  %v30 = vld [vmem:[%s0 + $0x50] sm:$0xff]
  %v31 = vld [vmem:[%s0 + $0x58] sm:$0xff]
  %v32 = vld [vmem:[%s0 + $0x60] sm:$0xf]
  %v33 = vld [vmem:[%s0 + $0x64] sm:$0xff]
  %v34 = vld [vmem:[%s0 + $0x6c] sm:$0xff]
  %v35 = vld [vmem:[%s0 + $0x74] sm:$0xf]
  %v36 = vld [vmem:[%s0 + $0x78] sm:$0xff]
  %v37 = vld [vmem:[%s0 + $0x80] sm:$0xff]
  %v38 = vld [vmem:[%s0 + $0x88] sm:$0xf]
  %v39 = vld [vmem:[%s0 + $0x8c] sm:$0xff]
  %v40 = vld [vmem:[%s0 + $0x94] sm:$0xff]
  %v41 = vld [vmem:[%s0 + $0x9c] sm:$0xf]
  %v42 = vld [vmem:[%s0 + $0xa0] sm:$0xff]
  %v43 = vld [vmem:[%s0 + $0xa8] sm:$0xff]
  %v44 = vld [vmem:[%s0 + $0xb0] sm:$0xf]
  %v45 = vld [vmem:[%s0 + $0xb4] sm:$0xff]
  %v46 = vld [vmem:[%s0 + $0xbc] sm:$0xff]
  %v47 = vld [vmem:[%s0 + $0xc4] sm:$0xf]
  %v48 = vld [vmem:[%s0 + $0xc8] sm:$0xff]
  %v49 = vld [vmem:[%s0 + $0xd0] sm:$0xff]
  %v50 = vld [vmem:[%s0 + $0xd8] sm:$0xf]
  %v51 = vld [vmem:[%s0 + $0xdc] sm:$0xff]
  %v52 = vld [vmem:[%s0 + $0xe4] sm:$0xff]
  %v53 = vld [vmem:[%s0 + $0xec] sm:$0xf]
  %v54 = vld [vmem:[%s0 + $0xf0] sm:$0xff]
  %v55 = vld [vmem:[%s0 + $0xf8] sm:$0xff]
  %v56 = vld [vmem:[%s0 + $0x100] sm:$0xf]
  %v57 = vld [vmem:[%s0 + $0x104] sm:$0xff]
  %v58 = vld [vmem:[%s0 + $0x10c] sm:$0xff]
  %v59 = vld [vmem:[%s0 + $0x114] sm:$0xf]
  %v60 = vld [vmem:[%s0 + $0x118] sm:$0xff]
  %v61 = vld [vmem:[%s0 + $0x120] sm:$0xff]
  %v62 = vld [vmem:[%s0 + $0x128] sm:$0xf]
  %v63 = vld [vmem:[%s0 + $0x12c] sm:$0xff]
  %v64 = vld [vmem:[%s0 + $0x134] sm:$0xff]
  %v65 = vld [vmem:[%s0 + $0x13c] sm:$0xf]
  %v66 = vld [vmem:[%s1] sm:$0xf]
  %v67 = vld [vmem:[%s1 + $0x4] sm:$0xf]
  %v68 = vld [vmem:[%s1 + $0x8] sm:$0xf]
  %v69 = vld [vmem:[%s1 + $0xc] sm:$0xf]
  %v70 = vld [vmem:[%s1 + $0x10] sm:$0xf]
  %v71 = vld [vmem:[%s1 + $0x14] sm:$0xf]
  %v72 = vld [vmem:[%s1 + $0x18] sm:$0xf]
  %v73 = vld [vmem:[%s1 + $0x1c] sm:$0xf]
  %v74 = vld [vmem:[%s1 + $0x20] sm:$0xf]
  %v75 = vld [vmem:[%s1 + $0x24] sm:$0xf]
  %v76 = vld [vmem:[%s1 + $0x28] sm:$0xf]
  %v77 = vld [vmem:[%s1 + $0x2c] sm:$0xf]
  %v78 = vld [vmem:[%s1 + $0x30] sm:$0xf]
  %v79 = vld [vmem:[%s1 + $0x34] sm:$0xf]
  %v80 = vld [vmem:[%s1 + $0x38] sm:$0xf]
  %v81 = vld [vmem:[%s1 + $0x3c] sm:$0xf]
  %v82 = vld [vmem:[%s1 + $0x40] sm:$0xf]
  %v83 = vld [vmem:[%s1 + $0x44] sm:$0xf]
  %v84 = vld [vmem:[%s1 + $0x48] sm:$0xf]
  %v85 = vld [vmem:[%s1 + $0x4c] sm:$0xf]
  %v86 = vld [vmem:[%s1 + $0x50] sm:$0xf]
  %v87 = vld [vmem:[%s1 + $0x54] sm:$0xf]
  %v88 = vld [vmem:[%s1 + $0x58] sm:$0xf]
  %v89 = vld [vmem:[%s1 + $0x5c] sm:$0xf]
  %v90 = vld [vmem:[%s1 + $0x60] sm:$0xf]
  %v91 = vld [vmem:[%s1 + $0x64] sm:$0xf]
  %v92 = vld [vmem:[%s1 + $0x68] sm:$0xf]
  %v93 = vld [vmem:[%s1 + $0x6c] sm:$0xf]
  %v94 = vld [vmem:[%s1 + $0x70] sm:$0xf]
  %v95 = vld [vmem:[%s1 + $0x74] sm:$0xf]
  %v96 = vld [vmem:[%s1 + $0x78] sm:$0xf]
  %v97 = vld [vmem:[%s1 + $0x7c] sm:$0xf]
  %v98 = vld [vmem:[%s1 + $0x80] sm:$0xf]
  %v99 = vld [vmem:[%s1 + $0x84] sm:$0xf]
  %v100 = vld [vmem:[%s1 + $0x88] sm:$0xf]
  %v101 = vld [vmem:[%s1 + $0x8c] sm:$0xf]
  %v102 = vld [vmem:[%s1 + $0x90] sm:$0xf]
  %v103 = vld [vmem:[%s1 + $0x94] sm:$0xf]
  %v104 = vld [vmem:[%s1 + $0x98] sm:$0xf]
  %v105 = vld [vmem:[%s1 + $0x9c] sm:$0xf]
  %v106 = vld [vmem:[%s1 + $0xa0] sm:$0xf]
  %v107 = vld [vmem:[%s1 + $0xa4] sm:$0xf]
  %v108 = vld [vmem:[%s1 + $0xa8] sm:$0xf]
  %v109 = vld [vmem:[%s1 + $0xac] sm:$0xf]
  %v110 = vld [vmem:[%s1 + $0xb0] sm:$0xf]
  %v111 = vld [vmem:[%s1 + $0xb4] sm:$0xf]
  %v112 = vld [vmem:[%s1 + $0xb8] sm:$0xf]
  %v113 = vld [vmem:[%s1 + $0xbc] sm:$0xf]
  %v114 = vld [vmem:[%s1 + $0xc0] sm:$0xf]
  %v115 = vld [vmem:[%s1 + $0xc4] sm:$0xf]
  %v116 = vld [vmem:[%s1 + $0xc8] sm:$0xf]
  %v117 = vld [vmem:[%s1 + $0xcc] sm:$0xf]
  %v118 = vld [vmem:[%s1 + $0xd0] sm:$0xf]
  %v119 = vld [vmem:[%s1 + $0xd4] sm:$0xf]
  %v120 = vld [vmem:[%s1 + $0xd8] sm:$0xf]
  %v121 = vld [vmem:[%s1 + $0xdc] sm:$0xf]
  %v122 = vld [vmem:[%s1 + $0xe0] sm:$0xf]
  %v123 = vld [vmem:[%s1 + $0xe4] sm:$0xf]
  %v124 = vld [vmem:[%s1 + $0xe8] sm:$0xf]
  %v125 = vld [vmem:[%s1 + $0xec] sm:$0xf]
  %v126 = vld [vmem:[%s1 + $0xf0] sm:$0xf]
  %v127 = vld [vmem:[%s1 + $0xf4] sm:$0xf]
  %v128 = vld [vmem:[%s1 + $0xf8] sm:$0xf]
  %v129 = vld [vmem:[%s1 + $0xfc] sm:$0xf]
  %v130 = vld [vmem:[%s1 + $0x100] sm:$0xf]
  %v131 = vld [vmem:[%s1 + $0x104] sm:$0xf]
  %v132 = vld [vmem:[%s1 + $0x108] sm:$0xf]
  %v133 = vld [vmem:[%s1 + $0x10c] sm:$0xf]
  %v134 = vld [vmem:[%s1 + $0x110] sm:$0xf]
  %v135 = vld [vmem:[%s1 + $0x114] sm:$0xf]
  %v136 = vld [vmem:[%s1 + $0x118] sm:$0xf]
  %v137 = vld [vmem:[%s1 + $0x11c] sm:$0xf]
  %v138 = vld [vmem:[%s1 + $0x120] sm:$0xf]
  %v139 = vld [vmem:[%s1 + $0x124] sm:$0xf]
  %v140 = vld [vmem:[%s1 + $0x128] sm:$0xf]
  %v141 = vld [vmem:[%s1 + $0x12c] sm:$0xf]
  %v142 = vld [vmem:[%s1 + $0x130] sm:$0xf]
  %v143 = vld [vmem:[%s1 + $0x134] sm:$0xf]
  %v144 = vld [vmem:[%s1 + $0x138] sm:$0xf]
  %v145 = vld [vmem:[%s1 + $0x13c] sm:$0xf]
  %v146 = vld [vmem:[%s2] sm:$0x1]
  %v148 = vlaneseq
  %v149 = vshrl.u32 %v148, 7
  %v150 = vsub.s32 0, %v149
  %v151 = vrot.slane %v146, %v150
  %v201 = vunpack.c.l.b16 %v18
  %v202 = vunpack.c.h.b16 %v18
  %v203 = vunpack.c.l.b16 %v19
  %v204 = vunpack.c.h.b16 %v19
  %v205 = vunpack.c.l.b16 %v20
  %v206 = vunpack.c.l.b16 %v21
  %v207 = vunpack.c.h.b16 %v21
  %v208 = vunpack.c.l.b16 %v22
  %v209 = vunpack.c.h.b16 %v22
  %v210 = vunpack.c.l.b16 %v23
  %v211 = vunpack.c.l.b16 %v24
  %v212 = vunpack.c.h.b16 %v24
  %v213 = vunpack.c.l.b16 %v25
  %v214 = vunpack.c.h.b16 %v25
  %v215 = vunpack.c.l.b16 %v26
  %v216 = vunpack.c.l.b16 %v27
  %v217 = vunpack.c.h.b16 %v27
  %v218 = vunpack.c.l.b16 %v28
  %v219 = vunpack.c.h.b16 %v28
  %v220 = vunpack.c.l.b16 %v29
  %v221 = vunpack.c.l.b16 %v30
  %v222 = vunpack.c.h.b16 %v30
  %v223 = vunpack.c.l.b16 %v31
  %v224 = vunpack.c.h.b16 %v31
  %v225 = vunpack.c.l.b16 %v32
  %v226 = vunpack.c.l.b16 %v33
  %v227 = vunpack.c.h.b16 %v33
  %v228 = vunpack.c.l.b16 %v34
  %v229 = vunpack.c.h.b16 %v34
  %v230 = vunpack.c.l.b16 %v35
  %v231 = vunpack.c.l.b16 %v36
  %v232 = vunpack.c.h.b16 %v36
  %v233 = vunpack.c.l.b16 %v37
  %v234 = vunpack.c.h.b16 %v37
  %v235 = vunpack.c.l.b16 %v38
  %v236 = vunpack.c.l.b16 %v39
  %v237 = vunpack.c.h.b16 %v39
  %v238 = vunpack.c.l.b16 %v40
  %v239 = vunpack.c.h.b16 %v40
  %v240 = vunpack.c.l.b16 %v41
  %v241 = vunpack.c.l.b16 %v42
  %v242 = vunpack.c.h.b16 %v42
  %v243 = vunpack.c.l.b16 %v43
  %v244 = vunpack.c.h.b16 %v43
  %v245 = vunpack.c.l.b16 %v44
  %v246 = vunpack.c.l.b16 %v45
  %v247 = vunpack.c.h.b16 %v45
  %v248 = vunpack.c.l.b16 %v46
  %v249 = vunpack.c.h.b16 %v46
  %v250 = vunpack.c.l.b16 %v47
  %v251 = vunpack.c.l.b16 %v48
  %v252 = vunpack.c.h.b16 %v48
  %v253 = vunpack.c.l.b16 %v49
  %v254 = vunpack.c.h.b16 %v49
  %v255 = vunpack.c.l.b16 %v50
  %v256 = vunpack.c.l.b16 %v51
  %v257 = vunpack.c.h.b16 %v51
  %v258 = vunpack.c.l.b16 %v52
  %v259 = vunpack.c.h.b16 %v52
  %v260 = vunpack.c.l.b16 %v53
  %v261 = vunpack.c.l.b16 %v54
  %v262 = vunpack.c.h.b16 %v54
  %v263 = vunpack.c.l.b16 %v55
  %v264 = vunpack.c.h.b16 %v55
  %v265 = vunpack.c.l.b16 %v56
  %v266 = vunpack.c.l.b16 %v57
  %v267 = vunpack.c.h.b16 %v57
  %v268 = vunpack.c.l.b16 %v58
  %v269 = vunpack.c.h.b16 %v58
  %v270 = vunpack.c.l.b16 %v59
  %v271 = vunpack.c.l.b16 %v60
  %v272 = vunpack.c.h.b16 %v60
  %v273 = vunpack.c.l.b16 %v61
  %v274 = vunpack.c.h.b16 %v61
  %v275 = vunpack.c.l.b16 %v62
  %v276 = vunpack.c.l.b16 %v63
  %v277 = vunpack.c.h.b16 %v63
  %v278 = vunpack.c.l.b16 %v64
  %v279 = vunpack.c.h.b16 %v64
  %v280 = vunpack.c.l.b16 %v65
  %v281 = vpack.c.b16 %v206, %v201
  %v282 = vpack.c.b16 %v207, %v202
  %v283 = vpack.c.b16 %v208, %v203
  %v284 = vpack.c.b16 %v209, %v204
  %v285 = vpack.c.b16 %v210, %v205
  %v286 = vpack.c.b16 %v216, %v211
  %v287 = vpack.c.b16 %v217, %v212
  %v288 = vpack.c.b16 %v218, %v213
  %v289 = vpack.c.b16 %v219, %v214
  %v290 = vpack.c.b16 %v220, %v215
  %v291 = vpack.c.b16 %v226, %v221
  %v292 = vpack.c.b16 %v227, %v222
  %v293 = vpack.c.b16 %v228, %v223
  %v294 = vpack.c.b16 %v229, %v224
  %v295 = vpack.c.b16 %v230, %v225
  %v296 = vpack.c.b16 %v236, %v231
  %v297 = vpack.c.b16 %v237, %v232
  %v298 = vpack.c.b16 %v238, %v233
  %v299 = vpack.c.b16 %v239, %v234
  %v300 = vpack.c.b16 %v240, %v235
  %v301 = vpack.c.b16 %v246, %v241
  %v302 = vpack.c.b16 %v247, %v242
  %v303 = vpack.c.b16 %v248, %v243
  %v304 = vpack.c.b16 %v249, %v244
  %v305 = vpack.c.b16 %v250, %v245
  %v306 = vpack.c.b16 %v256, %v251
  %v307 = vpack.c.b16 %v257, %v252
  %v308 = vpack.c.b16 %v258, %v253
  %v309 = vpack.c.b16 %v259, %v254
  %v310 = vpack.c.b16 %v260, %v255
  %v311 = vpack.c.b16 %v266, %v261
  %v312 = vpack.c.b16 %v267, %v262
  %v313 = vpack.c.b16 %v268, %v263
  %v314 = vpack.c.b16 %v269, %v264
  %v315 = vpack.c.b16 %v270, %v265
  %v316 = vpack.c.b16 %v276, %v271
  %v317 = vpack.c.b16 %v277, %v272
  %v318 = vpack.c.b16 %v278, %v273
  %v319 = vpack.c.b16 %v279, %v274
  %v320 = vpack.c.b16 %v280, %v275
  %v441 = vunpack.c.l.b16 %v66
  %v442 = vunpack.c.l.b16 %v67
  %v443 = vunpack.c.l.b16 %v68
  %v444 = vunpack.c.l.b16 %v69
  %v445 = vunpack.c.l.b16 %v70
  %v446 = vunpack.c.l.b16 %v71
  %v447 = vunpack.c.l.b16 %v72
  %v448 = vunpack.c.l.b16 %v73
  %v449 = vunpack.c.l.b16 %v74
  %v450 = vunpack.c.l.b16 %v75
  %v451 = vunpack.c.l.b16 %v76
  %v452 = vunpack.c.l.b16 %v77
  %v453 = vunpack.c.l.b16 %v78
  %v454 = vunpack.c.l.b16 %v79
  %v455 = vunpack.c.l.b16 %v80
  %v456 = vunpack.c.l.b16 %v81
  %v457 = vunpack.c.l.b16 %v82
  %v458 = vunpack.c.l.b16 %v83
  %v459 = vunpack.c.l.b16 %v84
  %v460 = vunpack.c.l.b16 %v85
  %v461 = vunpack.c.l.b16 %v86
  %v462 = vunpack.c.l.b16 %v87
  %v463 = vunpack.c.l.b16 %v88
  %v464 = vunpack.c.l.b16 %v89
  %v465 = vunpack.c.l.b16 %v90
  %v466 = vunpack.c.l.b16 %v91
  %v467 = vunpack.c.l.b16 %v92
  %v468 = vunpack.c.l.b16 %v93
  %v469 = vunpack.c.l.b16 %v94
  %v470 = vunpack.c.l.b16 %v95
  %v471 = vunpack.c.l.b16 %v96
  %v472 = vunpack.c.l.b16 %v97
  %v473 = vunpack.c.l.b16 %v98
  %v474 = vunpack.c.l.b16 %v99
  %v475 = vunpack.c.l.b16 %v100
  %v476 = vunpack.c.l.b16 %v101
  %v477 = vunpack.c.l.b16 %v102
  %v478 = vunpack.c.l.b16 %v103
  %v479 = vunpack.c.l.b16 %v104
  %v480 = vunpack.c.l.b16 %v105
  %v481 = vunpack.c.l.b16 %v106
  %v482 = vunpack.c.l.b16 %v107
  %v483 = vunpack.c.l.b16 %v108
  %v484 = vunpack.c.l.b16 %v109
  %v485 = vunpack.c.l.b16 %v110
  %v486 = vunpack.c.l.b16 %v111
  %v487 = vunpack.c.l.b16 %v112
  %v488 = vunpack.c.l.b16 %v113
  %v489 = vunpack.c.l.b16 %v114
  %v490 = vunpack.c.l.b16 %v115
  %v491 = vunpack.c.l.b16 %v116
  %v492 = vunpack.c.l.b16 %v117
  %v493 = vunpack.c.l.b16 %v118
  %v494 = vunpack.c.l.b16 %v119
  %v495 = vunpack.c.l.b16 %v120
  %v496 = vunpack.c.l.b16 %v121
  %v497 = vunpack.c.l.b16 %v122
  %v498 = vunpack.c.l.b16 %v123
  %v499 = vunpack.c.l.b16 %v124
  %v500 = vunpack.c.l.b16 %v125
  %v501 = vunpack.c.l.b16 %v126
  %v502 = vunpack.c.l.b16 %v127
  %v503 = vunpack.c.l.b16 %v128
  %v504 = vunpack.c.l.b16 %v129
  %v505 = vunpack.c.l.b16 %v130
  %v506 = vunpack.c.l.b16 %v131
  %v507 = vunpack.c.l.b16 %v132
  %v508 = vunpack.c.l.b16 %v133
  %v509 = vunpack.c.l.b16 %v134
  %v510 = vunpack.c.l.b16 %v135
  %v511 = vunpack.c.l.b16 %v136
  %v512 = vunpack.c.l.b16 %v137
  %v513 = vunpack.c.l.b16 %v138
  %v514 = vunpack.c.l.b16 %v139
  %v515 = vunpack.c.l.b16 %v140
  %v516 = vunpack.c.l.b16 %v141
  %v517 = vunpack.c.l.b16 %v142
  %v518 = vunpack.c.l.b16 %v143
  %v519 = vunpack.c.l.b16 %v144
  %v520 = vunpack.c.l.b16 %v145
  %v521 = vpack.c.b16 %v442, %v441
  %v522 = vpack.c.b16 %v444, %v443
  %v523 = vpack.c.b16 %v446, %v445
  %v524 = vpack.c.b16 %v448, %v447
  %v525 = vpack.c.b16 %v450, %v449
  %v526 = vpack.c.b16 %v452, %v451
  %v527 = vpack.c.b16 %v454, %v453
  %v528 = vpack.c.b16 %v456, %v455
  %v529 = vpack.c.b16 %v458, %v457
  %v530 = vpack.c.b16 %v460, %v459
  %v531 = vpack.c.b16 %v462, %v461
  %v532 = vpack.c.b16 %v464, %v463
  %v533 = vpack.c.b16 %v466, %v465
  %v534 = vpack.c.b16 %v468, %v467
  %v535 = vpack.c.b16 %v470, %v469
  %v536 = vpack.c.b16 %v472, %v471
  %v537 = vpack.c.b16 %v474, %v473
  %v538 = vpack.c.b16 %v476, %v475
  %v539 = vpack.c.b16 %v478, %v477
  %v540 = vpack.c.b16 %v480, %v479
  %v541 = vpack.c.b16 %v482, %v481
  %v542 = vpack.c.b16 %v484, %v483
  %v543 = vpack.c.b16 %v486, %v485
  %v544 = vpack.c.b16 %v488, %v487
  %v545 = vpack.c.b16 %v490, %v489
  %v546 = vpack.c.b16 %v492, %v491
  %v547 = vpack.c.b16 %v494, %v493
  %v548 = vpack.c.b16 %v496, %v495
  %v549 = vpack.c.b16 %v498, %v497
  %v550 = vpack.c.b16 %v500, %v499
  %v551 = vpack.c.b16 %v502, %v501
  %v552 = vpack.c.b16 %v504, %v503
  %v553 = vpack.c.b16 %v506, %v505
  %v554 = vpack.c.b16 %v508, %v507
  %v555 = vpack.c.b16 %v510, %v509
  %v556 = vpack.c.b16 %v512, %v511
  %v557 = vpack.c.b16 %v514, %v513
  %v558 = vpack.c.b16 %v516, %v515
  %v559 = vpack.c.b16 %v518, %v517
  %v560 = vpack.c.b16 %v520, %v519
  %601 = vmatprep.subr.bf16.mxu0 0
  %602 = vmatpush1.bf16.msra.mxu0 %v521
  %603 = vmatprep.subr.bf16.mxu0 0
  %604 = vmatpush1.bf16.msra.mxu0 %v522
  %605 = vmatprep.subr.bf16.mxu0 0
  %606 = vmatpush1.bf16.msra.mxu0 %v523
  %607 = vmatprep.subr.bf16.mxu0 0
  %608 = vmatpush1.bf16.msra.mxu0 %v524
  %609 = vmatprep.subr.bf16.mxu0 0
  %610 = vmatpush1.bf16.msra.mxu0 %v525
  %611 = vmatprep.subr.bf16.mxu0 0
  %612 = vmatpush1.bf16.msra.mxu0 %v526
  %613 = vmatprep.subr.bf16.mxu0 0
  %614 = vmatpush1.bf16.msra.mxu0 %v527
  %615 = vmatprep.subr.bf16.mxu0 0
  %616 = vmatpush1.bf16.msra.mxu0 %v528
  %617 = vmatprep.subr.bf16.mxu0 0
  %618 = vmatpush1.bf16.msra.mxu0 %v529
  %619 = vmatprep.subr.bf16.mxu0 0
  %620 = vmatpush1.bf16.msra.mxu0 %v530
  %621 = vmatprep.subr.bf16.mxu0 0
  %622 = vmatpush1.bf16.msra.mxu0 %v531
  %623 = vmatprep.subr.bf16.mxu0 0
  %624 = vmatpush1.bf16.msra.mxu0 %v532
  %625 = vmatprep.subr.bf16.mxu0 0
  %626 = vmatpush1.bf16.msra.mxu0 %v533
  %627 = vmatprep.subr.bf16.mxu0 0
  %628 = vmatpush1.bf16.msra.mxu0 %v534
  %629 = vmatprep.subr.bf16.mxu0 0
  %630 = vmatpush1.bf16.msra.mxu0 %v535
  %631 = vmatprep.subr.bf16.mxu0 0
  %632 = vmatpush1.bf16.msra.mxu0 %v536
  %633 = vmatprep.mubr.bf16.mxu0 %v282
  %634 = vmatmul.mubr.bf16.gmra.mrb[0].mxu0 %v281
  %v635 = vpop.f32.mrb[0].mxu0
  %v636 = vadd.f32 %v151, %v635
  %v637 = vpop.f32.mrb[0].mxu0
  %v638 = vpop.f32.mrb[0].mxu0
  %v639 = vadd.f32 %v151, %v638
  %v640 = vpop.f32.mrb[0].mxu0
  %641 = vmatprep.mubr.bf16.mxu0 %v287
  %642 = vmatmul.mubr.bf16.gmra.mrb[0].mxu0 %v286
  %v643 = vpop.f32.mrb[0].mxu0
  %v644 = vadd.f32 %v151, %v643
  %v645 = vpop.f32.mrb[0].mxu0
  %v646 = vpop.f32.mrb[0].mxu0
  %v647 = vadd.f32 %v151, %v646
  %v648 = vpop.f32.mrb[0].mxu0
  %649 = vmatprep.mubr.bf16.mxu0 %v292
  %650 = vmatmul.mubr.bf16.gmra.mrb[0].mxu0 %v291
  %v651 = vpop.f32.mrb[0].mxu0
  %v652 = vadd.f32 %v151, %v651
  %v653 = vpop.f32.mrb[0].mxu0
  %v654 = vpop.f32.mrb[0].mxu0
  %v655 = vadd.f32 %v151, %v654
  %v656 = vpop.f32.mrb[0].mxu0
  %657 = vmatprep.mubr.bf16.mxu0 %v297
  %658 = vmatmul.mubr.bf16.gmra.mrb[0].mxu0 %v296
  %v659 = vpop.f32.mrb[0].mxu0
  %v660 = vadd.f32 %v151, %v659
  %v661 = vpop.f32.mrb[0].mxu0
  %v662 = vpop.f32.mrb[0].mxu0
  %v663 = vadd.f32 %v151, %v662
  %v664 = vpop.f32.mrb[0].mxu0
  %665 = vmatprep.mubr.bf16.mxu0 %v302
  %666 = vmatmul.mubr.bf16.gmra.mrb[0].mxu0 %v301
  %v667 = vpop.f32.mrb[0].mxu0
  %v668 = vadd.f32 %v151, %v667
  %v669 = vpop.f32.mrb[0].mxu0
  %v670 = vpop.f32.mrb[0].mxu0
  %v671 = vadd.f32 %v151, %v670
  %v672 = vpop.f32.mrb[0].mxu0
  %673 = vmatprep.mubr.bf16.mxu0 %v307
  %674 = vmatmul.mubr.bf16.gmra.mrb[0].mxu0 %v306
  %v675 = vpop.f32.mrb[0].mxu0
  %v676 = vadd.f32 %v151, %v675
  %v677 = vpop.f32.mrb[0].mxu0
  %v678 = vpop.f32.mrb[0].mxu0
  %v679 = vadd.f32 %v151, %v678
  %v680 = vpop.f32.mrb[0].mxu0
  %681 = vmatprep.mubr.bf16.mxu0 %v312
  %682 = vmatmul.mubr.bf16.gmra.mrb[0].mxu0 %v311
  %v683 = vpop.f32.mrb[0].mxu0
  %v684 = vadd.f32 %v151, %v683
  %v685 = vpop.f32.mrb[0].mxu0
  %v686 = vpop.f32.mrb[0].mxu0
  %v687 = vadd.f32 %v151, %v686
  %v688 = vpop.f32.mrb[0].mxu0
  %689 = vmatprep.mubr.bf16.mxu0 %v317
  %690 = vmatmul.mubr.bf16.gmra.mrb[0].mxu0 %v316
  %v691 = vpop.f32.mrb[0].mxu0
  %v692 = vadd.f32 %v151, %v691
  %v693 = vpop.f32.mrb[0].mxu0
  %v694 = vpop.f32.mrb[0].mxu0
  %v695 = vadd.f32 %v151, %v694
  %v696 = vpop.f32.mrb[0].mxu0
  %697 = vdwg.mxu0
  %698 = vmatprep.subr.bf16.mxu0 0
  %699 = vmatpush1.bf16.msra.mxu0 %v537
  %700 = vmatprep.subr.bf16.mxu0 0
  %701 = vmatpush1.bf16.msra.mxu0 %v538
  %702 = vmatprep.subr.bf16.mxu0 0
  %703 = vmatpush1.bf16.msra.mxu0 %v539
  %704 = vmatprep.subr.bf16.mxu0 0
  %705 = vmatpush1.bf16.msra.mxu0 %v540
  %706 = vmatprep.subr.bf16.mxu0 0
  %707 = vmatpush1.bf16.msra.mxu0 %v541
  %708 = vmatprep.subr.bf16.mxu0 0
  %709 = vmatpush1.bf16.msra.mxu0 %v542
  %710 = vmatprep.subr.bf16.mxu0 0
  %711 = vmatpush1.bf16.msra.mxu0 %v543
  %712 = vmatprep.subr.bf16.mxu0 0
  %713 = vmatpush1.bf16.msra.mxu0 %v544
  %714 = vmatprep.subr.bf16.mxu0 0
  %715 = vmatpush1.bf16.msra.mxu0 %v545
  %716 = vmatprep.subr.bf16.mxu0 0
  %717 = vmatpush1.bf16.msra.mxu0 %v546
  %718 = vmatprep.subr.bf16.mxu0 0
  %719 = vmatpush1.bf16.msra.mxu0 %v547
  %720 = vmatprep.subr.bf16.mxu0 0
  %721 = vmatpush1.bf16.msra.mxu0 %v548
  %722 = vmatprep.subr.bf16.mxu0 0
  %723 = vmatpush1.bf16.msra.mxu0 %v549
  %724 = vmatprep.subr.bf16.mxu0 0
  %725 = vmatpush1.bf16.msra.mxu0 %v550
  %726 = vmatprep.subr.bf16.mxu0 0
  %727 = vmatpush1.bf16.msra.mxu0 %v551
  %728 = vmatprep.subr.bf16.mxu0 0
  %729 = vmatpush1.bf16.msra.mxu0 %v552
  %730 = vmatprep.mubr.bf16.mxu0 %v284
  %731 = vmatmul.mubr.bf16.gmra.mrb[0].mxu0 %v283
  %v732 = vpop.f32.mrb[0].mxu0
  %v733 = vadd.f32 %v636, %v732
  %v734 = vpop.f32.mrb[0].mxu0
  %v735 = vpop.f32.mrb[0].mxu0
  %v736 = vadd.f32 %v639, %v735
  %v737 = vpop.f32.mrb[0].mxu0
  %738 = vmatprep.mubr.bf16.mxu0 %v289
  %739 = vmatmul.mubr.bf16.gmra.mrb[0].mxu0 %v288
  %v740 = vpop.f32.mrb[0].mxu0
  %v741 = vadd.f32 %v644, %v740
  %v742 = vpop.f32.mrb[0].mxu0
  %v743 = vpop.f32.mrb[0].mxu0
  %v744 = vadd.f32 %v647, %v743
  %v745 = vpop.f32.mrb[0].mxu0
  %746 = vmatprep.mubr.bf16.mxu0 %v294
  %747 = vmatmul.mubr.bf16.gmra.mrb[0].mxu0 %v293
  %v748 = vpop.f32.mrb[0].mxu0
  %v749 = vadd.f32 %v652, %v748
  %v750 = vpop.f32.mrb[0].mxu0
  %v751 = vpop.f32.mrb[0].mxu0
  %v752 = vadd.f32 %v655, %v751
  %v753 = vpop.f32.mrb[0].mxu0
  %754 = vmatprep.mubr.bf16.mxu0 %v299
  %755 = vmatmul.mubr.bf16.gmra.mrb[0].mxu0 %v298
  %v756 = vpop.f32.mrb[0].mxu0
  %v757 = vadd.f32 %v660, %v756
  %v758 = vpop.f32.mrb[0].mxu0
  %v759 = vpop.f32.mrb[0].mxu0
  %v760 = vadd.f32 %v663, %v759
  %v761 = vpop.f32.mrb[0].mxu0
  %762 = vmatprep.mubr.bf16.mxu0 %v304
  %763 = vmatmul.mubr.bf16.gmra.mrb[0].mxu0 %v303
  %v764 = vpop.f32.mrb[0].mxu0
  %v765 = vadd.f32 %v668, %v764
  %v766 = vpop.f32.mrb[0].mxu0
  %v767 = vpop.f32.mrb[0].mxu0
  %v768 = vadd.f32 %v671, %v767
  %v769 = vpop.f32.mrb[0].mxu0
  %770 = vmatprep.mubr.bf16.mxu0 %v309
  %771 = vmatmul.mubr.bf16.gmra.mrb[0].mxu0 %v308
  %v772 = vpop.f32.mrb[0].mxu0
  %v773 = vadd.f32 %v676, %v772
  %v774 = vpop.f32.mrb[0].mxu0
  %v775 = vpop.f32.mrb[0].mxu0
  %v776 = vadd.f32 %v679, %v775
  %v777 = vpop.f32.mrb[0].mxu0
  %778 = vmatprep.mubr.bf16.mxu0 %v314
  %779 = vmatmul.mubr.bf16.gmra.mrb[0].mxu0 %v313
  %v780 = vpop.f32.mrb[0].mxu0
  %v781 = vadd.f32 %v684, %v780
  %v782 = vpop.f32.mrb[0].mxu0
  %v783 = vpop.f32.mrb[0].mxu0
  %v784 = vadd.f32 %v687, %v783
  %v785 = vpop.f32.mrb[0].mxu0
  %786 = vmatprep.mubr.bf16.mxu0 %v319
  %787 = vmatmul.mubr.bf16.gmra.mrb[0].mxu0 %v318
  %v788 = vpop.f32.mrb[0].mxu0
  %v789 = vadd.f32 %v692, %v788
  %v790 = vpop.f32.mrb[0].mxu0
  %v791 = vpop.f32.mrb[0].mxu0
  %v792 = vadd.f32 %v695, %v791
  %v793 = vpop.f32.mrb[0].mxu0
  %794 = vdwg.mxu0
  %795 = vmatprep.subr.bf16.mxu0 0
  %796 = vmatpush1.bf16.msra.mxu0 %v553
  %797 = vmatprep.subr.bf16.mxu0 0
  %798 = vmatpush1.bf16.msra.mxu0 %v554
  %799 = vmatprep.subr.bf16.mxu0 0
  %800 = vmatpush1.bf16.msra.mxu0 %v555
  %801 = vmatprep.subr.bf16.mxu0 0
  %802 = vmatpush1.bf16.msra.mxu0 %v556
  %803 = vmatprep.subr.bf16.mxu0 0
  %804 = vmatpush1.bf16.msra.mxu0 %v557
  %805 = vmatprep.subr.bf16.mxu0 0
  %806 = vmatpush1.bf16.msra.mxu0 %v558
  %807 = vmatprep.subr.bf16.mxu0 0
  %808 = vmatpush1.bf16.msra.mxu0 %v559
  %809 = vmatprep.subr.bf16.mxu0 0
  %810 = vmatpush1.bf16.msra.mxu0 %v560
  %811 = vmatprep.subr.bf16.mxu0 0
  %812 = vmatpush1.bf16.msra.mxu0 0
  %813 = vmatprep.subr.bf16.mxu0 0
  %814 = vmatpush1.bf16.msra.mxu0 0
  %815 = vmatprep.subr.bf16.mxu0 0
  %816 = vmatpush1.bf16.msra.mxu0 0
  %817 = vmatprep.subr.bf16.mxu0 0
  %818 = vmatpush1.bf16.msra.mxu0 0
  %819 = vmatprep.subr.bf16.mxu0 0
  %820 = vmatpush1.bf16.msra.mxu0 0
  %821 = vmatprep.subr.bf16.mxu0 0
  %822 = vmatpush1.bf16.msra.mxu0 0
  %823 = vmatprep.subr.bf16.mxu0 0
  %824 = vmatpush1.bf16.msra.mxu0 0
  %825 = vmatprep.subr.bf16.mxu0 0
  %826 = vmatpush1.bf16.msra.mxu0 0
  %827 = vmatprep.mubr.bf16.mxu0 0
  %828 = vmatmul.mubr.bf16.gmra.mrb[0].mxu0 %v285
  %v829 = vpop.f32.mrb[0].mxu0
  %v830 = vadd.f32 %v733, %v829
  %v831 = vpop.f32.mrb[0].mxu0
  %v832 = vpop.f32.mrb[0].mxu0
  %v833 = vadd.f32 %v736, %v832
  %v834 = vpop.f32.mrb[0].mxu0
  %835 = vmatprep.mubr.bf16.mxu0 0
  %836 = vmatmul.mubr.bf16.gmra.mrb[0].mxu0 %v290
  %v837 = vpop.f32.mrb[0].mxu0
  %v838 = vadd.f32 %v741, %v837
  %v839 = vpop.f32.mrb[0].mxu0
  %v840 = vpop.f32.mrb[0].mxu0
  %v841 = vadd.f32 %v744, %v840
  %v842 = vpop.f32.mrb[0].mxu0
  %843 = vmatprep.mubr.bf16.mxu0 0
  %844 = vmatmul.mubr.bf16.gmra.mrb[0].mxu0 %v295
  %v845 = vpop.f32.mrb[0].mxu0
  %v846 = vadd.f32 %v749, %v845
  %v847 = vpop.f32.mrb[0].mxu0
  %v848 = vpop.f32.mrb[0].mxu0
  %v849 = vadd.f32 %v752, %v848
  %v850 = vpop.f32.mrb[0].mxu0
  %851 = vmatprep.mubr.bf16.mxu0 0
  %852 = vmatmul.mubr.bf16.gmra.mrb[0].mxu0 %v300
  %v853 = vpop.f32.mrb[0].mxu0
  %v854 = vadd.f32 %v757, %v853
  %v855 = vpop.f32.mrb[0].mxu0
  %v856 = vpop.f32.mrb[0].mxu0
  %v857 = vadd.f32 %v760, %v856
  %v858 = vpop.f32.mrb[0].mxu0
  %859 = vmatprep.mubr.bf16.mxu0 0
  %860 = vmatmul.mubr.bf16.gmra.mrb[0].mxu0 %v305
  %v861 = vpop.f32.mrb[0].mxu0
  %v862 = vadd.f32 %v765, %v861
  %v863 = vpop.f32.mrb[0].mxu0
  %v864 = vpop.f32.mrb[0].mxu0
  %v865 = vadd.f32 %v768, %v864
  %v866 = vpop.f32.mrb[0].mxu0
  %867 = vmatprep.mubr.bf16.mxu0 0
  %868 = vmatmul.mubr.bf16.gmra.mrb[0].mxu0 %v310
  %v869 = vpop.f32.mrb[0].mxu0
  %v870 = vadd.f32 %v773, %v869
  %v871 = vpop.f32.mrb[0].mxu0
  %v872 = vpop.f32.mrb[0].mxu0
  %v873 = vadd.f32 %v776, %v872
  %v874 = vpop.f32.mrb[0].mxu0
  %875 = vmatprep.mubr.bf16.mxu0 0
  %876 = vmatmul.mubr.bf16.gmra.mrb[0].mxu0 %v315
  %v877 = vpop.f32.mrb[0].mxu0
  %v878 = vadd.f32 %v781, %v877
  %v879 = vpop.f32.mrb[0].mxu0
  %v880 = vpop.f32.mrb[0].mxu0
  %v881 = vadd.f32 %v784, %v880
  %v882 = vpop.f32.mrb[0].mxu0
  %883 = vmatprep.mubr.bf16.mxu0 0
  %884 = vmatmul.mubr.bf16.gmra.mrb[0].mxu0 %v320
  %v885 = vpop.f32.mrb[0].mxu0
  %v886 = vadd.f32 %v789, %v885
  %v887 = vpop.f32.mrb[0].mxu0
  %v888 = vpop.f32.mrb[0].mxu0
  %v889 = vadd.f32 %v792, %v888
  %v890 = vpop.f32.mrb[0].mxu0
  %891 = vdwg.mxu0
  %v892 = vmax.f32 %v830, 0.0
  %v893 = vmax.f32 %v833, 0.0
  %v894 = vmax.f32 %v838, 0.0
  %v895 = vmax.f32 %v841, 0.0
  %v896 = vmax.f32 %v846, 0.0
  %v897 = vmax.f32 %v849, 0.0
  %v898 = vmax.f32 %v854, 0.0
  %v899 = vmax.f32 %v857, 0.0
  %v900 = vmax.f32 %v862, 0.0
  %v901 = vmax.f32 %v865, 0.0
  %v902 = vmax.f32 %v870, 0.0
  %v903 = vmax.f32 %v873, 0.0
  %v904 = vmax.f32 %v878, 0.0
  %v905 = vmax.f32 %v881, 0.0
  %v906 = vmax.f32 %v886, 0.0
  %v907 = vmax.f32 %v889, 0.0
  %v908 = vld [vmem:[%s3] sm:$0xf]
  %v909 = vld [vmem:[%s3 + $0x4] sm:$0xf]
  %v910 = vld [vmem:[%s3 + $0x8] sm:$0xf]
  %v911 = vld [vmem:[%s3 + $0xc] sm:$0xf]
  %v912 = vld [vmem:[%s3 + $0x10] sm:$0xf]
  %v913 = vld [vmem:[%s3 + $0x14] sm:$0xf]
  %v914 = vld [vmem:[%s3 + $0x18] sm:$0xf]
  %v915 = vld [vmem:[%s3 + $0x1c] sm:$0xf]
  %v916 = vld [vmem:[%s3 + $0x20] sm:$0xf]
  %v917 = vld [vmem:[%s3 + $0x24] sm:$0xf]
  %v918 = vld [vmem:[%s3 + $0x28] sm:$0xf]
  %v919 = vld [vmem:[%s3 + $0x2c] sm:$0xf]
  %v920 = vld [vmem:[%s3 + $0x30] sm:$0xf]
  %v921 = vld [vmem:[%s3 + $0x34] sm:$0xf]
  %v922 = vld [vmem:[%s3 + $0x38] sm:$0xf]
  %v923 = vld [vmem:[%s3 + $0x3c] sm:$0xf]
  %v924 = vunpack.c.l.bf16 %v908
  %v925 = vunpack.c.l.bf16 %v909
  %v926 = vunpack.c.l.bf16 %v910
  %v927 = vunpack.c.l.bf16 %v911
  %v928 = vunpack.c.l.bf16 %v912
  %v929 = vunpack.c.l.bf16 %v913
  %v930 = vunpack.c.l.bf16 %v914
  %v931 = vunpack.c.l.bf16 %v915
  %v932 = vunpack.c.l.bf16 %v916
  %v933 = vunpack.c.l.bf16 %v917
  %v934 = vunpack.c.l.bf16 %v918
  %v935 = vunpack.c.l.bf16 %v919
  %v936 = vunpack.c.l.bf16 %v920
  %v937 = vunpack.c.l.bf16 %v921
  %v938 = vunpack.c.l.bf16 %v922
  %v939 = vunpack.c.l.bf16 %v923
  %v940 = vadd.f32 %v892, %v924
  %v941 = vadd.f32 %v893, %v925
  %v942 = vadd.f32 %v894, %v926
  %v943 = vadd.f32 %v895, %v927
  %v944 = vadd.f32 %v896, %v928
  %v945 = vadd.f32 %v897, %v929
  %v946 = vadd.f32 %v898, %v930
  %v947 = vadd.f32 %v899, %v931
  %v948 = vadd.f32 %v900, %v932
  %v949 = vadd.f32 %v901, %v933
  %v950 = vadd.f32 %v902, %v934
  %v951 = vadd.f32 %v903, %v935
  %v952 = vadd.f32 %v904, %v936
  %v953 = vadd.f32 %v905, %v937
  %v954 = vadd.f32 %v906, %v938
  %v955 = vadd.f32 %v907, %v939
  %956 = vst [vmem:[%s4] sm:$0xff] %v940
  %957 = vst [vmem:[%s4 + $0x8] sm:$0xff] %v941
  %958 = vst [vmem:[%s4 + $0x10] sm:$0xff] %v942
  %959 = vst [vmem:[%s4 + $0x18] sm:$0xff] %v943
  %960 = vst [vmem:[%s4 + $0x20] sm:$0xff] %v944
  %961 = vst [vmem:[%s4 + $0x28] sm:$0xff] %v945
  %962 = vst [vmem:[%s4 + $0x30] sm:$0xff] %v946
  %963 = vst [vmem:[%s4 + $0x38] sm:$0xff] %v947
  %964 = vst [vmem:[%s4 + $0x40] sm:$0xff] %v948
  %965 = vst [vmem:[%s4 + $0x48] sm:$0xff] %v949
  %966 = vst [vmem:[%s4 + $0x50] sm:$0xff] %v950
  %967 = vst [vmem:[%s4 + $0x58] sm:$0xff] %v951
  %968 = vst [vmem:[%s4 + $0x60] sm:$0xff] %v952
  %969 = vst [vmem:[%s4 + $0x68] sm:$0xff] %v953
  %970 = vst [vmem:[%s4 + $0x70] sm:$0xff] %v954
  %971 = vst [vmem:[%s4 + $0x78] sm:$0xff] %v955
  // Predicated region
  $region18: #{generator_forward.16} parent=0 // pred_check
    _
  $region19: #{generator_forward.16} parent=0 // pred_check_branch
    %973 = sbr.rel (0) target = $region21
  $region20: #{generator_forward.16} parent=0 // pred_region
    _
  $region21: #{generator_forward.16} parent=0 // pred_fallthru
    _
  // Predicated region
  $region22: #{generator_forward.16} parent=0 // pred_check
    _
  $region23: #{generator_forward.16} parent=0 // pred_check_branch
    %975 = sbr.rel (0) target = $region25
  $region24: #{generator_forward.16} parent=0 // pred_region
    _
  $region25: #{generator_forward.16} parent=0 // pred_fallthru
    _

// kernel: generator_forward.17
$region0: #{generator_forward.17}
  #allocation0 [shape = 'u32[]', space=smem, size = 0x4, offset = 0x4, fixed_abs, tag = 'smem constant byte address 0x4 - core index']
  #allocation1 [shape = 'u32[144,128]{1,0:T(1,128)}', space=vmem, size = 0x12000, scoped, tag = 'internal scratch']
  %s0 = inlined_call_operand.vmem [shape: bf16[512,512], index: 0, kind: input, shape index: {}]
  %s1 = inlined_call_operand.vmem [shape: bf16[512,128], index: 1, kind: input, shape index: {}]
  %s2 = inlined_call_operand.vmem [shape: f32[1,128], index: 2, kind: input, shape index: {}]
  %s3 = inlined_call_operand.vmem [shape: f32[512,128], index: 3, kind: output, shape index: {}]
  %s4 = sld [smem:[#allocation0]]
  $region22: #{generator_forward.17} parent=0
    _
  %s6 = ssub.s32 1, %s4
  %s7 = scalar_select 0, %s6, %s4
  // Predicated region
  $region2: #{generator_forward.17} parent=0 // pred_check
    _
  $region3: #{generator_forward.17} parent=0 // pred_check_branch
    %9 = sbr.rel (0) target = $region5
  $region4: #{generator_forward.17} parent=0 // pred_region
    _
  $region5: #{generator_forward.17} parent=0 // pred_fallthru
    _
  // Predicated region
  $region6: #{generator_forward.17} parent=0 // pred_check
    _
  $region7: #{generator_forward.17} parent=0 // pred_check_branch
    %11 = sbr.rel (0) target = $region9
  $region8: #{generator_forward.17} parent=0 // pred_region
    _
  $region9: #{generator_forward.17} parent=0 // pred_fallthru
    _
  // Predicated region
  $region10: #{generator_forward.17} parent=0 // pred_check
    _
  $region11: #{generator_forward.17} parent=0 // pred_check_branch
    %13 = sbr.rel (0) target = $region13
  $region12: #{generator_forward.17} parent=0 // pred_region
    _
  $region13: #{generator_forward.17} parent=0 // pred_fallthru
    _
  %v15 = vld [vmem:[%s0] sm:$0xff]
  %v16 = vld [vmem:[%s0 + $0x8] sm:$0xff]
  %v17 = vld [vmem:[%s0 + $0x10] sm:$0xff]
  %v18 = vld [vmem:[%s0 + $0x18] sm:$0xff]
  %v19 = vld [vmem:[%s0 + $0x20] sm:$0xff]
  %v20 = vld [vmem:[%s0 + $0x28] sm:$0xff]
  %v21 = vld [vmem:[%s0 + $0x30] sm:$0xff]
  %v22 = vld [vmem:[%s0 + $0x38] sm:$0xff]
  %v23 = vld [vmem:[%s0 + $0x40] sm:$0xff]
  %v24 = vld [vmem:[%s0 + $0x48] sm:$0xff]
  %v25 = vld [vmem:[%s0 + $0x50] sm:$0xff]
  %v26 = vld [vmem:[%s0 + $0x58] sm:$0xff]
  %v27 = vld [vmem:[%s0 + $0x60] sm:$0xff]
  %v28 = vld [vmem:[%s0 + $0x68] sm:$0xff]
  %v29 = vld [vmem:[%s0 + $0x70] sm:$0xff]
  %v30 = vld [vmem:[%s0 + $0x78] sm:$0xff]
  %v31 = vld [vmem:[%s0 + $0x80] sm:$0xff]
  %v32 = vld [vmem:[%s0 + $0x88] sm:$0xff]
  %v33 = vld [vmem:[%s0 + $0x90] sm:$0xff]
  %v34 = vld [vmem:[%s0 + $0x98] sm:$0xff]
  %v35 = vld [vmem:[%s0 + $0xa0] sm:$0xff]
  %v36 = vld [vmem:[%s0 + $0xa8] sm:$0xff]
  %v37 = vld [vmem:[%s0 + $0xb0] sm:$0xff]
  %v38 = vld [vmem:[%s0 + $0xb8] sm:$0xff]
  %v39 = vld [vmem:[%s0 + $0xc0] sm:$0xff]
  %v40 = vld [vmem:[%s0 + $0xc8] sm:$0xff]
  %v41 = vld [vmem:[%s0 + $0xd0] sm:$0xff]
  %v42 = vld [vmem:[%s0 + $0xd8] sm:$0xff]
  %v43 = vld [vmem:[%s0 + $0xe0] sm:$0xff]
  %v44 = vld [vmem:[%s0 + $0xe8] sm:$0xff]
  %v45 = vld [vmem:[%s0 + $0xf0] sm:$0xff]
  %v46 = vld [vmem:[%s0 + $0xf8] sm:$0xff]
  %v47 = vld [vmem:[%s0 + $0x100] sm:$0xff]
  %v48 = vld [vmem:[%s0 + $0x108] sm:$0xff]
  %v49 = vld [vmem:[%s0 + $0x110] sm:$0xff]
  %v50 = vld [vmem:[%s0 + $0x118] sm:$0xff]
  %v51 = vld [vmem:[%s0 + $0x120] sm:$0xff]
  %v52 = vld [vmem:[%s0 + $0x128] sm:$0xff]
  %v53 = vld [vmem:[%s0 + $0x130] sm:$0xff]
  %v54 = vld [vmem:[%s0 + $0x138] sm:$0xff]
  %v55 = vld [vmem:[%s0 + $0x140] sm:$0xff]
  %v56 = vld [vmem:[%s0 + $0x148] sm:$0xff]
  %v57 = vld [vmem:[%s0 + $0x150] sm:$0xff]
  %v58 = vld [vmem:[%s0 + $0x158] sm:$0xff]
  %v59 = vld [vmem:[%s0 + $0x160] sm:$0xff]
  %v60 = vld [vmem:[%s0 + $0x168] sm:$0xff]
  %v61 = vld [vmem:[%s0 + $0x170] sm:$0xff]
  %v62 = vld [vmem:[%s0 + $0x178] sm:$0xff]
  %v63 = vld [vmem:[%s0 + $0x180] sm:$0xff]
  %v64 = vld [vmem:[%s0 + $0x188] sm:$0xff]
  %v65 = vld [vmem:[%s0 + $0x190] sm:$0xff]
  %v66 = vld [vmem:[%s0 + $0x198] sm:$0xff]
  %v67 = vld [vmem:[%s0 + $0x1a0] sm:$0xff]
  %v68 = vld [vmem:[%s0 + $0x1a8] sm:$0xff]
  %v69 = vld [vmem:[%s0 + $0x1b0] sm:$0xff]
  %v70 = vld [vmem:[%s0 + $0x1b8] sm:$0xff]
  %v71 = vld [vmem:[%s0 + $0x1c0] sm:$0xff]
  %v72 = vld [vmem:[%s0 + $0x1c8] sm:$0xff]
  %v73 = vld [vmem:[%s0 + $0x1d0] sm:$0xff]
  %v74 = vld [vmem:[%s0 + $0x1d8] sm:$0xff]
  %v75 = vld [vmem:[%s0 + $0x1e0] sm:$0xff]
  %v76 = vld [vmem:[%s0 + $0x1e8] sm:$0xff]
  %v77 = vld [vmem:[%s0 + $0x1f0] sm:$0xff]
  %v78 = vld [vmem:[%s0 + $0x1f8] sm:$0xff]
  %v79 = vld [vmem:[%s0 + $0x200] sm:$0xff]
  %v80 = vld [vmem:[%s0 + $0x208] sm:$0xff]
  %v81 = vld [vmem:[%s0 + $0x210] sm:$0xff]
  %v82 = vld [vmem:[%s0 + $0x218] sm:$0xff]
  %v83 = vld [vmem:[%s0 + $0x220] sm:$0xff]
  %v84 = vld [vmem:[%s0 + $0x228] sm:$0xff]
  %v85 = vld [vmem:[%s0 + $0x230] sm:$0xff]
  %v86 = vld [vmem:[%s0 + $0x238] sm:$0xff]
  %v87 = vld [vmem:[%s0 + $0x240] sm:$0xff]
  %v88 = vld [vmem:[%s0 + $0x248] sm:$0xff]
  %v89 = vld [vmem:[%s0 + $0x250] sm:$0xff]
  %v90 = vld [vmem:[%s0 + $0x258] sm:$0xff]
  %v91 = vld [vmem:[%s0 + $0x260] sm:$0xff]
  %v92 = vld [vmem:[%s0 + $0x268] sm:$0xff]
  %v93 = vld [vmem:[%s0 + $0x270] sm:$0xff]
  %v94 = vld [vmem:[%s0 + $0x278] sm:$0xff]
  %v95 = vld [vmem:[%s0 + $0x280] sm:$0xff]
  %v96 = vld [vmem:[%s0 + $0x288] sm:$0xff]
  %v97 = vld [vmem:[%s0 + $0x290] sm:$0xff]
  %v98 = vld [vmem:[%s0 + $0x298] sm:$0xff]
  %v99 = vld [vmem:[%s0 + $0x2a0] sm:$0xff]
  %v100 = vld [vmem:[%s0 + $0x2a8] sm:$0xff]
  %v101 = vld [vmem:[%s0 + $0x2b0] sm:$0xff]
  %v102 = vld [vmem:[%s0 + $0x2b8] sm:$0xff]
  %v103 = vld [vmem:[%s0 + $0x2c0] sm:$0xff]
  %v104 = vld [vmem:[%s0 + $0x2c8] sm:$0xff]
  %v105 = vld [vmem:[%s0 + $0x2d0] sm:$0xff]
  %v106 = vld [vmem:[%s0 + $0x2d8] sm:$0xff]
  %v107 = vld [vmem:[%s0 + $0x2e0] sm:$0xff]
  %v108 = vld [vmem:[%s0 + $0x2e8] sm:$0xff]
  %v109 = vld [vmem:[%s0 + $0x2f0] sm:$0xff]
  %v110 = vld [vmem:[%s0 + $0x2f8] sm:$0xff]
  %v111 = vld [vmem:[%s0 + $0x300] sm:$0xff]
  %v112 = vld [vmem:[%s0 + $0x308] sm:$0xff]
  %v113 = vld [vmem:[%s0 + $0x310] sm:$0xff]
  %v114 = vld [vmem:[%s0 + $0x318] sm:$0xff]
  %v115 = vld [vmem:[%s0 + $0x320] sm:$0xff]
  %v116 = vld [vmem:[%s0 + $0x328] sm:$0xff]
  %v117 = vld [vmem:[%s0 + $0x330] sm:$0xff]
  %v118 = vld [vmem:[%s0 + $0x338] sm:$0xff]
  %v119 = vld [vmem:[%s0 + $0x340] sm:$0xff]
  %v120 = vld [vmem:[%s0 + $0x348] sm:$0xff]
  %v121 = vld [vmem:[%s0 + $0x350] sm:$0xff]
  %v122 = vld [vmem:[%s0 + $0x358] sm:$0xff]
  %v123 = vld [vmem:[%s0 + $0x360] sm:$0xff]
  %v124 = vld [vmem:[%s0 + $0x368] sm:$0xff]
  %v125 = vld [vmem:[%s0 + $0x370] sm:$0xff]
  %v126 = vld [vmem:[%s0 + $0x378] sm:$0xff]
  %v127 = vld [vmem:[%s0 + $0x380] sm:$0xff]
  %v128 = vld [vmem:[%s0 + $0x388] sm:$0xff]
  %v129 = vld [vmem:[%s0 + $0x390] sm:$0xff]
  %v130 = vld [vmem:[%s0 + $0x398] sm:$0xff]
  %v131 = vld [vmem:[%s0 + $0x3a0] sm:$0xff]
  %v132 = vld [vmem:[%s0 + $0x3a8] sm:$0xff]
  %v133 = vld [vmem:[%s0 + $0x3b0] sm:$0xff]
  %v134 = vld [vmem:[%s0 + $0x3b8] sm:$0xff]
  %v135 = vld [vmem:[%s0 + $0x3c0] sm:$0xff]
  %v136 = vld [vmem:[%s0 + $0x3c8] sm:$0xff]
  %v137 = vld [vmem:[%s0 + $0x3d0] sm:$0xff]
  %v138 = vld [vmem:[%s0 + $0x3d8] sm:$0xff]
  %v139 = vld [vmem:[%s0 + $0x3e0] sm:$0xff]
  %v140 = vld [vmem:[%s0 + $0x3e8] sm:$0xff]
  %v141 = vld [vmem:[%s0 + $0x3f0] sm:$0xff]
  %v142 = vld [vmem:[%s0 + $0x3f8] sm:$0xff]
  %v143 = vld [vmem:[%s1] sm:$0xf]
  %v144 = vld [vmem:[%s1 + $0x4] sm:$0xf]
  %v145 = vld [vmem:[%s1 + $0x8] sm:$0xf]
  %v146 = vld [vmem:[%s1 + $0xc] sm:$0xf]
  %v147 = vld [vmem:[%s1 + $0x10] sm:$0xf]
  %v148 = vld [vmem:[%s1 + $0x14] sm:$0xf]
  %v149 = vld [vmem:[%s1 + $0x18] sm:$0xf]
  %v150 = vld [vmem:[%s1 + $0x1c] sm:$0xf]
  %v151 = vld [vmem:[%s1 + $0x20] sm:$0xf]
  %v152 = vld [vmem:[%s1 + $0x24] sm:$0xf]
  %v153 = vld [vmem:[%s1 + $0x28] sm:$0xf]
  %v154 = vld [vmem:[%s1 + $0x2c] sm:$0xf]
  %v155 = vld [vmem:[%s1 + $0x30] sm:$0xf]
  %v156 = vld [vmem:[%s1 + $0x34] sm:$0xf]
  %v157 = vld [vmem:[%s1 + $0x38] sm:$0xf]
  %v158 = vld [vmem:[%s1 + $0x3c] sm:$0xf]
  %v159 = vld [vmem:[%s1 + $0x40] sm:$0xf]
  %v160 = vld [vmem:[%s1 + $0x44] sm:$0xf]
  %v161 = vld [vmem:[%s1 + $0x48] sm:$0xf]
  %v162 = vld [vmem:[%s1 + $0x4c] sm:$0xf]
  %v163 = vld [vmem:[%s1 + $0x50] sm:$0xf]
  %v164 = vld [vmem:[%s1 + $0x54] sm:$0xf]
  %v165 = vld [vmem:[%s1 + $0x58] sm:$0xf]
  %v166 = vld [vmem:[%s1 + $0x5c] sm:$0xf]
  %v167 = vld [vmem:[%s1 + $0x60] sm:$0xf]
  %v168 = vld [vmem:[%s1 + $0x64] sm:$0xf]
  %v169 = vld [vmem:[%s1 + $0x68] sm:$0xf]
  %v170 = vld [vmem:[%s1 + $0x6c] sm:$0xf]
  %v171 = vld [vmem:[%s1 + $0x70] sm:$0xf]
  %v172 = vld [vmem:[%s1 + $0x74] sm:$0xf]
  %v173 = vld [vmem:[%s1 + $0x78] sm:$0xf]
  %v174 = vld [vmem:[%s1 + $0x7c] sm:$0xf]
  %v175 = vld [vmem:[%s1 + $0x80] sm:$0xf]
  %v176 = vld [vmem:[%s1 + $0x84] sm:$0xf]
  %v177 = vld [vmem:[%s1 + $0x88] sm:$0xf]
  %v178 = vld [vmem:[%s1 + $0x8c] sm:$0xf]
  %v179 = vld [vmem:[%s1 + $0x90] sm:$0xf]
  %v180 = vld [vmem:[%s1 + $0x94] sm:$0xf]
  %v181 = vld [vmem:[%s1 + $0x98] sm:$0xf]
  %v182 = vld [vmem:[%s1 + $0x9c] sm:$0xf]
  %v183 = vld [vmem:[%s1 + $0xa0] sm:$0xf]
  %v184 = vld [vmem:[%s1 + $0xa4] sm:$0xf]
  %v185 = vld [vmem:[%s1 + $0xa8] sm:$0xf]
  %v186 = vld [vmem:[%s1 + $0xac] sm:$0xf]
  %v187 = vld [vmem:[%s1 + $0xb0] sm:$0xf]
  %v188 = vld [vmem:[%s1 + $0xb4] sm:$0xf]
  %v189 = vld [vmem:[%s1 + $0xb8] sm:$0xf]
  %v190 = vld [vmem:[%s1 + $0xbc] sm:$0xf]
  %v191 = vld [vmem:[%s1 + $0xc0] sm:$0xf]
  %v192 = vld [vmem:[%s1 + $0xc4] sm:$0xf]
  %v193 = vld [vmem:[%s1 + $0xc8] sm:$0xf]
  %v194 = vld [vmem:[%s1 + $0xcc] sm:$0xf]
  %v195 = vld [vmem:[%s1 + $0xd0] sm:$0xf]
  %v196 = vld [vmem:[%s1 + $0xd4] sm:$0xf]
  %v197 = vld [vmem:[%s1 + $0xd8] sm:$0xf]
  %v198 = vld [vmem:[%s1 + $0xdc] sm:$0xf]
  %v199 = vld [vmem:[%s1 + $0xe0] sm:$0xf]
  %v200 = vld [vmem:[%s1 + $0xe4] sm:$0xf]
  %v201 = vld [vmem:[%s1 + $0xe8] sm:$0xf]
  %v202 = vld [vmem:[%s1 + $0xec] sm:$0xf]
  %v203 = vld [vmem:[%s1 + $0xf0] sm:$0xf]
  %v204 = vld [vmem:[%s1 + $0xf4] sm:$0xf]
  %v205 = vld [vmem:[%s1 + $0xf8] sm:$0xf]
  %v206 = vld [vmem:[%s1 + $0xfc] sm:$0xf]
  %v207 = vld [vmem:[%s2] sm:$0x1]
  %v209 = vlaneseq
  %v210 = vshrl.u32 %v209, 7
  %v211 = vsub.s32 0, %v210
  %v212 = vrot.slane %v207, %v211
  %v342 = vunpack.c.l.b16 %v15
  %v343 = vunpack.c.h.b16 %v15
  %v344 = vunpack.c.l.b16 %v16
  %v345 = vunpack.c.h.b16 %v16
  %v346 = vunpack.c.l.b16 %v17
  %v347 = vunpack.c.h.b16 %v17
  %v348 = vunpack.c.l.b16 %v18
  %v349 = vunpack.c.h.b16 %v18
  %v350 = vunpack.c.l.b16 %v19
  %v351 = vunpack.c.h.b16 %v19
  %v352 = vunpack.c.l.b16 %v20
  %v353 = vunpack.c.h.b16 %v20
  %v354 = vunpack.c.l.b16 %v21
  %v355 = vunpack.c.h.b16 %v21
  %v356 = vunpack.c.l.b16 %v22
  %v357 = vunpack.c.h.b16 %v22
  %v358 = vunpack.c.l.b16 %v23
  %v359 = vunpack.c.h.b16 %v23
  %v360 = vunpack.c.l.b16 %v24
  %v361 = vunpack.c.h.b16 %v24
  %v362 = vunpack.c.l.b16 %v25
  %v363 = vunpack.c.h.b16 %v25
  %v364 = vunpack.c.l.b16 %v26
  %v365 = vunpack.c.h.b16 %v26
  %v366 = vunpack.c.l.b16 %v27
  %v367 = vunpack.c.h.b16 %v27
  %v368 = vunpack.c.l.b16 %v28
  %v369 = vunpack.c.h.b16 %v28
  %v370 = vunpack.c.l.b16 %v29
  %v371 = vunpack.c.h.b16 %v29
  %v372 = vunpack.c.l.b16 %v30
  %v373 = vunpack.c.h.b16 %v30
  %v374 = vunpack.c.l.b16 %v31
  %v375 = vunpack.c.h.b16 %v31
  %v376 = vunpack.c.l.b16 %v32
  %v377 = vunpack.c.h.b16 %v32
  %v378 = vunpack.c.l.b16 %v33
  %v379 = vunpack.c.h.b16 %v33
  %v380 = vunpack.c.l.b16 %v34
  %v381 = vunpack.c.h.b16 %v34
  %v382 = vunpack.c.l.b16 %v35
  %v383 = vunpack.c.h.b16 %v35
  %v384 = vunpack.c.l.b16 %v36
  %v385 = vunpack.c.h.b16 %v36
  %v386 = vunpack.c.l.b16 %v37
  %v387 = vunpack.c.h.b16 %v37
  %v388 = vunpack.c.l.b16 %v38
  %v389 = vunpack.c.h.b16 %v38
  %v390 = vunpack.c.l.b16 %v39
  %v391 = vunpack.c.h.b16 %v39
  %v392 = vunpack.c.l.b16 %v40
  %v393 = vunpack.c.h.b16 %v40
  %v394 = vunpack.c.l.b16 %v41
  %v395 = vunpack.c.h.b16 %v41
  %v396 = vunpack.c.l.b16 %v42
  %v397 = vunpack.c.h.b16 %v42
  %v398 = vunpack.c.l.b16 %v43
  %v399 = vunpack.c.h.b16 %v43
  %v400 = vunpack.c.l.b16 %v44
  %v401 = vunpack.c.h.b16 %v44
  %v402 = vunpack.c.l.b16 %v45
  %v403 = vunpack.c.h.b16 %v45
  %v404 = vunpack.c.l.b16 %v46
  %v405 = vunpack.c.h.b16 %v46
  %v406 = vunpack.c.l.b16 %v47
  %v407 = vunpack.c.h.b16 %v47
  %v408 = vunpack.c.l.b16 %v48
  %v409 = vunpack.c.h.b16 %v48
  %v410 = vunpack.c.l.b16 %v49
  %v411 = vunpack.c.h.b16 %v49
  %v412 = vunpack.c.l.b16 %v50
  %v413 = vunpack.c.h.b16 %v50
  %v414 = vunpack.c.l.b16 %v51
  %v415 = vunpack.c.h.b16 %v51
  %v416 = vunpack.c.l.b16 %v52
  %v417 = vunpack.c.h.b16 %v52
  %v418 = vunpack.c.l.b16 %v53
  %v419 = vunpack.c.h.b16 %v53
  %v420 = vunpack.c.l.b16 %v54
  %v421 = vunpack.c.h.b16 %v54
  %v422 = vunpack.c.l.b16 %v55
  %v423 = vunpack.c.h.b16 %v55
  %v424 = vunpack.c.l.b16 %v56
  %v425 = vunpack.c.h.b16 %v56
  %v426 = vunpack.c.l.b16 %v57
  %v427 = vunpack.c.h.b16 %v57
  %v428 = vunpack.c.l.b16 %v58
  %v429 = vunpack.c.h.b16 %v58
  %v430 = vunpack.c.l.b16 %v59
  %v431 = vunpack.c.h.b16 %v59
  %v432 = vunpack.c.l.b16 %v60
  %v433 = vunpack.c.h.b16 %v60
  %v434 = vunpack.c.l.b16 %v61
  %v435 = vunpack.c.h.b16 %v61
  %v436 = vunpack.c.l.b16 %v62
  %v437 = vunpack.c.h.b16 %v62
  %v438 = vunpack.c.l.b16 %v63
  %v439 = vunpack.c.h.b16 %v63
  %v440 = vunpack.c.l.b16 %v64
  %v441 = vunpack.c.h.b16 %v64
  %v442 = vunpack.c.l.b16 %v65
  %v443 = vunpack.c.h.b16 %v65
  %v444 = vunpack.c.l.b16 %v66
  %v445 = vunpack.c.h.b16 %v66
  %v446 = vunpack.c.l.b16 %v67
  %v447 = vunpack.c.h.b16 %v67
  %v448 = vunpack.c.l.b16 %v68
  %v449 = vunpack.c.h.b16 %v68
  %v450 = vunpack.c.l.b16 %v69
  %v451 = vunpack.c.h.b16 %v69
  %v452 = vunpack.c.l.b16 %v70
  %v453 = vunpack.c.h.b16 %v70
  %v454 = vunpack.c.l.b16 %v71
  %v455 = vunpack.c.h.b16 %v71
  %v456 = vunpack.c.l.b16 %v72
  %v457 = vunpack.c.h.b16 %v72
  %v458 = vunpack.c.l.b16 %v73
  %v459 = vunpack.c.h.b16 %v73
  %v460 = vunpack.c.l.b16 %v74
  %v461 = vunpack.c.h.b16 %v74
  %v462 = vunpack.c.l.b16 %v75
  %v463 = vunpack.c.h.b16 %v75
  %v464 = vunpack.c.l.b16 %v76
  %v465 = vunpack.c.h.b16 %v76
  %v466 = vunpack.c.l.b16 %v77
  %v467 = vunpack.c.h.b16 %v77
  %v468 = vunpack.c.l.b16 %v78
  %v469 = vunpack.c.h.b16 %v78
  %v470 = vunpack.c.l.b16 %v79
  %v471 = vunpack.c.h.b16 %v79
  %v472 = vunpack.c.l.b16 %v80
  %v473 = vunpack.c.h.b16 %v80
  %v474 = vunpack.c.l.b16 %v81
  %v475 = vunpack.c.h.b16 %v81
  %v476 = vunpack.c.l.b16 %v82
  %v477 = vunpack.c.h.b16 %v82
  %v478 = vunpack.c.l.b16 %v83
  %v479 = vunpack.c.h.b16 %v83
  %v480 = vunpack.c.l.b16 %v84
  %v481 = vunpack.c.h.b16 %v84
  %v482 = vunpack.c.l.b16 %v85
  %v483 = vunpack.c.h.b16 %v85
  %v484 = vunpack.c.l.b16 %v86
  %v485 = vunpack.c.h.b16 %v86
  %v486 = vunpack.c.l.b16 %v87
  %v487 = vunpack.c.h.b16 %v87
  %v488 = vunpack.c.l.b16 %v88
  %v489 = vunpack.c.h.b16 %v88
  %v490 = vunpack.c.l.b16 %v89
  %v491 = vunpack.c.h.b16 %v89
  %v492 = vunpack.c.l.b16 %v90
  %v493 = vunpack.c.h.b16 %v90
  %v494 = vunpack.c.l.b16 %v91
  %v495 = vunpack.c.h.b16 %v91
  %v496 = vunpack.c.l.b16 %v92
  %v497 = vunpack.c.h.b16 %v92
  %v498 = vunpack.c.l.b16 %v93
  %v499 = vunpack.c.h.b16 %v93
  %v500 = vunpack.c.l.b16 %v94
  %v501 = vunpack.c.h.b16 %v94
  %v502 = vunpack.c.l.b16 %v95
  %v503 = vunpack.c.h.b16 %v95
  %v504 = vunpack.c.l.b16 %v96
  %v505 = vunpack.c.h.b16 %v96
  %v506 = vunpack.c.l.b16 %v97
  %v507 = vunpack.c.h.b16 %v97
  %v508 = vunpack.c.l.b16 %v98
  %v509 = vunpack.c.h.b16 %v98
  %v510 = vunpack.c.l.b16 %v99
  %v511 = vunpack.c.h.b16 %v99
  %v512 = vunpack.c.l.b16 %v100
  %v513 = vunpack.c.h.b16 %v100
  %v514 = vunpack.c.l.b16 %v101
  %v515 = vunpack.c.h.b16 %v101
  %v516 = vunpack.c.l.b16 %v102
  %v517 = vunpack.c.h.b16 %v102
  %v518 = vunpack.c.l.b16 %v103
  %v519 = vunpack.c.h.b16 %v103
  %v520 = vunpack.c.l.b16 %v104
  %v521 = vunpack.c.h.b16 %v104
  %v522 = vunpack.c.l.b16 %v105
  %v523 = vunpack.c.h.b16 %v105
  %v524 = vunpack.c.l.b16 %v106
  %v525 = vunpack.c.h.b16 %v106
  %v526 = vunpack.c.l.b16 %v107
  %v527 = vunpack.c.h.b16 %v107
  %v528 = vunpack.c.l.b16 %v108
  %v529 = vunpack.c.h.b16 %v108
  %v530 = vunpack.c.l.b16 %v109
  %v531 = vunpack.c.h.b16 %v109
  %v532 = vunpack.c.l.b16 %v110
  %v533 = vunpack.c.h.b16 %v110
  %v534 = vunpack.c.l.b16 %v111
  %v535 = vunpack.c.h.b16 %v111
  %v536 = vunpack.c.l.b16 %v112
  %v537 = vunpack.c.h.b16 %v112
  %v538 = vunpack.c.l.b16 %v113
  %v539 = vunpack.c.h.b16 %v113
  %v540 = vunpack.c.l.b16 %v114
  %v541 = vunpack.c.h.b16 %v114
  %v542 = vunpack.c.l.b16 %v115
  %v543 = vunpack.c.h.b16 %v115
  %v544 = vunpack.c.l.b16 %v116
  %v545 = vunpack.c.h.b16 %v116
  %v546 = vunpack.c.l.b16 %v117
  %v547 = vunpack.c.h.b16 %v117
  %v548 = vunpack.c.l.b16 %v118
  %v549 = vunpack.c.h.b16 %v118
  %v550 = vunpack.c.l.b16 %v119
  %v551 = vunpack.c.h.b16 %v119
  %v552 = vunpack.c.l.b16 %v120
  %v553 = vunpack.c.h.b16 %v120
  %v554 = vunpack.c.l.b16 %v121
  %v555 = vunpack.c.h.b16 %v121
  %v556 = vunpack.c.l.b16 %v122
  %v557 = vunpack.c.h.b16 %v122
  %v558 = vunpack.c.l.b16 %v123
  %v559 = vunpack.c.h.b16 %v123
  %v560 = vunpack.c.l.b16 %v124
  %v561 = vunpack.c.h.b16 %v124
  %v562 = vunpack.c.l.b16 %v125
  %v563 = vunpack.c.h.b16 %v125
  %v564 = vunpack.c.l.b16 %v126
  %v565 = vunpack.c.h.b16 %v126
  %v566 = vunpack.c.l.b16 %v127
  %v567 = vunpack.c.h.b16 %v127
  %v568 = vunpack.c.l.b16 %v128
  %v569 = vunpack.c.h.b16 %v128
  %v570 = vunpack.c.l.b16 %v129
  %v571 = vunpack.c.h.b16 %v129
  %v572 = vunpack.c.l.b16 %v130
  %v573 = vunpack.c.h.b16 %v130
  %v574 = vunpack.c.l.b16 %v131
  %v575 = vunpack.c.h.b16 %v131
  %v576 = vunpack.c.l.b16 %v132
  %v577 = vunpack.c.h.b16 %v132
  %v578 = vunpack.c.l.b16 %v133
  %v579 = vunpack.c.h.b16 %v133
  %v580 = vunpack.c.l.b16 %v134
  %v581 = vunpack.c.h.b16 %v134
  %v582 = vunpack.c.l.b16 %v135
  %v583 = vunpack.c.h.b16 %v135
  %v584 = vunpack.c.l.b16 %v136
  %v585 = vunpack.c.h.b16 %v136
  %v586 = vunpack.c.l.b16 %v137
  %v587 = vunpack.c.h.b16 %v137
  %v588 = vunpack.c.l.b16 %v138
  %v589 = vunpack.c.h.b16 %v138
  %v590 = vunpack.c.l.b16 %v139
  %v591 = vunpack.c.h.b16 %v139
  %v592 = vunpack.c.l.b16 %v140
  %v593 = vunpack.c.h.b16 %v140
  %v594 = vunpack.c.l.b16 %v141
  %v595 = vunpack.c.h.b16 %v141
  %v596 = vunpack.c.l.b16 %v142
  %v597 = vunpack.c.h.b16 %v142
  %v598 = vpack.c.b16 %v346, %v342
  %v599 = vpack.c.b16 %v347, %v343
  %v600 = vpack.c.b16 %v348, %v344
  %v601 = vpack.c.b16 %v349, %v345
  %v602 = vpack.c.b16 %v354, %v350
  %v603 = vpack.c.b16 %v355, %v351
  %v604 = vpack.c.b16 %v356, %v352
  %v605 = vpack.c.b16 %v357, %v353
  %v606 = vpack.c.b16 %v362, %v358
  %v607 = vpack.c.b16 %v363, %v359
  %v608 = vpack.c.b16 %v364, %v360
  %v609 = vpack.c.b16 %v365, %v361
  %v610 = vpack.c.b16 %v370, %v366
  %v611 = vpack.c.b16 %v371, %v367
  %v612 = vpack.c.b16 %v372, %v368
  %v613 = vpack.c.b16 %v373, %v369
  %v614 = vpack.c.b16 %v378, %v374
  %v615 = vpack.c.b16 %v379, %v375
  %v616 = vpack.c.b16 %v380, %v376
  %v617 = vpack.c.b16 %v381, %v377
  %v618 = vpack.c.b16 %v386, %v382
  %v619 = vpack.c.b16 %v387, %v383
  %v620 = vpack.c.b16 %v388, %v384
  %v621 = vpack.c.b16 %v389, %v385
  %v622 = vpack.c.b16 %v394, %v390
  %v623 = vpack.c.b16 %v395, %v391
  %v624 = vpack.c.b16 %v396, %v392
  %v625 = vpack.c.b16 %v397, %v393
  %v626 = vpack.c.b16 %v402, %v398
  %v627 = vpack.c.b16 %v403, %v399
  %v628 = vpack.c.b16 %v404, %v400
  %v629 = vpack.c.b16 %v405, %v401
  %v630 = vpack.c.b16 %v410, %v406
  %v631 = vpack.c.b16 %v411, %v407
  %v632 = vpack.c.b16 %v412, %v408
  %v633 = vpack.c.b16 %v413, %v409
  %v634 = vpack.c.b16 %v418, %v414
  %v635 = vpack.c.b16 %v419, %v415
  %v636 = vpack.c.b16 %v420, %v416
  %v637 = vpack.c.b16 %v421, %v417
  %v638 = vpack.c.b16 %v426, %v422
  %v639 = vpack.c.b16 %v427, %v423
  %v640 = vpack.c.b16 %v428, %v424
  %v641 = vpack.c.b16 %v429, %v425
  %v642 = vpack.c.b16 %v434, %v430
  %v643 = vpack.c.b16 %v435, %v431
  %v644 = vpack.c.b16 %v436, %v432
  %v645 = vpack.c.b16 %v437, %v433
  %v646 = vpack.c.b16 %v442, %v438
  %v647 = vpack.c.b16 %v443, %v439
  %v648 = vpack.c.b16 %v444, %v440
  %v649 = vpack.c.b16 %v445, %v441
  %v650 = vpack.c.b16 %v450, %v446
  %v651 = vpack.c.b16 %v451, %v447
  %v652 = vpack.c.b16 %v452, %v448
  %v653 = vpack.c.b16 %v453, %v449
  %v654 = vpack.c.b16 %v458, %v454
  %v655 = vpack.c.b16 %v459, %v455
  %v656 = vpack.c.b16 %v460, %v456
  %v657 = vpack.c.b16 %v461, %v457
  %v658 = vpack.c.b16 %v466, %v462
  %v659 = vpack.c.b16 %v467, %v463
  %v660 = vpack.c.b16 %v468, %v464
  %v661 = vpack.c.b16 %v469, %v465
  %v662 = vpack.c.b16 %v474, %v470
  %v663 = vpack.c.b16 %v475, %v471
  %v664 = vpack.c.b16 %v476, %v472
  %v665 = vpack.c.b16 %v477, %v473
  %v666 = vpack.c.b16 %v482, %v478
  %v667 = vpack.c.b16 %v483, %v479
  %v668 = vpack.c.b16 %v484, %v480
  %v669 = vpack.c.b16 %v485, %v481
  %v670 = vpack.c.b16 %v490, %v486
  %v671 = vpack.c.b16 %v491, %v487
  %v672 = vpack.c.b16 %v492, %v488
  %v673 = vpack.c.b16 %v493, %v489
  %v674 = vpack.c.b16 %v498, %v494
  %v675 = vpack.c.b16 %v499, %v495
  %v676 = vpack.c.b16 %v500, %v496
  %v677 = vpack.c.b16 %v501, %v497
  %v678 = vpack.c.b16 %v506, %v502
  %v679 = vpack.c.b16 %v507, %v503
  %v680 = vpack.c.b16 %v508, %v504
  %v681 = vpack.c.b16 %v509, %v505
  %v682 = vpack.c.b16 %v514, %v510
  %v683 = vpack.c.b16 %v515, %v511
  %v684 = vpack.c.b16 %v516, %v512
  %v685 = vpack.c.b16 %v517, %v513
  %v686 = vpack.c.b16 %v522, %v518
  %v687 = vpack.c.b16 %v523, %v519
  %v688 = vpack.c.b16 %v524, %v520
  %v689 = vpack.c.b16 %v525, %v521
  %v690 = vpack.c.b16 %v530, %v526
  %v691 = vpack.c.b16 %v531, %v527
  %v692 = vpack.c.b16 %v532, %v528
  %v693 = vpack.c.b16 %v533, %v529
  %v694 = vpack.c.b16 %v538, %v534
  %v695 = vpack.c.b16 %v539, %v535
  %v696 = vpack.c.b16 %v540, %v536
  %v697 = vpack.c.b16 %v541, %v537
  %v698 = vpack.c.b16 %v546, %v542
  %v699 = vpack.c.b16 %v547, %v543
  %v700 = vpack.c.b16 %v548, %v544
  %v701 = vpack.c.b16 %v549, %v545
  %v702 = vpack.c.b16 %v554, %v550
  %v703 = vpack.c.b16 %v555, %v551
  %v704 = vpack.c.b16 %v556, %v552
  %v705 = vpack.c.b16 %v557, %v553
  %v706 = vpack.c.b16 %v562, %v558
  %v707 = vpack.c.b16 %v563, %v559
  %v708 = vpack.c.b16 %v564, %v560
  %v709 = vpack.c.b16 %v565, %v561
  %v710 = vpack.c.b16 %v570, %v566
  %v711 = vpack.c.b16 %v571, %v567
  %v712 = vpack.c.b16 %v572, %v568
  %v713 = vpack.c.b16 %v573, %v569
  %v714 = vpack.c.b16 %v578, %v574
  %v715 = vpack.c.b16 %v579, %v575
  %v716 = vpack.c.b16 %v580, %v576
  %v717 = vpack.c.b16 %v581, %v577
  %v718 = vpack.c.b16 %v586, %v582
  %v719 = vpack.c.b16 %v587, %v583
  %v720 = vpack.c.b16 %v588, %v584
  %v721 = vpack.c.b16 %v589, %v585
  %v722 = vpack.c.b16 %v594, %v590
  %v723 = vpack.c.b16 %v595, %v591
  %v724 = vpack.c.b16 %v596, %v592
  %v725 = vpack.c.b16 %v597, %v593
  %v918 = vunpack.c.l.b16 %v143
  %v919 = vunpack.c.l.b16 %v144
  %v920 = vunpack.c.l.b16 %v145
  %v921 = vunpack.c.l.b16 %v146
  %v922 = vunpack.c.l.b16 %v147
  %v923 = vunpack.c.l.b16 %v148
  %v924 = vunpack.c.l.b16 %v149
  %v925 = vunpack.c.l.b16 %v150
  %v926 = vunpack.c.l.b16 %v151
  %v927 = vunpack.c.l.b16 %v152
  %v928 = vunpack.c.l.b16 %v153
  %v929 = vunpack.c.l.b16 %v154
  %v930 = vunpack.c.l.b16 %v155
  %v931 = vunpack.c.l.b16 %v156
  %v932 = vunpack.c.l.b16 %v157
  %v933 = vunpack.c.l.b16 %v158
  %v934 = vunpack.c.l.b16 %v159
  %v935 = vunpack.c.l.b16 %v160
  %v936 = vunpack.c.l.b16 %v161
  %v937 = vunpack.c.l.b16 %v162
  %v938 = vunpack.c.l.b16 %v163
  %v939 = vunpack.c.l.b16 %v164
  %v940 = vunpack.c.l.b16 %v165
  %v941 = vunpack.c.l.b16 %v166
  %v942 = vunpack.c.l.b16 %v167
  %v943 = vunpack.c.l.b16 %v168
  %v944 = vunpack.c.l.b16 %v169
  %v945 = vunpack.c.l.b16 %v170
  %v946 = vunpack.c.l.b16 %v171
  %v947 = vunpack.c.l.b16 %v172
  %v948 = vunpack.c.l.b16 %v173
  %v949 = vunpack.c.l.b16 %v174
  %v950 = vunpack.c.l.b16 %v175
  %v951 = vunpack.c.l.b16 %v176
  %v952 = vunpack.c.l.b16 %v177
  %v953 = vunpack.c.l.b16 %v178
  %v954 = vunpack.c.l.b16 %v179
  %v955 = vunpack.c.l.b16 %v180
  %v956 = vunpack.c.l.b16 %v181
  %v957 = vunpack.c.l.b16 %v182
  %v958 = vunpack.c.l.b16 %v183
  %v959 = vunpack.c.l.b16 %v184
  %v960 = vunpack.c.l.b16 %v185
  %v961 = vunpack.c.l.b16 %v186
  %v962 = vunpack.c.l.b16 %v187
  %v963 = vunpack.c.l.b16 %v188
  %v964 = vunpack.c.l.b16 %v189
  %v965 = vunpack.c.l.b16 %v190
  %v966 = vunpack.c.l.b16 %v191
  %v967 = vunpack.c.l.b16 %v192
  %v968 = vunpack.c.l.b16 %v193
  %v969 = vunpack.c.l.b16 %v194
  %v970 = vunpack.c.l.b16 %v195
  %v971 = vunpack.c.l.b16 %v196
  %v972 = vunpack.c.l.b16 %v197
  %v973 = vunpack.c.l.b16 %v198
  %v974 = vunpack.c.l.b16 %v199
  %v975 = vunpack.c.l.b16 %v200
  %v976 = vunpack.c.l.b16 %v201
  %v977 = vunpack.c.l.b16 %v202
  %v978 = vunpack.c.l.b16 %v203
  %v979 = vunpack.c.l.b16 %v204
  %v980 = vunpack.c.l.b16 %v205
  %v981 = vunpack.c.l.b16 %v206
  %v982 = vpack.c.b16 %v919, %v918
  %v983 = vpack.c.b16 %v921, %v920
  %v984 = vpack.c.b16 %v923, %v922
  %v985 = vpack.c.b16 %v925, %v924
  %v986 = vpack.c.b16 %v927, %v926
  %v987 = vpack.c.b16 %v929, %v928
  %v988 = vpack.c.b16 %v931, %v930
  %v989 = vpack.c.b16 %v933, %v932
  %v990 = vpack.c.b16 %v935, %v934
  %v991 = vpack.c.b16 %v937, %v936
  %v992 = vpack.c.b16 %v939, %v938
  %v993 = vpack.c.b16 %v941, %v940
  %v994 = vpack.c.b16 %v943, %v942
  %v995 = vpack.c.b16 %v945, %v944
  %v996 = vpack.c.b16 %v947, %v946
  %v997 = vpack.c.b16 %v949, %v948
  %v998 = vpack.c.b16 %v951, %v950
  %v999 = vpack.c.b16 %v953, %v952
  %v1000 = vpack.c.b16 %v955, %v954
  %v1001 = vpack.c.b16 %v957, %v956
  %v1002 = vpack.c.b16 %v959, %v958
  %v1003 = vpack.c.b16 %v961, %v960
  %v1004 = vpack.c.b16 %v963, %v962
  %v1005 = vpack.c.b16 %v965, %v964
  %v1006 = vpack.c.b16 %v967, %v966
  %v1007 = vpack.c.b16 %v969, %v968
  %v1008 = vpack.c.b16 %v971, %v970
  %v1009 = vpack.c.b16 %v973, %v972
  %v1010 = vpack.c.b16 %v975, %v974
  %v1011 = vpack.c.b16 %v977, %v976
  %v1012 = vpack.c.b16 %v979, %v978
  %v1013 = vpack.c.b16 %v981, %v980
  %1046 = vmatprep.subr.bf16.mxu0 0
  %1047 = vmatpush1.bf16.msra.mxu0 %v982
  %1048 = vmatprep.subr.bf16.mxu0 0
  %1049 = vmatpush1.bf16.msra.mxu0 %v983
  %1050 = vmatprep.subr.bf16.mxu0 0
  %1051 = vmatpush1.bf16.msra.mxu0 %v984
  %1052 = vmatprep.subr.bf16.mxu0 0
  %1053 = vmatpush1.bf16.msra.mxu0 %v985
  %1054 = vmatprep.subr.bf16.mxu0 0
  %1055 = vmatpush1.bf16.msra.mxu0 %v986
  %1056 = vmatprep.subr.bf16.mxu0 0
  %1057 = vmatpush1.bf16.msra.mxu0 %v987
  %1058 = vmatprep.subr.bf16.mxu0 0
  %1059 = vmatpush1.bf16.msra.mxu0 %v988
  %1060 = vmatprep.subr.bf16.mxu0 0
  %1061 = vmatpush1.bf16.msra.mxu0 %v989
  %1062 = vmatprep.subr.bf16.mxu0 0
  %1063 = vmatpush1.bf16.msra.mxu0 %v990
  %1064 = vmatprep.subr.bf16.mxu0 0
  %1065 = vmatpush1.bf16.msra.mxu0 %v991
  %1066 = vmatprep.subr.bf16.mxu0 0
  %1067 = vmatpush1.bf16.msra.mxu0 %v992
  %1068 = vmatprep.subr.bf16.mxu0 0
  %1069 = vmatpush1.bf16.msra.mxu0 %v993
  %1070 = vmatprep.subr.bf16.mxu0 0
  %1071 = vmatpush1.bf16.msra.mxu0 %v994
  %1072 = vmatprep.subr.bf16.mxu0 0
  %1073 = vmatpush1.bf16.msra.mxu0 %v995
  %1074 = vmatprep.subr.bf16.mxu0 0
  %1075 = vmatpush1.bf16.msra.mxu0 %v996
  %1076 = vmatprep.subr.bf16.mxu0 0
  %1077 = vmatpush1.bf16.msra.mxu0 %v997
  %1078 = vmatprep.mubr.bf16.mxu0 %v599
  %1079 = vmatmul.mubr.bf16.gmra.mrb[0].mxu0 %v598
  %v1080 = vpop.f32.mrb[0].mxu0
  %v1081 = vadd.f32 %v212, %v1080
  %v1082 = vpop.f32.mrb[0].mxu0
  %v1083 = vpop.f32.mrb[0].mxu0
  %v1084 = vadd.f32 %v212, %v1083
  %v1085 = vpop.f32.mrb[0].mxu0
  %1086 = vmatprep.mubr.bf16.mxu0 %v603
  %1087 = vmatmul.mubr.bf16.gmra.mrb[0].mxu0 %v602
  %v1088 = vpop.f32.mrb[0].mxu0
  %v1089 = vadd.f32 %v212, %v1088
  %v1090 = vpop.f32.mrb[0].mxu0
  %v1091 = vpop.f32.mrb[0].mxu0
  %v1092 = vadd.f32 %v212, %v1091
  %v1093 = vpop.f32.mrb[0].mxu0
  %1094 = vmatprep.mubr.bf16.mxu0 %v607
  %1095 = vmatmul.mubr.bf16.gmra.mrb[0].mxu0 %v606
  %v1096 = vpop.f32.mrb[0].mxu0
  %v1097 = vadd.f32 %v212, %v1096
  %v1098 = vpop.f32.mrb[0].mxu0
  %v1099 = vpop.f32.mrb[0].mxu0
  %v1100 = vadd.f32 %v212, %v1099
  %v1101 = vpop.f32.mrb[0].mxu0
  %1102 = vmatprep.mubr.bf16.mxu0 %v611
  %1103 = vmatmul.mubr.bf16.gmra.mrb[0].mxu0 %v610
  %v1104 = vpop.f32.mrb[0].mxu0
  %v1105 = vadd.f32 %v212, %v1104
  %v1106 = vpop.f32.mrb[0].mxu0
  %v1107 = vpop.f32.mrb[0].mxu0
  %v1108 = vadd.f32 %v212, %v1107
  %v1109 = vpop.f32.mrb[0].mxu0
  %1110 = vmatprep.mubr.bf16.mxu0 %v615
  %1111 = vmatmul.mubr.bf16.gmra.mrb[0].mxu0 %v614
  %v1112 = vpop.f32.mrb[0].mxu0
  %v1113 = vadd.f32 %v212, %v1112
  %v1114 = vpop.f32.mrb[0].mxu0
  %v1115 = vpop.f32.mrb[0].mxu0
  %v1116 = vadd.f32 %v212, %v1115
  %v1117 = vpop.f32.mrb[0].mxu0
  %1118 = vmatprep.mubr.bf16.mxu0 %v619
  %1119 = vmatmul.mubr.bf16.gmra.mrb[0].mxu0 %v618
  %v1120 = vpop.f32.mrb[0].mxu0
  %v1121 = vadd.f32 %v212, %v1120
  %v1122 = vpop.f32.mrb[0].mxu0
  %v1123 = vpop.f32.mrb[0].mxu0
  %v1124 = vadd.f32 %v212, %v1123
  %v1125 = vpop.f32.mrb[0].mxu0
  %1126 = vmatprep.mubr.bf16.mxu0 %v623
  %1127 = vmatmul.mubr.bf16.gmra.mrb[0].mxu0 %v622
  %v1128 = vpop.f32.mrb[0].mxu0
  %v1129 = vadd.f32 %v212, %v1128
  %v1130 = vpop.f32.mrb[0].mxu0
  %v1131 = vpop.f32.mrb[0].mxu0
  %v1132 = vadd.f32 %v212, %v1131
  %v1133 = vpop.f32.mrb[0].mxu0
  %1134 = vmatprep.mubr.bf16.mxu0 %v627
  %1135 = vmatmul.mubr.bf16.gmra.mrb[0].mxu0 %v626
  %v1136 = vpop.f32.mrb[0].mxu0
  %v1137 = vadd.f32 %v212, %v1136
  %v1138 = vpop.f32.mrb[0].mxu0
  %v1139 = vpop.f32.mrb[0].mxu0
  %v1140 = vadd.f32 %v212, %v1139
  %v1141 = vpop.f32.mrb[0].mxu0
  %1142 = vmatprep.mubr.bf16.mxu0 %v631
  %1143 = vmatmul.mubr.bf16.gmra.mrb[0].mxu0 %v630
  %v1144 = vpop.f32.mrb[0].mxu0
  %v1145 = vadd.f32 %v212, %v1144
  %v1146 = vpop.f32.mrb[0].mxu0
  %v1147 = vpop.f32.mrb[0].mxu0
  %v1148 = vadd.f32 %v212, %v1147
  %v1149 = vpop.f32.mrb[0].mxu0
  %1150 = vmatprep.mubr.bf16.mxu0 %v635
  %1151 = vmatmul.mubr.bf16.gmra.mrb[0].mxu0 %v634
  %v1152 = vpop.f32.mrb[0].mxu0
  %v1153 = vadd.f32 %v212, %v1152
  %v1154 = vpop.f32.mrb[0].mxu0
  %v1155 = vpop.f32.mrb[0].mxu0
  %v1156 = vadd.f32 %v212, %v1155
  %v1157 = vpop.f32.mrb[0].mxu0
  %1158 = vmatprep.mubr.bf16.mxu0 %v639
  %1159 = vmatmul.mubr.bf16.gmra.mrb[0].mxu0 %v638
  %v1160 = vpop.f32.mrb[0].mxu0
  %v1161 = vadd.f32 %v212, %v1160
  %v1162 = vpop.f32.mrb[0].mxu0
  %v1163 = vpop.f32.mrb[0].mxu0
  %v1164 = vadd.f32 %v212, %v1163
  %v1165 = vpop.f32.mrb[0].mxu0
  %1166 = vmatprep.mubr.bf16.mxu0 %v643
  %1167 = vmatmul.mubr.bf16.gmra.mrb[0].mxu0 %v642
  %v1168 = vpop.f32.mrb[0].mxu0
  %v1169 = vadd.f32 %v212, %v1168
  %v1170 = vpop.f32.mrb[0].mxu0
  %v1171 = vpop.f32.mrb[0].mxu0
  %v1172 = vadd.f32 %v212, %v1171
  %v1173 = vpop.f32.mrb[0].mxu0
  %1174 = vmatprep.mubr.bf16.mxu0 %v647
  %1175 = vmatmul.mubr.bf16.gmra.mrb[0].mxu0 %v646
  %v1176 = vpop.f32.mrb[0].mxu0
  %v1177 = vadd.f32 %v212, %v1176
  %v1178 = vpop.f32.mrb[0].mxu0
  %v1179 = vpop.f32.mrb[0].mxu0
  %v1180 = vadd.f32 %v212, %v1179
  %v1181 = vpop.f32.mrb[0].mxu0
  %1182 = vmatprep.mubr.bf16.mxu0 %v651
  %1183 = vmatmul.mubr.bf16.gmra.mrb[0].mxu0 %v650
  %v1184 = vpop.f32.mrb[0].mxu0
  %v1185 = vadd.f32 %v212, %v1184
  %v1186 = vpop.f32.mrb[0].mxu0
  %v1187 = vpop.f32.mrb[0].mxu0
  %v1188 = vadd.f32 %v212, %v1187
  %v1189 = vpop.f32.mrb[0].mxu0
  %1190 = vmatprep.mubr.bf16.mxu0 %v655
  %1191 = vmatmul.mubr.bf16.gmra.mrb[0].mxu0 %v654
  %v1192 = vpop.f32.mrb[0].mxu0
  %v1193 = vadd.f32 %v212, %v1192
  %v1194 = vpop.f32.mrb[0].mxu0
  %v1195 = vpop.f32.mrb[0].mxu0
  %v1196 = vadd.f32 %v212, %v1195
  %v1197 = vpop.f32.mrb[0].mxu0
  %1198 = vmatprep.mubr.bf16.mxu0 %v659
  %1199 = vmatmul.mubr.bf16.gmra.mrb[0].mxu0 %v658
  %v1200 = vpop.f32.mrb[0].mxu0
  %v1201 = vadd.f32 %v212, %v1200
  %v1202 = vpop.f32.mrb[0].mxu0
  %v1203 = vpop.f32.mrb[0].mxu0
  %v1204 = vadd.f32 %v212, %v1203
  %v1205 = vpop.f32.mrb[0].mxu0
  %1206 = vmatprep.mubr.bf16.mxu0 %v663
  %1207 = vmatmul.mubr.bf16.gmra.mrb[0].mxu0 %v662
  %v1208 = vpop.f32.mrb[0].mxu0
  %v1209 = vadd.f32 %v212, %v1208
  %v1210 = vpop.f32.mrb[0].mxu0
  %v1211 = vpop.f32.mrb[0].mxu0
  %v1212 = vadd.f32 %v212, %v1211
  %v1213 = vpop.f32.mrb[0].mxu0
  %1214 = vmatprep.mubr.bf16.mxu0 %v667
  %1215 = vmatmul.mubr.bf16.gmra.mrb[0].mxu0 %v666
  %v1216 = vpop.f32.mrb[0].mxu0
  %v1217 = vadd.f32 %v212, %v1216
  %v1218 = vpop.f32.mrb[0].mxu0
  %v1219 = vpop.f32.mrb[0].mxu0
  %v1220 = vadd.f32 %v212, %v1219
  %v1221 = vpop.f32.mrb[0].mxu0
  %1222 = vmatprep.mubr.bf16.mxu0 %v671
  %1223 = vmatmul.mubr.bf16.gmra.mrb[0].mxu0 %v670
  %v1224 = vpop.f32.mrb[0].mxu0
  %v1225 = vadd.f32 %v212, %v1224
  %v1226 = vpop.f32.mrb[0].mxu0
  %v1227 = vpop.f32.mrb[0].mxu0
  %v1228 = vadd.f32 %v212, %v1227
  %v1229 = vpop.f32.mrb[0].mxu0
  %1230 = vmatprep.mubr.bf16.mxu0 %v675
  %1231 = vmatmul.mubr.bf16.gmra.mrb[0].mxu0 %v674
  %v1232 = vpop.f32.mrb[0].mxu0
  %v1233 = vadd.f32 %v212, %v1232
  %v1234 = vpop.f32.mrb[0].mxu0
  %v1235 = vpop.f32.mrb[0].mxu0
  %v1236 = vadd.f32 %v212, %v1235
  %v1237 = vpop.f32.mrb[0].mxu0
  %1238 = vmatprep.mubr.bf16.mxu0 %v679
  %1239 = vmatmul.mubr.bf16.gmra.mrb[0].mxu0 %v678
  %v1240 = vpop.f32.mrb[0].mxu0
  %v1241 = vadd.f32 %v212, %v1240
  %v1242 = vpop.f32.mrb[0].mxu0
  %v1243 = vpop.f32.mrb[0].mxu0
  %v1244 = vadd.f32 %v212, %v1243
  %v1245 = vpop.f32.mrb[0].mxu0
  %1246 = vmatprep.mubr.bf16.mxu0 %v683
  %1247 = vmatmul.mubr.bf16.gmra.mrb[0].mxu0 %v682
  %v1248 = vpop.f32.mrb[0].mxu0
  %v1249 = vadd.f32 %v212, %v1248
  %v1250 = vpop.f32.mrb[0].mxu0
  %v1251 = vpop.f32.mrb[0].mxu0
  %v1252 = vadd.f32 %v212, %v1251
  %v1253 = vpop.f32.mrb[0].mxu0
  %1254 = vmatprep.mubr.bf16.mxu0 %v687
  %1255 = vmatmul.mubr.bf16.gmra.mrb[0].mxu0 %v686
  %v1256 = vpop.f32.mrb[0].mxu0
  %v1257 = vadd.f32 %v212, %v1256
  %v1258 = vpop.f32.mrb[0].mxu0
  %v1259 = vpop.f32.mrb[0].mxu0
  %v1260 = vadd.f32 %v212, %v1259
  %v1261 = vpop.f32.mrb[0].mxu0
  %1262 = vmatprep.mubr.bf16.mxu0 %v691
  %1263 = vmatmul.mubr.bf16.gmra.mrb[0].mxu0 %v690
  %v1264 = vpop.f32.mrb[0].mxu0
  %v1265 = vadd.f32 %v212, %v1264
  %v1266 = vpop.f32.mrb[0].mxu0
  %v1267 = vpop.f32.mrb[0].mxu0
  %v1268 = vadd.f32 %v212, %v1267
  %v1269 = vpop.f32.mrb[0].mxu0
  %1270 = vmatprep.mubr.bf16.mxu0 %v695
  %1271 = vmatmul.mubr.bf16.gmra.mrb[0].mxu0 %v694
  %v1272 = vpop.f32.mrb[0].mxu0
  %v1273 = vadd.f32 %v212, %v1272
  %v1274 = vpop.f32.mrb[0].mxu0
  %v1275 = vpop.f32.mrb[0].mxu0
  %v1276 = vadd.f32 %v212, %v1275
  %v1277 = vpop.f32.mrb[0].mxu0
  %1278 = vmatprep.mubr.bf16.mxu0 %v699
  %1279 = vmatmul.mubr.bf16.gmra.mrb[0].mxu0 %v698
  %v1280 = vpop.f32.mrb[0].mxu0
  %v1281 = vadd.f32 %v212, %v1280
  %v1282 = vpop.f32.mrb[0].mxu0
  %v1283 = vpop.f32.mrb[0].mxu0
  %v1284 = vadd.f32 %v212, %v1283
  %v1285 = vpop.f32.mrb[0].mxu0
  %1286 = vmatprep.mubr.bf16.mxu0 %v703
  %1287 = vmatmul.mubr.bf16.gmra.mrb[0].mxu0 %v702
  %v1288 = vpop.f32.mrb[0].mxu0
  %v1289 = vadd.f32 %v212, %v1288
  %v1290 = vpop.f32.mrb[0].mxu0
  %v1291 = vpop.f32.mrb[0].mxu0
  %v1292 = vadd.f32 %v212, %v1291
  %v1293 = vpop.f32.mrb[0].mxu0
  %1294 = vmatprep.mubr.bf16.mxu0 %v707
  %1295 = vmatmul.mubr.bf16.gmra.mrb[0].mxu0 %v706
  %v1296 = vpop.f32.mrb[0].mxu0
  %v1297 = vadd.f32 %v212, %v1296
  %v1298 = vpop.f32.mrb[0].mxu0
  %v1299 = vpop.f32.mrb[0].mxu0
  %v1300 = vadd.f32 %v212, %v1299
  %v1301 = vpop.f32.mrb[0].mxu0
  %1302 = vmatprep.mubr.bf16.mxu0 %v711
  %1303 = vmatmul.mubr.bf16.gmra.mrb[0].mxu0 %v710
  %v1304 = vpop.f32.mrb[0].mxu0
  %v1305 = vadd.f32 %v212, %v1304
  %v1306 = vpop.f32.mrb[0].mxu0
  %v1307 = vpop.f32.mrb[0].mxu0
  %v1308 = vadd.f32 %v212, %v1307
  %v1309 = vpop.f32.mrb[0].mxu0
  %1310 = vmatprep.mubr.bf16.mxu0 %v715
  %1311 = vmatmul.mubr.bf16.gmra.mrb[0].mxu0 %v714
  %v1312 = vpop.f32.mrb[0].mxu0
  %v1313 = vadd.f32 %v212, %v1312
  %v1314 = vpop.f32.mrb[0].mxu0
  %v1315 = vpop.f32.mrb[0].mxu0
  %v1316 = vadd.f32 %v212, %v1315
  %v1317 = vpop.f32.mrb[0].mxu0
  %1318 = vmatprep.mubr.bf16.mxu0 %v719
  %1319 = vmatmul.mubr.bf16.gmra.mrb[0].mxu0 %v718
  %v1320 = vpop.f32.mrb[0].mxu0
  %v1321 = vadd.f32 %v212, %v1320
  %v1322 = vpop.f32.mrb[0].mxu0
  %v1323 = vpop.f32.mrb[0].mxu0
  %v1324 = vadd.f32 %v212, %v1323
  %v1325 = vpop.f32.mrb[0].mxu0
  %1326 = vmatprep.mubr.bf16.mxu0 %v723
  %1327 = vmatmul.mubr.bf16.gmra.mrb[0].mxu0 %v722
  %v1328 = vpop.f32.mrb[0].mxu0
  %v1329 = vadd.f32 %v212, %v1328
  %v1330 = vpop.f32.mrb[0].mxu0
  %v1331 = vpop.f32.mrb[0].mxu0
  %v1332 = vadd.f32 %v212, %v1331
  %v1333 = vpop.f32.mrb[0].mxu0
  %1334 = vdwg.mxu0
  %1335 = vmatprep.subr.bf16.mxu0 0
  %1336 = vmatpush1.bf16.msra.mxu0 %v998
  %1337 = vmatprep.subr.bf16.mxu0 0
  %1338 = vmatpush1.bf16.msra.mxu0 %v999
  %1339 = vmatprep.subr.bf16.mxu0 0
  %1340 = vmatpush1.bf16.msra.mxu0 %v1000
  %1341 = vmatprep.subr.bf16.mxu0 0
  %1342 = vmatpush1.bf16.msra.mxu0 %v1001
  %1343 = vmatprep.subr.bf16.mxu0 0
  %1344 = vmatpush1.bf16.msra.mxu0 %v1002
  %1345 = vmatprep.subr.bf16.mxu0 0
  %1346 = vmatpush1.bf16.msra.mxu0 %v1003
  %1347 = vmatprep.subr.bf16.mxu0 0
  %1348 = vmatpush1.bf16.msra.mxu0 %v1004
  %1349 = vmatprep.subr.bf16.mxu0 0
  %1350 = vmatpush1.bf16.msra.mxu0 %v1005
  %1351 = vmatprep.subr.bf16.mxu0 0
  %1352 = vmatpush1.bf16.msra.mxu0 %v1006
  %1353 = vmatprep.subr.bf16.mxu0 0
  %1354 = vmatpush1.bf16.msra.mxu0 %v1007
  %1355 = vmatprep.subr.bf16.mxu0 0
  %1356 = vmatpush1.bf16.msra.mxu0 %v1008
  %1357 = vmatprep.subr.bf16.mxu0 0
  %1358 = vmatpush1.bf16.msra.mxu0 %v1009
  %1359 = vmatprep.subr.bf16.mxu0 0
  %1360 = vmatpush1.bf16.msra.mxu0 %v1010
  %1361 = vmatprep.subr.bf16.mxu0 0
  %1362 = vmatpush1.bf16.msra.mxu0 %v1011
  %1363 = vmatprep.subr.bf16.mxu0 0
  %1364 = vmatpush1.bf16.msra.mxu0 %v1012
  %1365 = vmatprep.subr.bf16.mxu0 0
  %1366 = vmatpush1.bf16.msra.mxu0 %v1013
  %1367 = vmatprep.mubr.bf16.mxu0 %v601
  %1368 = vmatmul.mubr.bf16.gmra.mrb[0].mxu0 %v600
  %v1369 = vpop.f32.mrb[0].mxu0
  %v1370 = vadd.f32 %v1081, %v1369
  %v1371 = vpop.f32.mrb[0].mxu0
  %v1372 = vpop.f32.mrb[0].mxu0
  %v1373 = vadd.f32 %v1084, %v1372
  %v1374 = vpop.f32.mrb[0].mxu0
  %1375 = vmatprep.mubr.bf16.mxu0 %v605
  %1376 = vmatmul.mubr.bf16.gmra.mrb[0].mxu0 %v604
  %v1377 = vpop.f32.mrb[0].mxu0
  %v1378 = vadd.f32 %v1089, %v1377
  %v1379 = vpop.f32.mrb[0].mxu0
  %v1380 = vpop.f32.mrb[0].mxu0
  %v1381 = vadd.f32 %v1092, %v1380
  %v1382 = vpop.f32.mrb[0].mxu0
  %1383 = vmatprep.mubr.bf16.mxu0 %v609
  %1384 = vmatmul.mubr.bf16.gmra.mrb[0].mxu0 %v608
  %v1385 = vpop.f32.mrb[0].mxu0
  %v1386 = vadd.f32 %v1097, %v1385
  %v1387 = vpop.f32.mrb[0].mxu0
  %v1388 = vpop.f32.mrb[0].mxu0
  %v1389 = vadd.f32 %v1100, %v1388
  %v1390 = vpop.f32.mrb[0].mxu0
  %1391 = vmatprep.mubr.bf16.mxu0 %v613
  %1392 = vmatmul.mubr.bf16.gmra.mrb[0].mxu0 %v612
  %v1393 = vpop.f32.mrb[0].mxu0
  %v1394 = vadd.f32 %v1105, %v1393
  %v1395 = vpop.f32.mrb[0].mxu0
  %v1396 = vpop.f32.mrb[0].mxu0
  %v1397 = vadd.f32 %v1108, %v1396
  %v1398 = vpop.f32.mrb[0].mxu0
  %1399 = vmatprep.mubr.bf16.mxu0 %v617
  %1400 = vmatmul.mubr.bf16.gmra.mrb[0].mxu0 %v616
  %v1401 = vpop.f32.mrb[0].mxu0
  %v1402 = vadd.f32 %v1113, %v1401
  %v1403 = vpop.f32.mrb[0].mxu0
  %v1404 = vpop.f32.mrb[0].mxu0
  %v1405 = vadd.f32 %v1116, %v1404
  %v1406 = vpop.f32.mrb[0].mxu0
  %1407 = vmatprep.mubr.bf16.mxu0 %v621
  %1408 = vmatmul.mubr.bf16.gmra.mrb[0].mxu0 %v620
  %v1409 = vpop.f32.mrb[0].mxu0
  %v1410 = vadd.f32 %v1121, %v1409
  %v1411 = vpop.f32.mrb[0].mxu0
  %v1412 = vpop.f32.mrb[0].mxu0
  %v1413 = vadd.f32 %v1124, %v1412
  %v1414 = vpop.f32.mrb[0].mxu0
  %1415 = vmatprep.mubr.bf16.mxu0 %v625
  %1416 = vmatmul.mubr.bf16.gmra.mrb[0].mxu0 %v624
  %v1417 = vpop.f32.mrb[0].mxu0
  %v1418 = vadd.f32 %v1129, %v1417
  %v1419 = vpop.f32.mrb[0].mxu0
  %v1420 = vpop.f32.mrb[0].mxu0
  %v1421 = vadd.f32 %v1132, %v1420
  %v1422 = vpop.f32.mrb[0].mxu0
  %1423 = vmatprep.mubr.bf16.mxu0 %v629
  %1424 = vmatmul.mubr.bf16.gmra.mrb[0].mxu0 %v628
  %v1425 = vpop.f32.mrb[0].mxu0
  %v1426 = vadd.f32 %v1137, %v1425
  %v1427 = vpop.f32.mrb[0].mxu0
  %v1428 = vpop.f32.mrb[0].mxu0
  %v1429 = vadd.f32 %v1140, %v1428
  %v1430 = vpop.f32.mrb[0].mxu0
  %1431 = vmatprep.mubr.bf16.mxu0 %v633
  %1432 = vmatmul.mubr.bf16.gmra.mrb[0].mxu0 %v632
  %v1433 = vpop.f32.mrb[0].mxu0
  %v1434 = vadd.f32 %v1145, %v1433
  %v1435 = vpop.f32.mrb[0].mxu0
  %v1436 = vpop.f32.mrb[0].mxu0
  %v1437 = vadd.f32 %v1148, %v1436
  %v1438 = vpop.f32.mrb[0].mxu0
  %1439 = vmatprep.mubr.bf16.mxu0 %v637
  %1440 = vmatmul.mubr.bf16.gmra.mrb[0].mxu0 %v636
  %v1441 = vpop.f32.mrb[0].mxu0
  %v1442 = vadd.f32 %v1153, %v1441
  %v1443 = vpop.f32.mrb[0].mxu0
  %v1444 = vpop.f32.mrb[0].mxu0
  %v1445 = vadd.f32 %v1156, %v1444
  %v1446 = vpop.f32.mrb[0].mxu0
  %1447 = vmatprep.mubr.bf16.mxu0 %v641
  %1448 = vmatmul.mubr.bf16.gmra.mrb[0].mxu0 %v640
  %v1449 = vpop.f32.mrb[0].mxu0
  %v1450 = vadd.f32 %v1161, %v1449
  %v1451 = vpop.f32.mrb[0].mxu0
  %v1452 = vpop.f32.mrb[0].mxu0
  %v1453 = vadd.f32 %v1164, %v1452
  %v1454 = vpop.f32.mrb[0].mxu0
  %1455 = vmatprep.mubr.bf16.mxu0 %v645
  %1456 = vmatmul.mubr.bf16.gmra.mrb[0].mxu0 %v644
  %v1457 = vpop.f32.mrb[0].mxu0
  %v1458 = vadd.f32 %v1169, %v1457
  %v1459 = vpop.f32.mrb[0].mxu0
  %v1460 = vpop.f32.mrb[0].mxu0
  %v1461 = vadd.f32 %v1172, %v1460
  %v1462 = vpop.f32.mrb[0].mxu0
  %1463 = vmatprep.mubr.bf16.mxu0 %v649
  %1464 = vmatmul.mubr.bf16.gmra.mrb[0].mxu0 %v648
  %v1465 = vpop.f32.mrb[0].mxu0
  %v1466 = vadd.f32 %v1177, %v1465
  %v1467 = vpop.f32.mrb[0].mxu0
  %v1468 = vpop.f32.mrb[0].mxu0
  %v1469 = vadd.f32 %v1180, %v1468
  %v1470 = vpop.f32.mrb[0].mxu0
  %1471 = vmatprep.mubr.bf16.mxu0 %v653
  %1472 = vmatmul.mubr.bf16.gmra.mrb[0].mxu0 %v652
  %v1473 = vpop.f32.mrb[0].mxu0
  %v1474 = vadd.f32 %v1185, %v1473
  %v1475 = vpop.f32.mrb[0].mxu0
  %v1476 = vpop.f32.mrb[0].mxu0
  %v1477 = vadd.f32 %v1188, %v1476
  %v1478 = vpop.f32.mrb[0].mxu0
  %1479 = vmatprep.mubr.bf16.mxu0 %v657
  %1480 = vmatmul.mubr.bf16.gmra.mrb[0].mxu0 %v656
  %v1481 = vpop.f32.mrb[0].mxu0
  %v1482 = vadd.f32 %v1193, %v1481
  %v1483 = vpop.f32.mrb[0].mxu0
  %v1484 = vpop.f32.mrb[0].mxu0
  %v1485 = vadd.f32 %v1196, %v1484
  %v1486 = vpop.f32.mrb[0].mxu0
  %1487 = vmatprep.mubr.bf16.mxu0 %v661
  %1488 = vmatmul.mubr.bf16.gmra.mrb[0].mxu0 %v660
  %v1489 = vpop.f32.mrb[0].mxu0
  %v1490 = vadd.f32 %v1201, %v1489
  %v1491 = vpop.f32.mrb[0].mxu0
  %v1492 = vpop.f32.mrb[0].mxu0
  %v1493 = vadd.f32 %v1204, %v1492
  %v1494 = vpop.f32.mrb[0].mxu0
  %1495 = vmatprep.mubr.bf16.mxu0 %v665
  %1496 = vmatmul.mubr.bf16.gmra.mrb[0].mxu0 %v664
  %v1497 = vpop.f32.mrb[0].mxu0
  %v1498 = vadd.f32 %v1209, %v1497
  %v1499 = vpop.f32.mrb[0].mxu0
  %v1500 = vpop.f32.mrb[0].mxu0
  %v1501 = vadd.f32 %v1212, %v1500
  %v1502 = vpop.f32.mrb[0].mxu0
  %1503 = vmatprep.mubr.bf16.mxu0 %v669
  %1504 = vmatmul.mubr.bf16.gmra.mrb[0].mxu0 %v668
  %v1505 = vpop.f32.mrb[0].mxu0
  %v1506 = vadd.f32 %v1217, %v1505
  %v1507 = vpop.f32.mrb[0].mxu0
  %v1508 = vpop.f32.mrb[0].mxu0
  %v1509 = vadd.f32 %v1220, %v1508
  %v1510 = vpop.f32.mrb[0].mxu0
  %1511 = vmatprep.mubr.bf16.mxu0 %v673
  %1512 = vmatmul.mubr.bf16.gmra.mrb[0].mxu0 %v672
  %v1513 = vpop.f32.mrb[0].mxu0
  %v1514 = vadd.f32 %v1225, %v1513
  %v1515 = vpop.f32.mrb[0].mxu0
  %v1516 = vpop.f32.mrb[0].mxu0
  %v1517 = vadd.f32 %v1228, %v1516
  %v1518 = vpop.f32.mrb[0].mxu0
  %1519 = vmatprep.mubr.bf16.mxu0 %v677
  %1520 = vmatmul.mubr.bf16.gmra.mrb[0].mxu0 %v676
  %v1521 = vpop.f32.mrb[0].mxu0
  %v1522 = vadd.f32 %v1233, %v1521
  %v1523 = vpop.f32.mrb[0].mxu0
  %v1524 = vpop.f32.mrb[0].mxu0
  %v1525 = vadd.f32 %v1236, %v1524
  %v1526 = vpop.f32.mrb[0].mxu0
  %1527 = vmatprep.mubr.bf16.mxu0 %v681
  %1528 = vmatmul.mubr.bf16.gmra.mrb[0].mxu0 %v680
  %v1529 = vpop.f32.mrb[0].mxu0
  %v1530 = vadd.f32 %v1241, %v1529
  %v1531 = vpop.f32.mrb[0].mxu0
  %v1532 = vpop.f32.mrb[0].mxu0
  %v1533 = vadd.f32 %v1244, %v1532
  %v1534 = vpop.f32.mrb[0].mxu0
  %1535 = vmatprep.mubr.bf16.mxu0 %v685
  %1536 = vmatmul.mubr.bf16.gmra.mrb[0].mxu0 %v684
  %v1537 = vpop.f32.mrb[0].mxu0
  %v1538 = vadd.f32 %v1249, %v1537
  %v1539 = vpop.f32.mrb[0].mxu0
  %v1540 = vpop.f32.mrb[0].mxu0
  %v1541 = vadd.f32 %v1252, %v1540
  %v1542 = vpop.f32.mrb[0].mxu0
  %1543 = vmatprep.mubr.bf16.mxu0 %v689
  %1544 = vmatmul.mubr.bf16.gmra.mrb[0].mxu0 %v688
  %v1545 = vpop.f32.mrb[0].mxu0
  %v1546 = vadd.f32 %v1257, %v1545
  %v1547 = vpop.f32.mrb[0].mxu0
  %v1548 = vpop.f32.mrb[0].mxu0
  %v1549 = vadd.f32 %v1260, %v1548
  %v1550 = vpop.f32.mrb[0].mxu0
  %1551 = vmatprep.mubr.bf16.mxu0 %v693
  %1552 = vmatmul.mubr.bf16.gmra.mrb[0].mxu0 %v692
  %v1553 = vpop.f32.mrb[0].mxu0
  %v1554 = vadd.f32 %v1265, %v1553
  %v1555 = vpop.f32.mrb[0].mxu0
  %v1556 = vpop.f32.mrb[0].mxu0
  %v1557 = vadd.f32 %v1268, %v1556
  %v1558 = vpop.f32.mrb[0].mxu0
  %1559 = vmatprep.mubr.bf16.mxu0 %v697
  %1560 = vmatmul.mubr.bf16.gmra.mrb[0].mxu0 %v696
  %v1561 = vpop.f32.mrb[0].mxu0
  %v1562 = vadd.f32 %v1273, %v1561
  %v1563 = vpop.f32.mrb[0].mxu0
  %v1564 = vpop.f32.mrb[0].mxu0
  %v1565 = vadd.f32 %v1276, %v1564
  %v1566 = vpop.f32.mrb[0].mxu0
  %1567 = vmatprep.mubr.bf16.mxu0 %v701
  %1568 = vmatmul.mubr.bf16.gmra.mrb[0].mxu0 %v700
  %v1569 = vpop.f32.mrb[0].mxu0
  %v1570 = vadd.f32 %v1281, %v1569
  %v1571 = vpop.f32.mrb[0].mxu0
  %v1572 = vpop.f32.mrb[0].mxu0
  %v1573 = vadd.f32 %v1284, %v1572
  %v1574 = vpop.f32.mrb[0].mxu0
  %1575 = vmatprep.mubr.bf16.mxu0 %v705
  %1576 = vmatmul.mubr.bf16.gmra.mrb[0].mxu0 %v704
  %v1577 = vpop.f32.mrb[0].mxu0
  %v1578 = vadd.f32 %v1289, %v1577
  %v1579 = vpop.f32.mrb[0].mxu0
  %v1580 = vpop.f32.mrb[0].mxu0
  %v1581 = vadd.f32 %v1292, %v1580
  %v1582 = vpop.f32.mrb[0].mxu0
  %1583 = vmatprep.mubr.bf16.mxu0 %v709
  %1584 = vmatmul.mubr.bf16.gmra.mrb[0].mxu0 %v708
  %v1585 = vpop.f32.mrb[0].mxu0
  %v1586 = vadd.f32 %v1297, %v1585
  %v1587 = vpop.f32.mrb[0].mxu0
  %v1588 = vpop.f32.mrb[0].mxu0
  %v1589 = vadd.f32 %v1300, %v1588
  %v1590 = vpop.f32.mrb[0].mxu0
  %1591 = vmatprep.mubr.bf16.mxu0 %v713
  %1592 = vmatmul.mubr.bf16.gmra.mrb[0].mxu0 %v712
  %v1593 = vpop.f32.mrb[0].mxu0
  %v1594 = vadd.f32 %v1305, %v1593
  %v1595 = vpop.f32.mrb[0].mxu0
  %v1596 = vpop.f32.mrb[0].mxu0
  %v1597 = vadd.f32 %v1308, %v1596
  %v1598 = vpop.f32.mrb[0].mxu0
  %1599 = vmatprep.mubr.bf16.mxu0 %v717
  %1600 = vmatmul.mubr.bf16.gmra.mrb[0].mxu0 %v716
  %v1601 = vpop.f32.mrb[0].mxu0
  %v1602 = vadd.f32 %v1313, %v1601
  %v1603 = vpop.f32.mrb[0].mxu0
  %v1604 = vpop.f32.mrb[0].mxu0
  %v1605 = vadd.f32 %v1316, %v1604
  %v1606 = vpop.f32.mrb[0].mxu0
  %1607 = vmatprep.mubr.bf16.mxu0 %v721
  %1608 = vmatmul.mubr.bf16.gmra.mrb[0].mxu0 %v720
  %v1609 = vpop.f32.mrb[0].mxu0
  %v1610 = vadd.f32 %v1321, %v1609
  %v1611 = vpop.f32.mrb[0].mxu0
  %v1612 = vpop.f32.mrb[0].mxu0
  %v1613 = vadd.f32 %v1324, %v1612
  %v1614 = vpop.f32.mrb[0].mxu0
  %1615 = vmatprep.mubr.bf16.mxu0 %v725
  %1616 = vmatmul.mubr.bf16.gmra.mrb[0].mxu0 %v724
  %v1617 = vpop.f32.mrb[0].mxu0
  %v1618 = vadd.f32 %v1329, %v1617
  %v1619 = vpop.f32.mrb[0].mxu0
  %v1620 = vpop.f32.mrb[0].mxu0
  %v1621 = vadd.f32 %v1332, %v1620
  %v1622 = vpop.f32.mrb[0].mxu0
  %1623 = vdwg.mxu0
  %v1624 = vmax.f32 %v1370, 0.0
  %v1625 = vmax.f32 %v1373, 0.0
  %v1626 = vmax.f32 %v1378, 0.0
  %v1627 = vmax.f32 %v1381, 0.0
  %v1628 = vmax.f32 %v1386, 0.0
  %v1629 = vmax.f32 %v1389, 0.0
  %v1630 = vmax.f32 %v1394, 0.0
  %v1631 = vmax.f32 %v1397, 0.0
  %v1632 = vmax.f32 %v1402, 0.0
  %v1633 = vmax.f32 %v1405, 0.0
  %v1634 = vmax.f32 %v1410, 0.0
  %v1635 = vmax.f32 %v1413, 0.0
  %v1636 = vmax.f32 %v1418, 0.0
  %v1637 = vmax.f32 %v1421, 0.0
  %v1638 = vmax.f32 %v1426, 0.0
  %v1639 = vmax.f32 %v1429, 0.0
  %v1640 = vmax.f32 %v1434, 0.0
  %v1641 = vmax.f32 %v1437, 0.0
  %v1642 = vmax.f32 %v1442, 0.0
  %v1643 = vmax.f32 %v1445, 0.0
  %v1644 = vmax.f32 %v1450, 0.0
  %v1645 = vmax.f32 %v1453, 0.0
  %v1646 = vmax.f32 %v1458, 0.0
  %v1647 = vmax.f32 %v1461, 0.0
  %v1648 = vmax.f32 %v1466, 0.0
  %v1649 = vmax.f32 %v1469, 0.0
  %v1650 = vmax.f32 %v1474, 0.0
  %v1651 = vmax.f32 %v1477, 0.0
  %v1652 = vmax.f32 %v1482, 0.0
  %v1653 = vmax.f32 %v1485, 0.0
  %v1654 = vmax.f32 %v1490, 0.0
  %v1655 = vmax.f32 %v1493, 0.0
  %v1656 = vmax.f32 %v1498, 0.0
  %v1657 = vmax.f32 %v1501, 0.0
  %v1658 = vmax.f32 %v1506, 0.0
  %v1659 = vmax.f32 %v1509, 0.0
  %v1660 = vmax.f32 %v1514, 0.0
  %v1661 = vmax.f32 %v1517, 0.0
  %v1662 = vmax.f32 %v1522, 0.0
  %v1663 = vmax.f32 %v1525, 0.0
  %v1664 = vmax.f32 %v1530, 0.0
  %v1665 = vmax.f32 %v1533, 0.0
  %v1666 = vmax.f32 %v1538, 0.0
  %v1667 = vmax.f32 %v1541, 0.0
  %v1668 = vmax.f32 %v1546, 0.0
  %v1669 = vmax.f32 %v1549, 0.0
  %v1670 = vmax.f32 %v1554, 0.0
  %v1671 = vmax.f32 %v1557, 0.0
  %v1672 = vmax.f32 %v1562, 0.0
  %v1673 = vmax.f32 %v1565, 0.0
  %v1674 = vmax.f32 %v1570, 0.0
  %v1675 = vmax.f32 %v1573, 0.0
  %v1676 = vmax.f32 %v1578, 0.0
  %v1677 = vmax.f32 %v1581, 0.0
  %v1678 = vmax.f32 %v1586, 0.0
  %v1679 = vmax.f32 %v1589, 0.0
  %v1680 = vmax.f32 %v1594, 0.0
  %v1681 = vmax.f32 %v1597, 0.0
  %v1682 = vmax.f32 %v1602, 0.0
  %v1683 = vmax.f32 %v1605, 0.0
  %v1684 = vmax.f32 %v1610, 0.0
  %v1685 = vmax.f32 %v1613, 0.0
  %v1686 = vmax.f32 %v1618, 0.0
  %v1687 = vmax.f32 %v1621, 0.0
  %1688 = vst [vmem:[%s3] sm:$0xff] %v1624
  %1689 = vst [vmem:[%s3 + $0x8] sm:$0xff] %v1625
  %1690 = vst [vmem:[%s3 + $0x10] sm:$0xff] %v1626
  %1691 = vst [vmem:[%s3 + $0x18] sm:$0xff] %v1627
  %1692 = vst [vmem:[%s3 + $0x20] sm:$0xff] %v1628
  %1693 = vst [vmem:[%s3 + $0x28] sm:$0xff] %v1629
  %1694 = vst [vmem:[%s3 + $0x30] sm:$0xff] %v1630
  %1695 = vst [vmem:[%s3 + $0x38] sm:$0xff] %v1631
  %1696 = vst [vmem:[%s3 + $0x40] sm:$0xff] %v1632
  %1697 = vst [vmem:[%s3 + $0x48] sm:$0xff] %v1633
  %1698 = vst [vmem:[%s3 + $0x50] sm:$0xff] %v1634
  %1699 = vst [vmem:[%s3 + $0x58] sm:$0xff] %v1635
  %1700 = vst [vmem:[%s3 + $0x60] sm:$0xff] %v1636
  %1701 = vst [vmem:[%s3 + $0x68] sm:$0xff] %v1637
  %1702 = vst [vmem:[%s3 + $0x70] sm:$0xff] %v1638
  %1703 = vst [vmem:[%s3 + $0x78] sm:$0xff] %v1639
  %1704 = vst [vmem:[%s3 + $0x80] sm:$0xff] %v1640
  %1705 = vst [vmem:[%s3 + $0x88] sm:$0xff] %v1641
  %1706 = vst [vmem:[%s3 + $0x90] sm:$0xff] %v1642
  %1707 = vst [vmem:[%s3 + $0x98] sm:$0xff] %v1643
  %1708 = vst [vmem:[%s3 + $0xa0] sm:$0xff] %v1644
  %1709 = vst [vmem:[%s3 + $0xa8] sm:$0xff] %v1645
  %1710 = vst [vmem:[%s3 + $0xb0] sm:$0xff] %v1646
  %1711 = vst [vmem:[%s3 + $0xb8] sm:$0xff] %v1647
  %1712 = vst [vmem:[%s3 + $0xc0] sm:$0xff] %v1648
  %1713 = vst [vmem:[%s3 + $0xc8] sm:$0xff] %v1649
  %1714 = vst [vmem:[%s3 + $0xd0] sm:$0xff] %v1650
  %1715 = vst [vmem:[%s3 + $0xd8] sm:$0xff] %v1651
  %1716 = vst [vmem:[%s3 + $0xe0] sm:$0xff] %v1652
  %1717 = vst [vmem:[%s3 + $0xe8] sm:$0xff] %v1653
  %1718 = vst [vmem:[%s3 + $0xf0] sm:$0xff] %v1654
  %1719 = vst [vmem:[%s3 + $0xf8] sm:$0xff] %v1655
  %1720 = vst [vmem:[%s3 + $0x100] sm:$0xff] %v1656
  %1721 = vst [vmem:[%s3 + $0x108] sm:$0xff] %v1657
  %1722 = vst [vmem:[%s3 + $0x110] sm:$0xff] %v1658
  %1723 = vst [vmem:[%s3 + $0x118] sm:$0xff] %v1659
  %1724 = vst [vmem:[%s3 + $0x120] sm:$0xff] %v1660
  %1725 = vst [vmem:[%s3 + $0x128] sm:$0xff] %v1661
  %1726 = vst [vmem:[%s3 + $0x130] sm:$0xff] %v1662
  %1727 = vst [vmem:[%s3 + $0x138] sm:$0xff] %v1663
  %1728 = vst [vmem:[%s3 + $0x140] sm:$0xff] %v1664
  %1729 = vst [vmem:[%s3 + $0x148] sm:$0xff] %v1665
  %1730 = vst [vmem:[%s3 + $0x150] sm:$0xff] %v1666
  %1731 = vst [vmem:[%s3 + $0x158] sm:$0xff] %v1667
  %1732 = vst [vmem:[%s3 + $0x160] sm:$0xff] %v1668
  %1733 = vst [vmem:[%s3 + $0x168] sm:$0xff] %v1669
  %1734 = vst [vmem:[%s3 + $0x170] sm:$0xff] %v1670
  %1735 = vst [vmem:[%s3 + $0x178] sm:$0xff] %v1671
  %1736 = vst [vmem:[%s3 + $0x180] sm:$0xff] %v1672
  %1737 = vst [vmem:[%s3 + $0x188] sm:$0xff] %v1673
  %1738 = vst [vmem:[%s3 + $0x190] sm:$0xff] %v1674
  %1739 = vst [vmem:[%s3 + $0x198] sm:$0xff] %v1675
  %1740 = vst [vmem:[%s3 + $0x1a0] sm:$0xff] %v1676
  %1741 = vst [vmem:[%s3 + $0x1a8] sm:$0xff] %v1677
  %1742 = vst [vmem:[%s3 + $0x1b0] sm:$0xff] %v1678
  %1743 = vst [vmem:[%s3 + $0x1b8] sm:$0xff] %v1679
  %1744 = vst [vmem:[%s3 + $0x1c0] sm:$0xff] %v1680
  %1745 = vst [vmem:[%s3 + $0x1c8] sm:$0xff] %v1681
  %1746 = vst [vmem:[%s3 + $0x1d0] sm:$0xff] %v1682
  %1747 = vst [vmem:[%s3 + $0x1d8] sm:$0xff] %v1683
  %1748 = vst [vmem:[%s3 + $0x1e0] sm:$0xff] %v1684
  %1749 = vst [vmem:[%s3 + $0x1e8] sm:$0xff] %v1685
  %1750 = vst [vmem:[%s3 + $0x1f0] sm:$0xff] %v1686
  %1751 = vst [vmem:[%s3 + $0x1f8] sm:$0xff] %v1687
  // Predicated region
  $region14: #{generator_forward.17} parent=0 // pred_check
    _
  $region15: #{generator_forward.17} parent=0 // pred_check_branch
    %1753 = sbr.rel (0) target = $region17
  $region16: #{generator_forward.17} parent=0 // pred_region
    _
  $region17: #{generator_forward.17} parent=0 // pred_fallthru
    _
  // Predicated region
  $region18: #{generator_forward.17} parent=0 // pred_check
    _
  $region19: #{generator_forward.17} parent=0 // pred_check_branch
    %1755 = sbr.rel (0) target = $region21
  $region20: #{generator_forward.17} parent=0 // pred_region
    _
  $region21: #{generator_forward.17} parent=0 // pred_fallthru
    _

// kernel: generator_forward.18
$region0: #{generator_forward.18}
  #allocation0 [shape = 'u32[]', space=smem, size = 0x4, offset = 0x4, fixed_abs, tag = 'smem constant byte address 0x4 - core index']
  #allocation1 [shape = 'u32[144,128]{1,0:T(1,128)}', space=vmem, size = 0x12000, scoped, tag = 'internal scratch']
  %s0 = inlined_call_operand.vmem [shape: bf16[512,512], index: 0, kind: input, shape index: {}]
  %s1 = inlined_call_operand.vmem [shape: bf16[512,128], index: 1, kind: input, shape index: {}]
  %s2 = inlined_call_operand.vmem [shape: f32[1,128], index: 2, kind: input, shape index: {}]
  %s3 = inlined_call_operand.vmem [shape: bf16[512,128], index: 3, kind: input, shape index: {}]
  %s4 = inlined_call_operand.vmem [shape: f32[512,128], index: 4, kind: output, shape index: {}]
  %s5 = sld [smem:[#allocation0]]
  $region26: #{generator_forward.18} parent=0
    _
  %s7 = ssub.s32 1, %s5
  %s8 = scalar_select 0, %s7, %s5
  // Predicated region
  $region2: #{generator_forward.18} parent=0 // pred_check
    _
  $region3: #{generator_forward.18} parent=0 // pred_check_branch
    %10 = sbr.rel (0) target = $region5
  $region4: #{generator_forward.18} parent=0 // pred_region
    _
  $region5: #{generator_forward.18} parent=0 // pred_fallthru
    _
  // Predicated region
  $region6: #{generator_forward.18} parent=0 // pred_check
    _
  $region7: #{generator_forward.18} parent=0 // pred_check_branch
    %12 = sbr.rel (0) target = $region9
  $region8: #{generator_forward.18} parent=0 // pred_region
    _
  $region9: #{generator_forward.18} parent=0 // pred_fallthru
    _
  // Predicated region
  $region10: #{generator_forward.18} parent=0 // pred_check
    _
  $region11: #{generator_forward.18} parent=0 // pred_check_branch
    %14 = sbr.rel (0) target = $region13
  $region12: #{generator_forward.18} parent=0 // pred_region
    _
  $region13: #{generator_forward.18} parent=0 // pred_fallthru
    _
  // Predicated region
  $region14: #{generator_forward.18} parent=0 // pred_check
    _
  $region15: #{generator_forward.18} parent=0 // pred_check_branch
    %16 = sbr.rel (0) target = $region17
  $region16: #{generator_forward.18} parent=0 // pred_region
    _
  $region17: #{generator_forward.18} parent=0 // pred_fallthru
    _
  %v18 = vld [vmem:[%s0] sm:$0xff]
  %v19 = vld [vmem:[%s0 + $0x8] sm:$0xff]
  %v20 = vld [vmem:[%s0 + $0x10] sm:$0xff]
  %v21 = vld [vmem:[%s0 + $0x18] sm:$0xff]
  %v22 = vld [vmem:[%s0 + $0x20] sm:$0xff]
  %v23 = vld [vmem:[%s0 + $0x28] sm:$0xff]
  %v24 = vld [vmem:[%s0 + $0x30] sm:$0xff]
  %v25 = vld [vmem:[%s0 + $0x38] sm:$0xff]
  %v26 = vld [vmem:[%s0 + $0x40] sm:$0xff]
  %v27 = vld [vmem:[%s0 + $0x48] sm:$0xff]
  %v28 = vld [vmem:[%s0 + $0x50] sm:$0xff]
  %v29 = vld [vmem:[%s0 + $0x58] sm:$0xff]
  %v30 = vld [vmem:[%s0 + $0x60] sm:$0xff]
  %v31 = vld [vmem:[%s0 + $0x68] sm:$0xff]
  %v32 = vld [vmem:[%s0 + $0x70] sm:$0xff]
  %v33 = vld [vmem:[%s0 + $0x78] sm:$0xff]
  %v34 = vld [vmem:[%s0 + $0x80] sm:$0xff]
  %v35 = vld [vmem:[%s0 + $0x88] sm:$0xff]
  %v36 = vld [vmem:[%s0 + $0x90] sm:$0xff]
  %v37 = vld [vmem:[%s0 + $0x98] sm:$0xff]
  %v38 = vld [vmem:[%s0 + $0xa0] sm:$0xff]
  %v39 = vld [vmem:[%s0 + $0xa8] sm:$0xff]
  %v40 = vld [vmem:[%s0 + $0xb0] sm:$0xff]
  %v41 = vld [vmem:[%s0 + $0xb8] sm:$0xff]
  %v42 = vld [vmem:[%s0 + $0xc0] sm:$0xff]
  %v43 = vld [vmem:[%s0 + $0xc8] sm:$0xff]
  %v44 = vld [vmem:[%s0 + $0xd0] sm:$0xff]
  %v45 = vld [vmem:[%s0 + $0xd8] sm:$0xff]
  %v46 = vld [vmem:[%s0 + $0xe0] sm:$0xff]
  %v47 = vld [vmem:[%s0 + $0xe8] sm:$0xff]
  %v48 = vld [vmem:[%s0 + $0xf0] sm:$0xff]
  %v49 = vld [vmem:[%s0 + $0xf8] sm:$0xff]
  %v50 = vld [vmem:[%s0 + $0x100] sm:$0xff]
  %v51 = vld [vmem:[%s0 + $0x108] sm:$0xff]
  %v52 = vld [vmem:[%s0 + $0x110] sm:$0xff]
  %v53 = vld [vmem:[%s0 + $0x118] sm:$0xff]
  %v54 = vld [vmem:[%s0 + $0x120] sm:$0xff]
  %v55 = vld [vmem:[%s0 + $0x128] sm:$0xff]
  %v56 = vld [vmem:[%s0 + $0x130] sm:$0xff]
  %v57 = vld [vmem:[%s0 + $0x138] sm:$0xff]
  %v58 = vld [vmem:[%s0 + $0x140] sm:$0xff]
  %v59 = vld [vmem:[%s0 + $0x148] sm:$0xff]
  %v60 = vld [vmem:[%s0 + $0x150] sm:$0xff]
  %v61 = vld [vmem:[%s0 + $0x158] sm:$0xff]
  %v62 = vld [vmem:[%s0 + $0x160] sm:$0xff]
  %v63 = vld [vmem:[%s0 + $0x168] sm:$0xff]
  %v64 = vld [vmem:[%s0 + $0x170] sm:$0xff]
  %v65 = vld [vmem:[%s0 + $0x178] sm:$0xff]
  %v66 = vld [vmem:[%s0 + $0x180] sm:$0xff]
  %v67 = vld [vmem:[%s0 + $0x188] sm:$0xff]
  %v68 = vld [vmem:[%s0 + $0x190] sm:$0xff]
  %v69 = vld [vmem:[%s0 + $0x198] sm:$0xff]
  %v70 = vld [vmem:[%s0 + $0x1a0] sm:$0xff]
  %v71 = vld [vmem:[%s0 + $0x1a8] sm:$0xff]
  %v72 = vld [vmem:[%s0 + $0x1b0] sm:$0xff]
  %v73 = vld [vmem:[%s0 + $0x1b8] sm:$0xff]
  %v74 = vld [vmem:[%s0 + $0x1c0] sm:$0xff]
  %v75 = vld [vmem:[%s0 + $0x1c8] sm:$0xff]
  %v76 = vld [vmem:[%s0 + $0x1d0] sm:$0xff]
  %v77 = vld [vmem:[%s0 + $0x1d8] sm:$0xff]
  %v78 = vld [vmem:[%s0 + $0x1e0] sm:$0xff]
  %v79 = vld [vmem:[%s0 + $0x1e8] sm:$0xff]
  %v80 = vld [vmem:[%s0 + $0x1f0] sm:$0xff]
  %v81 = vld [vmem:[%s0 + $0x1f8] sm:$0xff]
  %v82 = vld [vmem:[%s0 + $0x200] sm:$0xff]
  %v83 = vld [vmem:[%s0 + $0x208] sm:$0xff]
  %v84 = vld [vmem:[%s0 + $0x210] sm:$0xff]
  %v85 = vld [vmem:[%s0 + $0x218] sm:$0xff]
  %v86 = vld [vmem:[%s0 + $0x220] sm:$0xff]
  %v87 = vld [vmem:[%s0 + $0x228] sm:$0xff]
  %v88 = vld [vmem:[%s0 + $0x230] sm:$0xff]
  %v89 = vld [vmem:[%s0 + $0x238] sm:$0xff]
  %v90 = vld [vmem:[%s0 + $0x240] sm:$0xff]
  %v91 = vld [vmem:[%s0 + $0x248] sm:$0xff]
  %v92 = vld [vmem:[%s0 + $0x250] sm:$0xff]
  %v93 = vld [vmem:[%s0 + $0x258] sm:$0xff]
  %v94 = vld [vmem:[%s0 + $0x260] sm:$0xff]
  %v95 = vld [vmem:[%s0 + $0x268] sm:$0xff]
  %v96 = vld [vmem:[%s0 + $0x270] sm:$0xff]
  %v97 = vld [vmem:[%s0 + $0x278] sm:$0xff]
  %v98 = vld [vmem:[%s0 + $0x280] sm:$0xff]
  %v99 = vld [vmem:[%s0 + $0x288] sm:$0xff]
  %v100 = vld [vmem:[%s0 + $0x290] sm:$0xff]
  %v101 = vld [vmem:[%s0 + $0x298] sm:$0xff]
  %v102 = vld [vmem:[%s0 + $0x2a0] sm:$0xff]
  %v103 = vld [vmem:[%s0 + $0x2a8] sm:$0xff]
  %v104 = vld [vmem:[%s0 + $0x2b0] sm:$0xff]
  %v105 = vld [vmem:[%s0 + $0x2b8] sm:$0xff]
  %v106 = vld [vmem:[%s0 + $0x2c0] sm:$0xff]
  %v107 = vld [vmem:[%s0 + $0x2c8] sm:$0xff]
  %v108 = vld [vmem:[%s0 + $0x2d0] sm:$0xff]
  %v109 = vld [vmem:[%s0 + $0x2d8] sm:$0xff]
  %v110 = vld [vmem:[%s0 + $0x2e0] sm:$0xff]
  %v111 = vld [vmem:[%s0 + $0x2e8] sm:$0xff]
  %v112 = vld [vmem:[%s0 + $0x2f0] sm:$0xff]
  %v113 = vld [vmem:[%s0 + $0x2f8] sm:$0xff]
  %v114 = vld [vmem:[%s0 + $0x300] sm:$0xff]
  %v115 = vld [vmem:[%s0 + $0x308] sm:$0xff]
  %v116 = vld [vmem:[%s0 + $0x310] sm:$0xff]
  %v117 = vld [vmem:[%s0 + $0x318] sm:$0xff]
  %v118 = vld [vmem:[%s0 + $0x320] sm:$0xff]
  %v119 = vld [vmem:[%s0 + $0x328] sm:$0xff]
  %v120 = vld [vmem:[%s0 + $0x330] sm:$0xff]
  %v121 = vld [vmem:[%s0 + $0x338] sm:$0xff]
  %v122 = vld [vmem:[%s0 + $0x340] sm:$0xff]
  %v123 = vld [vmem:[%s0 + $0x348] sm:$0xff]
  %v124 = vld [vmem:[%s0 + $0x350] sm:$0xff]
  %v125 = vld [vmem:[%s0 + $0x358] sm:$0xff]
  %v126 = vld [vmem:[%s0 + $0x360] sm:$0xff]
  %v127 = vld [vmem:[%s0 + $0x368] sm:$0xff]
  %v128 = vld [vmem:[%s0 + $0x370] sm:$0xff]
  %v129 = vld [vmem:[%s0 + $0x378] sm:$0xff]
  %v130 = vld [vmem:[%s0 + $0x380] sm:$0xff]
  %v131 = vld [vmem:[%s0 + $0x388] sm:$0xff]
  %v132 = vld [vmem:[%s0 + $0x390] sm:$0xff]
  %v133 = vld [vmem:[%s0 + $0x398] sm:$0xff]
  %v134 = vld [vmem:[%s0 + $0x3a0] sm:$0xff]
  %v135 = vld [vmem:[%s0 + $0x3a8] sm:$0xff]
  %v136 = vld [vmem:[%s0 + $0x3b0] sm:$0xff]
  %v137 = vld [vmem:[%s0 + $0x3b8] sm:$0xff]
  %v138 = vld [vmem:[%s0 + $0x3c0] sm:$0xff]
  %v139 = vld [vmem:[%s0 + $0x3c8] sm:$0xff]
  %v140 = vld [vmem:[%s0 + $0x3d0] sm:$0xff]
  %v141 = vld [vmem:[%s0 + $0x3d8] sm:$0xff]
  %v142 = vld [vmem:[%s0 + $0x3e0] sm:$0xff]
  %v143 = vld [vmem:[%s0 + $0x3e8] sm:$0xff]
  %v144 = vld [vmem:[%s0 + $0x3f0] sm:$0xff]
  %v145 = vld [vmem:[%s0 + $0x3f8] sm:$0xff]
  %v146 = vld [vmem:[%s1] sm:$0xf]
  %v147 = vld [vmem:[%s1 + $0x4] sm:$0xf]
  %v148 = vld [vmem:[%s1 + $0x8] sm:$0xf]
  %v149 = vld [vmem:[%s1 + $0xc] sm:$0xf]
  %v150 = vld [vmem:[%s1 + $0x10] sm:$0xf]
  %v151 = vld [vmem:[%s1 + $0x14] sm:$0xf]
  %v152 = vld [vmem:[%s1 + $0x18] sm:$0xf]
  %v153 = vld [vmem:[%s1 + $0x1c] sm:$0xf]
  %v154 = vld [vmem:[%s1 + $0x20] sm:$0xf]
  %v155 = vld [vmem:[%s1 + $0x24] sm:$0xf]
  %v156 = vld [vmem:[%s1 + $0x28] sm:$0xf]
  %v157 = vld [vmem:[%s1 + $0x2c] sm:$0xf]
  %v158 = vld [vmem:[%s1 + $0x30] sm:$0xf]
  %v159 = vld [vmem:[%s1 + $0x34] sm:$0xf]
  %v160 = vld [vmem:[%s1 + $0x38] sm:$0xf]
  %v161 = vld [vmem:[%s1 + $0x3c] sm:$0xf]
  %v162 = vld [vmem:[%s1 + $0x40] sm:$0xf]
  %v163 = vld [vmem:[%s1 + $0x44] sm:$0xf]
  %v164 = vld [vmem:[%s1 + $0x48] sm:$0xf]
  %v165 = vld [vmem:[%s1 + $0x4c] sm:$0xf]
  %v166 = vld [vmem:[%s1 + $0x50] sm:$0xf]
  %v167 = vld [vmem:[%s1 + $0x54] sm:$0xf]
  %v168 = vld [vmem:[%s1 + $0x58] sm:$0xf]
  %v169 = vld [vmem:[%s1 + $0x5c] sm:$0xf]
  %v170 = vld [vmem:[%s1 + $0x60] sm:$0xf]
  %v171 = vld [vmem:[%s1 + $0x64] sm:$0xf]
  %v172 = vld [vmem:[%s1 + $0x68] sm:$0xf]
  %v173 = vld [vmem:[%s1 + $0x6c] sm:$0xf]
  %v174 = vld [vmem:[%s1 + $0x70] sm:$0xf]
  %v175 = vld [vmem:[%s1 + $0x74] sm:$0xf]
  %v176 = vld [vmem:[%s1 + $0x78] sm:$0xf]
  %v177 = vld [vmem:[%s1 + $0x7c] sm:$0xf]
  %v178 = vld [vmem:[%s1 + $0x80] sm:$0xf]
  %v179 = vld [vmem:[%s1 + $0x84] sm:$0xf]
  %v180 = vld [vmem:[%s1 + $0x88] sm:$0xf]
  %v181 = vld [vmem:[%s1 + $0x8c] sm:$0xf]
  %v182 = vld [vmem:[%s1 + $0x90] sm:$0xf]
  %v183 = vld [vmem:[%s1 + $0x94] sm:$0xf]
  %v184 = vld [vmem:[%s1 + $0x98] sm:$0xf]
  %v185 = vld [vmem:[%s1 + $0x9c] sm:$0xf]
  %v186 = vld [vmem:[%s1 + $0xa0] sm:$0xf]
  %v187 = vld [vmem:[%s1 + $0xa4] sm:$0xf]
  %v188 = vld [vmem:[%s1 + $0xa8] sm:$0xf]
  %v189 = vld [vmem:[%s1 + $0xac] sm:$0xf]
  %v190 = vld [vmem:[%s1 + $0xb0] sm:$0xf]
  %v191 = vld [vmem:[%s1 + $0xb4] sm:$0xf]
  %v192 = vld [vmem:[%s1 + $0xb8] sm:$0xf]
  %v193 = vld [vmem:[%s1 + $0xbc] sm:$0xf]
  %v194 = vld [vmem:[%s1 + $0xc0] sm:$0xf]
  %v195 = vld [vmem:[%s1 + $0xc4] sm:$0xf]
  %v196 = vld [vmem:[%s1 + $0xc8] sm:$0xf]
  %v197 = vld [vmem:[%s1 + $0xcc] sm:$0xf]
  %v198 = vld [vmem:[%s1 + $0xd0] sm:$0xf]
  %v199 = vld [vmem:[%s1 + $0xd4] sm:$0xf]
  %v200 = vld [vmem:[%s1 + $0xd8] sm:$0xf]
  %v201 = vld [vmem:[%s1 + $0xdc] sm:$0xf]
  %v202 = vld [vmem:[%s1 + $0xe0] sm:$0xf]
  %v203 = vld [vmem:[%s1 + $0xe4] sm:$0xf]
  %v204 = vld [vmem:[%s1 + $0xe8] sm:$0xf]
  %v205 = vld [vmem:[%s1 + $0xec] sm:$0xf]
  %v206 = vld [vmem:[%s1 + $0xf0] sm:$0xf]
  %v207 = vld [vmem:[%s1 + $0xf4] sm:$0xf]
  %v208 = vld [vmem:[%s1 + $0xf8] sm:$0xf]
  %v209 = vld [vmem:[%s1 + $0xfc] sm:$0xf]
  %v210 = vld [vmem:[%s2] sm:$0x1]
  %v212 = vlaneseq
  %v213 = vshrl.u32 %v212, 7
  %v214 = vsub.s32 0, %v213
  %v215 = vrot.slane %v210, %v214
  %v345 = vunpack.c.l.b16 %v18
  %v346 = vunpack.c.h.b16 %v18
  %v347 = vunpack.c.l.b16 %v19
  %v348 = vunpack.c.h.b16 %v19
  %v349 = vunpack.c.l.b16 %v20
  %v350 = vunpack.c.h.b16 %v20
  %v351 = vunpack.c.l.b16 %v21
  %v352 = vunpack.c.h.b16 %v21
  %v353 = vunpack.c.l.b16 %v22
  %v354 = vunpack.c.h.b16 %v22
  %v355 = vunpack.c.l.b16 %v23
  %v356 = vunpack.c.h.b16 %v23
  %v357 = vunpack.c.l.b16 %v24
  %v358 = vunpack.c.h.b16 %v24
  %v359 = vunpack.c.l.b16 %v25
  %v360 = vunpack.c.h.b16 %v25
  %v361 = vunpack.c.l.b16 %v26
  %v362 = vunpack.c.h.b16 %v26
  %v363 = vunpack.c.l.b16 %v27
  %v364 = vunpack.c.h.b16 %v27
  %v365 = vunpack.c.l.b16 %v28
  %v366 = vunpack.c.h.b16 %v28
  %v367 = vunpack.c.l.b16 %v29
  %v368 = vunpack.c.h.b16 %v29
  %v369 = vunpack.c.l.b16 %v30
  %v370 = vunpack.c.h.b16 %v30
  %v371 = vunpack.c.l.b16 %v31
  %v372 = vunpack.c.h.b16 %v31
  %v373 = vunpack.c.l.b16 %v32
  %v374 = vunpack.c.h.b16 %v32
  %v375 = vunpack.c.l.b16 %v33
  %v376 = vunpack.c.h.b16 %v33
  %v377 = vunpack.c.l.b16 %v34
  %v378 = vunpack.c.h.b16 %v34
  %v379 = vunpack.c.l.b16 %v35
  %v380 = vunpack.c.h.b16 %v35
  %v381 = vunpack.c.l.b16 %v36
  %v382 = vunpack.c.h.b16 %v36
  %v383 = vunpack.c.l.b16 %v37
  %v384 = vunpack.c.h.b16 %v37
  %v385 = vunpack.c.l.b16 %v38
  %v386 = vunpack.c.h.b16 %v38
  %v387 = vunpack.c.l.b16 %v39
  %v388 = vunpack.c.h.b16 %v39
  %v389 = vunpack.c.l.b16 %v40
  %v390 = vunpack.c.h.b16 %v40
  %v391 = vunpack.c.l.b16 %v41
  %v392 = vunpack.c.h.b16 %v41
  %v393 = vunpack.c.l.b16 %v42
  %v394 = vunpack.c.h.b16 %v42
  %v395 = vunpack.c.l.b16 %v43
  %v396 = vunpack.c.h.b16 %v43
  %v397 = vunpack.c.l.b16 %v44
  %v398 = vunpack.c.h.b16 %v44
  %v399 = vunpack.c.l.b16 %v45
  %v400 = vunpack.c.h.b16 %v45
  %v401 = vunpack.c.l.b16 %v46
  %v402 = vunpack.c.h.b16 %v46
  %v403 = vunpack.c.l.b16 %v47
  %v404 = vunpack.c.h.b16 %v47
  %v405 = vunpack.c.l.b16 %v48
  %v406 = vunpack.c.h.b16 %v48
  %v407 = vunpack.c.l.b16 %v49
  %v408 = vunpack.c.h.b16 %v49
  %v409 = vunpack.c.l.b16 %v50
  %v410 = vunpack.c.h.b16 %v50
  %v411 = vunpack.c.l.b16 %v51
  %v412 = vunpack.c.h.b16 %v51
  %v413 = vunpack.c.l.b16 %v52
  %v414 = vunpack.c.h.b16 %v52
  %v415 = vunpack.c.l.b16 %v53
  %v416 = vunpack.c.h.b16 %v53
  %v417 = vunpack.c.l.b16 %v54
  %v418 = vunpack.c.h.b16 %v54
  %v419 = vunpack.c.l.b16 %v55
  %v420 = vunpack.c.h.b16 %v55
  %v421 = vunpack.c.l.b16 %v56
  %v422 = vunpack.c.h.b16 %v56
  %v423 = vunpack.c.l.b16 %v57
  %v424 = vunpack.c.h.b16 %v57
  %v425 = vunpack.c.l.b16 %v58
  %v426 = vunpack.c.h.b16 %v58
  %v427 = vunpack.c.l.b16 %v59
  %v428 = vunpack.c.h.b16 %v59
  %v429 = vunpack.c.l.b16 %v60
  %v430 = vunpack.c.h.b16 %v60
  %v431 = vunpack.c.l.b16 %v61
  %v432 = vunpack.c.h.b16 %v61
  %v433 = vunpack.c.l.b16 %v62
  %v434 = vunpack.c.h.b16 %v62
  %v435 = vunpack.c.l.b16 %v63
  %v436 = vunpack.c.h.b16 %v63
  %v437 = vunpack.c.l.b16 %v64
  %v438 = vunpack.c.h.b16 %v64
  %v439 = vunpack.c.l.b16 %v65
  %v440 = vunpack.c.h.b16 %v65
  %v441 = vunpack.c.l.b16 %v66
  %v442 = vunpack.c.h.b16 %v66
  %v443 = vunpack.c.l.b16 %v67
  %v444 = vunpack.c.h.b16 %v67
  %v445 = vunpack.c.l.b16 %v68
  %v446 = vunpack.c.h.b16 %v68
  %v447 = vunpack.c.l.b16 %v69
  %v448 = vunpack.c.h.b16 %v69
  %v449 = vunpack.c.l.b16 %v70
  %v450 = vunpack.c.h.b16 %v70
  %v451 = vunpack.c.l.b16 %v71
  %v452 = vunpack.c.h.b16 %v71
  %v453 = vunpack.c.l.b16 %v72
  %v454 = vunpack.c.h.b16 %v72
  %v455 = vunpack.c.l.b16 %v73
  %v456 = vunpack.c.h.b16 %v73
  %v457 = vunpack.c.l.b16 %v74
  %v458 = vunpack.c.h.b16 %v74
  %v459 = vunpack.c.l.b16 %v75
  %v460 = vunpack.c.h.b16 %v75
  %v461 = vunpack.c.l.b16 %v76
  %v462 = vunpack.c.h.b16 %v76
  %v463 = vunpack.c.l.b16 %v77
  %v464 = vunpack.c.h.b16 %v77
  %v465 = vunpack.c.l.b16 %v78
  %v466 = vunpack.c.h.b16 %v78
  %v467 = vunpack.c.l.b16 %v79
  %v468 = vunpack.c.h.b16 %v79
  %v469 = vunpack.c.l.b16 %v80
  %v470 = vunpack.c.h.b16 %v80
  %v471 = vunpack.c.l.b16 %v81
  %v472 = vunpack.c.h.b16 %v81
  %v473 = vunpack.c.l.b16 %v82
  %v474 = vunpack.c.h.b16 %v82
  %v475 = vunpack.c.l.b16 %v83
  %v476 = vunpack.c.h.b16 %v83
  %v477 = vunpack.c.l.b16 %v84
  %v478 = vunpack.c.h.b16 %v84
  %v479 = vunpack.c.l.b16 %v85
  %v480 = vunpack.c.h.b16 %v85
  %v481 = vunpack.c.l.b16 %v86
  %v482 = vunpack.c.h.b16 %v86
  %v483 = vunpack.c.l.b16 %v87
  %v484 = vunpack.c.h.b16 %v87
  %v485 = vunpack.c.l.b16 %v88
  %v486 = vunpack.c.h.b16 %v88
  %v487 = vunpack.c.l.b16 %v89
  %v488 = vunpack.c.h.b16 %v89
  %v489 = vunpack.c.l.b16 %v90
  %v490 = vunpack.c.h.b16 %v90
  %v491 = vunpack.c.l.b16 %v91
  %v492 = vunpack.c.h.b16 %v91
  %v493 = vunpack.c.l.b16 %v92
  %v494 = vunpack.c.h.b16 %v92
  %v495 = vunpack.c.l.b16 %v93
  %v496 = vunpack.c.h.b16 %v93
  %v497 = vunpack.c.l.b16 %v94
  %v498 = vunpack.c.h.b16 %v94
  %v499 = vunpack.c.l.b16 %v95
  %v500 = vunpack.c.h.b16 %v95
  %v501 = vunpack.c.l.b16 %v96
  %v502 = vunpack.c.h.b16 %v96
  %v503 = vunpack.c.l.b16 %v97
  %v504 = vunpack.c.h.b16 %v97
  %v505 = vunpack.c.l.b16 %v98
  %v506 = vunpack.c.h.b16 %v98
  %v507 = vunpack.c.l.b16 %v99
  %v508 = vunpack.c.h.b16 %v99
  %v509 = vunpack.c.l.b16 %v100
  %v510 = vunpack.c.h.b16 %v100
  %v511 = vunpack.c.l.b16 %v101
  %v512 = vunpack.c.h.b16 %v101
  %v513 = vunpack.c.l.b16 %v102
  %v514 = vunpack.c.h.b16 %v102
  %v515 = vunpack.c.l.b16 %v103
  %v516 = vunpack.c.h.b16 %v103
  %v517 = vunpack.c.l.b16 %v104
  %v518 = vunpack.c.h.b16 %v104
  %v519 = vunpack.c.l.b16 %v105
  %v520 = vunpack.c.h.b16 %v105
  %v521 = vunpack.c.l.b16 %v106
  %v522 = vunpack.c.h.b16 %v106
  %v523 = vunpack.c.l.b16 %v107
  %v524 = vunpack.c.h.b16 %v107
  %v525 = vunpack.c.l.b16 %v108
  %v526 = vunpack.c.h.b16 %v108
  %v527 = vunpack.c.l.b16 %v109
  %v528 = vunpack.c.h.b16 %v109
  %v529 = vunpack.c.l.b16 %v110
  %v530 = vunpack.c.h.b16 %v110
  %v531 = vunpack.c.l.b16 %v111
  %v532 = vunpack.c.h.b16 %v111
  %v533 = vunpack.c.l.b16 %v112
  %v534 = vunpack.c.h.b16 %v112
  %v535 = vunpack.c.l.b16 %v113
  %v536 = vunpack.c.h.b16 %v113
  %v537 = vunpack.c.l.b16 %v114
  %v538 = vunpack.c.h.b16 %v114
  %v539 = vunpack.c.l.b16 %v115
  %v540 = vunpack.c.h.b16 %v115
  %v541 = vunpack.c.l.b16 %v116
  %v542 = vunpack.c.h.b16 %v116
  %v543 = vunpack.c.l.b16 %v117
  %v544 = vunpack.c.h.b16 %v117
  %v545 = vunpack.c.l.b16 %v118
  %v546 = vunpack.c.h.b16 %v118
  %v547 = vunpack.c.l.b16 %v119
  %v548 = vunpack.c.h.b16 %v119
  %v549 = vunpack.c.l.b16 %v120
  %v550 = vunpack.c.h.b16 %v120
  %v551 = vunpack.c.l.b16 %v121
  %v552 = vunpack.c.h.b16 %v121
  %v553 = vunpack.c.l.b16 %v122
  %v554 = vunpack.c.h.b16 %v122
  %v555 = vunpack.c.l.b16 %v123
  %v556 = vunpack.c.h.b16 %v123
  %v557 = vunpack.c.l.b16 %v124
  %v558 = vunpack.c.h.b16 %v124
  %v559 = vunpack.c.l.b16 %v125
  %v560 = vunpack.c.h.b16 %v125
  %v561 = vunpack.c.l.b16 %v126
  %v562 = vunpack.c.h.b16 %v126
  %v563 = vunpack.c.l.b16 %v127
  %v564 = vunpack.c.h.b16 %v127
  %v565 = vunpack.c.l.b16 %v128
  %v566 = vunpack.c.h.b16 %v128
  %v567 = vunpack.c.l.b16 %v129
  %v568 = vunpack.c.h.b16 %v129
  %v569 = vunpack.c.l.b16 %v130
  %v570 = vunpack.c.h.b16 %v130
  %v571 = vunpack.c.l.b16 %v131
  %v572 = vunpack.c.h.b16 %v131
  %v573 = vunpack.c.l.b16 %v132
  %v574 = vunpack.c.h.b16 %v132
  %v575 = vunpack.c.l.b16 %v133
  %v576 = vunpack.c.h.b16 %v133
  %v577 = vunpack.c.l.b16 %v134
  %v578 = vunpack.c.h.b16 %v134
  %v579 = vunpack.c.l.b16 %v135
  %v580 = vunpack.c.h.b16 %v135
  %v581 = vunpack.c.l.b16 %v136
  %v582 = vunpack.c.h.b16 %v136
  %v583 = vunpack.c.l.b16 %v137
  %v584 = vunpack.c.h.b16 %v137
  %v585 = vunpack.c.l.b16 %v138
  %v586 = vunpack.c.h.b16 %v138
  %v587 = vunpack.c.l.b16 %v139
  %v588 = vunpack.c.h.b16 %v139
  %v589 = vunpack.c.l.b16 %v140
  %v590 = vunpack.c.h.b16 %v140
  %v591 = vunpack.c.l.b16 %v141
  %v592 = vunpack.c.h.b16 %v141
  %v593 = vunpack.c.l.b16 %v142
  %v594 = vunpack.c.h.b16 %v142
  %v595 = vunpack.c.l.b16 %v143
  %v596 = vunpack.c.h.b16 %v143
  %v597 = vunpack.c.l.b16 %v144
  %v598 = vunpack.c.h.b16 %v144
  %v599 = vunpack.c.l.b16 %v145
  %v600 = vunpack.c.h.b16 %v145
  %v601 = vpack.c.b16 %v349, %v345
  %v602 = vpack.c.b16 %v350, %v346
  %v603 = vpack.c.b16 %v351, %v347
  %v604 = vpack.c.b16 %v352, %v348
  %v605 = vpack.c.b16 %v357, %v353
  %v606 = vpack.c.b16 %v358, %v354
  %v607 = vpack.c.b16 %v359, %v355
  %v608 = vpack.c.b16 %v360, %v356
  %v609 = vpack.c.b16 %v365, %v361
  %v610 = vpack.c.b16 %v366, %v362
  %v611 = vpack.c.b16 %v367, %v363
  %v612 = vpack.c.b16 %v368, %v364
  %v613 = vpack.c.b16 %v373, %v369
  %v614 = vpack.c.b16 %v374, %v370
  %v615 = vpack.c.b16 %v375, %v371
  %v616 = vpack.c.b16 %v376, %v372
  %v617 = vpack.c.b16 %v381, %v377
  %v618 = vpack.c.b16 %v382, %v378
  %v619 = vpack.c.b16 %v383, %v379
  %v620 = vpack.c.b16 %v384, %v380
  %v621 = vpack.c.b16 %v389, %v385
  %v622 = vpack.c.b16 %v390, %v386
  %v623 = vpack.c.b16 %v391, %v387
  %v624 = vpack.c.b16 %v392, %v388
  %v625 = vpack.c.b16 %v397, %v393
  %v626 = vpack.c.b16 %v398, %v394
  %v627 = vpack.c.b16 %v399, %v395
  %v628 = vpack.c.b16 %v400, %v396
  %v629 = vpack.c.b16 %v405, %v401
  %v630 = vpack.c.b16 %v406, %v402
  %v631 = vpack.c.b16 %v407, %v403
  %v632 = vpack.c.b16 %v408, %v404
  %v633 = vpack.c.b16 %v413, %v409
  %v634 = vpack.c.b16 %v414, %v410
  %v635 = vpack.c.b16 %v415, %v411
  %v636 = vpack.c.b16 %v416, %v412
  %v637 = vpack.c.b16 %v421, %v417
  %v638 = vpack.c.b16 %v422, %v418
  %v639 = vpack.c.b16 %v423, %v419
  %v640 = vpack.c.b16 %v424, %v420
  %v641 = vpack.c.b16 %v429, %v425
  %v642 = vpack.c.b16 %v430, %v426
  %v643 = vpack.c.b16 %v431, %v427
  %v644 = vpack.c.b16 %v432, %v428
  %v645 = vpack.c.b16 %v437, %v433
  %v646 = vpack.c.b16 %v438, %v434
  %v647 = vpack.c.b16 %v439, %v435
  %v648 = vpack.c.b16 %v440, %v436
  %v649 = vpack.c.b16 %v445, %v441
  %v650 = vpack.c.b16 %v446, %v442
  %v651 = vpack.c.b16 %v447, %v443
  %v652 = vpack.c.b16 %v448, %v444
  %v653 = vpack.c.b16 %v453, %v449
  %v654 = vpack.c.b16 %v454, %v450
  %v655 = vpack.c.b16 %v455, %v451
  %v656 = vpack.c.b16 %v456, %v452
  %v657 = vpack.c.b16 %v461, %v457
  %v658 = vpack.c.b16 %v462, %v458
  %v659 = vpack.c.b16 %v463, %v459
  %v660 = vpack.c.b16 %v464, %v460
  %v661 = vpack.c.b16 %v469, %v465
  %v662 = vpack.c.b16 %v470, %v466
  %v663 = vpack.c.b16 %v471, %v467
  %v664 = vpack.c.b16 %v472, %v468
  %v665 = vpack.c.b16 %v477, %v473
  %v666 = vpack.c.b16 %v478, %v474
  %v667 = vpack.c.b16 %v479, %v475
  %v668 = vpack.c.b16 %v480, %v476
  %v669 = vpack.c.b16 %v485, %v481
  %v670 = vpack.c.b16 %v486, %v482
  %v671 = vpack.c.b16 %v487, %v483
  %v672 = vpack.c.b16 %v488, %v484
  %v673 = vpack.c.b16 %v493, %v489
  %v674 = vpack.c.b16 %v494, %v490
  %v675 = vpack.c.b16 %v495, %v491
  %v676 = vpack.c.b16 %v496, %v492
  %v677 = vpack.c.b16 %v501, %v497
  %v678 = vpack.c.b16 %v502, %v498
  %v679 = vpack.c.b16 %v503, %v499
  %v680 = vpack.c.b16 %v504, %v500
  %v681 = vpack.c.b16 %v509, %v505
  %v682 = vpack.c.b16 %v510, %v506
  %v683 = vpack.c.b16 %v511, %v507
  %v684 = vpack.c.b16 %v512, %v508
  %v685 = vpack.c.b16 %v517, %v513
  %v686 = vpack.c.b16 %v518, %v514
  %v687 = vpack.c.b16 %v519, %v515
  %v688 = vpack.c.b16 %v520, %v516
  %v689 = vpack.c.b16 %v525, %v521
  %v690 = vpack.c.b16 %v526, %v522
  %v691 = vpack.c.b16 %v527, %v523
  %v692 = vpack.c.b16 %v528, %v524
  %v693 = vpack.c.b16 %v533, %v529
  %v694 = vpack.c.b16 %v534, %v530
  %v695 = vpack.c.b16 %v535, %v531
  %v696 = vpack.c.b16 %v536, %v532
  %v697 = vpack.c.b16 %v541, %v537
  %v698 = vpack.c.b16 %v542, %v538
  %v699 = vpack.c.b16 %v543, %v539
  %v700 = vpack.c.b16 %v544, %v540
  %v701 = vpack.c.b16 %v549, %v545
  %v702 = vpack.c.b16 %v550, %v546
  %v703 = vpack.c.b16 %v551, %v547
  %v704 = vpack.c.b16 %v552, %v548
  %v705 = vpack.c.b16 %v557, %v553
  %v706 = vpack.c.b16 %v558, %v554
  %v707 = vpack.c.b16 %v559, %v555
  %v708 = vpack.c.b16 %v560, %v556
  %v709 = vpack.c.b16 %v565, %v561
  %v710 = vpack.c.b16 %v566, %v562
  %v711 = vpack.c.b16 %v567, %v563
  %v712 = vpack.c.b16 %v568, %v564
  %v713 = vpack.c.b16 %v573, %v569
  %v714 = vpack.c.b16 %v574, %v570
  %v715 = vpack.c.b16 %v575, %v571
  %v716 = vpack.c.b16 %v576, %v572
  %v717 = vpack.c.b16 %v581, %v577
  %v718 = vpack.c.b16 %v582, %v578
  %v719 = vpack.c.b16 %v583, %v579
  %v720 = vpack.c.b16 %v584, %v580
  %v721 = vpack.c.b16 %v589, %v585
  %v722 = vpack.c.b16 %v590, %v586
  %v723 = vpack.c.b16 %v591, %v587
  %v724 = vpack.c.b16 %v592, %v588
  %v725 = vpack.c.b16 %v597, %v593
  %v726 = vpack.c.b16 %v598, %v594
  %v727 = vpack.c.b16 %v599, %v595
  %v728 = vpack.c.b16 %v600, %v596
  %v921 = vunpack.c.l.b16 %v146
  %v922 = vunpack.c.l.b16 %v147
  %v923 = vunpack.c.l.b16 %v148
  %v924 = vunpack.c.l.b16 %v149
  %v925 = vunpack.c.l.b16 %v150
  %v926 = vunpack.c.l.b16 %v151
  %v927 = vunpack.c.l.b16 %v152
  %v928 = vunpack.c.l.b16 %v153
  %v929 = vunpack.c.l.b16 %v154
  %v930 = vunpack.c.l.b16 %v155
  %v931 = vunpack.c.l.b16 %v156
  %v932 = vunpack.c.l.b16 %v157
  %v933 = vunpack.c.l.b16 %v158
  %v934 = vunpack.c.l.b16 %v159
  %v935 = vunpack.c.l.b16 %v160
  %v936 = vunpack.c.l.b16 %v161
  %v937 = vunpack.c.l.b16 %v162
  %v938 = vunpack.c.l.b16 %v163
  %v939 = vunpack.c.l.b16 %v164
  %v940 = vunpack.c.l.b16 %v165
  %v941 = vunpack.c.l.b16 %v166
  %v942 = vunpack.c.l.b16 %v167
  %v943 = vunpack.c.l.b16 %v168
  %v944 = vunpack.c.l.b16 %v169
  %v945 = vunpack.c.l.b16 %v170
  %v946 = vunpack.c.l.b16 %v171
  %v947 = vunpack.c.l.b16 %v172
  %v948 = vunpack.c.l.b16 %v173
  %v949 = vunpack.c.l.b16 %v174
  %v950 = vunpack.c.l.b16 %v175
  %v951 = vunpack.c.l.b16 %v176
  %v952 = vunpack.c.l.b16 %v177
  %v953 = vunpack.c.l.b16 %v178
  %v954 = vunpack.c.l.b16 %v179
  %v955 = vunpack.c.l.b16 %v180
  %v956 = vunpack.c.l.b16 %v181
  %v957 = vunpack.c.l.b16 %v182
  %v958 = vunpack.c.l.b16 %v183
  %v959 = vunpack.c.l.b16 %v184
  %v960 = vunpack.c.l.b16 %v185
  %v961 = vunpack.c.l.b16 %v186
  %v962 = vunpack.c.l.b16 %v187
  %v963 = vunpack.c.l.b16 %v188
  %v964 = vunpack.c.l.b16 %v189
  %v965 = vunpack.c.l.b16 %v190
  %v966 = vunpack.c.l.b16 %v191
  %v967 = vunpack.c.l.b16 %v192
  %v968 = vunpack.c.l.b16 %v193
  %v969 = vunpack.c.l.b16 %v194
  %v970 = vunpack.c.l.b16 %v195
  %v971 = vunpack.c.l.b16 %v196
  %v972 = vunpack.c.l.b16 %v197
  %v973 = vunpack.c.l.b16 %v198
  %v974 = vunpack.c.l.b16 %v199
  %v975 = vunpack.c.l.b16 %v200
  %v976 = vunpack.c.l.b16 %v201
  %v977 = vunpack.c.l.b16 %v202
  %v978 = vunpack.c.l.b16 %v203
  %v979 = vunpack.c.l.b16 %v204
  %v980 = vunpack.c.l.b16 %v205
  %v981 = vunpack.c.l.b16 %v206
  %v982 = vunpack.c.l.b16 %v207
  %v983 = vunpack.c.l.b16 %v208
  %v984 = vunpack.c.l.b16 %v209
  %v985 = vpack.c.b16 %v922, %v921
  %v986 = vpack.c.b16 %v924, %v923
  %v987 = vpack.c.b16 %v926, %v925
  %v988 = vpack.c.b16 %v928, %v927
  %v989 = vpack.c.b16 %v930, %v929
  %v990 = vpack.c.b16 %v932, %v931
  %v991 = vpack.c.b16 %v934, %v933
  %v992 = vpack.c.b16 %v936, %v935
  %v993 = vpack.c.b16 %v938, %v937
  %v994 = vpack.c.b16 %v940, %v939
  %v995 = vpack.c.b16 %v942, %v941
  %v996 = vpack.c.b16 %v944, %v943
  %v997 = vpack.c.b16 %v946, %v945
  %v998 = vpack.c.b16 %v948, %v947
  %v999 = vpack.c.b16 %v950, %v949
  %v1000 = vpack.c.b16 %v952, %v951
  %v1001 = vpack.c.b16 %v954, %v953
  %v1002 = vpack.c.b16 %v956, %v955
  %v1003 = vpack.c.b16 %v958, %v957
  %v1004 = vpack.c.b16 %v960, %v959
  %v1005 = vpack.c.b16 %v962, %v961
  %v1006 = vpack.c.b16 %v964, %v963
  %v1007 = vpack.c.b16 %v966, %v965
  %v1008 = vpack.c.b16 %v968, %v967
  %v1009 = vpack.c.b16 %v970, %v969
  %v1010 = vpack.c.b16 %v972, %v971
  %v1011 = vpack.c.b16 %v974, %v973
  %v1012 = vpack.c.b16 %v976, %v975
  %v1013 = vpack.c.b16 %v978, %v977
  %v1014 = vpack.c.b16 %v980, %v979
  %v1015 = vpack.c.b16 %v982, %v981
  %v1016 = vpack.c.b16 %v984, %v983
  %1049 = vmatprep.subr.bf16.mxu0 0
  %1050 = vmatpush1.bf16.msra.mxu0 %v985
  %1051 = vmatprep.subr.bf16.mxu0 0
  %1052 = vmatpush1.bf16.msra.mxu0 %v986
  %1053 = vmatprep.subr.bf16.mxu0 0
  %1054 = vmatpush1.bf16.msra.mxu0 %v987
  %1055 = vmatprep.subr.bf16.mxu0 0
  %1056 = vmatpush1.bf16.msra.mxu0 %v988
  %1057 = vmatprep.subr.bf16.mxu0 0
  %1058 = vmatpush1.bf16.msra.mxu0 %v989
  %1059 = vmatprep.subr.bf16.mxu0 0
  %1060 = vmatpush1.bf16.msra.mxu0 %v990
  %1061 = vmatprep.subr.bf16.mxu0 0
  %1062 = vmatpush1.bf16.msra.mxu0 %v991
  %1063 = vmatprep.subr.bf16.mxu0 0
  %1064 = vmatpush1.bf16.msra.mxu0 %v992
  %1065 = vmatprep.subr.bf16.mxu0 0
  %1066 = vmatpush1.bf16.msra.mxu0 %v993
  %1067 = vmatprep.subr.bf16.mxu0 0
  %1068 = vmatpush1.bf16.msra.mxu0 %v994
  %1069 = vmatprep.subr.bf16.mxu0 0
  %1070 = vmatpush1.bf16.msra.mxu0 %v995
  %1071 = vmatprep.subr.bf16.mxu0 0
  %1072 = vmatpush1.bf16.msra.mxu0 %v996
  %1073 = vmatprep.subr.bf16.mxu0 0
  %1074 = vmatpush1.bf16.msra.mxu0 %v997
  %1075 = vmatprep.subr.bf16.mxu0 0
  %1076 = vmatpush1.bf16.msra.mxu0 %v998
  %1077 = vmatprep.subr.bf16.mxu0 0
  %1078 = vmatpush1.bf16.msra.mxu0 %v999
  %1079 = vmatprep.subr.bf16.mxu0 0
  %1080 = vmatpush1.bf16.msra.mxu0 %v1000
  %1081 = vmatprep.mubr.bf16.mxu0 %v602
  %1082 = vmatmul.mubr.bf16.gmra.mrb[0].mxu0 %v601
  %v1083 = vpop.f32.mrb[0].mxu0
  %v1084 = vadd.f32 %v215, %v1083
  %v1085 = vpop.f32.mrb[0].mxu0
  %v1086 = vpop.f32.mrb[0].mxu0
  %v1087 = vadd.f32 %v215, %v1086
  %v1088 = vpop.f32.mrb[0].mxu0
  %1089 = vmatprep.mubr.bf16.mxu0 %v606
  %1090 = vmatmul.mubr.bf16.gmra.mrb[0].mxu0 %v605
  %v1091 = vpop.f32.mrb[0].mxu0
  %v1092 = vadd.f32 %v215, %v1091
  %v1093 = vpop.f32.mrb[0].mxu0
  %v1094 = vpop.f32.mrb[0].mxu0
  %v1095 = vadd.f32 %v215, %v1094
  %v1096 = vpop.f32.mrb[0].mxu0
  %1097 = vmatprep.mubr.bf16.mxu0 %v610
  %1098 = vmatmul.mubr.bf16.gmra.mrb[0].mxu0 %v609
  %v1099 = vpop.f32.mrb[0].mxu0
  %v1100 = vadd.f32 %v215, %v1099
  %v1101 = vpop.f32.mrb[0].mxu0
  %v1102 = vpop.f32.mrb[0].mxu0
  %v1103 = vadd.f32 %v215, %v1102
  %v1104 = vpop.f32.mrb[0].mxu0
  %1105 = vmatprep.mubr.bf16.mxu0 %v614
  %1106 = vmatmul.mubr.bf16.gmra.mrb[0].mxu0 %v613
  %v1107 = vpop.f32.mrb[0].mxu0
  %v1108 = vadd.f32 %v215, %v1107
  %v1109 = vpop.f32.mrb[0].mxu0
  %v1110 = vpop.f32.mrb[0].mxu0
  %v1111 = vadd.f32 %v215, %v1110
  %v1112 = vpop.f32.mrb[0].mxu0
  %1113 = vmatprep.mubr.bf16.mxu0 %v618
  %1114 = vmatmul.mubr.bf16.gmra.mrb[0].mxu0 %v617
  %v1115 = vpop.f32.mrb[0].mxu0
  %v1116 = vadd.f32 %v215, %v1115
  %v1117 = vpop.f32.mrb[0].mxu0
  %v1118 = vpop.f32.mrb[0].mxu0
  %v1119 = vadd.f32 %v215, %v1118
  %v1120 = vpop.f32.mrb[0].mxu0
  %1121 = vmatprep.mubr.bf16.mxu0 %v622
  %1122 = vmatmul.mubr.bf16.gmra.mrb[0].mxu0 %v621
  %v1123 = vpop.f32.mrb[0].mxu0
  %v1124 = vadd.f32 %v215, %v1123
  %v1125 = vpop.f32.mrb[0].mxu0
  %v1126 = vpop.f32.mrb[0].mxu0
  %v1127 = vadd.f32 %v215, %v1126
  %v1128 = vpop.f32.mrb[0].mxu0
  %1129 = vmatprep.mubr.bf16.mxu0 %v626
  %1130 = vmatmul.mubr.bf16.gmra.mrb[0].mxu0 %v625
  %v1131 = vpop.f32.mrb[0].mxu0
  %v1132 = vadd.f32 %v215, %v1131
  %v1133 = vpop.f32.mrb[0].mxu0
  %v1134 = vpop.f32.mrb[0].mxu0
  %v1135 = vadd.f32 %v215, %v1134
  %v1136 = vpop.f32.mrb[0].mxu0
  %1137 = vmatprep.mubr.bf16.mxu0 %v630
  %1138 = vmatmul.mubr.bf16.gmra.mrb[0].mxu0 %v629
  %v1139 = vpop.f32.mrb[0].mxu0
  %v1140 = vadd.f32 %v215, %v1139
  %v1141 = vpop.f32.mrb[0].mxu0
  %v1142 = vpop.f32.mrb[0].mxu0
  %v1143 = vadd.f32 %v215, %v1142
  %v1144 = vpop.f32.mrb[0].mxu0
  %1145 = vmatprep.mubr.bf16.mxu0 %v634
  %1146 = vmatmul.mubr.bf16.gmra.mrb[0].mxu0 %v633
  %v1147 = vpop.f32.mrb[0].mxu0
  %v1148 = vadd.f32 %v215, %v1147
  %v1149 = vpop.f32.mrb[0].mxu0
  %v1150 = vpop.f32.mrb[0].mxu0
  %v1151 = vadd.f32 %v215, %v1150
  %v1152 = vpop.f32.mrb[0].mxu0
  %1153 = vmatprep.mubr.bf16.mxu0 %v638
  %1154 = vmatmul.mubr.bf16.gmra.mrb[0].mxu0 %v637
  %v1155 = vpop.f32.mrb[0].mxu0
  %v1156 = vadd.f32 %v215, %v1155
  %v1157 = vpop.f32.mrb[0].mxu0
  %v1158 = vpop.f32.mrb[0].mxu0
  %v1159 = vadd.f32 %v215, %v1158
  %v1160 = vpop.f32.mrb[0].mxu0
  %1161 = vmatprep.mubr.bf16.mxu0 %v642
  %1162 = vmatmul.mubr.bf16.gmra.mrb[0].mxu0 %v641
  %v1163 = vpop.f32.mrb[0].mxu0
  %v1164 = vadd.f32 %v215, %v1163
  %v1165 = vpop.f32.mrb[0].mxu0
  %v1166 = vpop.f32.mrb[0].mxu0
  %v1167 = vadd.f32 %v215, %v1166
  %v1168 = vpop.f32.mrb[0].mxu0
  %1169 = vmatprep.mubr.bf16.mxu0 %v646
  %1170 = vmatmul.mubr.bf16.gmra.mrb[0].mxu0 %v645
  %v1171 = vpop.f32.mrb[0].mxu0
  %v1172 = vadd.f32 %v215, %v1171
  %v1173 = vpop.f32.mrb[0].mxu0
  %v1174 = vpop.f32.mrb[0].mxu0
  %v1175 = vadd.f32 %v215, %v1174
  %v1176 = vpop.f32.mrb[0].mxu0
  %1177 = vmatprep.mubr.bf16.mxu0 %v650
  %1178 = vmatmul.mubr.bf16.gmra.mrb[0].mxu0 %v649
  %v1179 = vpop.f32.mrb[0].mxu0
  %v1180 = vadd.f32 %v215, %v1179
  %v1181 = vpop.f32.mrb[0].mxu0
  %v1182 = vpop.f32.mrb[0].mxu0
  %v1183 = vadd.f32 %v215, %v1182
  %v1184 = vpop.f32.mrb[0].mxu0
  %1185 = vmatprep.mubr.bf16.mxu0 %v654
  %1186 = vmatmul.mubr.bf16.gmra.mrb[0].mxu0 %v653
  %v1187 = vpop.f32.mrb[0].mxu0
  %v1188 = vadd.f32 %v215, %v1187
  %v1189 = vpop.f32.mrb[0].mxu0
  %v1190 = vpop.f32.mrb[0].mxu0
  %v1191 = vadd.f32 %v215, %v1190
  %v1192 = vpop.f32.mrb[0].mxu0
  %1193 = vmatprep.mubr.bf16.mxu0 %v658
  %1194 = vmatmul.mubr.bf16.gmra.mrb[0].mxu0 %v657
  %v1195 = vpop.f32.mrb[0].mxu0
  %v1196 = vadd.f32 %v215, %v1195
  %v1197 = vpop.f32.mrb[0].mxu0
  %v1198 = vpop.f32.mrb[0].mxu0
  %v1199 = vadd.f32 %v215, %v1198
  %v1200 = vpop.f32.mrb[0].mxu0
  %1201 = vmatprep.mubr.bf16.mxu0 %v662
  %1202 = vmatmul.mubr.bf16.gmra.mrb[0].mxu0 %v661
  %v1203 = vpop.f32.mrb[0].mxu0
  %v1204 = vadd.f32 %v215, %v1203
  %v1205 = vpop.f32.mrb[0].mxu0
  %v1206 = vpop.f32.mrb[0].mxu0
  %v1207 = vadd.f32 %v215, %v1206
  %v1208 = vpop.f32.mrb[0].mxu0
  %1209 = vmatprep.mubr.bf16.mxu0 %v666
  %1210 = vmatmul.mubr.bf16.gmra.mrb[0].mxu0 %v665
  %v1211 = vpop.f32.mrb[0].mxu0
  %v1212 = vadd.f32 %v215, %v1211
  %v1213 = vpop.f32.mrb[0].mxu0
  %v1214 = vpop.f32.mrb[0].mxu0
  %v1215 = vadd.f32 %v215, %v1214
  %v1216 = vpop.f32.mrb[0].mxu0
  %1217 = vmatprep.mubr.bf16.mxu0 %v670
  %1218 = vmatmul.mubr.bf16.gmra.mrb[0].mxu0 %v669
  %v1219 = vpop.f32.mrb[0].mxu0
  %v1220 = vadd.f32 %v215, %v1219
  %v1221 = vpop.f32.mrb[0].mxu0
  %v1222 = vpop.f32.mrb[0].mxu0
  %v1223 = vadd.f32 %v215, %v1222
  %v1224 = vpop.f32.mrb[0].mxu0
  %1225 = vmatprep.mubr.bf16.mxu0 %v674
  %1226 = vmatmul.mubr.bf16.gmra.mrb[0].mxu0 %v673
  %v1227 = vpop.f32.mrb[0].mxu0
  %v1228 = vadd.f32 %v215, %v1227
  %v1229 = vpop.f32.mrb[0].mxu0
  %v1230 = vpop.f32.mrb[0].mxu0
  %v1231 = vadd.f32 %v215, %v1230
  %v1232 = vpop.f32.mrb[0].mxu0
  %1233 = vmatprep.mubr.bf16.mxu0 %v678
  %1234 = vmatmul.mubr.bf16.gmra.mrb[0].mxu0 %v677
  %v1235 = vpop.f32.mrb[0].mxu0
  %v1236 = vadd.f32 %v215, %v1235
  %v1237 = vpop.f32.mrb[0].mxu0
  %v1238 = vpop.f32.mrb[0].mxu0
  %v1239 = vadd.f32 %v215, %v1238
  %v1240 = vpop.f32.mrb[0].mxu0
  %1241 = vmatprep.mubr.bf16.mxu0 %v682
  %1242 = vmatmul.mubr.bf16.gmra.mrb[0].mxu0 %v681
  %v1243 = vpop.f32.mrb[0].mxu0
  %v1244 = vadd.f32 %v215, %v1243
  %v1245 = vpop.f32.mrb[0].mxu0
  %v1246 = vpop.f32.mrb[0].mxu0
  %v1247 = vadd.f32 %v215, %v1246
  %v1248 = vpop.f32.mrb[0].mxu0
  %1249 = vmatprep.mubr.bf16.mxu0 %v686
  %1250 = vmatmul.mubr.bf16.gmra.mrb[0].mxu0 %v685
  %v1251 = vpop.f32.mrb[0].mxu0
  %v1252 = vadd.f32 %v215, %v1251
  %v1253 = vpop.f32.mrb[0].mxu0
  %v1254 = vpop.f32.mrb[0].mxu0
  %v1255 = vadd.f32 %v215, %v1254
  %v1256 = vpop.f32.mrb[0].mxu0
  %1257 = vmatprep.mubr.bf16.mxu0 %v690
  %1258 = vmatmul.mubr.bf16.gmra.mrb[0].mxu0 %v689
  %v1259 = vpop.f32.mrb[0].mxu0
  %v1260 = vadd.f32 %v215, %v1259
  %v1261 = vpop.f32.mrb[0].mxu0
  %v1262 = vpop.f32.mrb[0].mxu0
  %v1263 = vadd.f32 %v215, %v1262
  %v1264 = vpop.f32.mrb[0].mxu0
  %1265 = vmatprep.mubr.bf16.mxu0 %v694
  %1266 = vmatmul.mubr.bf16.gmra.mrb[0].mxu0 %v693
  %v1267 = vpop.f32.mrb[0].mxu0
  %v1268 = vadd.f32 %v215, %v1267
  %v1269 = vpop.f32.mrb[0].mxu0
  %v1270 = vpop.f32.mrb[0].mxu0
  %v1271 = vadd.f32 %v215, %v1270
  %v1272 = vpop.f32.mrb[0].mxu0
  %1273 = vmatprep.mubr.bf16.mxu0 %v698
  %1274 = vmatmul.mubr.bf16.gmra.mrb[0].mxu0 %v697
  %v1275 = vpop.f32.mrb[0].mxu0
  %v1276 = vadd.f32 %v215, %v1275
  %v1277 = vpop.f32.mrb[0].mxu0
  %v1278 = vpop.f32.mrb[0].mxu0
  %v1279 = vadd.f32 %v215, %v1278
  %v1280 = vpop.f32.mrb[0].mxu0
  %1281 = vmatprep.mubr.bf16.mxu0 %v702
  %1282 = vmatmul.mubr.bf16.gmra.mrb[0].mxu0 %v701
  %v1283 = vpop.f32.mrb[0].mxu0
  %v1284 = vadd.f32 %v215, %v1283
  %v1285 = vpop.f32.mrb[0].mxu0
  %v1286 = vpop.f32.mrb[0].mxu0
  %v1287 = vadd.f32 %v215, %v1286
  %v1288 = vpop.f32.mrb[0].mxu0
  %1289 = vmatprep.mubr.bf16.mxu0 %v706
  %1290 = vmatmul.mubr.bf16.gmra.mrb[0].mxu0 %v705
  %v1291 = vpop.f32.mrb[0].mxu0
  %v1292 = vadd.f32 %v215, %v1291
  %v1293 = vpop.f32.mrb[0].mxu0
  %v1294 = vpop.f32.mrb[0].mxu0
  %v1295 = vadd.f32 %v215, %v1294
  %v1296 = vpop.f32.mrb[0].mxu0
  %1297 = vmatprep.mubr.bf16.mxu0 %v710
  %1298 = vmatmul.mubr.bf16.gmra.mrb[0].mxu0 %v709
  %v1299 = vpop.f32.mrb[0].mxu0
  %v1300 = vadd.f32 %v215, %v1299
  %v1301 = vpop.f32.mrb[0].mxu0
  %v1302 = vpop.f32.mrb[0].mxu0
  %v1303 = vadd.f32 %v215, %v1302
  %v1304 = vpop.f32.mrb[0].mxu0
  %1305 = vmatprep.mubr.bf16.mxu0 %v714
  %1306 = vmatmul.mubr.bf16.gmra.mrb[0].mxu0 %v713
  %v1307 = vpop.f32.mrb[0].mxu0
  %v1308 = vadd.f32 %v215, %v1307
  %v1309 = vpop.f32.mrb[0].mxu0
  %v1310 = vpop.f32.mrb[0].mxu0
  %v1311 = vadd.f32 %v215, %v1310
  %v1312 = vpop.f32.mrb[0].mxu0
  %1313 = vmatprep.mubr.bf16.mxu0 %v718
  %1314 = vmatmul.mubr.bf16.gmra.mrb[0].mxu0 %v717
  %v1315 = vpop.f32.mrb[0].mxu0
  %v1316 = vadd.f32 %v215, %v1315
  %v1317 = vpop.f32.mrb[0].mxu0
  %v1318 = vpop.f32.mrb[0].mxu0
  %v1319 = vadd.f32 %v215, %v1318
  %v1320 = vpop.f32.mrb[0].mxu0
  %1321 = vmatprep.mubr.bf16.mxu0 %v722
  %1322 = vmatmul.mubr.bf16.gmra.mrb[0].mxu0 %v721
  %v1323 = vpop.f32.mrb[0].mxu0
  %v1324 = vadd.f32 %v215, %v1323
  %v1325 = vpop.f32.mrb[0].mxu0
  %v1326 = vpop.f32.mrb[0].mxu0
  %v1327 = vadd.f32 %v215, %v1326
  %v1328 = vpop.f32.mrb[0].mxu0
  %1329 = vmatprep.mubr.bf16.mxu0 %v726
  %1330 = vmatmul.mubr.bf16.gmra.mrb[0].mxu0 %v725
  %v1331 = vpop.f32.mrb[0].mxu0
  %v1332 = vadd.f32 %v215, %v1331
  %v1333 = vpop.f32.mrb[0].mxu0
  %v1334 = vpop.f32.mrb[0].mxu0
  %v1335 = vadd.f32 %v215, %v1334
  %v1336 = vpop.f32.mrb[0].mxu0
  %1337 = vdwg.mxu0
  %1338 = vmatprep.subr.bf16.mxu0 0
  %1339 = vmatpush1.bf16.msra.mxu0 %v1001
  %1340 = vmatprep.subr.bf16.mxu0 0
  %1341 = vmatpush1.bf16.msra.mxu0 %v1002
  %1342 = vmatprep.subr.bf16.mxu0 0
  %1343 = vmatpush1.bf16.msra.mxu0 %v1003
  %1344 = vmatprep.subr.bf16.mxu0 0
  %1345 = vmatpush1.bf16.msra.mxu0 %v1004
  %1346 = vmatprep.subr.bf16.mxu0 0
  %1347 = vmatpush1.bf16.msra.mxu0 %v1005
  %1348 = vmatprep.subr.bf16.mxu0 0
  %1349 = vmatpush1.bf16.msra.mxu0 %v1006
  %1350 = vmatprep.subr.bf16.mxu0 0
  %1351 = vmatpush1.bf16.msra.mxu0 %v1007
  %1352 = vmatprep.subr.bf16.mxu0 0
  %1353 = vmatpush1.bf16.msra.mxu0 %v1008
  %1354 = vmatprep.subr.bf16.mxu0 0
  %1355 = vmatpush1.bf16.msra.mxu0 %v1009
  %1356 = vmatprep.subr.bf16.mxu0 0
  %1357 = vmatpush1.bf16.msra.mxu0 %v1010
  %1358 = vmatprep.subr.bf16.mxu0 0
  %1359 = vmatpush1.bf16.msra.mxu0 %v1011
  %1360 = vmatprep.subr.bf16.mxu0 0
  %1361 = vmatpush1.bf16.msra.mxu0 %v1012
  %1362 = vmatprep.subr.bf16.mxu0 0
  %1363 = vmatpush1.bf16.msra.mxu0 %v1013
  %1364 = vmatprep.subr.bf16.mxu0 0
  %1365 = vmatpush1.bf16.msra.mxu0 %v1014
  %1366 = vmatprep.subr.bf16.mxu0 0
  %1367 = vmatpush1.bf16.msra.mxu0 %v1015
  %1368 = vmatprep.subr.bf16.mxu0 0
  %1369 = vmatpush1.bf16.msra.mxu0 %v1016
  %1370 = vmatprep.mubr.bf16.mxu0 %v604
  %1371 = vmatmul.mubr.bf16.gmra.mrb[0].mxu0 %v603
  %v1372 = vpop.f32.mrb[0].mxu0
  %v1373 = vadd.f32 %v1084, %v1372
  %v1374 = vpop.f32.mrb[0].mxu0
  %v1375 = vpop.f32.mrb[0].mxu0
  %v1376 = vadd.f32 %v1087, %v1375
  %v1377 = vpop.f32.mrb[0].mxu0
  %1378 = vmatprep.mubr.bf16.mxu0 %v608
  %1379 = vmatmul.mubr.bf16.gmra.mrb[0].mxu0 %v607
  %v1380 = vpop.f32.mrb[0].mxu0
  %v1381 = vadd.f32 %v1092, %v1380
  %v1382 = vpop.f32.mrb[0].mxu0
  %v1383 = vpop.f32.mrb[0].mxu0
  %v1384 = vadd.f32 %v1095, %v1383
  %v1385 = vpop.f32.mrb[0].mxu0
  %1386 = vmatprep.mubr.bf16.mxu0 %v612
  %1387 = vmatmul.mubr.bf16.gmra.mrb[0].mxu0 %v611
  %v1388 = vpop.f32.mrb[0].mxu0
  %v1389 = vadd.f32 %v1100, %v1388
  %v1390 = vpop.f32.mrb[0].mxu0
  %v1391 = vpop.f32.mrb[0].mxu0
  %v1392 = vadd.f32 %v1103, %v1391
  %v1393 = vpop.f32.mrb[0].mxu0
  %1394 = vmatprep.mubr.bf16.mxu0 %v616
  %1395 = vmatmul.mubr.bf16.gmra.mrb[0].mxu0 %v615
  %v1396 = vpop.f32.mrb[0].mxu0
  %v1397 = vadd.f32 %v1108, %v1396
  %v1398 = vpop.f32.mrb[0].mxu0
  %v1399 = vpop.f32.mrb[0].mxu0
  %v1400 = vadd.f32 %v1111, %v1399
  %v1401 = vpop.f32.mrb[0].mxu0
  %1402 = vmatprep.mubr.bf16.mxu0 %v620
  %1403 = vmatmul.mubr.bf16.gmra.mrb[0].mxu0 %v619
  %v1404 = vpop.f32.mrb[0].mxu0
  %v1405 = vadd.f32 %v1116, %v1404
  %v1406 = vpop.f32.mrb[0].mxu0
  %v1407 = vpop.f32.mrb[0].mxu0
  %v1408 = vadd.f32 %v1119, %v1407
  %v1409 = vpop.f32.mrb[0].mxu0
  %1410 = vmatprep.mubr.bf16.mxu0 %v624
  %1411 = vmatmul.mubr.bf16.gmra.mrb[0].mxu0 %v623
  %v1412 = vpop.f32.mrb[0].mxu0
  %v1413 = vadd.f32 %v1124, %v1412
  %v1414 = vpop.f32.mrb[0].mxu0
  %v1415 = vpop.f32.mrb[0].mxu0
  %v1416 = vadd.f32 %v1127, %v1415
  %v1417 = vpop.f32.mrb[0].mxu0
  %1418 = vmatprep.mubr.bf16.mxu0 %v628
  %1419 = vmatmul.mubr.bf16.gmra.mrb[0].mxu0 %v627
  %v1420 = vpop.f32.mrb[0].mxu0
  %v1421 = vadd.f32 %v1132, %v1420
  %v1422 = vpop.f32.mrb[0].mxu0
  %v1423 = vpop.f32.mrb[0].mxu0
  %v1424 = vadd.f32 %v1135, %v1423
  %v1425 = vpop.f32.mrb[0].mxu0
  %1426 = vmatprep.mubr.bf16.mxu0 %v632
  %1427 = vmatmul.mubr.bf16.gmra.mrb[0].mxu0 %v631
  %v1428 = vpop.f32.mrb[0].mxu0
  %v1429 = vadd.f32 %v1140, %v1428
  %v1430 = vpop.f32.mrb[0].mxu0
  %v1431 = vpop.f32.mrb[0].mxu0
  %v1432 = vadd.f32 %v1143, %v1431
  %v1433 = vpop.f32.mrb[0].mxu0
  %1434 = vmatprep.mubr.bf16.mxu0 %v636
  %1435 = vmatmul.mubr.bf16.gmra.mrb[0].mxu0 %v635
  %v1436 = vpop.f32.mrb[0].mxu0
  %v1437 = vadd.f32 %v1148, %v1436
  %v1438 = vpop.f32.mrb[0].mxu0
  %v1439 = vpop.f32.mrb[0].mxu0
  %v1440 = vadd.f32 %v1151, %v1439
  %v1441 = vpop.f32.mrb[0].mxu0
  %1442 = vmatprep.mubr.bf16.mxu0 %v640
  %1443 = vmatmul.mubr.bf16.gmra.mrb[0].mxu0 %v639
  %v1444 = vpop.f32.mrb[0].mxu0
  %v1445 = vadd.f32 %v1156, %v1444
  %v1446 = vpop.f32.mrb[0].mxu0
  %v1447 = vpop.f32.mrb[0].mxu0
  %v1448 = vadd.f32 %v1159, %v1447
  %v1449 = vpop.f32.mrb[0].mxu0
  %1450 = vmatprep.mubr.bf16.mxu0 %v644
  %1451 = vmatmul.mubr.bf16.gmra.mrb[0].mxu0 %v643
  %v1452 = vpop.f32.mrb[0].mxu0
  %v1453 = vadd.f32 %v1164, %v1452
  %v1454 = vpop.f32.mrb[0].mxu0
  %v1455 = vpop.f32.mrb[0].mxu0
  %v1456 = vadd.f32 %v1167, %v1455
  %v1457 = vpop.f32.mrb[0].mxu0
  %1458 = vmatprep.mubr.bf16.mxu0 %v648
  %1459 = vmatmul.mubr.bf16.gmra.mrb[0].mxu0 %v647
  %v1460 = vpop.f32.mrb[0].mxu0
  %v1461 = vadd.f32 %v1172, %v1460
  %v1462 = vpop.f32.mrb[0].mxu0
  %v1463 = vpop.f32.mrb[0].mxu0
  %v1464 = vadd.f32 %v1175, %v1463
  %v1465 = vpop.f32.mrb[0].mxu0
  %1466 = vmatprep.mubr.bf16.mxu0 %v652
  %1467 = vmatmul.mubr.bf16.gmra.mrb[0].mxu0 %v651
  %v1468 = vpop.f32.mrb[0].mxu0
  %v1469 = vadd.f32 %v1180, %v1468
  %v1470 = vpop.f32.mrb[0].mxu0
  %v1471 = vpop.f32.mrb[0].mxu0
  %v1472 = vadd.f32 %v1183, %v1471
  %v1473 = vpop.f32.mrb[0].mxu0
  %1474 = vmatprep.mubr.bf16.mxu0 %v656
  %1475 = vmatmul.mubr.bf16.gmra.mrb[0].mxu0 %v655
  %v1476 = vpop.f32.mrb[0].mxu0
  %v1477 = vadd.f32 %v1188, %v1476
  %v1478 = vpop.f32.mrb[0].mxu0
  %v1479 = vpop.f32.mrb[0].mxu0
  %v1480 = vadd.f32 %v1191, %v1479
  %v1481 = vpop.f32.mrb[0].mxu0
  %1482 = vmatprep.mubr.bf16.mxu0 %v660
  %1483 = vmatmul.mubr.bf16.gmra.mrb[0].mxu0 %v659
  %v1484 = vpop.f32.mrb[0].mxu0
  %v1485 = vadd.f32 %v1196, %v1484
  %v1486 = vpop.f32.mrb[0].mxu0
  %v1487 = vpop.f32.mrb[0].mxu0
  %v1488 = vadd.f32 %v1199, %v1487
  %v1489 = vpop.f32.mrb[0].mxu0
  %1490 = vmatprep.mubr.bf16.mxu0 %v664
  %1491 = vmatmul.mubr.bf16.gmra.mrb[0].mxu0 %v663
  %v1492 = vpop.f32.mrb[0].mxu0
  %v1493 = vadd.f32 %v1204, %v1492
  %v1494 = vpop.f32.mrb[0].mxu0
  %v1495 = vpop.f32.mrb[0].mxu0
  %v1496 = vadd.f32 %v1207, %v1495
  %v1497 = vpop.f32.mrb[0].mxu0
  %1498 = vmatprep.mubr.bf16.mxu0 %v668
  %1499 = vmatmul.mubr.bf16.gmra.mrb[0].mxu0 %v667
  %v1500 = vpop.f32.mrb[0].mxu0
  %v1501 = vadd.f32 %v1212, %v1500
  %v1502 = vpop.f32.mrb[0].mxu0
  %v1503 = vpop.f32.mrb[0].mxu0
  %v1504 = vadd.f32 %v1215, %v1503
  %v1505 = vpop.f32.mrb[0].mxu0
  %1506 = vmatprep.mubr.bf16.mxu0 %v672
  %1507 = vmatmul.mubr.bf16.gmra.mrb[0].mxu0 %v671
  %v1508 = vpop.f32.mrb[0].mxu0
  %v1509 = vadd.f32 %v1220, %v1508
  %v1510 = vpop.f32.mrb[0].mxu0
  %v1511 = vpop.f32.mrb[0].mxu0
  %v1512 = vadd.f32 %v1223, %v1511
  %v1513 = vpop.f32.mrb[0].mxu0
  %1514 = vmatprep.mubr.bf16.mxu0 %v676
  %1515 = vmatmul.mubr.bf16.gmra.mrb[0].mxu0 %v675
  %v1516 = vpop.f32.mrb[0].mxu0
  %v1517 = vadd.f32 %v1228, %v1516
  %v1518 = vpop.f32.mrb[0].mxu0
  %v1519 = vpop.f32.mrb[0].mxu0
  %v1520 = vadd.f32 %v1231, %v1519
  %v1521 = vpop.f32.mrb[0].mxu0
  %1522 = vmatprep.mubr.bf16.mxu0 %v680
  %1523 = vmatmul.mubr.bf16.gmra.mrb[0].mxu0 %v679
  %v1524 = vpop.f32.mrb[0].mxu0
  %v1525 = vadd.f32 %v1236, %v1524
  %v1526 = vpop.f32.mrb[0].mxu0
  %v1527 = vpop.f32.mrb[0].mxu0
  %v1528 = vadd.f32 %v1239, %v1527
  %v1529 = vpop.f32.mrb[0].mxu0
  %1530 = vmatprep.mubr.bf16.mxu0 %v684
  %1531 = vmatmul.mubr.bf16.gmra.mrb[0].mxu0 %v683
  %v1532 = vpop.f32.mrb[0].mxu0
  %v1533 = vadd.f32 %v1244, %v1532
  %v1534 = vpop.f32.mrb[0].mxu0
  %v1535 = vpop.f32.mrb[0].mxu0
  %v1536 = vadd.f32 %v1247, %v1535
  %v1537 = vpop.f32.mrb[0].mxu0
  %1538 = vmatprep.mubr.bf16.mxu0 %v688
  %1539 = vmatmul.mubr.bf16.gmra.mrb[0].mxu0 %v687
  %v1540 = vpop.f32.mrb[0].mxu0
  %v1541 = vadd.f32 %v1252, %v1540
  %v1542 = vpop.f32.mrb[0].mxu0
  %v1543 = vpop.f32.mrb[0].mxu0
  %v1544 = vadd.f32 %v1255, %v1543
  %v1545 = vpop.f32.mrb[0].mxu0
  %1546 = vmatprep.mubr.bf16.mxu0 %v692
  %1547 = vmatmul.mubr.bf16.gmra.mrb[0].mxu0 %v691
  %v1548 = vpop.f32.mrb[0].mxu0
  %v1549 = vadd.f32 %v1260, %v1548
  %v1550 = vpop.f32.mrb[0].mxu0
  %v1551 = vpop.f32.mrb[0].mxu0
  %v1552 = vadd.f32 %v1263, %v1551
  %v1553 = vpop.f32.mrb[0].mxu0
  %1554 = vmatprep.mubr.bf16.mxu0 %v696
  %1555 = vmatmul.mubr.bf16.gmra.mrb[0].mxu0 %v695
  %v1556 = vpop.f32.mrb[0].mxu0
  %v1557 = vadd.f32 %v1268, %v1556
  %v1558 = vpop.f32.mrb[0].mxu0
  %v1559 = vpop.f32.mrb[0].mxu0
  %v1560 = vadd.f32 %v1271, %v1559
  %v1561 = vpop.f32.mrb[0].mxu0
  %1562 = vmatprep.mubr.bf16.mxu0 %v700
  %1563 = vmatmul.mubr.bf16.gmra.mrb[0].mxu0 %v699
  %v1564 = vpop.f32.mrb[0].mxu0
  %v1565 = vadd.f32 %v1276, %v1564
  %v1566 = vpop.f32.mrb[0].mxu0
  %v1567 = vpop.f32.mrb[0].mxu0
  %v1568 = vadd.f32 %v1279, %v1567
  %v1569 = vpop.f32.mrb[0].mxu0
  %1570 = vmatprep.mubr.bf16.mxu0 %v704
  %1571 = vmatmul.mubr.bf16.gmra.mrb[0].mxu0 %v703
  %v1572 = vpop.f32.mrb[0].mxu0
  %v1573 = vadd.f32 %v1284, %v1572
  %v1574 = vpop.f32.mrb[0].mxu0
  %v1575 = vpop.f32.mrb[0].mxu0
  %v1576 = vadd.f32 %v1287, %v1575
  %v1577 = vpop.f32.mrb[0].mxu0
  %1578 = vmatprep.mubr.bf16.mxu0 %v708
  %1579 = vmatmul.mubr.bf16.gmra.mrb[0].mxu0 %v707
  %v1580 = vpop.f32.mrb[0].mxu0
  %v1581 = vadd.f32 %v1292, %v1580
  %v1582 = vpop.f32.mrb[0].mxu0
  %v1583 = vpop.f32.mrb[0].mxu0
  %v1584 = vadd.f32 %v1295, %v1583
  %v1585 = vpop.f32.mrb[0].mxu0
  %1586 = vmatprep.mubr.bf16.mxu0 %v712
  %1587 = vmatmul.mubr.bf16.gmra.mrb[0].mxu0 %v711
  %v1588 = vpop.f32.mrb[0].mxu0
  %v1589 = vadd.f32 %v1300, %v1588
  %v1590 = vpop.f32.mrb[0].mxu0
  %v1591 = vpop.f32.mrb[0].mxu0
  %v1592 = vadd.f32 %v1303, %v1591
  %v1593 = vpop.f32.mrb[0].mxu0
  %1594 = vmatprep.mubr.bf16.mxu0 %v716
  %1595 = vmatmul.mubr.bf16.gmra.mrb[0].mxu0 %v715
  %v1596 = vpop.f32.mrb[0].mxu0
  %v1597 = vadd.f32 %v1308, %v1596
  %v1598 = vpop.f32.mrb[0].mxu0
  %v1599 = vpop.f32.mrb[0].mxu0
  %v1600 = vadd.f32 %v1311, %v1599
  %v1601 = vpop.f32.mrb[0].mxu0
  %1602 = vmatprep.mubr.bf16.mxu0 %v720
  %1603 = vmatmul.mubr.bf16.gmra.mrb[0].mxu0 %v719
  %v1604 = vpop.f32.mrb[0].mxu0
  %v1605 = vadd.f32 %v1316, %v1604
  %v1606 = vpop.f32.mrb[0].mxu0
  %v1607 = vpop.f32.mrb[0].mxu0
  %v1608 = vadd.f32 %v1319, %v1607
  %v1609 = vpop.f32.mrb[0].mxu0
  %1610 = vmatprep.mubr.bf16.mxu0 %v724
  %1611 = vmatmul.mubr.bf16.gmra.mrb[0].mxu0 %v723
  %v1612 = vpop.f32.mrb[0].mxu0
  %v1613 = vadd.f32 %v1324, %v1612
  %v1614 = vpop.f32.mrb[0].mxu0
  %v1615 = vpop.f32.mrb[0].mxu0
  %v1616 = vadd.f32 %v1327, %v1615
  %v1617 = vpop.f32.mrb[0].mxu0
  %1618 = vmatprep.mubr.bf16.mxu0 %v728
  %1619 = vmatmul.mubr.bf16.gmra.mrb[0].mxu0 %v727
  %v1620 = vpop.f32.mrb[0].mxu0
  %v1621 = vadd.f32 %v1332, %v1620
  %v1622 = vpop.f32.mrb[0].mxu0
  %v1623 = vpop.f32.mrb[0].mxu0
  %v1624 = vadd.f32 %v1335, %v1623
  %v1625 = vpop.f32.mrb[0].mxu0
  %1626 = vdwg.mxu0
  %v1627 = vmax.f32 %v1373, 0.0
  %v1628 = vmax.f32 %v1376, 0.0
  %v1629 = vmax.f32 %v1381, 0.0
  %v1630 = vmax.f32 %v1384, 0.0
  %v1631 = vmax.f32 %v1389, 0.0
  %v1632 = vmax.f32 %v1392, 0.0
  %v1633 = vmax.f32 %v1397, 0.0
  %v1634 = vmax.f32 %v1400, 0.0
  %v1635 = vmax.f32 %v1405, 0.0
  %v1636 = vmax.f32 %v1408, 0.0
  %v1637 = vmax.f32 %v1413, 0.0
  %v1638 = vmax.f32 %v1416, 0.0
  %v1639 = vmax.f32 %v1421, 0.0
  %v1640 = vmax.f32 %v1424, 0.0
  %v1641 = vmax.f32 %v1429, 0.0
  %v1642 = vmax.f32 %v1432, 0.0
  %v1643 = vmax.f32 %v1437, 0.0
  %v1644 = vmax.f32 %v1440, 0.0
  %v1645 = vmax.f32 %v1445, 0.0
  %v1646 = vmax.f32 %v1448, 0.0
  %v1647 = vmax.f32 %v1453, 0.0
  %v1648 = vmax.f32 %v1456, 0.0
  %v1649 = vmax.f32 %v1461, 0.0
  %v1650 = vmax.f32 %v1464, 0.0
  %v1651 = vmax.f32 %v1469, 0.0
  %v1652 = vmax.f32 %v1472, 0.0
  %v1653 = vmax.f32 %v1477, 0.0
  %v1654 = vmax.f32 %v1480, 0.0
  %v1655 = vmax.f32 %v1485, 0.0
  %v1656 = vmax.f32 %v1488, 0.0
  %v1657 = vmax.f32 %v1493, 0.0
  %v1658 = vmax.f32 %v1496, 0.0
  %v1659 = vmax.f32 %v1501, 0.0
  %v1660 = vmax.f32 %v1504, 0.0
  %v1661 = vmax.f32 %v1509, 0.0
  %v1662 = vmax.f32 %v1512, 0.0
  %v1663 = vmax.f32 %v1517, 0.0
  %v1664 = vmax.f32 %v1520, 0.0
  %v1665 = vmax.f32 %v1525, 0.0
  %v1666 = vmax.f32 %v1528, 0.0
  %v1667 = vmax.f32 %v1533, 0.0
  %v1668 = vmax.f32 %v1536, 0.0
  %v1669 = vmax.f32 %v1541, 0.0
  %v1670 = vmax.f32 %v1544, 0.0
  %v1671 = vmax.f32 %v1549, 0.0
  %v1672 = vmax.f32 %v1552, 0.0
  %v1673 = vmax.f32 %v1557, 0.0
  %v1674 = vmax.f32 %v1560, 0.0
  %v1675 = vmax.f32 %v1565, 0.0
  %v1676 = vmax.f32 %v1568, 0.0
  %v1677 = vmax.f32 %v1573, 0.0
  %v1678 = vmax.f32 %v1576, 0.0
  %v1679 = vmax.f32 %v1581, 0.0
  %v1680 = vmax.f32 %v1584, 0.0
  %v1681 = vmax.f32 %v1589, 0.0
  %v1682 = vmax.f32 %v1592, 0.0
  %v1683 = vmax.f32 %v1597, 0.0
  %v1684 = vmax.f32 %v1600, 0.0
  %v1685 = vmax.f32 %v1605, 0.0
  %v1686 = vmax.f32 %v1608, 0.0
  %v1687 = vmax.f32 %v1613, 0.0
  %v1688 = vmax.f32 %v1616, 0.0
  %v1689 = vmax.f32 %v1621, 0.0
  %v1690 = vmax.f32 %v1624, 0.0
  %v1691 = vld [vmem:[%s3] sm:$0xf]
  %v1692 = vld [vmem:[%s3 + $0x4] sm:$0xf]
  %v1693 = vld [vmem:[%s3 + $0x8] sm:$0xf]
  %v1694 = vld [vmem:[%s3 + $0xc] sm:$0xf]
  %v1695 = vld [vmem:[%s3 + $0x10] sm:$0xf]
  %v1696 = vld [vmem:[%s3 + $0x14] sm:$0xf]
  %v1697 = vld [vmem:[%s3 + $0x18] sm:$0xf]
  %v1698 = vld [vmem:[%s3 + $0x1c] sm:$0xf]
  %v1699 = vld [vmem:[%s3 + $0x20] sm:$0xf]
  %v1700 = vld [vmem:[%s3 + $0x24] sm:$0xf]
  %v1701 = vld [vmem:[%s3 + $0x28] sm:$0xf]
  %v1702 = vld [vmem:[%s3 + $0x2c] sm:$0xf]
  %v1703 = vld [vmem:[%s3 + $0x30] sm:$0xf]
  %v1704 = vld [vmem:[%s3 + $0x34] sm:$0xf]
  %v1705 = vld [vmem:[%s3 + $0x38] sm:$0xf]
  %v1706 = vld [vmem:[%s3 + $0x3c] sm:$0xf]
  %v1707 = vld [vmem:[%s3 + $0x40] sm:$0xf]
  %v1708 = vld [vmem:[%s3 + $0x44] sm:$0xf]
  %v1709 = vld [vmem:[%s3 + $0x48] sm:$0xf]
  %v1710 = vld [vmem:[%s3 + $0x4c] sm:$0xf]
  %v1711 = vld [vmem:[%s3 + $0x50] sm:$0xf]
  %v1712 = vld [vmem:[%s3 + $0x54] sm:$0xf]
  %v1713 = vld [vmem:[%s3 + $0x58] sm:$0xf]
  %v1714 = vld [vmem:[%s3 + $0x5c] sm:$0xf]
  %v1715 = vld [vmem:[%s3 + $0x60] sm:$0xf]
  %v1716 = vld [vmem:[%s3 + $0x64] sm:$0xf]
  %v1717 = vld [vmem:[%s3 + $0x68] sm:$0xf]
  %v1718 = vld [vmem:[%s3 + $0x6c] sm:$0xf]
  %v1719 = vld [vmem:[%s3 + $0x70] sm:$0xf]
  %v1720 = vld [vmem:[%s3 + $0x74] sm:$0xf]
  %v1721 = vld [vmem:[%s3 + $0x78] sm:$0xf]
  %v1722 = vld [vmem:[%s3 + $0x7c] sm:$0xf]
  %v1723 = vld [vmem:[%s3 + $0x80] sm:$0xf]
  %v1724 = vld [vmem:[%s3 + $0x84] sm:$0xf]
  %v1725 = vld [vmem:[%s3 + $0x88] sm:$0xf]
  %v1726 = vld [vmem:[%s3 + $0x8c] sm:$0xf]
  %v1727 = vld [vmem:[%s3 + $0x90] sm:$0xf]
  %v1728 = vld [vmem:[%s3 + $0x94] sm:$0xf]
  %v1729 = vld [vmem:[%s3 + $0x98] sm:$0xf]
  %v1730 = vld [vmem:[%s3 + $0x9c] sm:$0xf]
  %v1731 = vld [vmem:[%s3 + $0xa0] sm:$0xf]
  %v1732 = vld [vmem:[%s3 + $0xa4] sm:$0xf]
  %v1733 = vld [vmem:[%s3 + $0xa8] sm:$0xf]
  %v1734 = vld [vmem:[%s3 + $0xac] sm:$0xf]
  %v1735 = vld [vmem:[%s3 + $0xb0] sm:$0xf]
  %v1736 = vld [vmem:[%s3 + $0xb4] sm:$0xf]
  %v1737 = vld [vmem:[%s3 + $0xb8] sm:$0xf]
  %v1738 = vld [vmem:[%s3 + $0xbc] sm:$0xf]
  %v1739 = vld [vmem:[%s3 + $0xc0] sm:$0xf]
  %v1740 = vld [vmem:[%s3 + $0xc4] sm:$0xf]
  %v1741 = vld [vmem:[%s3 + $0xc8] sm:$0xf]
  %v1742 = vld [vmem:[%s3 + $0xcc] sm:$0xf]
  %v1743 = vld [vmem:[%s3 + $0xd0] sm:$0xf]
  %v1744 = vld [vmem:[%s3 + $0xd4] sm:$0xf]
  %v1745 = vld [vmem:[%s3 + $0xd8] sm:$0xf]
  %v1746 = vld [vmem:[%s3 + $0xdc] sm:$0xf]
  %v1747 = vld [vmem:[%s3 + $0xe0] sm:$0xf]
  %v1748 = vld [vmem:[%s3 + $0xe4] sm:$0xf]
  %v1749 = vld [vmem:[%s3 + $0xe8] sm:$0xf]
  %v1750 = vld [vmem:[%s3 + $0xec] sm:$0xf]
  %v1751 = vld [vmem:[%s3 + $0xf0] sm:$0xf]
  %v1752 = vld [vmem:[%s3 + $0xf4] sm:$0xf]
  %v1753 = vld [vmem:[%s3 + $0xf8] sm:$0xf]
  %v1754 = vld [vmem:[%s3 + $0xfc] sm:$0xf]
  %v1755 = vunpack.c.l.bf16 %v1691
  %v1756 = vunpack.c.l.bf16 %v1692
  %v1757 = vunpack.c.l.bf16 %v1693
  %v1758 = vunpack.c.l.bf16 %v1694
  %v1759 = vunpack.c.l.bf16 %v1695
  %v1760 = vunpack.c.l.bf16 %v1696
  %v1761 = vunpack.c.l.bf16 %v1697
  %v1762 = vunpack.c.l.bf16 %v1698
  %v1763 = vunpack.c.l.bf16 %v1699
  %v1764 = vunpack.c.l.bf16 %v1700
  %v1765 = vunpack.c.l.bf16 %v1701
  %v1766 = vunpack.c.l.bf16 %v1702
  %v1767 = vunpack.c.l.bf16 %v1703
  %v1768 = vunpack.c.l.bf16 %v1704
  %v1769 = vunpack.c.l.bf16 %v1705
  %v1770 = vunpack.c.l.bf16 %v1706
  %v1771 = vunpack.c.l.bf16 %v1707
  %v1772 = vunpack.c.l.bf16 %v1708
  %v1773 = vunpack.c.l.bf16 %v1709
  %v1774 = vunpack.c.l.bf16 %v1710
  %v1775 = vunpack.c.l.bf16 %v1711
  %v1776 = vunpack.c.l.bf16 %v1712
  %v1777 = vunpack.c.l.bf16 %v1713
  %v1778 = vunpack.c.l.bf16 %v1714
  %v1779 = vunpack.c.l.bf16 %v1715
  %v1780 = vunpack.c.l.bf16 %v1716
  %v1781 = vunpack.c.l.bf16 %v1717
  %v1782 = vunpack.c.l.bf16 %v1718
  %v1783 = vunpack.c.l.bf16 %v1719
  %v1784 = vunpack.c.l.bf16 %v1720
  %v1785 = vunpack.c.l.bf16 %v1721
  %v1786 = vunpack.c.l.bf16 %v1722
  %v1787 = vunpack.c.l.bf16 %v1723
  %v1788 = vunpack.c.l.bf16 %v1724
  %v1789 = vunpack.c.l.bf16 %v1725
  %v1790 = vunpack.c.l.bf16 %v1726
  %v1791 = vunpack.c.l.bf16 %v1727
  %v1792 = vunpack.c.l.bf16 %v1728
  %v1793 = vunpack.c.l.bf16 %v1729
  %v1794 = vunpack.c.l.bf16 %v1730
  %v1795 = vunpack.c.l.bf16 %v1731
  %v1796 = vunpack.c.l.bf16 %v1732
  %v1797 = vunpack.c.l.bf16 %v1733
  %v1798 = vunpack.c.l.bf16 %v1734
  %v1799 = vunpack.c.l.bf16 %v1735
  %v1800 = vunpack.c.l.bf16 %v1736
  %v1801 = vunpack.c.l.bf16 %v1737
  %v1802 = vunpack.c.l.bf16 %v1738
  %v1803 = vunpack.c.l.bf16 %v1739
  %v1804 = vunpack.c.l.bf16 %v1740
  %v1805 = vunpack.c.l.bf16 %v1741
  %v1806 = vunpack.c.l.bf16 %v1742
  %v1807 = vunpack.c.l.bf16 %v1743
  %v1808 = vunpack.c.l.bf16 %v1744
  %v1809 = vunpack.c.l.bf16 %v1745
  %v1810 = vunpack.c.l.bf16 %v1746
  %v1811 = vunpack.c.l.bf16 %v1747
  %v1812 = vunpack.c.l.bf16 %v1748
  %v1813 = vunpack.c.l.bf16 %v1749
  %v1814 = vunpack.c.l.bf16 %v1750
  %v1815 = vunpack.c.l.bf16 %v1751
  %v1816 = vunpack.c.l.bf16 %v1752
  %v1817 = vunpack.c.l.bf16 %v1753
  %v1818 = vunpack.c.l.bf16 %v1754
  %v1819 = vadd.f32 %v1627, %v1755
  %v1820 = vadd.f32 %v1628, %v1756
  %v1821 = vadd.f32 %v1629, %v1757
  %v1822 = vadd.f32 %v1630, %v1758
  %v1823 = vadd.f32 %v1631, %v1759
  %v1824 = vadd.f32 %v1632, %v1760
  %v1825 = vadd.f32 %v1633, %v1761
  %v1826 = vadd.f32 %v1634, %v1762
  %v1827 = vadd.f32 %v1635, %v1763
  %v1828 = vadd.f32 %v1636, %v1764
  %v1829 = vadd.f32 %v1637, %v1765
  %v1830 = vadd.f32 %v1638, %v1766
  %v1831 = vadd.f32 %v1639, %v1767
  %v1832 = vadd.f32 %v1640, %v1768
  %v1833 = vadd.f32 %v1641, %v1769
  %v1834 = vadd.f32 %v1642, %v1770
  %v1835 = vadd.f32 %v1643, %v1771
  %v1836 = vadd.f32 %v1644, %v1772
  %v1837 = vadd.f32 %v1645, %v1773
  %v1838 = vadd.f32 %v1646, %v1774
  %v1839 = vadd.f32 %v1647, %v1775
  %v1840 = vadd.f32 %v1648, %v1776
  %v1841 = vadd.f32 %v1649, %v1777
  %v1842 = vadd.f32 %v1650, %v1778
  %v1843 = vadd.f32 %v1651, %v1779
  %v1844 = vadd.f32 %v1652, %v1780
  %v1845 = vadd.f32 %v1653, %v1781
  %v1846 = vadd.f32 %v1654, %v1782
  %v1847 = vadd.f32 %v1655, %v1783
  %v1848 = vadd.f32 %v1656, %v1784
  %v1849 = vadd.f32 %v1657, %v1785
  %v1850 = vadd.f32 %v1658, %v1786
  %v1851 = vadd.f32 %v1659, %v1787
  %v1852 = vadd.f32 %v1660, %v1788
  %v1853 = vadd.f32 %v1661, %v1789
  %v1854 = vadd.f32 %v1662, %v1790
  %v1855 = vadd.f32 %v1663, %v1791
  %v1856 = vadd.f32 %v1664, %v1792
  %v1857 = vadd.f32 %v1665, %v1793
  %v1858 = vadd.f32 %v1666, %v1794
  %v1859 = vadd.f32 %v1667, %v1795
  %v1860 = vadd.f32 %v1668, %v1796
  %v1861 = vadd.f32 %v1669, %v1797
  %v1862 = vadd.f32 %v1670, %v1798
  %v1863 = vadd.f32 %v1671, %v1799
  %v1864 = vadd.f32 %v1672, %v1800
  %v1865 = vadd.f32 %v1673, %v1801
  %v1866 = vadd.f32 %v1674, %v1802
  %v1867 = vadd.f32 %v1675, %v1803
  %v1868 = vadd.f32 %v1676, %v1804
  %v1869 = vadd.f32 %v1677, %v1805
  %v1870 = vadd.f32 %v1678, %v1806
  %v1871 = vadd.f32 %v1679, %v1807
  %v1872 = vadd.f32 %v1680, %v1808
  %v1873 = vadd.f32 %v1681, %v1809
  %v1874 = vadd.f32 %v1682, %v1810
  %v1875 = vadd.f32 %v1683, %v1811
  %v1876 = vadd.f32 %v1684, %v1812
  %v1877 = vadd.f32 %v1685, %v1813
  %v1878 = vadd.f32 %v1686, %v1814
  %v1879 = vadd.f32 %v1687, %v1815
  %v1880 = vadd.f32 %v1688, %v1816
  %v1881 = vadd.f32 %v1689, %v1817
  %v1882 = vadd.f32 %v1690, %v1818
  %1883 = vst [vmem:[%s4] sm:$0xff] %v1819
  %1884 = vst [vmem:[%s4 + $0x8] sm:$0xff] %v1820
  %1885 = vst [vmem:[%s4 + $0x10] sm:$0xff] %v1821
  %1886 = vst [vmem:[%s4 + $0x18] sm:$0xff] %v1822
  %1887 = vst [vmem:[%s4 + $0x20] sm:$0xff] %v1823
  %1888 = vst [vmem:[%s4 + $0x28] sm:$0xff] %v1824
  %1889 = vst [vmem:[%s4 + $0x30] sm:$0xff] %v1825
  %1890 = vst [vmem:[%s4 + $0x38] sm:$0xff] %v1826
  %1891 = vst [vmem:[%s4 + $0x40] sm:$0xff] %v1827
  %1892 = vst [vmem:[%s4 + $0x48] sm:$0xff] %v1828
  %1893 = vst [vmem:[%s4 + $0x50] sm:$0xff] %v1829
  %1894 = vst [vmem:[%s4 + $0x58] sm:$0xff] %v1830
  %1895 = vst [vmem:[%s4 + $0x60] sm:$0xff] %v1831
  %1896 = vst [vmem:[%s4 + $0x68] sm:$0xff] %v1832
  %1897 = vst [vmem:[%s4 + $0x70] sm:$0xff] %v1833
  %1898 = vst [vmem:[%s4 + $0x78] sm:$0xff] %v1834
  %1899 = vst [vmem:[%s4 + $0x80] sm:$0xff] %v1835
  %1900 = vst [vmem:[%s4 + $0x88] sm:$0xff] %v1836
  %1901 = vst [vmem:[%s4 + $0x90] sm:$0xff] %v1837
  %1902 = vst [vmem:[%s4 + $0x98] sm:$0xff] %v1838
  %1903 = vst [vmem:[%s4 + $0xa0] sm:$0xff] %v1839
  %1904 = vst [vmem:[%s4 + $0xa8] sm:$0xff] %v1840
  %1905 = vst [vmem:[%s4 + $0xb0] sm:$0xff] %v1841
  %1906 = vst [vmem:[%s4 + $0xb8] sm:$0xff] %v1842
  %1907 = vst [vmem:[%s4 + $0xc0] sm:$0xff] %v1843
  %1908 = vst [vmem:[%s4 + $0xc8] sm:$0xff] %v1844
  %1909 = vst [vmem:[%s4 + $0xd0] sm:$0xff] %v1845
  %1910 = vst [vmem:[%s4 + $0xd8] sm:$0xff] %v1846
  %1911 = vst [vmem:[%s4 + $0xe0] sm:$0xff] %v1847
  %1912 = vst [vmem:[%s4 + $0xe8] sm:$0xff] %v1848
  %1913 = vst [vmem:[%s4 + $0xf0] sm:$0xff] %v1849
  %1914 = vst [vmem:[%s4 + $0xf8] sm:$0xff] %v1850
  %1915 = vst [vmem:[%s4 + $0x100] sm:$0xff] %v1851
  %1916 = vst [vmem:[%s4 + $0x108] sm:$0xff] %v1852
  %1917 = vst [vmem:[%s4 + $0x110] sm:$0xff] %v1853
  %1918 = vst [vmem:[%s4 + $0x118] sm:$0xff] %v1854
  %1919 = vst [vmem:[%s4 + $0x120] sm:$0xff] %v1855
  %1920 = vst [vmem:[%s4 + $0x128] sm:$0xff] %v1856
  %1921 = vst [vmem:[%s4 + $0x130] sm:$0xff] %v1857
  %1922 = vst [vmem:[%s4 + $0x138] sm:$0xff] %v1858
  %1923 = vst [vmem:[%s4 + $0x140] sm:$0xff] %v1859
  %1924 = vst [vmem:[%s4 + $0x148] sm:$0xff] %v1860
  %1925 = vst [vmem:[%s4 + $0x150] sm:$0xff] %v1861
  %1926 = vst [vmem:[%s4 + $0x158] sm:$0xff] %v1862
  %1927 = vst [vmem:[%s4 + $0x160] sm:$0xff] %v1863
  %1928 = vst [vmem:[%s4 + $0x168] sm:$0xff] %v1864
  %1929 = vst [vmem:[%s4 + $0x170] sm:$0xff] %v1865
  %1930 = vst [vmem:[%s4 + $0x178] sm:$0xff] %v1866
  %1931 = vst [vmem:[%s4 + $0x180] sm:$0xff] %v1867
  %1932 = vst [vmem:[%s4 + $0x188] sm:$0xff] %v1868
  %1933 = vst [vmem:[%s4 + $0x190] sm:$0xff] %v1869
  %1934 = vst [vmem:[%s4 + $0x198] sm:$0xff] %v1870
  %1935 = vst [vmem:[%s4 + $0x1a0] sm:$0xff] %v1871
  %1936 = vst [vmem:[%s4 + $0x1a8] sm:$0xff] %v1872
  %1937 = vst [vmem:[%s4 + $0x1b0] sm:$0xff] %v1873
  %1938 = vst [vmem:[%s4 + $0x1b8] sm:$0xff] %v1874
  %1939 = vst [vmem:[%s4 + $0x1c0] sm:$0xff] %v1875
  %1940 = vst [vmem:[%s4 + $0x1c8] sm:$0xff] %v1876
  %1941 = vst [vmem:[%s4 + $0x1d0] sm:$0xff] %v1877
  %1942 = vst [vmem:[%s4 + $0x1d8] sm:$0xff] %v1878
  %1943 = vst [vmem:[%s4 + $0x1e0] sm:$0xff] %v1879
  %1944 = vst [vmem:[%s4 + $0x1e8] sm:$0xff] %v1880
  %1945 = vst [vmem:[%s4 + $0x1f0] sm:$0xff] %v1881
  %1946 = vst [vmem:[%s4 + $0x1f8] sm:$0xff] %v1882
  // Predicated region
  $region18: #{generator_forward.18} parent=0 // pred_check
    _
  $region19: #{generator_forward.18} parent=0 // pred_check_branch
    %1948 = sbr.rel (0) target = $region21
  $region20: #{generator_forward.18} parent=0 // pred_region
    _
  $region21: #{generator_forward.18} parent=0 // pred_fallthru
    _
  // Predicated region
  $region22: #{generator_forward.18} parent=0 // pred_check
    _
  $region23: #{generator_forward.18} parent=0 // pred_check_branch
    %1950 = sbr.rel (0) target = $region25
  $region24: #{generator_forward.18} parent=0 // pred_region
    _
  $region25: #{generator_forward.18} parent=0 // pred_fallthru
    _

// kernel: generator_forward.19
$region0: #{generator_forward.19}
  #allocation0 [shape = 'u32[]', space=smem, size = 0x4, offset = 0x4, fixed_abs, tag = 'smem constant byte address 0x4 - core index']
  #allocation1 [shape = 'u32[144,128]{1,0:T(1,128)}', space=vmem, size = 0x12000, scoped, tag = 'internal scratch']
  %s0 = inlined_call_operand.vmem [shape: bf16[512,128], index: 0, kind: input, shape index: {}]
  %s1 = inlined_call_operand.vmem [shape: bf16[128,128], index: 1, kind: input, shape index: {}]
  %s2 = inlined_call_operand.vmem [shape: f32[1,128], index: 2, kind: input, shape index: {}]
  %s3 = inlined_call_operand.vmem [shape: f32[512,128], index: 3, kind: output, shape index: {}]
  %s4 = sld [smem:[#allocation0]]
  $region22: #{generator_forward.19} parent=0
    _
  %s6 = ssub.s32 1, %s4
  %s7 = scalar_select 0, %s6, %s4
  // Predicated region
  $region2: #{generator_forward.19} parent=0 // pred_check
    _
  $region3: #{generator_forward.19} parent=0 // pred_check_branch
    %9 = sbr.rel (0) target = $region5
  $region4: #{generator_forward.19} parent=0 // pred_region
    _
  $region5: #{generator_forward.19} parent=0 // pred_fallthru
    _
  // Predicated region
  $region6: #{generator_forward.19} parent=0 // pred_check
    _
  $region7: #{generator_forward.19} parent=0 // pred_check_branch
    %11 = sbr.rel (0) target = $region9
  $region8: #{generator_forward.19} parent=0 // pred_region
    _
  $region9: #{generator_forward.19} parent=0 // pred_fallthru
    _
  // Predicated region
  $region10: #{generator_forward.19} parent=0 // pred_check
    _
  $region11: #{generator_forward.19} parent=0 // pred_check_branch
    %13 = sbr.rel (0) target = $region13
  $region12: #{generator_forward.19} parent=0 // pred_region
    _
  $region13: #{generator_forward.19} parent=0 // pred_fallthru
    _
  %v15 = vld [vmem:[%s0] sm:$0xf]
  %v16 = vld [vmem:[%s0 + $0x4] sm:$0xf]
  %v17 = vld [vmem:[%s0 + $0x8] sm:$0xf]
  %v18 = vld [vmem:[%s0 + $0xc] sm:$0xf]
  %v19 = vld [vmem:[%s0 + $0x10] sm:$0xf]
  %v20 = vld [vmem:[%s0 + $0x14] sm:$0xf]
  %v21 = vld [vmem:[%s0 + $0x18] sm:$0xf]
  %v22 = vld [vmem:[%s0 + $0x1c] sm:$0xf]
  %v23 = vld [vmem:[%s0 + $0x20] sm:$0xf]
  %v24 = vld [vmem:[%s0 + $0x24] sm:$0xf]
  %v25 = vld [vmem:[%s0 + $0x28] sm:$0xf]
  %v26 = vld [vmem:[%s0 + $0x2c] sm:$0xf]
  %v27 = vld [vmem:[%s0 + $0x30] sm:$0xf]
  %v28 = vld [vmem:[%s0 + $0x34] sm:$0xf]
  %v29 = vld [vmem:[%s0 + $0x38] sm:$0xf]
  %v30 = vld [vmem:[%s0 + $0x3c] sm:$0xf]
  %v31 = vld [vmem:[%s0 + $0x40] sm:$0xf]
  %v32 = vld [vmem:[%s0 + $0x44] sm:$0xf]
  %v33 = vld [vmem:[%s0 + $0x48] sm:$0xf]
  %v34 = vld [vmem:[%s0 + $0x4c] sm:$0xf]
  %v35 = vld [vmem:[%s0 + $0x50] sm:$0xf]
  %v36 = vld [vmem:[%s0 + $0x54] sm:$0xf]
  %v37 = vld [vmem:[%s0 + $0x58] sm:$0xf]
  %v38 = vld [vmem:[%s0 + $0x5c] sm:$0xf]
  %v39 = vld [vmem:[%s0 + $0x60] sm:$0xf]
  %v40 = vld [vmem:[%s0 + $0x64] sm:$0xf]
  %v41 = vld [vmem:[%s0 + $0x68] sm:$0xf]
  %v42 = vld [vmem:[%s0 + $0x6c] sm:$0xf]
  %v43 = vld [vmem:[%s0 + $0x70] sm:$0xf]
  %v44 = vld [vmem:[%s0 + $0x74] sm:$0xf]
  %v45 = vld [vmem:[%s0 + $0x78] sm:$0xf]
  %v46 = vld [vmem:[%s0 + $0x7c] sm:$0xf]
  %v47 = vld [vmem:[%s0 + $0x80] sm:$0xf]
  %v48 = vld [vmem:[%s0 + $0x84] sm:$0xf]
  %v49 = vld [vmem:[%s0 + $0x88] sm:$0xf]
  %v50 = vld [vmem:[%s0 + $0x8c] sm:$0xf]
  %v51 = vld [vmem:[%s0 + $0x90] sm:$0xf]
  %v52 = vld [vmem:[%s0 + $0x94] sm:$0xf]
  %v53 = vld [vmem:[%s0 + $0x98] sm:$0xf]
  %v54 = vld [vmem:[%s0 + $0x9c] sm:$0xf]
  %v55 = vld [vmem:[%s0 + $0xa0] sm:$0xf]
  %v56 = vld [vmem:[%s0 + $0xa4] sm:$0xf]
  %v57 = vld [vmem:[%s0 + $0xa8] sm:$0xf]
  %v58 = vld [vmem:[%s0 + $0xac] sm:$0xf]
  %v59 = vld [vmem:[%s0 + $0xb0] sm:$0xf]
  %v60 = vld [vmem:[%s0 + $0xb4] sm:$0xf]
  %v61 = vld [vmem:[%s0 + $0xb8] sm:$0xf]
  %v62 = vld [vmem:[%s0 + $0xbc] sm:$0xf]
  %v63 = vld [vmem:[%s0 + $0xc0] sm:$0xf]
  %v64 = vld [vmem:[%s0 + $0xc4] sm:$0xf]
  %v65 = vld [vmem:[%s0 + $0xc8] sm:$0xf]
  %v66 = vld [vmem:[%s0 + $0xcc] sm:$0xf]
  %v67 = vld [vmem:[%s0 + $0xd0] sm:$0xf]
  %v68 = vld [vmem:[%s0 + $0xd4] sm:$0xf]
  %v69 = vld [vmem:[%s0 + $0xd8] sm:$0xf]
  %v70 = vld [vmem:[%s0 + $0xdc] sm:$0xf]
  %v71 = vld [vmem:[%s0 + $0xe0] sm:$0xf]
  %v72 = vld [vmem:[%s0 + $0xe4] sm:$0xf]
  %v73 = vld [vmem:[%s0 + $0xe8] sm:$0xf]
  %v74 = vld [vmem:[%s0 + $0xec] sm:$0xf]
  %v75 = vld [vmem:[%s0 + $0xf0] sm:$0xf]
  %v76 = vld [vmem:[%s0 + $0xf4] sm:$0xf]
  %v77 = vld [vmem:[%s0 + $0xf8] sm:$0xf]
  %v78 = vld [vmem:[%s0 + $0xfc] sm:$0xf]
  %v79 = vld [vmem:[%s1] sm:$0xf]
  %v80 = vld [vmem:[%s1 + $0x4] sm:$0xf]
  %v81 = vld [vmem:[%s1 + $0x8] sm:$0xf]
  %v82 = vld [vmem:[%s1 + $0xc] sm:$0xf]
  %v83 = vld [vmem:[%s1 + $0x10] sm:$0xf]
  %v84 = vld [vmem:[%s1 + $0x14] sm:$0xf]
  %v85 = vld [vmem:[%s1 + $0x18] sm:$0xf]
  %v86 = vld [vmem:[%s1 + $0x1c] sm:$0xf]
  %v87 = vld [vmem:[%s1 + $0x20] sm:$0xf]
  %v88 = vld [vmem:[%s1 + $0x24] sm:$0xf]
  %v89 = vld [vmem:[%s1 + $0x28] sm:$0xf]
  %v90 = vld [vmem:[%s1 + $0x2c] sm:$0xf]
  %v91 = vld [vmem:[%s1 + $0x30] sm:$0xf]
  %v92 = vld [vmem:[%s1 + $0x34] sm:$0xf]
  %v93 = vld [vmem:[%s1 + $0x38] sm:$0xf]
  %v94 = vld [vmem:[%s1 + $0x3c] sm:$0xf]
  %v95 = vld [vmem:[%s2] sm:$0x1]
  %v97 = vlaneseq
  %v98 = vshrl.u32 %v97, 7
  %v99 = vsub.s32 0, %v98
  %v100 = vrot.slane %v95, %v99
  %v166 = vunpack.c.l.b16 %v15
  %v167 = vunpack.c.l.b16 %v16
  %v168 = vunpack.c.l.b16 %v17
  %v169 = vunpack.c.l.b16 %v18
  %v170 = vunpack.c.l.b16 %v19
  %v171 = vunpack.c.l.b16 %v20
  %v172 = vunpack.c.l.b16 %v21
  %v173 = vunpack.c.l.b16 %v22
  %v174 = vunpack.c.l.b16 %v23
  %v175 = vunpack.c.l.b16 %v24
  %v176 = vunpack.c.l.b16 %v25
  %v177 = vunpack.c.l.b16 %v26
  %v178 = vunpack.c.l.b16 %v27
  %v179 = vunpack.c.l.b16 %v28
  %v180 = vunpack.c.l.b16 %v29
  %v181 = vunpack.c.l.b16 %v30
  %v182 = vunpack.c.l.b16 %v31
  %v183 = vunpack.c.l.b16 %v32
  %v184 = vunpack.c.l.b16 %v33
  %v185 = vunpack.c.l.b16 %v34
  %v186 = vunpack.c.l.b16 %v35
  %v187 = vunpack.c.l.b16 %v36
  %v188 = vunpack.c.l.b16 %v37
  %v189 = vunpack.c.l.b16 %v38
  %v190 = vunpack.c.l.b16 %v39
  %v191 = vunpack.c.l.b16 %v40
  %v192 = vunpack.c.l.b16 %v41
  %v193 = vunpack.c.l.b16 %v42
  %v194 = vunpack.c.l.b16 %v43
  %v195 = vunpack.c.l.b16 %v44
  %v196 = vunpack.c.l.b16 %v45
  %v197 = vunpack.c.l.b16 %v46
  %v198 = vunpack.c.l.b16 %v47
  %v199 = vunpack.c.l.b16 %v48
  %v200 = vunpack.c.l.b16 %v49
  %v201 = vunpack.c.l.b16 %v50
  %v202 = vunpack.c.l.b16 %v51
  %v203 = vunpack.c.l.b16 %v52
  %v204 = vunpack.c.l.b16 %v53
  %v205 = vunpack.c.l.b16 %v54
  %v206 = vunpack.c.l.b16 %v55
  %v207 = vunpack.c.l.b16 %v56
  %v208 = vunpack.c.l.b16 %v57
  %v209 = vunpack.c.l.b16 %v58
  %v210 = vunpack.c.l.b16 %v59
  %v211 = vunpack.c.l.b16 %v60
  %v212 = vunpack.c.l.b16 %v61
  %v213 = vunpack.c.l.b16 %v62
  %v214 = vunpack.c.l.b16 %v63
  %v215 = vunpack.c.l.b16 %v64
  %v216 = vunpack.c.l.b16 %v65
  %v217 = vunpack.c.l.b16 %v66
  %v218 = vunpack.c.l.b16 %v67
  %v219 = vunpack.c.l.b16 %v68
  %v220 = vunpack.c.l.b16 %v69
  %v221 = vunpack.c.l.b16 %v70
  %v222 = vunpack.c.l.b16 %v71
  %v223 = vunpack.c.l.b16 %v72
  %v224 = vunpack.c.l.b16 %v73
  %v225 = vunpack.c.l.b16 %v74
  %v226 = vunpack.c.l.b16 %v75
  %v227 = vunpack.c.l.b16 %v76
  %v228 = vunpack.c.l.b16 %v77
  %v229 = vunpack.c.l.b16 %v78
  %v230 = vpack.c.b16 %v167, %v166
  %v231 = vpack.c.b16 %v169, %v168
  %v232 = vpack.c.b16 %v171, %v170
  %v233 = vpack.c.b16 %v173, %v172
  %v234 = vpack.c.b16 %v175, %v174
  %v235 = vpack.c.b16 %v177, %v176
  %v236 = vpack.c.b16 %v179, %v178
  %v237 = vpack.c.b16 %v181, %v180
  %v238 = vpack.c.b16 %v183, %v182
  %v239 = vpack.c.b16 %v185, %v184
  %v240 = vpack.c.b16 %v187, %v186
  %v241 = vpack.c.b16 %v189, %v188
  %v242 = vpack.c.b16 %v191, %v190
  %v243 = vpack.c.b16 %v193, %v192
  %v244 = vpack.c.b16 %v195, %v194
  %v245 = vpack.c.b16 %v197, %v196
  %v246 = vpack.c.b16 %v199, %v198
  %v247 = vpack.c.b16 %v201, %v200
  %v248 = vpack.c.b16 %v203, %v202
  %v249 = vpack.c.b16 %v205, %v204
  %v250 = vpack.c.b16 %v207, %v206
  %v251 = vpack.c.b16 %v209, %v208
  %v252 = vpack.c.b16 %v211, %v210
  %v253 = vpack.c.b16 %v213, %v212
  %v254 = vpack.c.b16 %v215, %v214
  %v255 = vpack.c.b16 %v217, %v216
  %v256 = vpack.c.b16 %v219, %v218
  %v257 = vpack.c.b16 %v221, %v220
  %v258 = vpack.c.b16 %v223, %v222
  %v259 = vpack.c.b16 %v225, %v224
  %v260 = vpack.c.b16 %v227, %v226
  %v261 = vpack.c.b16 %v229, %v228
  %v310 = vunpack.c.l.b16 %v79
  %v311 = vunpack.c.l.b16 %v80
  %v312 = vunpack.c.l.b16 %v81
  %v313 = vunpack.c.l.b16 %v82
  %v314 = vunpack.c.l.b16 %v83
  %v315 = vunpack.c.l.b16 %v84
  %v316 = vunpack.c.l.b16 %v85
  %v317 = vunpack.c.l.b16 %v86
  %v318 = vunpack.c.l.b16 %v87
  %v319 = vunpack.c.l.b16 %v88
  %v320 = vunpack.c.l.b16 %v89
  %v321 = vunpack.c.l.b16 %v90
  %v322 = vunpack.c.l.b16 %v91
  %v323 = vunpack.c.l.b16 %v92
  %v324 = vunpack.c.l.b16 %v93
  %v325 = vunpack.c.l.b16 %v94
  %v326 = vpack.c.b16 %v311, %v310
  %v327 = vpack.c.b16 %v313, %v312
  %v328 = vpack.c.b16 %v315, %v314
  %v329 = vpack.c.b16 %v317, %v316
  %v330 = vpack.c.b16 %v319, %v318
  %v331 = vpack.c.b16 %v321, %v320
  %v332 = vpack.c.b16 %v323, %v322
  %v333 = vpack.c.b16 %v325, %v324
  %342 = vmatprep.subr.bf16.mxu0 0
  %343 = vmatpush1.bf16.msra.mxu0 %v326
  %344 = vmatprep.subr.bf16.mxu0 0
  %345 = vmatpush1.bf16.msra.mxu0 %v327
  %346 = vmatprep.subr.bf16.mxu0 0
  %347 = vmatpush1.bf16.msra.mxu0 %v328
  %348 = vmatprep.subr.bf16.mxu0 0
  %349 = vmatpush1.bf16.msra.mxu0 %v329
  %350 = vmatprep.subr.bf16.mxu0 0
  %351 = vmatpush1.bf16.msra.mxu0 %v330
  %352 = vmatprep.subr.bf16.mxu0 0
  %353 = vmatpush1.bf16.msra.mxu0 %v331
  %354 = vmatprep.subr.bf16.mxu0 0
  %355 = vmatpush1.bf16.msra.mxu0 %v332
  %356 = vmatprep.subr.bf16.mxu0 0
  %357 = vmatpush1.bf16.msra.mxu0 %v333
  %358 = vmatprep.subr.bf16.mxu0 0
  %359 = vmatpush1.bf16.msra.mxu0 0
  %360 = vmatprep.subr.bf16.mxu0 0
  %361 = vmatpush1.bf16.msra.mxu0 0
  %362 = vmatprep.subr.bf16.mxu0 0
  %363 = vmatpush1.bf16.msra.mxu0 0
  %364 = vmatprep.subr.bf16.mxu0 0
  %365 = vmatpush1.bf16.msra.mxu0 0
  %366 = vmatprep.subr.bf16.mxu0 0
  %367 = vmatpush1.bf16.msra.mxu0 0
  %368 = vmatprep.subr.bf16.mxu0 0
  %369 = vmatpush1.bf16.msra.mxu0 0
  %370 = vmatprep.subr.bf16.mxu0 0
  %371 = vmatpush1.bf16.msra.mxu0 0
  %372 = vmatprep.subr.bf16.mxu0 0
  %373 = vmatpush1.bf16.msra.mxu0 0
  %374 = vmatprep.mubr.bf16.mxu0 0
  %375 = vmatmul.mubr.bf16.gmra.mrb[0].mxu0 %v230
  %v376 = vpop.f32.mrb[0].mxu0
  %v377 = vadd.f32 %v100, %v376
  %v378 = vpop.f32.mrb[0].mxu0
  %v379 = vpop.f32.mrb[0].mxu0
  %v380 = vadd.f32 %v100, %v379
  %v381 = vpop.f32.mrb[0].mxu0
  %382 = vmatprep.mubr.bf16.mxu0 0
  %383 = vmatmul.mubr.bf16.gmra.mrb[0].mxu0 %v231
  %v384 = vpop.f32.mrb[0].mxu0
  %v385 = vadd.f32 %v100, %v384
  %v386 = vpop.f32.mrb[0].mxu0
  %v387 = vpop.f32.mrb[0].mxu0
  %v388 = vadd.f32 %v100, %v387
  %v389 = vpop.f32.mrb[0].mxu0
  %390 = vmatprep.mubr.bf16.mxu0 0
  %391 = vmatmul.mubr.bf16.gmra.mrb[0].mxu0 %v232
  %v392 = vpop.f32.mrb[0].mxu0
  %v393 = vadd.f32 %v100, %v392
  %v394 = vpop.f32.mrb[0].mxu0
  %v395 = vpop.f32.mrb[0].mxu0
  %v396 = vadd.f32 %v100, %v395
  %v397 = vpop.f32.mrb[0].mxu0
  %398 = vmatprep.mubr.bf16.mxu0 0
  %399 = vmatmul.mubr.bf16.gmra.mrb[0].mxu0 %v233
  %v400 = vpop.f32.mrb[0].mxu0
  %v401 = vadd.f32 %v100, %v400
  %v402 = vpop.f32.mrb[0].mxu0
  %v403 = vpop.f32.mrb[0].mxu0
  %v404 = vadd.f32 %v100, %v403
  %v405 = vpop.f32.mrb[0].mxu0
  %406 = vmatprep.mubr.bf16.mxu0 0
  %407 = vmatmul.mubr.bf16.gmra.mrb[0].mxu0 %v234
  %v408 = vpop.f32.mrb[0].mxu0
  %v409 = vadd.f32 %v100, %v408
  %v410 = vpop.f32.mrb[0].mxu0
  %v411 = vpop.f32.mrb[0].mxu0
  %v412 = vadd.f32 %v100, %v411
  %v413 = vpop.f32.mrb[0].mxu0
  %414 = vmatprep.mubr.bf16.mxu0 0
  %415 = vmatmul.mubr.bf16.gmra.mrb[0].mxu0 %v235
  %v416 = vpop.f32.mrb[0].mxu0
  %v417 = vadd.f32 %v100, %v416
  %v418 = vpop.f32.mrb[0].mxu0
  %v419 = vpop.f32.mrb[0].mxu0
  %v420 = vadd.f32 %v100, %v419
  %v421 = vpop.f32.mrb[0].mxu0
  %422 = vmatprep.mubr.bf16.mxu0 0
  %423 = vmatmul.mubr.bf16.gmra.mrb[0].mxu0 %v236
  %v424 = vpop.f32.mrb[0].mxu0
  %v425 = vadd.f32 %v100, %v424
  %v426 = vpop.f32.mrb[0].mxu0
  %v427 = vpop.f32.mrb[0].mxu0
  %v428 = vadd.f32 %v100, %v427
  %v429 = vpop.f32.mrb[0].mxu0
  %430 = vmatprep.mubr.bf16.mxu0 0
  %431 = vmatmul.mubr.bf16.gmra.mrb[0].mxu0 %v237
  %v432 = vpop.f32.mrb[0].mxu0
  %v433 = vadd.f32 %v100, %v432
  %v434 = vpop.f32.mrb[0].mxu0
  %v435 = vpop.f32.mrb[0].mxu0
  %v436 = vadd.f32 %v100, %v435
  %v437 = vpop.f32.mrb[0].mxu0
  %438 = vmatprep.mubr.bf16.mxu0 0
  %439 = vmatmul.mubr.bf16.gmra.mrb[0].mxu0 %v238
  %v440 = vpop.f32.mrb[0].mxu0
  %v441 = vadd.f32 %v100, %v440
  %v442 = vpop.f32.mrb[0].mxu0
  %v443 = vpop.f32.mrb[0].mxu0
  %v444 = vadd.f32 %v100, %v443
  %v445 = vpop.f32.mrb[0].mxu0
  %446 = vmatprep.mubr.bf16.mxu0 0
  %447 = vmatmul.mubr.bf16.gmra.mrb[0].mxu0 %v239
  %v448 = vpop.f32.mrb[0].mxu0
  %v449 = vadd.f32 %v100, %v448
  %v450 = vpop.f32.mrb[0].mxu0
  %v451 = vpop.f32.mrb[0].mxu0
  %v452 = vadd.f32 %v100, %v451
  %v453 = vpop.f32.mrb[0].mxu0
  %454 = vmatprep.mubr.bf16.mxu0 0
  %455 = vmatmul.mubr.bf16.gmra.mrb[0].mxu0 %v240
  %v456 = vpop.f32.mrb[0].mxu0
  %v457 = vadd.f32 %v100, %v456
  %v458 = vpop.f32.mrb[0].mxu0
  %v459 = vpop.f32.mrb[0].mxu0
  %v460 = vadd.f32 %v100, %v459
  %v461 = vpop.f32.mrb[0].mxu0
  %462 = vmatprep.mubr.bf16.mxu0 0
  %463 = vmatmul.mubr.bf16.gmra.mrb[0].mxu0 %v241
  %v464 = vpop.f32.mrb[0].mxu0
  %v465 = vadd.f32 %v100, %v464
  %v466 = vpop.f32.mrb[0].mxu0
  %v467 = vpop.f32.mrb[0].mxu0
  %v468 = vadd.f32 %v100, %v467
  %v469 = vpop.f32.mrb[0].mxu0
  %470 = vmatprep.mubr.bf16.mxu0 0
  %471 = vmatmul.mubr.bf16.gmra.mrb[0].mxu0 %v242
  %v472 = vpop.f32.mrb[0].mxu0
  %v473 = vadd.f32 %v100, %v472
  %v474 = vpop.f32.mrb[0].mxu0
  %v475 = vpop.f32.mrb[0].mxu0
  %v476 = vadd.f32 %v100, %v475
  %v477 = vpop.f32.mrb[0].mxu0
  %478 = vmatprep.mubr.bf16.mxu0 0
  %479 = vmatmul.mubr.bf16.gmra.mrb[0].mxu0 %v243
  %v480 = vpop.f32.mrb[0].mxu0
  %v481 = vadd.f32 %v100, %v480
  %v482 = vpop.f32.mrb[0].mxu0
  %v483 = vpop.f32.mrb[0].mxu0
  %v484 = vadd.f32 %v100, %v483
  %v485 = vpop.f32.mrb[0].mxu0
  %486 = vmatprep.mubr.bf16.mxu0 0
  %487 = vmatmul.mubr.bf16.gmra.mrb[0].mxu0 %v244
  %v488 = vpop.f32.mrb[0].mxu0
  %v489 = vadd.f32 %v100, %v488
  %v490 = vpop.f32.mrb[0].mxu0
  %v491 = vpop.f32.mrb[0].mxu0
  %v492 = vadd.f32 %v100, %v491
  %v493 = vpop.f32.mrb[0].mxu0
  %494 = vmatprep.mubr.bf16.mxu0 0
  %495 = vmatmul.mubr.bf16.gmra.mrb[0].mxu0 %v245
  %v496 = vpop.f32.mrb[0].mxu0
  %v497 = vadd.f32 %v100, %v496
  %v498 = vpop.f32.mrb[0].mxu0
  %v499 = vpop.f32.mrb[0].mxu0
  %v500 = vadd.f32 %v100, %v499
  %v501 = vpop.f32.mrb[0].mxu0
  %502 = vmatprep.mubr.bf16.mxu0 0
  %503 = vmatmul.mubr.bf16.gmra.mrb[0].mxu0 %v246
  %v504 = vpop.f32.mrb[0].mxu0
  %v505 = vadd.f32 %v100, %v504
  %v506 = vpop.f32.mrb[0].mxu0
  %v507 = vpop.f32.mrb[0].mxu0
  %v508 = vadd.f32 %v100, %v507
  %v509 = vpop.f32.mrb[0].mxu0
  %510 = vmatprep.mubr.bf16.mxu0 0
  %511 = vmatmul.mubr.bf16.gmra.mrb[0].mxu0 %v247
  %v512 = vpop.f32.mrb[0].mxu0
  %v513 = vadd.f32 %v100, %v512
  %v514 = vpop.f32.mrb[0].mxu0
  %v515 = vpop.f32.mrb[0].mxu0
  %v516 = vadd.f32 %v100, %v515
  %v517 = vpop.f32.mrb[0].mxu0
  %518 = vmatprep.mubr.bf16.mxu0 0
  %519 = vmatmul.mubr.bf16.gmra.mrb[0].mxu0 %v248
  %v520 = vpop.f32.mrb[0].mxu0
  %v521 = vadd.f32 %v100, %v520
  %v522 = vpop.f32.mrb[0].mxu0
  %v523 = vpop.f32.mrb[0].mxu0
  %v524 = vadd.f32 %v100, %v523
  %v525 = vpop.f32.mrb[0].mxu0
  %526 = vmatprep.mubr.bf16.mxu0 0
  %527 = vmatmul.mubr.bf16.gmra.mrb[0].mxu0 %v249
  %v528 = vpop.f32.mrb[0].mxu0
  %v529 = vadd.f32 %v100, %v528
  %v530 = vpop.f32.mrb[0].mxu0
  %v531 = vpop.f32.mrb[0].mxu0
  %v532 = vadd.f32 %v100, %v531
  %v533 = vpop.f32.mrb[0].mxu0
  %534 = vmatprep.mubr.bf16.mxu0 0
  %535 = vmatmul.mubr.bf16.gmra.mrb[0].mxu0 %v250
  %v536 = vpop.f32.mrb[0].mxu0
  %v537 = vadd.f32 %v100, %v536
  %v538 = vpop.f32.mrb[0].mxu0
  %v539 = vpop.f32.mrb[0].mxu0
  %v540 = vadd.f32 %v100, %v539
  %v541 = vpop.f32.mrb[0].mxu0
  %542 = vmatprep.mubr.bf16.mxu0 0
  %543 = vmatmul.mubr.bf16.gmra.mrb[0].mxu0 %v251
  %v544 = vpop.f32.mrb[0].mxu0
  %v545 = vadd.f32 %v100, %v544
  %v546 = vpop.f32.mrb[0].mxu0
  %v547 = vpop.f32.mrb[0].mxu0
  %v548 = vadd.f32 %v100, %v547
  %v549 = vpop.f32.mrb[0].mxu0
  %550 = vmatprep.mubr.bf16.mxu0 0
  %551 = vmatmul.mubr.bf16.gmra.mrb[0].mxu0 %v252
  %v552 = vpop.f32.mrb[0].mxu0
  %v553 = vadd.f32 %v100, %v552
  %v554 = vpop.f32.mrb[0].mxu0
  %v555 = vpop.f32.mrb[0].mxu0
  %v556 = vadd.f32 %v100, %v555
  %v557 = vpop.f32.mrb[0].mxu0
  %558 = vmatprep.mubr.bf16.mxu0 0
  %559 = vmatmul.mubr.bf16.gmra.mrb[0].mxu0 %v253
  %v560 = vpop.f32.mrb[0].mxu0
  %v561 = vadd.f32 %v100, %v560
  %v562 = vpop.f32.mrb[0].mxu0
  %v563 = vpop.f32.mrb[0].mxu0
  %v564 = vadd.f32 %v100, %v563
  %v565 = vpop.f32.mrb[0].mxu0
  %566 = vmatprep.mubr.bf16.mxu0 0
  %567 = vmatmul.mubr.bf16.gmra.mrb[0].mxu0 %v254
  %v568 = vpop.f32.mrb[0].mxu0
  %v569 = vadd.f32 %v100, %v568
  %v570 = vpop.f32.mrb[0].mxu0
  %v571 = vpop.f32.mrb[0].mxu0
  %v572 = vadd.f32 %v100, %v571
  %v573 = vpop.f32.mrb[0].mxu0
  %574 = vmatprep.mubr.bf16.mxu0 0
  %575 = vmatmul.mubr.bf16.gmra.mrb[0].mxu0 %v255
  %v576 = vpop.f32.mrb[0].mxu0
  %v577 = vadd.f32 %v100, %v576
  %v578 = vpop.f32.mrb[0].mxu0
  %v579 = vpop.f32.mrb[0].mxu0
  %v580 = vadd.f32 %v100, %v579
  %v581 = vpop.f32.mrb[0].mxu0
  %582 = vmatprep.mubr.bf16.mxu0 0
  %583 = vmatmul.mubr.bf16.gmra.mrb[0].mxu0 %v256
  %v584 = vpop.f32.mrb[0].mxu0
  %v585 = vadd.f32 %v100, %v584
  %v586 = vpop.f32.mrb[0].mxu0
  %v587 = vpop.f32.mrb[0].mxu0
  %v588 = vadd.f32 %v100, %v587
  %v589 = vpop.f32.mrb[0].mxu0
  %590 = vmatprep.mubr.bf16.mxu0 0
  %591 = vmatmul.mubr.bf16.gmra.mrb[0].mxu0 %v257
  %v592 = vpop.f32.mrb[0].mxu0
  %v593 = vadd.f32 %v100, %v592
  %v594 = vpop.f32.mrb[0].mxu0
  %v595 = vpop.f32.mrb[0].mxu0
  %v596 = vadd.f32 %v100, %v595
  %v597 = vpop.f32.mrb[0].mxu0
  %598 = vmatprep.mubr.bf16.mxu0 0
  %599 = vmatmul.mubr.bf16.gmra.mrb[0].mxu0 %v258
  %v600 = vpop.f32.mrb[0].mxu0
  %v601 = vadd.f32 %v100, %v600
  %v602 = vpop.f32.mrb[0].mxu0
  %v603 = vpop.f32.mrb[0].mxu0
  %v604 = vadd.f32 %v100, %v603
  %v605 = vpop.f32.mrb[0].mxu0
  %606 = vmatprep.mubr.bf16.mxu0 0
  %607 = vmatmul.mubr.bf16.gmra.mrb[0].mxu0 %v259
  %v608 = vpop.f32.mrb[0].mxu0
  %v609 = vadd.f32 %v100, %v608
  %v610 = vpop.f32.mrb[0].mxu0
  %v611 = vpop.f32.mrb[0].mxu0
  %v612 = vadd.f32 %v100, %v611
  %v613 = vpop.f32.mrb[0].mxu0
  %614 = vmatprep.mubr.bf16.mxu0 0
  %615 = vmatmul.mubr.bf16.gmra.mrb[0].mxu0 %v260
  %v616 = vpop.f32.mrb[0].mxu0
  %v617 = vadd.f32 %v100, %v616
  %v618 = vpop.f32.mrb[0].mxu0
  %v619 = vpop.f32.mrb[0].mxu0
  %v620 = vadd.f32 %v100, %v619
  %v621 = vpop.f32.mrb[0].mxu0
  %622 = vmatprep.mubr.bf16.mxu0 0
  %623 = vmatmul.mubr.bf16.gmra.mrb[0].mxu0 %v261
  %v624 = vpop.f32.mrb[0].mxu0
  %v625 = vadd.f32 %v100, %v624
  %v626 = vpop.f32.mrb[0].mxu0
  %v627 = vpop.f32.mrb[0].mxu0
  %v628 = vadd.f32 %v100, %v627
  %v629 = vpop.f32.mrb[0].mxu0
  %630 = vdwg.mxu0
  %v631 = vtanh.pop %v377
  %v632 = vtanh.pop %v380
  %v633 = vtanh.pop %v385
  %v634 = vtanh.pop %v388
  %v635 = vtanh.pop %v393
  %v636 = vtanh.pop %v396
  %v637 = vtanh.pop %v401
  %v638 = vtanh.pop %v404
  %v639 = vtanh.pop %v409
  %v640 = vtanh.pop %v412
  %v641 = vtanh.pop %v417
  %v642 = vtanh.pop %v420
  %v643 = vtanh.pop %v425
  %v644 = vtanh.pop %v428
  %v645 = vtanh.pop %v433
  %v646 = vtanh.pop %v436
  %v647 = vtanh.pop %v441
  %v648 = vtanh.pop %v444
  %v649 = vtanh.pop %v449
  %v650 = vtanh.pop %v452
  %v651 = vtanh.pop %v457
  %v652 = vtanh.pop %v460
  %v653 = vtanh.pop %v465
  %v654 = vtanh.pop %v468
  %v655 = vtanh.pop %v473
  %v656 = vtanh.pop %v476
  %v657 = vtanh.pop %v481
  %v658 = vtanh.pop %v484
  %v659 = vtanh.pop %v489
  %v660 = vtanh.pop %v492
  %v661 = vtanh.pop %v497
  %v662 = vtanh.pop %v500
  %v663 = vtanh.pop %v505
  %v664 = vtanh.pop %v508
  %v665 = vtanh.pop %v513
  %v666 = vtanh.pop %v516
  %v667 = vtanh.pop %v521
  %v668 = vtanh.pop %v524
  %v669 = vtanh.pop %v529
  %v670 = vtanh.pop %v532
  %v671 = vtanh.pop %v537
  %v672 = vtanh.pop %v540
  %v673 = vtanh.pop %v545
  %v674 = vtanh.pop %v548
  %v675 = vtanh.pop %v553
  %v676 = vtanh.pop %v556
  %v677 = vtanh.pop %v561
  %v678 = vtanh.pop %v564
  %v679 = vtanh.pop %v569
  %v680 = vtanh.pop %v572
  %v681 = vtanh.pop %v577
  %v682 = vtanh.pop %v580
  %v683 = vtanh.pop %v585
  %v684 = vtanh.pop %v588
  %v685 = vtanh.pop %v593
  %v686 = vtanh.pop %v596
  %v687 = vtanh.pop %v601
  %v688 = vtanh.pop %v604
  %v689 = vtanh.pop %v609
  %v690 = vtanh.pop %v612
  %v691 = vtanh.pop %v617
  %v692 = vtanh.pop %v620
  %v693 = vtanh.pop %v625
  %v694 = vtanh.pop %v628
  %695 = vst [vmem:[%s3] sm:$0xff] %v631
  %696 = vst [vmem:[%s3 + $0x8] sm:$0xff] %v632
  %697 = vst [vmem:[%s3 + $0x10] sm:$0xff] %v633
  %698 = vst [vmem:[%s3 + $0x18] sm:$0xff] %v634
  %699 = vst [vmem:[%s3 + $0x20] sm:$0xff] %v635
  %700 = vst [vmem:[%s3 + $0x28] sm:$0xff] %v636
  %701 = vst [vmem:[%s3 + $0x30] sm:$0xff] %v637
  %702 = vst [vmem:[%s3 + $0x38] sm:$0xff] %v638
  %703 = vst [vmem:[%s3 + $0x40] sm:$0xff] %v639
  %704 = vst [vmem:[%s3 + $0x48] sm:$0xff] %v640
  %705 = vst [vmem:[%s3 + $0x50] sm:$0xff] %v641
  %706 = vst [vmem:[%s3 + $0x58] sm:$0xff] %v642
  %707 = vst [vmem:[%s3 + $0x60] sm:$0xff] %v643
  %708 = vst [vmem:[%s3 + $0x68] sm:$0xff] %v644
  %709 = vst [vmem:[%s3 + $0x70] sm:$0xff] %v645
  %710 = vst [vmem:[%s3 + $0x78] sm:$0xff] %v646
  %711 = vst [vmem:[%s3 + $0x80] sm:$0xff] %v647
  %712 = vst [vmem:[%s3 + $0x88] sm:$0xff] %v648
  %713 = vst [vmem:[%s3 + $0x90] sm:$0xff] %v649
  %714 = vst [vmem:[%s3 + $0x98] sm:$0xff] %v650
  %715 = vst [vmem:[%s3 + $0xa0] sm:$0xff] %v651
  %716 = vst [vmem:[%s3 + $0xa8] sm:$0xff] %v652
  %717 = vst [vmem:[%s3 + $0xb0] sm:$0xff] %v653
  %718 = vst [vmem:[%s3 + $0xb8] sm:$0xff] %v654
  %719 = vst [vmem:[%s3 + $0xc0] sm:$0xff] %v655
  %720 = vst [vmem:[%s3 + $0xc8] sm:$0xff] %v656
  %721 = vst [vmem:[%s3 + $0xd0] sm:$0xff] %v657
  %722 = vst [vmem:[%s3 + $0xd8] sm:$0xff] %v658
  %723 = vst [vmem:[%s3 + $0xe0] sm:$0xff] %v659
  %724 = vst [vmem:[%s3 + $0xe8] sm:$0xff] %v660
  %725 = vst [vmem:[%s3 + $0xf0] sm:$0xff] %v661
  %726 = vst [vmem:[%s3 + $0xf8] sm:$0xff] %v662
  %727 = vst [vmem:[%s3 + $0x100] sm:$0xff] %v663
  %728 = vst [vmem:[%s3 + $0x108] sm:$0xff] %v664
  %729 = vst [vmem:[%s3 + $0x110] sm:$0xff] %v665
  %730 = vst [vmem:[%s3 + $0x118] sm:$0xff] %v666
  %731 = vst [vmem:[%s3 + $0x120] sm:$0xff] %v667
  %732 = vst [vmem:[%s3 + $0x128] sm:$0xff] %v668
  %733 = vst [vmem:[%s3 + $0x130] sm:$0xff] %v669
  %734 = vst [vmem:[%s3 + $0x138] sm:$0xff] %v670
  %735 = vst [vmem:[%s3 + $0x140] sm:$0xff] %v671
  %736 = vst [vmem:[%s3 + $0x148] sm:$0xff] %v672
  %737 = vst [vmem:[%s3 + $0x150] sm:$0xff] %v673
  %738 = vst [vmem:[%s3 + $0x158] sm:$0xff] %v674
  %739 = vst [vmem:[%s3 + $0x160] sm:$0xff] %v675
  %740 = vst [vmem:[%s3 + $0x168] sm:$0xff] %v676
  %741 = vst [vmem:[%s3 + $0x170] sm:$0xff] %v677
  %742 = vst [vmem:[%s3 + $0x178] sm:$0xff] %v678
  %743 = vst [vmem:[%s3 + $0x180] sm:$0xff] %v679
  %744 = vst [vmem:[%s3 + $0x188] sm:$0xff] %v680
  %745 = vst [vmem:[%s3 + $0x190] sm:$0xff] %v681
  %746 = vst [vmem:[%s3 + $0x198] sm:$0xff] %v682
  %747 = vst [vmem:[%s3 + $0x1a0] sm:$0xff] %v683
  %748 = vst [vmem:[%s3 + $0x1a8] sm:$0xff] %v684
  %749 = vst [vmem:[%s3 + $0x1b0] sm:$0xff] %v685
  %750 = vst [vmem:[%s3 + $0x1b8] sm:$0xff] %v686
  %751 = vst [vmem:[%s3 + $0x1c0] sm:$0xff] %v687
  %752 = vst [vmem:[%s3 + $0x1c8] sm:$0xff] %v688
  %753 = vst [vmem:[%s3 + $0x1d0] sm:$0xff] %v689
  %754 = vst [vmem:[%s3 + $0x1d8] sm:$0xff] %v690
  %755 = vst [vmem:[%s3 + $0x1e0] sm:$0xff] %v691
  %756 = vst [vmem:[%s3 + $0x1e8] sm:$0xff] %v692
  %757 = vst [vmem:[%s3 + $0x1f0] sm:$0xff] %v693
  %758 = vst [vmem:[%s3 + $0x1f8] sm:$0xff] %v694
  // Predicated region
  $region14: #{generator_forward.19} parent=0 // pred_check
    _
  $region15: #{generator_forward.19} parent=0 // pred_check_branch
    %760 = sbr.rel (0) target = $region17
  $region16: #{generator_forward.19} parent=0 // pred_region
    _
  $region17: #{generator_forward.19} parent=0 // pred_fallthru
    _
  // Predicated region
  $region18: #{generator_forward.19} parent=0 // pred_check
    _
  $region19: #{generator_forward.19} parent=0 // pred_check_branch
    %762 = sbr.rel (0) target = $region21
  $region20: #{generator_forward.19} parent=0 // pred_region
    _
  $region21: #{generator_forward.19} parent=0 // pred_fallthru
    _

</llo_original>
